<compile_context>
chip_gen: v7x
topology: tpu7x:2x2x1
jax: 0.10.0
libtpu: 0.0.40
codegen_flags: <defaults>
</compile_context>

<pallas_src>
import functools

import jax
import jax.numpy as jnp
from jax.experimental import pallas as pl
from jax.experimental.pallas import tpu as pltpu


# -----------------------------------------------------------------------------
# Kernel: fused conv stage  (block1 -> block2 -> block3 -> LSTM input gates)
# -----------------------------------------------------------------------------
def _conv_stage_kernel(x_ref, *refs, H, ch_change):
    if ch_change:
        (B1a, s1a, t1a, B2a, s2a, t2a, B11, b11) = refs[:8]
        rest = refs[8:]
    else:
        (B1a, s1a, t1a, B2a, s2a, t2a) = refs[:6]
        B11 = b11 = None
        rest = refs[6:]
    (B1b, s1b, t1b, B2b, s2b, t2b,
     B1c, s1c, t1c, B2c, s2c, t2c,
     Bx, bx, gx_ref) = rest

    x = x_ref[...]
    R = x.shape[0]
    # H-direction zero-padding masks at every slice boundary inside the block.
    # Hoisted once and reused by all seven 3x3 convs below.
    row = jax.lax.broadcasted_iota(jnp.int32, (R, 1), 0)
    hh = row % H
    up_m = hh >= 1
    dn_m = hh <= H - 2

    def conv3(v, B3):
        # 3x3 conv as ONE K=3*W*Cin MXU matmul (bf16 inputs, f32 accumulation):
        # lanes [x[h-1] | x[h] | x[h+1]] @ [b_kh0; b_kh1; b_kh2].
        v_up = jnp.where(up_m, pltpu.roll(v, 1, axis=0), 0.0)       # x[h-1]
        v_dn = jnp.where(dn_m, pltpu.roll(v, R - 1, axis=0), 0.0)   # x[h+1]
        v3 = jnp.concatenate([v_up, v, v_dn], axis=1).astype(jnp.bfloat16)
        return jnp.dot(v3, B3[...], preferred_element_type=jnp.float32)

    def block(v, B1, s1, t1, B2, s2, t2, Bsc=None, bsc=None):
        # conv3x3 + BN + ReLU -> conv3x3 + BN -> (+ 1x1 shortcut) -> add -> ReLU.
        y = jnp.maximum(conv3(v, B1) * s1[...] + t1[...], 0.0)
        y = conv3(y, B2) * s2[...] + t2[...]
        if Bsc is None:
            ident = v
        else:
            ident = jnp.dot(v.astype(jnp.bfloat16), Bsc[...],
                            preferred_element_type=jnp.float32) + bsc[...]
        return jnp.maximum(y + ident, 0.0)

    a = block(x, B1a, s1a, t1a, B2a, s2a, t2a, B11, b11)
    a = block(a, B1b, s1b, t1b, B2b, s2b, t2b)
    a = block(a, B1c, s1c, t1c, B2c, s2c, t2c)
    # Input->gate pre-activations for BOTH directions (columns (dir, gate, w, c)).
    gx_ref[...] = (conv3(a, Bx) + bx[...]).astype(gx_ref.dtype)


# -----------------------------------------------------------------------------
# Kernel: ConvLSTM recurrence (grid = (direction, time), state in VMEM scratch)
# -----------------------------------------------------------------------------
def _lstm_scan_kernel(gx_ref, bh_ref, h_all_ref, c_fin_ref, h_sc, c_sc, *, H, Wch):
    s = pl.program_id(1)

    @pl.when(s == 0)
    def _():
        h_sc[...] = jnp.zeros_like(h_sc)
        c_sc[...] = jnp.zeros_like(c_sc)

    hprev = h_sc[...]
    R = hprev.shape[0]
    row = jax.lax.broadcasted_iota(jnp.int32, (R, 1), 0)
    hh = row % H
    h_up = jnp.where(hh >= 1, pltpu.roll(hprev, 1, axis=0), 0.0)
    h_dn = jnp.where(hh <= H - 2, pltpu.roll(hprev, R - 1, axis=0), 0.0)
    h3 = jnp.concatenate([h_up, hprev, h_dn], axis=1).astype(jnp.bfloat16)

    gates = gx_ref[0].astype(jnp.float32) + jnp.dot(
        h3, bh_ref[0], preferred_element_type=jnp.float32)
    i = jax.nn.sigmoid(gates[:, 0 * Wch:1 * Wch])
    f = jax.nn.sigmoid(gates[:, 1 * Wch:2 * Wch])
    g = jnp.tanh(gates[:, 2 * Wch:3 * Wch])
    o = jax.nn.sigmoid(gates[:, 3 * Wch:4 * Wch])
    c_new = f * c_sc[...] + i * g
    h_new = o * jnp.tanh(c_new)
    h_sc[...] = h_new
    c_sc[...] = c_new
    h_all_ref[0, 0] = h_new
    c_fin_ref[0] = c_new


# -----------------------------------------------------------------------------
# Wrappers
# -----------------------------------------------------------------------------
def _pick_slices_per_block(n_slices, H, in_lanes, out_lanes, mid_lanes):
    # Rough per-row VMEM bytes: double-buffered f32 input + bf16 output blocks
    # plus in-kernel f32/bf16 temporaries of the fused block chain.
    per_row = (4 * 2 * in_lanes + 2 * 2 * out_lanes
               + 4 * (6 * mid_lanes + out_lanes)
               + 2 * (3 * mid_lanes + 3 * in_lanes))
    budget = 16 * 1024 * 1024          # per-block budget, safe inside v7x's 64 MiB
    cap = max(1, budget // (H * per_row))
    if n_slices > 1:
        # keep >= 2 grid steps so DMA/compute overlap and the slice axis can
        # shard across v7x's two TensorCores.
        cap = min(cap, n_slices // 2)
    best = 1
    for d in range(1, n_slices + 1):
        if n_slices % d == 0 and d <= cap:
            best = d
    return best


def conv_stage_and_gates(x_rows, params, H, n_slices):
    R, in_lanes = x_rows.shape
    bp1, bp2, bp3 = params['block1'], params['block2'], params['block3']
    lp = params['lstm']
    ch_change = 'B11' in bp1

    weights = [bp1['B1'], bp1['scale1'], bp1['shift1'],
               bp1['B2'], bp1['scale2'], bp1['shift2']]
    if ch_change:
        weights += [bp1['B11'], bp1['bias11']]
    for bp in (bp2, bp3):
        weights += [bp['B1'], bp['scale1'], bp['shift1'],
                    bp['B2'], bp['scale2'], bp['shift2']]
    weights += [lp['Bx'], lp['bx']]

    out_lanes = lp['Bx'].shape[-1]
    mid_lanes = bp2['B1'].shape[-1]

    s_blk = _pick_slices_per_block(n_slices, H, in_lanes, out_lanes, mid_lanes)
    blk_rows = s_blk * H
    grid = (n_slices // s_blk,)

    kernel = functools.partial(_conv_stage_kernel, H=H, ch_change=ch_change)
    in_specs = [pl.BlockSpec((blk_rows, in_lanes), lambda i: (i, 0))]
    # Weights: whole array, constant index map (kept resident across grid steps).
    in_specs += [pl.BlockSpec(w.shape, (lambda i, nd=w.ndim: (0,) * nd))
                 for w in weights]
    out_specs = pl.BlockSpec((blk_rows, out_lanes), lambda i: (i, 0))

    return pl.pallas_call(
        kernel,
        out_shape=jax.ShapeDtypeStruct((R, out_lanes), jnp.bfloat16),
        grid_spec=pltpu.PrefetchScalarGridSpec(
            num_scalar_prefetch=0, grid=grid,
            in_specs=in_specs, out_specs=out_specs),
        compiler_params=pltpu.CompilerParams(
            dimension_semantics=("parallel",),
            vmem_limit_bytes=48 * 1024 * 1024),
    )(x_rows, *weights)


def lstm_scan(gx, Bh, H):
    # gx: (T, b*H, 2*4*Wch) bf16 (direction selected via lane-block index).
    # Bh: (2, 3*Wch, 4*Wch) bf16.
    T, bH, C8 = gx.shape
    C4 = C8 // 2
    Wch = C4 // 4
    Kh = Bh.shape[1]
    kernel = functools.partial(_lstm_scan_kernel, H=H, Wch=Wch)

    def t_of(d, s):
        # d == 0: forward in time (s); d == 1: reversed (T-1-s).
        return s + d * (T - 1 - 2 * s)

    grid_spec = pltpu.PrefetchScalarGridSpec(
        num_scalar_prefetch=0,
        grid=(2, T),
        in_specs=[
            pl.BlockSpec((1, bH, C4), lambda d, s: (t_of(d, s), 0, d)),
            pl.BlockSpec((1, Kh, C4), lambda d, s: (d, 0, 0)),
        ],
        out_specs=[
            pl.BlockSpec((1, 1, bH, Wch), lambda d, s: (d, t_of(d, s), 0, 0)),
            pl.BlockSpec((1, bH, Wch), lambda d, s: (d, 0, 0)),
        ],
        scratch_shapes=[pltpu.VMEM((bH, Wch), jnp.float32),
                        pltpu.VMEM((bH, Wch), jnp.float32)],
    )
    return pl.pallas_call(
        kernel,
        out_shape=(jax.ShapeDtypeStruct((2, T, bH, Wch), jnp.float32),
                   jax.ShapeDtypeStruct((2, bH, Wch), jnp.float32)),
        grid_spec=grid_spec,
        compiler_params=pltpu.CompilerParams(
            dimension_semantics=("parallel", "arbitrary"),
            vmem_limit_bytes=32 * 1024 * 1024),
    )(gx, Bh)


# -----------------------------------------------------------------------------
# Full forward
# -----------------------------------------------------------------------------
def straightnet_back_lc_forward(x, params):
    """x: (b, t, c, h, w) float32 (PyTorch convention). Returns (output, state)."""
    b, t, c, h, w = x.shape
    # voltoslices + (rows, lanes) layout: rows ordered (t, b, h), lanes = (w, c).
    a = x.transpose(1, 0, 3, 4, 2).reshape(t * b * h, w * c).astype(jnp.float32)
    in_lanes = params['block1']['B1'].shape[0] // 3
    if in_lanes > a.shape[1]:                 # pad input lanes to a 128 multiple
        a = jnp.pad(a, ((0, 0), (0, in_lanes - a.shape[1])))

    # blocks 1-3 + both-direction input->gate convs in ONE gridded pallas_call.
    gx = conv_stage_and_gates(a, params, h, n_slices=t * b)   # (t*b*h, 8*Wch) bf16

    lp = params['lstm']
    Wch = lp['Bh'].shape[-1] // 4
    ch = Wch // w
    # Free reshape (rows already t-major); no host transpose — the scan picks the
    # direction via the gx BlockSpec lane-block index.
    gx = gx.reshape(t, b * h, 2 * 4 * Wch)

    h_all, c_fin = lstm_scan(gx, lp['Bh'], h)  # (2,t,b*h,Wch), (2,b*h,Wch)

    # 1x1 output head (output_channel=1): lane width = w < 128 would force masked
    # stores in Pallas; this trivial channel reduction is left to XLA.
    comb = h_all[0] + h_all[1]                                     # (t, b*h, W*ch)
    head = jnp.squeeze(comb.reshape(t, b * h, w, ch) @ lp['w_out'], -1) + lp['b_out']
    output = head.reshape(t, b, h, w).transpose(1, 0, 2, 3)[:, :, None]

    def to_nchw(v):                                # (b*h, W*ch) -> (b, ch, h, w)
        return v.reshape(b, h, w, ch).transpose(0, 3, 1, 2)

    state = ((to_nchw(h_all[0, t - 1]), to_nchw(c_fin[0])),
             (to_nchw(h_all[1, 0]), to_nchw(c_fin[1])))
    return output, state


# -----------------------------------------------------------------------------
# Parameter construction (raw HWIO params + packing into kernel layouts)
# -----------------------------------------------------------------------------
def make_raw_params(key, in_channels, conv_channel, lstm_channel):
    keys = iter(jax.random.split(key, 64))
    nxt = lambda: next(keys)

    def conv_w(cin, cout, k=3):
        fan_in = k * k * cin
        return jax.random.normal(nxt(), (k, k, cin, cout),
                                 jnp.float32) / jnp.sqrt(float(fan_in))

    def bias(cout):
        return 0.05 * jax.random.normal(nxt(), (cout,), jnp.float32)

    def bn_fold(cout, eps=1e-5):
        gamma = 1.0 + 0.1 * jax.random.normal(nxt(), (cout,), jnp.float32)
        beta = 0.1 * jax.random.normal(nxt(), (cout,), jnp.float32)
        mean = 0.1 * jax.random.normal(nxt(), (cout,), jnp.float32)
        var = jax.random.uniform(nxt(), (cout,), jnp.float32, 0.5, 1.5)
        scale = gamma / jnp.sqrt(var + eps)
        shift = beta - mean * scale
        return scale, shift

    def block(cin, cout):
        p = {'w1': conv_w(cin, cout), 'b1': bias(cout)}
        p['s1'], p['t1'] = bn_fold(cout)
        p['w2'], p['b2'] = conv_w(cout, cout), bias(cout)
        p['s2'], p['t2'] = bn_fold(cout)
        if cin != cout:
            p['w11'] = conv_w(cin, cout, k=1)
            p['b11'] = bias(cout)
        return p

    ch = lstm_channel
    return {
        'block1': block(in_channels, conv_channel),
        'block2': block(conv_channel, conv_channel),
        'block3': block(conv_channel, conv_channel),
        'lstm': {
            'wx_f': conv_w(conv_channel, 4 * ch), 'bx_f': bias(4 * ch),
            'wh_f': conv_w(ch, 4 * ch),
            'wx_b': conv_w(conv_channel, 4 * ch), 'bx_b': bias(4 * ch),
            'wh_b': conv_w(ch, 4 * ch),
            'w_out': conv_w(ch, 1, k=1), 'b_out': bias(1),
        },
    }


def _round_up(n, m):
    return ((n + m - 1) // m) * m


def _banded_conv_mats(w_hwio, W, k_pad=None):
    """(3,3,Cin,Cout) HWIO conv -> (3*k_pad, W*Cout) stacked banded matrices.

    Per kh segment: mat[w_in*Cin+ci, w_out*Cout+co] = w[kh, kw, ci, co] with
    kw = w_in - w_out + 1, zero outside |w_in-w_out| <= 1 (zero padding in W).
    Segments are stacked along K in kh order to match lanes [x[h-1]|x[h]|x[h+1]].
    Rows of each segment are zero-padded to k_pad (lane-padded inputs).
    """
    Cin = w_hwio.shape[2]
    K = W * Cin
    k_pad = K if k_pad is None else k_pad
    mats = []
    for kh in range(3):
        m = None
        for kw in range(3):
            off = kw - 1                                   # w_in = w_out + off
            sel = jnp.eye(W, k=-off, dtype=jnp.float32)    # sel[w_in, w_out]
            term = jnp.kron(sel, w_hwio[kh, kw])
            m = term if m is None else m + term
        if k_pad > K:
            m = jnp.pad(m, ((0, k_pad - K), (0, 0)))
        mats.append(m)
    return jnp.concatenate(mats, axis=0)


def _gate_major_cols(mat, W, ch):
    """Permute output columns from (w, gate, c) order to (gate, w, c) order."""
    K = mat.shape[0]
    return mat.reshape(K, W, 4, ch).transpose(0, 2, 1, 3).reshape(K, 4 * W * ch)


def _tile_cols(vec, W):
    """(Cout,) per-channel vector -> (1, W*Cout) matching (w, c) column order."""
    return jnp.tile(vec, W).reshape(1, W * vec.shape[0])


def _tile_gate_cols(vec, W, ch):
    """(4*ch,) gate bias -> (1, 4*W*ch) matching (gate, w, c) column order."""
    return jnp.broadcast_to(vec.reshape(4, 1, ch), (4, W, ch)).reshape(1, 4 * W * ch)


def pack_params(raw, W):
    def pack_block(p, k_pad_in=None):
        d = {
            'B1': _banded_conv_mats(p['w1'], W, k_pad_in).astype(jnp.bfloat16),
            'scale1': _tile_cols(p['s1'], W),
            'shift1': _tile_cols(p['t1'] + p['b1'] * p['s1'], W),
            'B2': _banded_conv_mats(p['w2'], W).astype(jnp.bfloat16),
            'scale2': _tile_cols(p['s2'], W),
            'shift2': _tile_cols(p['t2'] + p['b2'] * p['s2'], W),
        }
        if 'w11' in p:
            b11 = jnp.kron(jnp.eye(W, dtype=jnp.float32), p['w11'][0, 0])
            if k_pad_in is not None and k_pad_in > b11.shape[0]:
                b11 = jnp.pad(b11, ((0, k_pad_in - b11.shape[0]), (0, 0)))
            d['B11'] = b11.astype(jnp.bfloat16)
            d['bias11'] = _tile_cols(p['b11'], W)
        return d

    cin = raw['block1']['w1'].shape[2]
    in_pad = _round_up(W * cin, 128)               # lane-pad network input to 128

    L = raw['lstm']
    ch = L['wh_f'].shape[-1] // 4
    Bx_f = _gate_major_cols(_banded_conv_mats(L['wx_f'], W), W, ch)
    Bx_b = _gate_major_cols(_banded_conv_mats(L['wx_b'], W), W, ch)
    Bh_f = _gate_major_cols(_banded_conv_mats(L['wh_f'], W), W, ch)
    Bh_b = _gate_major_cols(_banded_conv_mats(L['wh_b'], W), W, ch)
    return {
        'block1': pack_block(raw['block1'], in_pad),
        'block2': pack_block(raw['block2']),
        'block3': pack_block(raw['block3']),
        'lstm': {
            'Bx': jnp.concatenate([Bx_f, Bx_b], axis=-1).astype(jnp.bfloat16),
            'bx': jnp.concatenate([_tile_gate_cols(L['bx_f'], W, ch),
                                   _tile_gate_cols(L['bx_b'], W, ch)], axis=-1),
            'Bh': jnp.stack([Bh_f, Bh_b], axis=0).astype(jnp.bfloat16),
            'w_out': L['w_out'].reshape(ch, 1),
            'b_out': L['b_out'][0],
        },
    }


# -----------------------------------------------------------------------------
# Pure-JAX reference (same stand-in BiConvLSTM semantics) for verification
# -----------------------------------------------------------------------------
def _ref_conv(x, w, b=None, padding=((1, 1), (1, 1))):
    out = jax.lax.conv_general_dilated(
        x, w, window_strides=(1, 1), padding=padding,
        dimension_numbers=('NCHW', 'HWIO', 'NCHW'),
        precision=jax.lax.Precision.HIGHEST)
    if b is not None:
        out = out + b.reshape(1, -1, 1, 1)
    return out


def reference_forward(x, raw):
    b, t, c, h, w = x.shape
    xs = x.reshape(b * t, c, h, w)

    def aff(y, s, sh):
        return y * s.reshape(1, -1, 1, 1) + sh.reshape(1, -1, 1, 1)

    def ref_block(xx, p):
        y = jnp.maximum(aff(_ref_conv(xx, p['w1'], p['b1']), p['s1'], p['t1']), 0.0)
        y = aff(_ref_conv(y, p['w2'], p['b2']), p['s2'], p['t2'])
        if 'w11' in p:
            ident = _ref_conv(xx, p['w11'], p['b11'], padding=((0, 0), (0, 0)))
        else:
            ident = xx
        return jnp.maximum(y + ident, 0.0)

    a = ref_block(xs, raw['block1'])
    a = ref_block(a, raw['block2'])
    a = ref_block(a, raw['block3'])
    seq = a.reshape(b, t, a.shape[1], h, w)

    L = raw['lstm']
    ch = L['wh_f'].shape[-1] // 4

    def run(wx, bx, wh, order):
        hc = jnp.zeros((b, ch, h, w), jnp.float32)
        cc = jnp.zeros_like(hc)
        hs = [None] * t
        for ti in order:
            g = _ref_conv(seq[:, ti], wx, bx) + _ref_conv(hc, wh)
            ig = jax.nn.sigmoid(g[:, 0 * ch:1 * ch])
            fg = jax.nn.sigmoid(g[:, 1 * ch:2 * ch])
            gg = jnp.tanh(g[:, 2 * ch:3 * ch])
            og = jax.nn.sigmoid(g[:, 3 * ch:4 * ch])
            cc = fg * cc + ig * gg
            hc = og * jnp.tanh(cc)
            hs[ti] = hc
        return hs, (hc, cc)

    hs_f, st_f = run(L['wx_f'], L['bx_f'], L['wh_f'], range(t))
    hs_b, st_b = run(L['wx_b'], L['bx_b'], L['wh_b'], list(reversed(range(t))))

    w_o = L['w_out'].reshape(-1)
    outs = []
    for ti in range(t):
        comb = hs_f[ti] + hs_b[ti]
        o = jnp.einsum('bchw,c->bhw', comb, w_o) + L['b_out'][0]
        outs.append(o[:, None])
    return jnp.stack(outs, axis=1), (st_f, st_b)


# -----------------------------------------------------------------------------
if __name__ == "__main__":
    key = jax.random.PRNGKey(0)
    k_x, k_p = jax.random.split(key)

    b, t, c, h, w = 2, 4, 4, 16, 16
    conv_channel, lstm_channel = 8, 8

    x = jax.random.normal(k_x, (b, t, c, h, w), jnp.float32)
    raw = make_raw_params(k_p, c, conv_channel, lstm_channel)
    params = pack_params(raw, w)

    fwd = jax.jit(straightnet_back_lc_forward)
    output, state = fwd(x, params)
    jax.block_until_ready((output, state))
    assert output.shape == (b, t, 1, h, w)

    # Verify against the pure-JAX reference (tolerance covers bf16 MXU inputs
    # vs the f32 HIGHEST-precision reference).
    out_ref, state_ref = reference_forward(x, raw)
    errs = [jnp.max(jnp.abs(output - out_ref))]
    for (hk, ck), (hr, cr) in zip(state, state_ref):
        errs.append(jnp.max(jnp.abs(hk - hr)))
        errs.append(jnp.max(jnp.abs(ck - cr)))
    max_err = float(jnp.max(jnp.stack(errs)))
    assert max_err < 2e-1, f"kernel/reference mismatch: max abs err = {max_err}"

    print("KERNEL_OK")
</pallas_src>

<mosaic_0001>
module attributes {stable_mosaic.version = 11 : i64} {
  func.func @_conv_stage_kernel(%arg0: i32, %arg1: memref<64x128xf32, #tpu.memory_space<vmem>>, %arg2: memref<384x128xbf16, #tpu.memory_space<vmem>>, %arg3: memref<1x128xf32, #tpu.memory_space<vmem>>, %arg4: memref<1x128xf32, #tpu.memory_space<vmem>>, %arg5: memref<384x128xbf16, #tpu.memory_space<vmem>>, %arg6: memref<1x128xf32, #tpu.memory_space<vmem>>, %arg7: memref<1x128xf32, #tpu.memory_space<vmem>>, %arg8: memref<128x128xbf16, #tpu.memory_space<vmem>>, %arg9: memref<1x128xf32, #tpu.memory_space<vmem>>, %arg10: memref<384x128xbf16, #tpu.memory_space<vmem>>, %arg11: memref<1x128xf32, #tpu.memory_space<vmem>>, %arg12: memref<1x128xf32, #tpu.memory_space<vmem>>, %arg13: memref<384x128xbf16, #tpu.memory_space<vmem>>, %arg14: memref<1x128xf32, #tpu.memory_space<vmem>>, %arg15: memref<1x128xf32, #tpu.memory_space<vmem>>, %arg16: memref<384x128xbf16, #tpu.memory_space<vmem>>, %arg17: memref<1x128xf32, #tpu.memory_space<vmem>>, %arg18: memref<1x128xf32, #tpu.memory_space<vmem>>, %arg19: memref<384x128xbf16, #tpu.memory_space<vmem>>, %arg20: memref<1x128xf32, #tpu.memory_space<vmem>>, %arg21: memref<1x128xf32, #tpu.memory_space<vmem>>, %arg22: memref<384x1024xbf16, #tpu.memory_space<vmem>>, %arg23: memref<1x1024xf32, #tpu.memory_space<vmem>>, %arg24: memref<64x1024xbf16, #tpu.memory_space<vmem>>) attributes {dimension_semantics = [#tpu.dimension_semantics<parallel>], iteration_bounds = array<i64: 2>, scalar_prefetch = 0 : i64, scratch_operands = 0 : i64, tpu.core_type = #tpu.core_type<tc>, window_params = [{transform_indices = @transform_0, window_bounds = array<i64: 64, 128>}, {pipeline_mode = #tpu.pipeline_mode<synchronous>, transform_indices = @transform_1, window_bounds = array<i64: 384, 128>}, {pipeline_mode = #tpu.pipeline_mode<synchronous>, transform_indices = @transform_2, window_bounds = array<i64: 1, 128>}, {pipeline_mode = #tpu.pipeline_mode<synchronous>, transform_indices = @transform_3, window_bounds = array<i64: 1, 128>}, {pipeline_mode = #tpu.pipeline_mode<synchronous>, transform_indices = @transform_4, window_bounds = array<i64: 384, 128>}, {pipeline_mode = #tpu.pipeline_mode<synchronous>, transform_indices = @transform_5, window_bounds = array<i64: 1, 128>}, {pipeline_mode = #tpu.pipeline_mode<synchronous>, transform_indices = @transform_6, window_bounds = array<i64: 1, 128>}, {pipeline_mode = #tpu.pipeline_mode<synchronous>, transform_indices = @transform_7, window_bounds = array<i64: 128, 128>}, {pipeline_mode = #tpu.pipeline_mode<synchronous>, transform_indices = @transform_8, window_bounds = array<i64: 1, 128>}, {pipeline_mode = #tpu.pipeline_mode<synchronous>, transform_indices = @transform_9, window_bounds = array<i64: 384, 128>}, {pipeline_mode = #tpu.pipeline_mode<synchronous>, transform_indices = @transform_10, window_bounds = array<i64: 1, 128>}, {pipeline_mode = #tpu.pipeline_mode<synchronous>, transform_indices = @transform_11, window_bounds = array<i64: 1, 128>}, {pipeline_mode = #tpu.pipeline_mode<synchronous>, transform_indices = @transform_12, window_bounds = array<i64: 384, 128>}, {pipeline_mode = #tpu.pipeline_mode<synchronous>, transform_indices = @transform_13, window_bounds = array<i64: 1, 128>}, {pipeline_mode = #tpu.pipeline_mode<synchronous>, transform_indices = @transform_14, window_bounds = array<i64: 1, 128>}, {pipeline_mode = #tpu.pipeline_mode<synchronous>, transform_indices = @transform_15, window_bounds = array<i64: 384, 128>}, {pipeline_mode = #tpu.pipeline_mode<synchronous>, transform_indices = @transform_16, window_bounds = array<i64: 1, 128>}, {pipeline_mode = #tpu.pipeline_mode<synchronous>, transform_indices = @transform_17, window_bounds = array<i64: 1, 128>}, {pipeline_mode = #tpu.pipeline_mode<synchronous>, transform_indices = @transform_18, window_bounds = array<i64: 384, 128>}, {pipeline_mode = #tpu.pipeline_mode<synchronous>, transform_indices = @transform_19, window_bounds = array<i64: 1, 128>}, {pipeline_mode = #tpu.pipeline_mode<synchronous>, transform_indices = @transform_20, window_bounds = array<i64: 1, 128>}, {pipeline_mode = #tpu.pipeline_mode<synchronous>, transform_indices = @transform_21, window_bounds = array<i64: 384, 1024>}, {pipeline_mode = #tpu.pipeline_mode<synchronous>, transform_indices = @transform_22, window_bounds = array<i64: 1, 1024>}, {transform_indices = @transform_23, window_bounds = array<i64: 64, 1024>}]} {
    %c0 = arith.constant 0 : index
    %c0_0 = arith.constant 0 : index
    %0 = vector.load %arg1[%c0, %c0_0] : memref<64x128xf32, #tpu.memory_space<vmem>>, vector<64x128xf32>
    %1 = tpu.iota {dimensions = array<i32: 0>} : vector<64x1xi32>
    %c16_i32 = arith.constant 16 : i32
    %c0_i32 = arith.constant 0 : i32
    %2 = arith.cmpi eq, %c16_i32, %c0_i32 : i32
    %c1_i32 = arith.constant 1 : i32
    %3 = arith.select %2, %c1_i32, %c16_i32 : i32
    %4 = vector.broadcast %3 : i32 to vector<64x1xi32>
    %5 = arith.remsi %1, %4 : vector<64x1xi32>
    %c0_i32_1 = arith.constant 0 : i32
    %6 = vector.broadcast %c0_i32_1 : i32 to vector<64x1xi32>
    %7 = arith.cmpi ne, %5, %6 : vector<64x1xi32>
    %c0_i32_2 = arith.constant 0 : i32
    %8 = vector.broadcast %c0_i32_2 : i32 to vector<64x1xi32>
    %9 = arith.cmpi slt, %5, %8 : vector<64x1xi32>
    %c0_i32_3 = arith.constant 0 : i32
    %10 = arith.cmpi slt, %3, %c0_i32_3 : i32
    %11 = vector.broadcast %10 : i1 to vector<64x1xi1>
    %12 = vector.broadcast %11 : vector<64x1xi1> to vector<64x1xi1>
    %13 = arith.xori %9, %12 : vector<64x1xi1>
    %14 = arith.andi %13, %7 : vector<64x1xi1>
    %15 = vector.broadcast %3 : i32 to vector<64x1xi32>
    %16 = arith.addi %5, %15 : vector<64x1xi32>
    %17 = arith.select %14, %16, %5 : vector<64x1xi1>, vector<64x1xi32>
    %c1_i32_4 = arith.constant 1 : i32
    %18 = vector.broadcast %c1_i32_4 : i32 to vector<64x1xi32>
    %19 = arith.cmpi sge, %17, %18 : vector<64x1xi32>
    %c14_i32 = arith.constant 14 : i32
    %20 = vector.broadcast %c14_i32 : i32 to vector<64x1xi32>
    %21 = arith.cmpi sle, %17, %20 : vector<64x1xi32>
    %c1_i32_5 = arith.constant 1 : i32
    %22 = tpu.dynamic_rotate %0 by %c1_i32_5 dim 0 : vector<64x128xf32>, i32 -> vector<64x128xf32>
    %cst = arith.constant 0.000000e+00 : f32
    %23 = vector.shape_cast %19 : vector<64x1xi1> to vector<64x1xi1>
    %24 = vector.broadcast %23 : vector<64x1xi1> to vector<64x128xi1>
    %25 = vector.broadcast %cst : f32 to vector<64x128xf32>
    %26 = arith.select %24, %22, %25 : vector<64x128xi1>, vector<64x128xf32>
    %c63_i32 = arith.constant 63 : i32
    %27 = tpu.dynamic_rotate %0 by %c63_i32 dim 0 : vector<64x128xf32>, i32 -> vector<64x128xf32>
    %cst_6 = arith.constant 0.000000e+00 : f32
    %28 = vector.shape_cast %21 : vector<64x1xi1> to vector<64x1xi1>
    %29 = vector.broadcast %28 : vector<64x1xi1> to vector<64x128xi1>
    %30 = vector.broadcast %cst_6 : f32 to vector<64x128xf32>
    %31 = arith.select %29, %27, %30 : vector<64x128xi1>, vector<64x128xf32>
    %32 = tpu.concatenate %26, %0, %31 in 1 : vector<64x128xf32>, vector<64x128xf32>, vector<64x128xf32> -> vector<64x384xf32>
    %33 = arith.truncf %32 : vector<64x384xf32> to vector<64x384xbf16>
    %c0_7 = arith.constant 0 : index
    %c0_8 = arith.constant 0 : index
    %34 = vector.load %arg2[%c0_7, %c0_8] : memref<384x128xbf16, #tpu.memory_space<vmem>>, vector<384x128xbf16>
    %cst_9 = arith.constant dense<0.000000e+00> : vector<64x128xf32>
    %35 = tpu.matmul %33, %34, %cst_9 {dimension_numbers = #tpu.dot_dimension_numbers<[1], [0], [0], [1], [0, 0, 1, 1], [], []>} : vector<64x384xbf16>, vector<384x128xbf16>, vector<64x128xf32> -> vector<64x128xf32>
    %c0_10 = arith.constant 0 : index
    %c0_11 = arith.constant 0 : index
    %36 = vector.load %arg3[%c0_10, %c0_11] : memref<1x128xf32, #tpu.memory_space<vmem>>, vector<1x128xf32>
    %37 = vector.broadcast %36 : vector<1x128xf32> to vector<64x128xf32>
    %38 = arith.mulf %35, %37 : vector<64x128xf32>
    %c0_12 = arith.constant 0 : index
    %c0_13 = arith.constant 0 : index
    %39 = vector.load %arg4[%c0_12, %c0_13] : memref<1x128xf32, #tpu.memory_space<vmem>>, vector<1x128xf32>
    %40 = vector.broadcast %39 : vector<1x128xf32> to vector<64x128xf32>
    %41 = arith.addf %38, %40 : vector<64x128xf32>
    %cst_14 = arith.constant 0.000000e+00 : f32
    %42 = vector.broadcast %cst_14 : f32 to vector<64x128xf32>
    %43 = arith.maximumf %41, %42 : vector<64x128xf32>
    %c1_i32_15 = arith.constant 1 : i32
    %44 = tpu.dynamic_rotate %43 by %c1_i32_15 dim 0 : vector<64x128xf32>, i32 -> vector<64x128xf32>
    %cst_16 = arith.constant 0.000000e+00 : f32
    %45 = vector.shape_cast %19 : vector<64x1xi1> to vector<64x1xi1>
    %46 = vector.broadcast %45 : vector<64x1xi1> to vector<64x128xi1>
    %47 = vector.broadcast %cst_16 : f32 to vector<64x128xf32>
    %48 = arith.select %46, %44, %47 : vector<64x128xi1>, vector<64x128xf32>
    %c63_i32_17 = arith.constant 63 : i32
    %49 = tpu.dynamic_rotate %43 by %c63_i32_17 dim 0 : vector<64x128xf32>, i32 -> vector<64x128xf32>
    %cst_18 = arith.constant 0.000000e+00 : f32
    %50 = vector.shape_cast %21 : vector<64x1xi1> to vector<64x1xi1>
    %51 = vector.broadcast %50 : vector<64x1xi1> to vector<64x128xi1>
    %52 = vector.broadcast %cst_18 : f32 to vector<64x128xf32>
    %53 = arith.select %51, %49, %52 : vector<64x128xi1>, vector<64x128xf32>
    %54 = tpu.concatenate %48, %43, %53 in 1 : vector<64x128xf32>, vector<64x128xf32>, vector<64x128xf32> -> vector<64x384xf32>
    %55 = arith.truncf %54 : vector<64x384xf32> to vector<64x384xbf16>
    %c0_19 = arith.constant 0 : index
    %c0_20 = arith.constant 0 : index
    %56 = vector.load %arg5[%c0_19, %c0_20] : memref<384x128xbf16, #tpu.memory_space<vmem>>, vector<384x128xbf16>
    %cst_21 = arith.constant dense<0.000000e+00> : vector<64x128xf32>
    %57 = tpu.matmul %55, %56, %cst_21 {dimension_numbers = #tpu.dot_dimension_numbers<[1], [0], [0], [1], [0, 0, 1, 1], [], []>} : vector<64x384xbf16>, vector<384x128xbf16>, vector<64x128xf32> -> vector<64x128xf32>
    %c0_22 = arith.constant 0 : index
    %c0_23 = arith.constant 0 : index
    %58 = vector.load %arg6[%c0_22, %c0_23] : memref<1x128xf32, #tpu.memory_space<vmem>>, vector<1x128xf32>
    %59 = vector.broadcast %58 : vector<1x128xf32> to vector<64x128xf32>
    %60 = arith.mulf %57, %59 : vector<64x128xf32>
    %c0_24 = arith.constant 0 : index
    %c0_25 = arith.constant 0 : index
    %61 = vector.load %arg7[%c0_24, %c0_25] : memref<1x128xf32, #tpu.memory_space<vmem>>, vector<1x128xf32>
    %62 = vector.broadcast %61 : vector<1x128xf32> to vector<64x128xf32>
    %63 = arith.addf %60, %62 : vector<64x128xf32>
    %64 = arith.truncf %0 : vector<64x128xf32> to vector<64x128xbf16>
    %c0_26 = arith.constant 0 : index
    %c0_27 = arith.constant 0 : index
    %65 = vector.load %arg8[%c0_26, %c0_27] : memref<128x128xbf16, #tpu.memory_space<vmem>>, vector<128x128xbf16>
    %cst_28 = arith.constant dense<0.000000e+00> : vector<64x128xf32>
    %66 = tpu.matmul %64, %65, %cst_28 {dimension_numbers = #tpu.dot_dimension_numbers<[1], [0], [0], [1], [0, 0, 1, 1], [], []>} : vector<64x128xbf16>, vector<128x128xbf16>, vector<64x128xf32> -> vector<64x128xf32>
    %c0_29 = arith.constant 0 : index
    %c0_30 = arith.constant 0 : index
    %67 = vector.load %arg9[%c0_29, %c0_30] : memref<1x128xf32, #tpu.memory_space<vmem>>, vector<1x128xf32>
    %68 = vector.broadcast %67 : vector<1x128xf32> to vector<64x128xf32>
    %69 = arith.addf %66, %68 : vector<64x128xf32>
    %70 = arith.addf %63, %69 : vector<64x128xf32>
    %cst_31 = arith.constant 0.000000e+00 : f32
    %71 = vector.broadcast %cst_31 : f32 to vector<64x128xf32>
    %72 = arith.maximumf %70, %71 : vector<64x128xf32>
    %c1_i32_32 = arith.constant 1 : i32
    %73 = tpu.dynamic_rotate %72 by %c1_i32_32 dim 0 : vector<64x128xf32>, i32 -> vector<64x128xf32>
    %cst_33 = arith.constant 0.000000e+00 : f32
    %74 = vector.shape_cast %19 : vector<64x1xi1> to vector<64x1xi1>
    %75 = vector.broadcast %74 : vector<64x1xi1> to vector<64x128xi1>
    %76 = vector.broadcast %cst_33 : f32 to vector<64x128xf32>
    %77 = arith.select %75, %73, %76 : vector<64x128xi1>, vector<64x128xf32>
    %c63_i32_34 = arith.constant 63 : i32
    %78 = tpu.dynamic_rotate %72 by %c63_i32_34 dim 0 : vector<64x128xf32>, i32 -> vector<64x128xf32>
    %cst_35 = arith.constant 0.000000e+00 : f32
    %79 = vector.shape_cast %21 : vector<64x1xi1> to vector<64x1xi1>
    %80 = vector.broadcast %79 : vector<64x1xi1> to vector<64x128xi1>
    %81 = vector.broadcast %cst_35 : f32 to vector<64x128xf32>
    %82 = arith.select %80, %78, %81 : vector<64x128xi1>, vector<64x128xf32>
    %83 = tpu.concatenate %77, %72, %82 in 1 : vector<64x128xf32>, vector<64x128xf32>, vector<64x128xf32> -> vector<64x384xf32>
    %84 = arith.truncf %83 : vector<64x384xf32> to vector<64x384xbf16>
    %c0_36 = arith.constant 0 : index
    %c0_37 = arith.constant 0 : index
    %85 = vector.load %arg10[%c0_36, %c0_37] : memref<384x128xbf16, #tpu.memory_space<vmem>>, vector<384x128xbf16>
    %cst_38 = arith.constant dense<0.000000e+00> : vector<64x128xf32>
    %86 = tpu.matmul %84, %85, %cst_38 {dimension_numbers = #tpu.dot_dimension_numbers<[1], [0], [0], [1], [0, 0, 1, 1], [], []>} : vector<64x384xbf16>, vector<384x128xbf16>, vector<64x128xf32> -> vector<64x128xf32>
    %c0_39 = arith.constant 0 : index
    %c0_40 = arith.constant 0 : index
    %87 = vector.load %arg11[%c0_39, %c0_40] : memref<1x128xf32, #tpu.memory_space<vmem>>, vector<1x128xf32>
    %88 = vector.broadcast %87 : vector<1x128xf32> to vector<64x128xf32>
    %89 = arith.mulf %86, %88 : vector<64x128xf32>
    %c0_41 = arith.constant 0 : index
    %c0_42 = arith.constant 0 : index
    %90 = vector.load %arg12[%c0_41, %c0_42] : memref<1x128xf32, #tpu.memory_space<vmem>>, vector<1x128xf32>
    %91 = vector.broadcast %90 : vector<1x128xf32> to vector<64x128xf32>
    %92 = arith.addf %89, %91 : vector<64x128xf32>
    %cst_43 = arith.constant 0.000000e+00 : f32
    %93 = vector.broadcast %cst_43 : f32 to vector<64x128xf32>
    %94 = arith.maximumf %92, %93 : vector<64x128xf32>
    %c1_i32_44 = arith.constant 1 : i32
    %95 = tpu.dynamic_rotate %94 by %c1_i32_44 dim 0 : vector<64x128xf32>, i32 -> vector<64x128xf32>
    %cst_45 = arith.constant 0.000000e+00 : f32
    %96 = vector.shape_cast %19 : vector<64x1xi1> to vector<64x1xi1>
    %97 = vector.broadcast %96 : vector<64x1xi1> to vector<64x128xi1>
    %98 = vector.broadcast %cst_45 : f32 to vector<64x128xf32>
    %99 = arith.select %97, %95, %98 : vector<64x128xi1>, vector<64x128xf32>
    %c63_i32_46 = arith.constant 63 : i32
    %100 = tpu.dynamic_rotate %94 by %c63_i32_46 dim 0 : vector<64x128xf32>, i32 -> vector<64x128xf32>
    %cst_47 = arith.constant 0.000000e+00 : f32
    %101 = vector.shape_cast %21 : vector<64x1xi1> to vector<64x1xi1>
    %102 = vector.broadcast %101 : vector<64x1xi1> to vector<64x128xi1>
    %103 = vector.broadcast %cst_47 : f32 to vector<64x128xf32>
    %104 = arith.select %102, %100, %103 : vector<64x128xi1>, vector<64x128xf32>
    %105 = tpu.concatenate %99, %94, %104 in 1 : vector<64x128xf32>, vector<64x128xf32>, vector<64x128xf32> -> vector<64x384xf32>
    %106 = arith.truncf %105 : vector<64x384xf32> to vector<64x384xbf16>
    %c0_48 = arith.constant 0 : index
    %c0_49 = arith.constant 0 : index
    %107 = vector.load %arg13[%c0_48, %c0_49] : memref<384x128xbf16, #tpu.memory_space<vmem>>, vector<384x128xbf16>
    %cst_50 = arith.constant dense<0.000000e+00> : vector<64x128xf32>
    %108 = tpu.matmul %106, %107, %cst_50 {dimension_numbers = #tpu.dot_dimension_numbers<[1], [0], [0], [1], [0, 0, 1, 1], [], []>} : vector<64x384xbf16>, vector<384x128xbf16>, vector<64x128xf32> -> vector<64x128xf32>
    %c0_51 = arith.constant 0 : index
    %c0_52 = arith.constant 0 : index
    %109 = vector.load %arg14[%c0_51, %c0_52] : memref<1x128xf32, #tpu.memory_space<vmem>>, vector<1x128xf32>
    %110 = vector.broadcast %109 : vector<1x128xf32> to vector<64x128xf32>
    %111 = arith.mulf %108, %110 : vector<64x128xf32>
    %c0_53 = arith.constant 0 : index
    %c0_54 = arith.constant 0 : index
    %112 = vector.load %arg15[%c0_53, %c0_54] : memref<1x128xf32, #tpu.memory_space<vmem>>, vector<1x128xf32>
    %113 = vector.broadcast %112 : vector<1x128xf32> to vector<64x128xf32>
    %114 = arith.addf %111, %113 : vector<64x128xf32>
    %115 = arith.addf %114, %72 : vector<64x128xf32>
    %cst_55 = arith.constant 0.000000e+00 : f32
    %116 = vector.broadcast %cst_55 : f32 to vector<64x128xf32>
    %117 = arith.maximumf %115, %116 : vector<64x128xf32>
    %c1_i32_56 = arith.constant 1 : i32
    %118 = tpu.dynamic_rotate %117 by %c1_i32_56 dim 0 : vector<64x128xf32>, i32 -> vector<64x128xf32>
    %cst_57 = arith.constant 0.000000e+00 : f32
    %119 = vector.shape_cast %19 : vector<64x1xi1> to vector<64x1xi1>
    %120 = vector.broadcast %119 : vector<64x1xi1> to vector<64x128xi1>
    %121 = vector.broadcast %cst_57 : f32 to vector<64x128xf32>
    %122 = arith.select %120, %118, %121 : vector<64x128xi1>, vector<64x128xf32>
    %c63_i32_58 = arith.constant 63 : i32
    %123 = tpu.dynamic_rotate %117 by %c63_i32_58 dim 0 : vector<64x128xf32>, i32 -> vector<64x128xf32>
    %cst_59 = arith.constant 0.000000e+00 : f32
    %124 = vector.shape_cast %21 : vector<64x1xi1> to vector<64x1xi1>
    %125 = vector.broadcast %124 : vector<64x1xi1> to vector<64x128xi1>
    %126 = vector.broadcast %cst_59 : f32 to vector<64x128xf32>
    %127 = arith.select %125, %123, %126 : vector<64x128xi1>, vector<64x128xf32>
    %128 = tpu.concatenate %122, %117, %127 in 1 : vector<64x128xf32>, vector<64x128xf32>, vector<64x128xf32> -> vector<64x384xf32>
    %129 = arith.truncf %128 : vector<64x384xf32> to vector<64x384xbf16>
    %c0_60 = arith.constant 0 : index
    %c0_61 = arith.constant 0 : index
    %130 = vector.load %arg16[%c0_60, %c0_61] : memref<384x128xbf16, #tpu.memory_space<vmem>>, vector<384x128xbf16>
    %cst_62 = arith.constant dense<0.000000e+00> : vector<64x128xf32>
    %131 = tpu.matmul %129, %130, %cst_62 {dimension_numbers = #tpu.dot_dimension_numbers<[1], [0], [0], [1], [0, 0, 1, 1], [], []>} : vector<64x384xbf16>, vector<384x128xbf16>, vector<64x128xf32> -> vector<64x128xf32>
    %c0_63 = arith.constant 0 : index
    %c0_64 = arith.constant 0 : index
    %132 = vector.load %arg17[%c0_63, %c0_64] : memref<1x128xf32, #tpu.memory_space<vmem>>, vector<1x128xf32>
    %133 = vector.broadcast %132 : vector<1x128xf32> to vector<64x128xf32>
    %134 = arith.mulf %131, %133 : vector<64x128xf32>
    %c0_65 = arith.constant 0 : index
    %c0_66 = arith.constant 0 : index
    %135 = vector.load %arg18[%c0_65, %c0_66] : memref<1x128xf32, #tpu.memory_space<vmem>>, vector<1x128xf32>
    %136 = vector.broadcast %135 : vector<1x128xf32> to vector<64x128xf32>
    %137 = arith.addf %134, %136 : vector<64x128xf32>
    %cst_67 = arith.constant 0.000000e+00 : f32
    %138 = vector.broadcast %cst_67 : f32 to vector<64x128xf32>
    %139 = arith.maximumf %137, %138 : vector<64x128xf32>
    %c1_i32_68 = arith.constant 1 : i32
    %140 = tpu.dynamic_rotate %139 by %c1_i32_68 dim 0 : vector<64x128xf32>, i32 -> vector<64x128xf32>
    %cst_69 = arith.constant 0.000000e+00 : f32
    %141 = vector.shape_cast %19 : vector<64x1xi1> to vector<64x1xi1>
    %142 = vector.broadcast %141 : vector<64x1xi1> to vector<64x128xi1>
    %143 = vector.broadcast %cst_69 : f32 to vector<64x128xf32>
    %144 = arith.select %142, %140, %143 : vector<64x128xi1>, vector<64x128xf32>
    %c63_i32_70 = arith.constant 63 : i32
    %145 = tpu.dynamic_rotate %139 by %c63_i32_70 dim 0 : vector<64x128xf32>, i32 -> vector<64x128xf32>
    %cst_71 = arith.constant 0.000000e+00 : f32
    %146 = vector.shape_cast %21 : vector<64x1xi1> to vector<64x1xi1>
    %147 = vector.broadcast %146 : vector<64x1xi1> to vector<64x128xi1>
    %148 = vector.broadcast %cst_71 : f32 to vector<64x128xf32>
    %149 = arith.select %147, %145, %148 : vector<64x128xi1>, vector<64x128xf32>
    %150 = tpu.concatenate %144, %139, %149 in 1 : vector<64x128xf32>, vector<64x128xf32>, vector<64x128xf32> -> vector<64x384xf32>
    %151 = arith.truncf %150 : vector<64x384xf32> to vector<64x384xbf16>
    %c0_72 = arith.constant 0 : index
    %c0_73 = arith.constant 0 : index
    %152 = vector.load %arg19[%c0_72, %c0_73] : memref<384x128xbf16, #tpu.memory_space<vmem>>, vector<384x128xbf16>
    %cst_74 = arith.constant dense<0.000000e+00> : vector<64x128xf32>
    %153 = tpu.matmul %151, %152, %cst_74 {dimension_numbers = #tpu.dot_dimension_numbers<[1], [0], [0], [1], [0, 0, 1, 1], [], []>} : vector<64x384xbf16>, vector<384x128xbf16>, vector<64x128xf32> -> vector<64x128xf32>
    %c0_75 = arith.constant 0 : index
    %c0_76 = arith.constant 0 : index
    %154 = vector.load %arg20[%c0_75, %c0_76] : memref<1x128xf32, #tpu.memory_space<vmem>>, vector<1x128xf32>
    %155 = vector.broadcast %154 : vector<1x128xf32> to vector<64x128xf32>
    %156 = arith.mulf %153, %155 : vector<64x128xf32>
    %c0_77 = arith.constant 0 : index
    %c0_78 = arith.constant 0 : index
    %157 = vector.load %arg21[%c0_77, %c0_78] : memref<1x128xf32, #tpu.memory_space<vmem>>, vector<1x128xf32>
    %158 = vector.broadcast %157 : vector<1x128xf32> to vector<64x128xf32>
    %159 = arith.addf %156, %158 : vector<64x128xf32>
    %160 = arith.addf %159, %117 : vector<64x128xf32>
    %cst_79 = arith.constant 0.000000e+00 : f32
    %161 = vector.broadcast %cst_79 : f32 to vector<64x128xf32>
    %162 = arith.maximumf %160, %161 : vector<64x128xf32>
    %c1_i32_80 = arith.constant 1 : i32
    %163 = tpu.dynamic_rotate %162 by %c1_i32_80 dim 0 : vector<64x128xf32>, i32 -> vector<64x128xf32>
    %cst_81 = arith.constant 0.000000e+00 : f32
    %164 = vector.shape_cast %19 : vector<64x1xi1> to vector<64x1xi1>
    %165 = vector.broadcast %164 : vector<64x1xi1> to vector<64x128xi1>
    %166 = vector.broadcast %cst_81 : f32 to vector<64x128xf32>
    %167 = arith.select %165, %163, %166 : vector<64x128xi1>, vector<64x128xf32>
    %c63_i32_82 = arith.constant 63 : i32
    %168 = tpu.dynamic_rotate %162 by %c63_i32_82 dim 0 : vector<64x128xf32>, i32 -> vector<64x128xf32>
    %cst_83 = arith.constant 0.000000e+00 : f32
    %169 = vector.shape_cast %21 : vector<64x1xi1> to vector<64x1xi1>
    %170 = vector.broadcast %169 : vector<64x1xi1> to vector<64x128xi1>
    %171 = vector.broadcast %cst_83 : f32 to vector<64x128xf32>
    %172 = arith.select %170, %168, %171 : vector<64x128xi1>, vector<64x128xf32>
    %173 = tpu.concatenate %167, %162, %172 in 1 : vector<64x128xf32>, vector<64x128xf32>, vector<64x128xf32> -> vector<64x384xf32>
    %174 = arith.truncf %173 : vector<64x384xf32> to vector<64x384xbf16>
    %c0_84 = arith.constant 0 : index
    %c0_85 = arith.constant 0 : index
    %175 = vector.load %arg22[%c0_84, %c0_85] : memref<384x1024xbf16, #tpu.memory_space<vmem>>, vector<384x1024xbf16>
    %cst_86 = arith.constant dense<0.000000e+00> : vector<64x1024xf32>
    %176 = tpu.matmul %174, %175, %cst_86 {dimension_numbers = #tpu.dot_dimension_numbers<[1], [0], [0], [1], [0, 0, 1, 1], [], []>} : vector<64x384xbf16>, vector<384x1024xbf16>, vector<64x1024xf32> -> vector<64x1024xf32>
    %c0_87 = arith.constant 0 : index
    %c0_88 = arith.constant 0 : index
    %177 = vector.load %arg23[%c0_87, %c0_88] : memref<1x1024xf32, #tpu.memory_space<vmem>>, vector<1x1024xf32>
    %178 = vector.broadcast %177 : vector<1x1024xf32> to vector<64x1024xf32>
    %179 = arith.addf %176, %178 : vector<64x1024xf32>
    %180 = arith.truncf %179 : vector<64x1024xf32> to vector<64x1024xbf16>
    %c0_89 = arith.constant 0 : index
    %c0_90 = arith.constant 0 : index
    %181 = vector.load %arg24[%c0_89, %c0_90] : memref<64x1024xbf16, #tpu.memory_space<vmem>>, vector<64x1024xbf16>
    tpu.vector_store %arg24[%c0_89, %c0_90], %180 {strides = array<i32>} : memref<64x1024xbf16, #tpu.memory_space<vmem>>, vector<64x1024xbf16>,
    return
  }
  func.func @transform_0(%arg0: i32) -> (i32, i32) {
    %c0_i32 = arith.constant 0 : i32
    %c0_i32_0 = arith.constant 0 : i32
    return %arg0, %c0_i32 : i32, i32
  }
  func.func @transform_1(%arg0: i32) -> (i32, i32) {
    %c0_i32 = arith.constant 0 : i32
    %c0_i32_0 = arith.constant 0 : i32
    %c0_i32_1 = arith.constant 0 : i32
    return %c0_i32, %c0_i32_0 : i32, i32
  }
  func.func @transform_2(%arg0: i32) -> (i32, i32) {
    %c0_i32 = arith.constant 0 : i32
    %c0_i32_0 = arith.constant 0 : i32
    %c0_i32_1 = arith.constant 0 : i32
    return %c0_i32, %c0_i32_0 : i32, i32
  }
  func.func @transform_3(%arg0: i32) -> (i32, i32) {
    %c0_i32 = arith.constant 0 : i32
    %c0_i32_0 = arith.constant 0 : i32
    %c0_i32_1 = arith.constant 0 : i32
    return %c0_i32, %c0_i32_0 : i32, i32
  }
  func.func @transform_4(%arg0: i32) -> (i32, i32) {
    %c0_i32 = arith.constant 0 : i32
    %c0_i32_0 = arith.constant 0 : i32
    %c0_i32_1 = arith.constant 0 : i32
    return %c0_i32, %c0_i32_0 : i32, i32
  }
  func.func @transform_5(%arg0: i32) -> (i32, i32) {
    %c0_i32 = arith.constant 0 : i32
    %c0_i32_0 = arith.constant 0 : i32
    %c0_i32_1 = arith.constant 0 : i32
    return %c0_i32, %c0_i32_0 : i32, i32
  }
  func.func @transform_6(%arg0: i32) -> (i32, i32) {
    %c0_i32 = arith.constant 0 : i32
    %c0_i32_0 = arith.constant 0 : i32
    %c0_i32_1 = arith.constant 0 : i32
    return %c0_i32, %c0_i32_0 : i32, i32
  }
  func.func @transform_7(%arg0: i32) -> (i32, i32) {
    %c0_i32 = arith.constant 0 : i32
    %c0_i32_0 = arith.constant 0 : i32
    %c0_i32_1 = arith.constant 0 : i32
    return %c0_i32, %c0_i32_0 : i32, i32
  }
  func.func @transform_8(%arg0: i32) -> (i32, i32) {
    %c0_i32 = arith.constant 0 : i32
    %c0_i32_0 = arith.constant 0 : i32
    %c0_i32_1 = arith.constant 0 : i32
    return %c0_i32, %c0_i32_0 : i32, i32
  }
  func.func @transform_9(%arg0: i32) -> (i32, i32) {
    %c0_i32 = arith.constant 0 : i32
    %c0_i32_0 = arith.constant 0 : i32
    %c0_i32_1 = arith.constant 0 : i32
    return %c0_i32, %c0_i32_0 : i32, i32
  }
  func.func @transform_10(%arg0: i32) -> (i32, i32) {
    %c0_i32 = arith.constant 0 : i32
    %c0_i32_0 = arith.constant 0 : i32
    %c0_i32_1 = arith.constant 0 : i32
    return %c0_i32, %c0_i32_0 : i32, i32
  }
  func.func @transform_11(%arg0: i32) -> (i32, i32) {
    %c0_i32 = arith.constant 0 : i32
    %c0_i32_0 = arith.constant 0 : i32
    %c0_i32_1 = arith.constant 0 : i32
    return %c0_i32, %c0_i32_0 : i32, i32
  }
  func.func @transform_12(%arg0: i32) -> (i32, i32) {
    %c0_i32 = arith.constant 0 : i32
    %c0_i32_0 = arith.constant 0 : i32
    %c0_i32_1 = arith.constant 0 : i32
    return %c0_i32, %c0_i32_0 : i32, i32
  }
  func.func @transform_13(%arg0: i32) -> (i32, i32) {
    %c0_i32 = arith.constant 0 : i32
    %c0_i32_0 = arith.constant 0 : i32
    %c0_i32_1 = arith.constant 0 : i32
    return %c0_i32, %c0_i32_0 : i32, i32
  }
  func.func @transform_14(%arg0: i32) -> (i32, i32) {
    %c0_i32 = arith.constant 0 : i32
    %c0_i32_0 = arith.constant 0 : i32
    %c0_i32_1 = arith.constant 0 : i32
    return %c0_i32, %c0_i32_0 : i32, i32
  }
  func.func @transform_15(%arg0: i32) -> (i32, i32) {
    %c0_i32 = arith.constant 0 : i32
    %c0_i32_0 = arith.constant 0 : i32
    %c0_i32_1 = arith.constant 0 : i32
    return %c0_i32, %c0_i32_0 : i32, i32
  }
  func.func @transform_16(%arg0: i32) -> (i32, i32) {
    %c0_i32 = arith.constant 0 : i32
    %c0_i32_0 = arith.constant 0 : i32
    %c0_i32_1 = arith.constant 0 : i32
    return %c0_i32, %c0_i32_0 : i32, i32
  }
  func.func @transform_17(%arg0: i32) -> (i32, i32) {
    %c0_i32 = arith.constant 0 : i32
    %c0_i32_0 = arith.constant 0 : i32
    %c0_i32_1 = arith.constant 0 : i32
    return %c0_i32, %c0_i32_0 : i32, i32
  }
  func.func @transform_18(%arg0: i32) -> (i32, i32) {
    %c0_i32 = arith.constant 0 : i32
    %c0_i32_0 = arith.constant 0 : i32
    %c0_i32_1 = arith.constant 0 : i32
    return %c0_i32, %c0_i32_0 : i32, i32
  }
  func.func @transform_19(%arg0: i32) -> (i32, i32) {
    %c0_i32 = arith.constant 0 : i32
    %c0_i32_0 = arith.constant 0 : i32
    %c0_i32_1 = arith.constant 0 : i32
    return %c0_i32, %c0_i32_0 : i32, i32
  }
  func.func @transform_20(%arg0: i32) -> (i32, i32) {
    %c0_i32 = arith.constant 0 : i32
    %c0_i32_0 = arith.constant 0 : i32
    %c0_i32_1 = arith.constant 0 : i32
    return %c0_i32, %c0_i32_0 : i32, i32
  }
  func.func @transform_21(%arg0: i32) -> (i32, i32) {
    %c0_i32 = arith.constant 0 : i32
    %c0_i32_0 = arith.constant 0 : i32
    %c0_i32_1 = arith.constant 0 : i32
    return %c0_i32, %c0_i32_0 : i32, i32
  }
  func.func @transform_22(%arg0: i32) -> (i32, i32) {
    %c0_i32 = arith.constant 0 : i32
    %c0_i32_0 = arith.constant 0 : i32
    %c0_i32_1 = arith.constant 0 : i32
    return %c0_i32, %c0_i32_0 : i32, i32
  }
  func.func @transform_23(%arg0: i32) -> (i32, i32) {
    %c0_i32 = arith.constant 0 : i32
    %c0_i32_0 = arith.constant 0 : i32
    return %arg0, %c0_i32 : i32, i32
  }
}

module attributes {stable_mosaic.version = 11 : i64} {
  func.func @_lstm_scan_kernel(%arg0: i32, %arg1: i32, %arg2: memref<1x32x512xbf16, #tpu.memory_space<vmem>>, %arg3: memref<1x384x512xbf16, #tpu.memory_space<vmem>>, %arg4: memref<1x1x32x128xf32, #tpu.memory_space<vmem>>, %arg5: memref<1x32x128xf32, #tpu.memory_space<vmem>>, %arg6: memref<32x128xf32, #tpu.memory_space<vmem>>, %arg7: memref<32x128xf32, #tpu.memory_space<vmem>>) attributes {dimension_semantics = [#tpu.dimension_semantics<parallel>, #tpu.dimension_semantics<arbitrary>], iteration_bounds = array<i64: 2, 4>, scalar_prefetch = 0 : i64, scratch_operands = 2 : i64, tpu.core_type = #tpu.core_type<tc>, window_params = [{transform_indices = @transform_0, window_bounds = array<i64: 1, 32, 512>}, {transform_indices = @transform_1, window_bounds = array<i64: 1, 384, 512>}, {transform_indices = @transform_2, window_bounds = array<i64: 1, 1, 32, 128>}, {transform_indices = @transform_3, window_bounds = array<i64: 1, 32, 128>}]} {
    %c0_i32 = arith.constant 0 : i32
    %0 = arith.cmpi eq, %arg1, %c0_i32 : i32
    %1 = arith.extui %0 : i1 to i32
    %c0_i32_0 = arith.constant 0 : i32
    %2 = arith.cmpi ne, %1, %c0_i32_0 : i32
    scf.if %2 {
      %cst_32 = arith.constant 0.000000e+00 : f32
      %78 = vector.broadcast %cst_32 : f32 to vector<32x128xf32>
      %c0_33 = arith.constant 0 : index
      %c0_34 = arith.constant 0 : index
      %79 = vector.load %arg6[%c0_33, %c0_34] : memref<32x128xf32, #tpu.memory_space<vmem>>, vector<32x128xf32>
      tpu.vector_store %arg6[%c0_33, %c0_34], %78 {strides = array<i32>} : memref<32x128xf32, #tpu.memory_space<vmem>>, vector<32x128xf32>,
      %cst_35 = arith.constant 0.000000e+00 : f32
      %80 = vector.broadcast %cst_35 : f32 to vector<32x128xf32>
      %c0_36 = arith.constant 0 : index
      %c0_37 = arith.constant 0 : index
      %81 = vector.load %arg7[%c0_36, %c0_37] : memref<32x128xf32, #tpu.memory_space<vmem>>, vector<32x128xf32>
      tpu.vector_store %arg7[%c0_36, %c0_37], %80 {strides = array<i32>} : memref<32x128xf32, #tpu.memory_space<vmem>>, vector<32x128xf32>,
    } else {
    }
    %c0 = arith.constant 0 : index
    %c0_1 = arith.constant 0 : index
    %3 = vector.load %arg6[%c0, %c0_1] : memref<32x128xf32, #tpu.memory_space<vmem>>, vector<32x128xf32>
    %4 = tpu.iota {dimensions = array<i32: 0>} : vector<32x1xi32>
    %c16_i32 = arith.constant 16 : i32
    %c0_i32_2 = arith.constant 0 : i32
    %5 = arith.cmpi eq, %c16_i32, %c0_i32_2 : i32
    %c1_i32 = arith.constant 1 : i32
    %6 = arith.select %5, %c1_i32, %c16_i32 : i32
    %7 = vector.broadcast %6 : i32 to vector<32x1xi32>
    %8 = arith.remsi %4, %7 : vector<32x1xi32>
    %c0_i32_3 = arith.constant 0 : i32
    %9 = vector.broadcast %c0_i32_3 : i32 to vector<32x1xi32>
    %10 = arith.cmpi ne, %8, %9 : vector<32x1xi32>
    %c0_i32_4 = arith.constant 0 : i32
    %11 = vector.broadcast %c0_i32_4 : i32 to vector<32x1xi32>
    %12 = arith.cmpi slt, %8, %11 : vector<32x1xi32>
    %c0_i32_5 = arith.constant 0 : i32
    %13 = arith.cmpi slt, %6, %c0_i32_5 : i32
    %14 = vector.broadcast %13 : i1 to vector<32x1xi1>
    %15 = vector.broadcast %14 : vector<32x1xi1> to vector<32x1xi1>
    %16 = arith.xori %12, %15 : vector<32x1xi1>
    %17 = arith.andi %16, %10 : vector<32x1xi1>
    %18 = vector.broadcast %6 : i32 to vector<32x1xi32>
    %19 = arith.addi %8, %18 : vector<32x1xi32>
    %20 = arith.select %17, %19, %8 : vector<32x1xi1>, vector<32x1xi32>
    %c1_i32_6 = arith.constant 1 : i32
    %21 = vector.broadcast %c1_i32_6 : i32 to vector<32x1xi32>
    %22 = arith.cmpi sge, %20, %21 : vector<32x1xi32>
    %c1_i32_7 = arith.constant 1 : i32
    %23 = tpu.dynamic_rotate %3 by %c1_i32_7 dim 0 : vector<32x128xf32>, i32 -> vector<32x128xf32>
    %cst = arith.constant 0.000000e+00 : f32
    %24 = vector.shape_cast %22 : vector<32x1xi1> to vector<32x1xi1>
    %25 = vector.broadcast %24 : vector<32x1xi1> to vector<32x128xi1>
    %26 = vector.broadcast %cst : f32 to vector<32x128xf32>
    %27 = arith.select %25, %23, %26 : vector<32x128xi1>, vector<32x128xf32>
    %c14_i32 = arith.constant 14 : i32
    %28 = vector.broadcast %c14_i32 : i32 to vector<32x1xi32>
    %29 = arith.cmpi sle, %20, %28 : vector<32x1xi32>
    %c31_i32 = arith.constant 31 : i32
    %30 = tpu.dynamic_rotate %3 by %c31_i32 dim 0 : vector<32x128xf32>, i32 -> vector<32x128xf32>
    %cst_8 = arith.constant 0.000000e+00 : f32
    %31 = vector.shape_cast %29 : vector<32x1xi1> to vector<32x1xi1>
    %32 = vector.broadcast %31 : vector<32x1xi1> to vector<32x128xi1>
    %33 = vector.broadcast %cst_8 : f32 to vector<32x128xf32>
    %34 = arith.select %32, %30, %33 : vector<32x128xi1>, vector<32x128xf32>
    %35 = tpu.concatenate %27, %3, %34 in 1 : vector<32x128xf32>, vector<32x128xf32>, vector<32x128xf32> -> vector<32x384xf32>
    %36 = arith.truncf %35 : vector<32x384xf32> to vector<32x384xbf16>
    %c0_9 = arith.constant 0 : index
    %c0_10 = arith.constant 0 : index
    %c0_11 = arith.constant 0 : index
    %37 = vector.load %arg2[%c0_9, %c0_10, %c0_11] : memref<1x32x512xbf16, #tpu.memory_space<vmem>>, vector<1x32x512xbf16>
    %38 = vector.shape_cast %37 : vector<1x32x512xbf16> to vector<32x512xbf16>
    %39 = arith.extf %38 : vector<32x512xbf16> to vector<32x512xf32>
    %c0_12 = arith.constant 0 : index
    %c0_13 = arith.constant 0 : index
    %c0_14 = arith.constant 0 : index
    %40 = vector.load %arg3[%c0_12, %c0_13, %c0_14] : memref<1x384x512xbf16, #tpu.memory_space<vmem>>, vector<1x384x512xbf16>
    %41 = vector.shape_cast %40 : vector<1x384x512xbf16> to vector<384x512xbf16>
    %cst_15 = arith.constant dense<0.000000e+00> : vector<32x512xf32>
    %42 = tpu.matmul %36, %41, %cst_15 {dimension_numbers = #tpu.dot_dimension_numbers<[1], [0], [0], [1], [0, 0, 1, 1], [], []>} : vector<32x384xbf16>, vector<384x512xbf16>, vector<32x512xf32> -> vector<32x512xf32>
    %43 = arith.addf %39, %42 : vector<32x512xf32>
    %44 = vector.extract_strided_slice %43 {offsets = [0, 0], sizes = [32, 128], strides = [1, 1]} : vector<32x512xf32> to vector<32x128xf32>
    %45 = arith.negf %44 : vector<32x128xf32>
    %46 = math.exp %45 : vector<32x128xf32>
    %cst_16 = arith.constant 1.000000e+00 : f32
    %47 = vector.broadcast %cst_16 : f32 to vector<32x128xf32>
    %48 = arith.addf %47, %46 : vector<32x128xf32>
    %49 = arith.divf %47, %48 : vector<32x128xf32>
    %50 = vector.extract_strided_slice %43 {offsets = [0, 128], sizes = [32, 128], strides = [1, 1]} : vector<32x512xf32> to vector<32x128xf32>
    %51 = arith.negf %50 : vector<32x128xf32>
    %52 = math.exp %51 : vector<32x128xf32>
    %cst_17 = arith.constant 1.000000e+00 : f32
    %53 = vector.broadcast %cst_17 : f32 to vector<32x128xf32>
    %54 = arith.addf %53, %52 : vector<32x128xf32>
    %55 = arith.divf %53, %54 : vector<32x128xf32>
    %56 = vector.extract_strided_slice %43 {offsets = [0, 256], sizes = [32, 128], strides = [1, 1]} : vector<32x512xf32> to vector<32x128xf32>
    %57 = math.tanh %56 : vector<32x128xf32>
    %58 = vector.extract_strided_slice %43 {offsets = [0, 384], sizes = [32, 128], strides = [1, 1]} : vector<32x512xf32> to vector<32x128xf32>
    %59 = arith.negf %58 : vector<32x128xf32>
    %60 = math.exp %59 : vector<32x128xf32>
    %cst_18 = arith.constant 1.000000e+00 : f32
    %61 = vector.broadcast %cst_18 : f32 to vector<32x128xf32>
    %62 = arith.addf %61, %60 : vector<32x128xf32>
    %63 = arith.divf %61, %62 : vector<32x128xf32>
    %c0_19 = arith.constant 0 : index
    %c0_20 = arith.constant 0 : index
    %64 = vector.load %arg7[%c0_19, %c0_20] : memref<32x128xf32, #tpu.memory_space<vmem>>, vector<32x128xf32>
    %65 = arith.mulf %55, %64 : vector<32x128xf32>
    %66 = arith.mulf %49, %57 : vector<32x128xf32>
    %67 = arith.addf %65, %66 : vector<32x128xf32>
    %68 = math.tanh %67 : vector<32x128xf32>
    %69 = arith.mulf %63, %68 : vector<32x128xf32>
    %c0_21 = arith.constant 0 : index
    %c0_22 = arith.constant 0 : index
    %70 = vector.load %arg6[%c0_21, %c0_22] : memref<32x128xf32, #tpu.memory_space<vmem>>, vector<32x128xf32>
    tpu.vector_store %arg6[%c0_21, %c0_22], %69 {strides = array<i32>} : memref<32x128xf32, #tpu.memory_space<vmem>>, vector<32x128xf32>,
    %c0_23 = arith.constant 0 : index
    %c0_24 = arith.constant 0 : index
    %71 = vector.load %arg7[%c0_23, %c0_24] : memref<32x128xf32, #tpu.memory_space<vmem>>, vector<32x128xf32>
    tpu.vector_store %arg7[%c0_23, %c0_24], %67 {strides = array<i32>} : memref<32x128xf32, #tpu.memory_space<vmem>>, vector<32x128xf32>,
    %c0_25 = arith.constant 0 : index
    %c0_26 = arith.constant 0 : index
    %c0_27 = arith.constant 0 : index
    %c0_28 = arith.constant 0 : index
    %72 = vector.load %arg4[%c0_25, %c0_26, %c0_27, %c0_28] : memref<1x1x32x128xf32, #tpu.memory_space<vmem>>, vector<1x1x32x128xf32>
    %73 = vector.shape_cast %72 : vector<1x1x32x128xf32> to vector<32x128xf32>
    %74 = vector.shape_cast %69 : vector<32x128xf32> to vector<1x1x32x128xf32>
    tpu.vector_store %arg4[%c0_25, %c0_26, %c0_27, %c0_28], %74 {strides = array<i32>} : memref<1x1x32x128xf32, #tpu.memory_space<vmem>>, vector<1x1x32x128xf32>,
    %c0_29 = arith.constant 0 : index
    %c0_30 = arith.constant 0 : index
    %c0_31 = arith.constant 0 : index
    %75 = vector.load %arg5[%c0_29, %c0_30, %c0_31] : memref<1x32x128xf32, #tpu.memory_space<vmem>>, vector<1x32x128xf32>
    %76 = vector.shape_cast %75 : vector<1x32x128xf32> to vector<32x128xf32>
    %77 = vector.shape_cast %67 : vector<32x128xf32> to vector<1x32x128xf32>
    tpu.vector_store %arg5[%c0_29, %c0_30, %c0_31], %77 {strides = array<i32>} : memref<1x32x128xf32, #tpu.memory_space<vmem>>, vector<1x32x128xf32>,
    return
  }
  func.func @transform_0(%arg0: i32, %arg1: i32) -> (i32, i32, i32) {
    %c2_i32 = arith.constant 2 : i32
    %0 = arith.muli %c2_i32, %arg1 : i32
    %c3_i32 = arith.constant 3 : i32
    %1 = arith.subi %c3_i32, %0 : i32
    %2 = arith.muli %arg0, %1 : i32
    %3 = arith.addi %arg1, %2 : i32
    %c0_i32 = arith.constant 0 : i32
    %c0_i32_0 = arith.constant 0 : i32
    return %3, %c0_i32, %arg0 : i32, i32, i32
  }
  func.func @transform_1(%arg0: i32, %arg1: i32) -> (i32, i32, i32) {
    %c0_i32 = arith.constant 0 : i32
    %c0_i32_0 = arith.constant 0 : i32
    %c0_i32_1 = arith.constant 0 : i32
    return %arg0, %c0_i32, %c0_i32_0 : i32, i32, i32
  }
  func.func @transform_2(%arg0: i32, %arg1: i32) -> (i32, i32, i32, i32) {
    %c2_i32 = arith.constant 2 : i32
    %0 = arith.muli %c2_i32, %arg1 : i32
    %c3_i32 = arith.constant 3 : i32
    %1 = arith.subi %c3_i32, %0 : i32
    %2 = arith.muli %arg0, %1 : i32
    %3 = arith.addi %arg1, %2 : i32
    %c0_i32 = arith.constant 0 : i32
    %c0_i32_0 = arith.constant 0 : i32
    %c0_i32_1 = arith.constant 0 : i32
    return %arg0, %3, %c0_i32, %c0_i32_0 : i32, i32, i32, i32
  }
  func.func @transform_3(%arg0: i32, %arg1: i32) -> (i32, i32, i32) {
    %c0_i32 = arith.constant 0 : i32
    %c0_i32_0 = arith.constant 0 : i32
    %c0_i32_1 = arith.constant 0 : i32
    return %arg0, %c0_i32, %c0_i32_0 : i32, i32, i32
  }
}

</mosaic_0001>

<llo_original>
// kernel: squeeze.10
$region0: #{squeeze.10}
  %s0 = inlined_call_operand.vmem [shape: f32[1,1,32,128], index: 0, kind: input, shape index: {}]
  %s1 = inlined_call_operand.vmem [shape: f32[2,16,16,8], index: 1, kind: output, shape index: {}]
  $region1: #{squeeze.10} parent=0
    #allocation0 [shape = 'u8[524288]{0}', space=vmem, size = 0x80000, scoped, tag = 'scoped mem for output reshape']
    %v2 = vld [vmem:[%s0] sm:$0xff]
    %vm3 = vcmask 130048
    %4 = vst.msk [vmem:[#allocation0] ss:$8 sm:$0xf] %vm3, %v2
    %5 = vst.msk [vmem:[#allocation0] ss:$8 sm:$0xf0] %vm3, %v2
    %s6 = scalar_lea.vmem %s0, 8
    %v7 = vld [vmem:[%s6] sm:$0xff]
    %vm8 = vcmask 130048
    %s9 = scalar_lea.vmem [#allocation0], 64
    %10 = vst.msk [vmem:[%s9] ss:$8 sm:$0xf] %vm8, %v7
    %s11 = scalar_lea.vmem [#allocation0], 64
    %12 = vst.msk [vmem:[%s11] ss:$8 sm:$0xf0] %vm8, %v7
    %s13 = scalar_lea.vmem %s0, 16
    %v14 = vld [vmem:[%s13] sm:$0xff]
    %vm15 = vcmask 130048
    %s16 = scalar_lea.vmem [#allocation0], 128
    %17 = vst.msk [vmem:[%s16] ss:$8 sm:$0xf] %vm15, %v14
    %s18 = scalar_lea.vmem [#allocation0], 128
    %19 = vst.msk [vmem:[%s18] ss:$8 sm:$0xf0] %vm15, %v14
    %s20 = scalar_lea.vmem %s0, 24
    %v21 = vld [vmem:[%s20] sm:$0xff]
    %vm22 = vcmask 130048
    %s23 = scalar_lea.vmem [#allocation0], 192
    %24 = vst.msk [vmem:[%s23] ss:$8 sm:$0xf] %vm22, %v21
    %s25 = scalar_lea.vmem [#allocation0], 192
    %26 = vst.msk [vmem:[%s25] ss:$8 sm:$0xf0] %vm22, %v21
    %s27 = scalar_lea.vmem %s0, 32
    %v28 = vld [vmem:[%s27] sm:$0xff]
    %vm29 = vcmask 130048
    %s30 = scalar_lea.vmem [#allocation0], 256
    %31 = vst.msk [vmem:[%s30] ss:$8 sm:$0xf] %vm29, %v28
    %s32 = scalar_lea.vmem [#allocation0], 256
    %33 = vst.msk [vmem:[%s32] ss:$8 sm:$0xf0] %vm29, %v28
    %s34 = scalar_lea.vmem %s0, 40
    %v35 = vld [vmem:[%s34] sm:$0xff]
    %vm36 = vcmask 130048
    %s37 = scalar_lea.vmem [#allocation0], 320
    %38 = vst.msk [vmem:[%s37] ss:$8 sm:$0xf] %vm36, %v35
    %s39 = scalar_lea.vmem [#allocation0], 320
    %40 = vst.msk [vmem:[%s39] ss:$8 sm:$0xf0] %vm36, %v35
    %s41 = scalar_lea.vmem %s0, 48
    %v42 = vld [vmem:[%s41] sm:$0xff]
    %vm43 = vcmask 130048
    %s44 = scalar_lea.vmem [#allocation0], 384
    %45 = vst.msk [vmem:[%s44] ss:$8 sm:$0xf] %vm43, %v42
    %s46 = scalar_lea.vmem [#allocation0], 384
    %47 = vst.msk [vmem:[%s46] ss:$8 sm:$0xf0] %vm43, %v42
    %s48 = scalar_lea.vmem %s0, 56
    %v49 = vld [vmem:[%s48] sm:$0xff]
    %vm50 = vcmask 130048
    %s51 = scalar_lea.vmem [#allocation0], 448
    %52 = vst.msk [vmem:[%s51] ss:$8 sm:$0xf] %vm50, %v49
    %s53 = scalar_lea.vmem [#allocation0], 448
    %54 = vst.msk [vmem:[%s53] ss:$8 sm:$0xf0] %vm50, %v49
    %s55 = scalar_lea.vmem %s0, 64
    %v56 = vld [vmem:[%s55] sm:$0xff]
    %vm57 = vcmask 130048
    %s58 = scalar_lea.vmem [#allocation0], 512
    %59 = vst.msk [vmem:[%s58] ss:$8 sm:$0xf] %vm57, %v56
    %s60 = scalar_lea.vmem [#allocation0], 512
    %61 = vst.msk [vmem:[%s60] ss:$8 sm:$0xf0] %vm57, %v56
    %s62 = scalar_lea.vmem %s0, 72
    %v63 = vld [vmem:[%s62] sm:$0xff]
    %vm64 = vcmask 130048
    %s65 = scalar_lea.vmem [#allocation0], 576
    %66 = vst.msk [vmem:[%s65] ss:$8 sm:$0xf] %vm64, %v63
    %s67 = scalar_lea.vmem [#allocation0], 576
    %68 = vst.msk [vmem:[%s67] ss:$8 sm:$0xf0] %vm64, %v63
    %s69 = scalar_lea.vmem %s0, 80
    %v70 = vld [vmem:[%s69] sm:$0xff]
    %vm71 = vcmask 130048
    %s72 = scalar_lea.vmem [#allocation0], 640
    %73 = vst.msk [vmem:[%s72] ss:$8 sm:$0xf] %vm71, %v70
    %s74 = scalar_lea.vmem [#allocation0], 640
    %75 = vst.msk [vmem:[%s74] ss:$8 sm:$0xf0] %vm71, %v70
    %s76 = scalar_lea.vmem %s0, 88
    %v77 = vld [vmem:[%s76] sm:$0xff]
    %vm78 = vcmask 130048
    %s79 = scalar_lea.vmem [#allocation0], 704
    %80 = vst.msk [vmem:[%s79] ss:$8 sm:$0xf] %vm78, %v77
    %s81 = scalar_lea.vmem [#allocation0], 704
    %82 = vst.msk [vmem:[%s81] ss:$8 sm:$0xf0] %vm78, %v77
    %s83 = scalar_lea.vmem %s0, 96
    %v84 = vld [vmem:[%s83] sm:$0xff]
    %vm85 = vcmask 130048
    %s86 = scalar_lea.vmem [#allocation0], 768
    %87 = vst.msk [vmem:[%s86] ss:$8 sm:$0xf] %vm85, %v84
    %s88 = scalar_lea.vmem [#allocation0], 768
    %89 = vst.msk [vmem:[%s88] ss:$8 sm:$0xf0] %vm85, %v84
    %s90 = scalar_lea.vmem %s0, 104
    %v91 = vld [vmem:[%s90] sm:$0xff]
    %vm92 = vcmask 130048
    %s93 = scalar_lea.vmem [#allocation0], 832
    %94 = vst.msk [vmem:[%s93] ss:$8 sm:$0xf] %vm92, %v91
    %s95 = scalar_lea.vmem [#allocation0], 832
    %96 = vst.msk [vmem:[%s95] ss:$8 sm:$0xf0] %vm92, %v91
    %s97 = scalar_lea.vmem %s0, 112
    %v98 = vld [vmem:[%s97] sm:$0xff]
    %vm99 = vcmask 130048
    %s100 = scalar_lea.vmem [#allocation0], 896
    %101 = vst.msk [vmem:[%s100] ss:$8 sm:$0xf] %vm99, %v98
    %s102 = scalar_lea.vmem [#allocation0], 896
    %103 = vst.msk [vmem:[%s102] ss:$8 sm:$0xf0] %vm99, %v98
    %s104 = scalar_lea.vmem %s0, 120
    %v105 = vld [vmem:[%s104] sm:$0xff]
    %vm106 = vcmask 130048
    %s107 = scalar_lea.vmem [#allocation0], 960
    %108 = vst.msk [vmem:[%s107] ss:$8 sm:$0xf] %vm106, %v105
    %s109 = scalar_lea.vmem [#allocation0], 960
    %110 = vst.msk [vmem:[%s109] ss:$8 sm:$0xf0] %vm106, %v105
    %v111 = vld [vmem:[%s0] sm:$0xff]
    %112 = vrot.lane.b32.xlu0 %v111, 112
    %v113 = vpop.permute.xlu0 %112
    %vm114 = vcmask 130048
    %s115 = scalar_lea.vmem [#allocation0], 1
    %116 = vst.msk [vmem:[%s115] ss:$8 sm:$0xf] %vm114, %v113
    %s117 = scalar_lea.vmem [#allocation0], 1
    %118 = vst.msk [vmem:[%s117] ss:$8 sm:$0xf0] %vm114, %v113
    %s119 = scalar_lea.vmem %s0, 8
    %v120 = vld [vmem:[%s119] sm:$0xff]
    %121 = vrot.lane.b32.xlu0 %v120, 112
    %v122 = vpop.permute.xlu0 %121
    %vm123 = vcmask 130048
    %s124 = scalar_lea.vmem [#allocation0], 65
    %125 = vst.msk [vmem:[%s124] ss:$8 sm:$0xf] %vm123, %v122
    %s126 = scalar_lea.vmem [#allocation0], 65
    %127 = vst.msk [vmem:[%s126] ss:$8 sm:$0xf0] %vm123, %v122
    %s128 = scalar_lea.vmem %s0, 16
    %v129 = vld [vmem:[%s128] sm:$0xff]
    %130 = vrot.lane.b32.xlu0 %v129, 112
    %v131 = vpop.permute.xlu0 %130
    %vm132 = vcmask 130048
    %s133 = scalar_lea.vmem [#allocation0], 129
    %134 = vst.msk [vmem:[%s133] ss:$8 sm:$0xf] %vm132, %v131
    %s135 = scalar_lea.vmem [#allocation0], 129
    %136 = vst.msk [vmem:[%s135] ss:$8 sm:$0xf0] %vm132, %v131
    %s137 = scalar_lea.vmem %s0, 24
    %v138 = vld [vmem:[%s137] sm:$0xff]
    %139 = vrot.lane.b32.xlu0 %v138, 112
    %v140 = vpop.permute.xlu0 %139
    %vm141 = vcmask 130048
    %s142 = scalar_lea.vmem [#allocation0], 193
    %143 = vst.msk [vmem:[%s142] ss:$8 sm:$0xf] %vm141, %v140
    %s144 = scalar_lea.vmem [#allocation0], 193
    %145 = vst.msk [vmem:[%s144] ss:$8 sm:$0xf0] %vm141, %v140
    %s146 = scalar_lea.vmem %s0, 32
    %v147 = vld [vmem:[%s146] sm:$0xff]
    %148 = vrot.lane.b32.xlu0 %v147, 112
    %v149 = vpop.permute.xlu0 %148
    %vm150 = vcmask 130048
    %s151 = scalar_lea.vmem [#allocation0], 257
    %152 = vst.msk [vmem:[%s151] ss:$8 sm:$0xf] %vm150, %v149
    %s153 = scalar_lea.vmem [#allocation0], 257
    %154 = vst.msk [vmem:[%s153] ss:$8 sm:$0xf0] %vm150, %v149
    %s155 = scalar_lea.vmem %s0, 40
    %v156 = vld [vmem:[%s155] sm:$0xff]
    %157 = vrot.lane.b32.xlu0 %v156, 112
    %v158 = vpop.permute.xlu0 %157
    %vm159 = vcmask 130048
    %s160 = scalar_lea.vmem [#allocation0], 321
    %161 = vst.msk [vmem:[%s160] ss:$8 sm:$0xf] %vm159, %v158
    %s162 = scalar_lea.vmem [#allocation0], 321
    %163 = vst.msk [vmem:[%s162] ss:$8 sm:$0xf0] %vm159, %v158
    %s164 = scalar_lea.vmem %s0, 48
    %v165 = vld [vmem:[%s164] sm:$0xff]
    %166 = vrot.lane.b32.xlu0 %v165, 112
    %v167 = vpop.permute.xlu0 %166
    %vm168 = vcmask 130048
    %s169 = scalar_lea.vmem [#allocation0], 385
    %170 = vst.msk [vmem:[%s169] ss:$8 sm:$0xf] %vm168, %v167
    %s171 = scalar_lea.vmem [#allocation0], 385
    %172 = vst.msk [vmem:[%s171] ss:$8 sm:$0xf0] %vm168, %v167
    %s173 = scalar_lea.vmem %s0, 56
    %v174 = vld [vmem:[%s173] sm:$0xff]
    %175 = vrot.lane.b32.xlu0 %v174, 112
    %v176 = vpop.permute.xlu0 %175
    %vm177 = vcmask 130048
    %s178 = scalar_lea.vmem [#allocation0], 449
    %179 = vst.msk [vmem:[%s178] ss:$8 sm:$0xf] %vm177, %v176
    %s180 = scalar_lea.vmem [#allocation0], 449
    %181 = vst.msk [vmem:[%s180] ss:$8 sm:$0xf0] %vm177, %v176
    %s182 = scalar_lea.vmem %s0, 64
    %v183 = vld [vmem:[%s182] sm:$0xff]
    %184 = vrot.lane.b32.xlu0 %v183, 112
    %v185 = vpop.permute.xlu0 %184
    %vm186 = vcmask 130048
    %s187 = scalar_lea.vmem [#allocation0], 513
    %188 = vst.msk [vmem:[%s187] ss:$8 sm:$0xf] %vm186, %v185
    %s189 = scalar_lea.vmem [#allocation0], 513
    %190 = vst.msk [vmem:[%s189] ss:$8 sm:$0xf0] %vm186, %v185
    %s191 = scalar_lea.vmem %s0, 72
    %v192 = vld [vmem:[%s191] sm:$0xff]
    %193 = vrot.lane.b32.xlu0 %v192, 112
    %v194 = vpop.permute.xlu0 %193
    %vm195 = vcmask 130048
    %s196 = scalar_lea.vmem [#allocation0], 577
    %197 = vst.msk [vmem:[%s196] ss:$8 sm:$0xf] %vm195, %v194
    %s198 = scalar_lea.vmem [#allocation0], 577
    %199 = vst.msk [vmem:[%s198] ss:$8 sm:$0xf0] %vm195, %v194
    %s200 = scalar_lea.vmem %s0, 80
    %v201 = vld [vmem:[%s200] sm:$0xff]
    %202 = vrot.lane.b32.xlu0 %v201, 112
    %v203 = vpop.permute.xlu0 %202
    %vm204 = vcmask 130048
    %s205 = scalar_lea.vmem [#allocation0], 641
    %206 = vst.msk [vmem:[%s205] ss:$8 sm:$0xf] %vm204, %v203
    %s207 = scalar_lea.vmem [#allocation0], 641
    %208 = vst.msk [vmem:[%s207] ss:$8 sm:$0xf0] %vm204, %v203
    %s209 = scalar_lea.vmem %s0, 88
    %v210 = vld [vmem:[%s209] sm:$0xff]
    %211 = vrot.lane.b32.xlu0 %v210, 112
    %v212 = vpop.permute.xlu0 %211
    %vm213 = vcmask 130048
    %s214 = scalar_lea.vmem [#allocation0], 705
    %215 = vst.msk [vmem:[%s214] ss:$8 sm:$0xf] %vm213, %v212
    %s216 = scalar_lea.vmem [#allocation0], 705
    %217 = vst.msk [vmem:[%s216] ss:$8 sm:$0xf0] %vm213, %v212
    %s218 = scalar_lea.vmem %s0, 96
    %v219 = vld [vmem:[%s218] sm:$0xff]
    %220 = vrot.lane.b32.xlu0 %v219, 112
    %v221 = vpop.permute.xlu0 %220
    %vm222 = vcmask 130048
    %s223 = scalar_lea.vmem [#allocation0], 769
    %224 = vst.msk [vmem:[%s223] ss:$8 sm:$0xf] %vm222, %v221
    %s225 = scalar_lea.vmem [#allocation0], 769
    %226 = vst.msk [vmem:[%s225] ss:$8 sm:$0xf0] %vm222, %v221
    %s227 = scalar_lea.vmem %s0, 104
    %v228 = vld [vmem:[%s227] sm:$0xff]
    %229 = vrot.lane.b32.xlu0 %v228, 112
    %v230 = vpop.permute.xlu0 %229
    %vm231 = vcmask 130048
    %s232 = scalar_lea.vmem [#allocation0], 833
    %233 = vst.msk [vmem:[%s232] ss:$8 sm:$0xf] %vm231, %v230
    %s234 = scalar_lea.vmem [#allocation0], 833
    %235 = vst.msk [vmem:[%s234] ss:$8 sm:$0xf0] %vm231, %v230
    %s236 = scalar_lea.vmem %s0, 112
    %v237 = vld [vmem:[%s236] sm:$0xff]
    %238 = vrot.lane.b32.xlu0 %v237, 112
    %v239 = vpop.permute.xlu0 %238
    %vm240 = vcmask 130048
    %s241 = scalar_lea.vmem [#allocation0], 897
    %242 = vst.msk [vmem:[%s241] ss:$8 sm:$0xf] %vm240, %v239
    %s243 = scalar_lea.vmem [#allocation0], 897
    %244 = vst.msk [vmem:[%s243] ss:$8 sm:$0xf0] %vm240, %v239
    %s245 = scalar_lea.vmem %s0, 120
    %v246 = vld [vmem:[%s245] sm:$0xff]
    %247 = vrot.lane.b32.xlu0 %v246, 112
    %v248 = vpop.permute.xlu0 %247
    %vm249 = vcmask 130048
    %s250 = scalar_lea.vmem [#allocation0], 961
    %251 = vst.msk [vmem:[%s250] ss:$8 sm:$0xf] %vm249, %v248
    %s252 = scalar_lea.vmem [#allocation0], 961
    %253 = vst.msk [vmem:[%s252] ss:$8 sm:$0xf0] %vm249, %v248
    %s255 = sshllo.u32 0, 2
    %v257 = vld [vmem:[#allocation0] sm:%s255]
    %s258 = sshllo.u32 0, 2
    %259 = vst [vmem:[%s1] sm:%s258] %v257
    %s260 = scalar_lea.vmem [#allocation0], 8
    %v261 = vld [vmem:[%s260] sm:%s255]
    %s262 = sshllo.u32 0, 2
    %s263 = scalar_lea.vmem %s1, 2
    %264 = vst [vmem:[%s263] sm:%s262] %v261
    %s265 = scalar_lea.vmem [#allocation0], 16
    %v266 = vld [vmem:[%s265] sm:%s255]
    %s267 = sshllo.u32 0, 2
    %s268 = smul.addr 2, 2
    %s269 = scalar_lea.vmem %s1, %s268
    %270 = vst [vmem:[%s269] sm:%s267] %v266
    %s271 = scalar_lea.vmem [#allocation0], 24
    %v272 = vld [vmem:[%s271] sm:%s255]
    %s273 = sshllo.u32 0, 2
    %s274 = smul.addr 2, 3
    %s275 = scalar_lea.vmem %s1, %s274
    %276 = vst [vmem:[%s275] sm:%s273] %v272
    %s277 = scalar_lea.vmem [#allocation0], 32
    %v278 = vld [vmem:[%s277] sm:%s255]
    %s279 = sshllo.u32 0, 2
    %s280 = smul.addr 2, 4
    %s281 = scalar_lea.vmem %s1, %s280
    %282 = vst [vmem:[%s281] sm:%s279] %v278
    %s283 = scalar_lea.vmem [#allocation0], 40
    %v284 = vld [vmem:[%s283] sm:%s255]
    %s285 = sshllo.u32 0, 2
    %s286 = smul.addr 2, 5
    %s287 = scalar_lea.vmem %s1, %s286
    %288 = vst [vmem:[%s287] sm:%s285] %v284
    %s289 = scalar_lea.vmem [#allocation0], 48
    %v290 = vld [vmem:[%s289] sm:%s255]
    %s291 = sshllo.u32 0, 2
    %s292 = smul.addr 2, 6
    %s293 = scalar_lea.vmem %s1, %s292
    %294 = vst [vmem:[%s293] sm:%s291] %v290
    %s295 = scalar_lea.vmem [#allocation0], 56
    %v296 = vld [vmem:[%s295] sm:%s255]
    %s297 = sshllo.u32 0, 2
    %s298 = smul.addr 2, 7
    %s299 = scalar_lea.vmem %s1, %s298
    %300 = vst [vmem:[%s299] sm:%s297] %v296
    %s301 = scalar_lea.vmem [#allocation0], 64
    %v302 = vld [vmem:[%s301] sm:%s255]
    %s303 = sshllo.u32 0, 2
    %s304 = smul.addr 2, 8
    %s305 = scalar_lea.vmem %s1, %s304
    %306 = vst [vmem:[%s305] sm:%s303] %v302
    %s307 = scalar_lea.vmem [#allocation0], 72
    %v308 = vld [vmem:[%s307] sm:%s255]
    %s309 = sshllo.u32 0, 2
    %s310 = smul.addr 2, 9
    %s311 = scalar_lea.vmem %s1, %s310
    %312 = vst [vmem:[%s311] sm:%s309] %v308
    %s313 = scalar_lea.vmem [#allocation0], 80
    %v314 = vld [vmem:[%s313] sm:%s255]
    %s315 = sshllo.u32 0, 2
    %s316 = smul.addr 2, 10
    %s317 = scalar_lea.vmem %s1, %s316
    %318 = vst [vmem:[%s317] sm:%s315] %v314
    %s319 = scalar_lea.vmem [#allocation0], 88
    %v320 = vld [vmem:[%s319] sm:%s255]
    %s321 = sshllo.u32 0, 2
    %s322 = smul.addr 2, 11
    %s323 = scalar_lea.vmem %s1, %s322
    %324 = vst [vmem:[%s323] sm:%s321] %v320
    %s325 = scalar_lea.vmem [#allocation0], 96
    %v326 = vld [vmem:[%s325] sm:%s255]
    %s327 = sshllo.u32 0, 2
    %s328 = smul.addr 2, 12
    %s329 = scalar_lea.vmem %s1, %s328
    %330 = vst [vmem:[%s329] sm:%s327] %v326
    %s331 = scalar_lea.vmem [#allocation0], 104
    %v332 = vld [vmem:[%s331] sm:%s255]
    %s333 = sshllo.u32 0, 2
    %s334 = smul.addr 2, 13
    %s335 = scalar_lea.vmem %s1, %s334
    %336 = vst [vmem:[%s335] sm:%s333] %v332
    %s337 = scalar_lea.vmem [#allocation0], 112
    %v338 = vld [vmem:[%s337] sm:%s255]
    %s339 = sshllo.u32 0, 2
    %s340 = smul.addr 2, 14
    %s341 = scalar_lea.vmem %s1, %s340
    %342 = vst [vmem:[%s341] sm:%s339] %v338
    %s343 = scalar_lea.vmem [#allocation0], 120
    %v344 = vld [vmem:[%s343] sm:%s255]
    %s345 = sshllo.u32 0, 2
    %s346 = smul.addr 2, 15
    %s347 = scalar_lea.vmem %s1, %s346
    %348 = vst [vmem:[%s347] sm:%s345] %v344
    %s349 = scalar_lea.vmem [#allocation0], 128
    %v350 = vld [vmem:[%s349] sm:%s255]
    %s351 = sshllo.u32 0, 2
    %s352 = smul.addr 2, 16
    %s353 = scalar_lea.vmem %s1, %s352
    %354 = vst [vmem:[%s353] sm:%s351] %v350
    %s355 = scalar_lea.vmem [#allocation0], 136
    %v356 = vld [vmem:[%s355] sm:%s255]
    %s357 = sshllo.u32 0, 2
    %s358 = smul.addr 2, 17
    %s359 = scalar_lea.vmem %s1, %s358
    %360 = vst [vmem:[%s359] sm:%s357] %v356
    %s361 = scalar_lea.vmem [#allocation0], 144
    %v362 = vld [vmem:[%s361] sm:%s255]
    %s363 = sshllo.u32 0, 2
    %s364 = smul.addr 2, 18
    %s365 = scalar_lea.vmem %s1, %s364
    %366 = vst [vmem:[%s365] sm:%s363] %v362
    %s367 = scalar_lea.vmem [#allocation0], 152
    %v368 = vld [vmem:[%s367] sm:%s255]
    %s369 = sshllo.u32 0, 2
    %s370 = smul.addr 2, 19
    %s371 = scalar_lea.vmem %s1, %s370
    %372 = vst [vmem:[%s371] sm:%s369] %v368
    %s373 = scalar_lea.vmem [#allocation0], 160
    %v374 = vld [vmem:[%s373] sm:%s255]
    %s375 = sshllo.u32 0, 2
    %s376 = smul.addr 2, 20
    %s377 = scalar_lea.vmem %s1, %s376
    %378 = vst [vmem:[%s377] sm:%s375] %v374
    %s379 = scalar_lea.vmem [#allocation0], 168
    %v380 = vld [vmem:[%s379] sm:%s255]
    %s381 = sshllo.u32 0, 2
    %s382 = smul.addr 2, 21
    %s383 = scalar_lea.vmem %s1, %s382
    %384 = vst [vmem:[%s383] sm:%s381] %v380
    %s385 = scalar_lea.vmem [#allocation0], 176
    %v386 = vld [vmem:[%s385] sm:%s255]
    %s387 = sshllo.u32 0, 2
    %s388 = smul.addr 2, 22
    %s389 = scalar_lea.vmem %s1, %s388
    %390 = vst [vmem:[%s389] sm:%s387] %v386
    %s391 = scalar_lea.vmem [#allocation0], 184
    %v392 = vld [vmem:[%s391] sm:%s255]
    %s393 = sshllo.u32 0, 2
    %s394 = smul.addr 2, 23
    %s395 = scalar_lea.vmem %s1, %s394
    %396 = vst [vmem:[%s395] sm:%s393] %v392
    %s397 = scalar_lea.vmem [#allocation0], 192
    %v398 = vld [vmem:[%s397] sm:%s255]
    %s399 = sshllo.u32 0, 2
    %s400 = smul.addr 2, 24
    %s401 = scalar_lea.vmem %s1, %s400
    %402 = vst [vmem:[%s401] sm:%s399] %v398
    %s403 = scalar_lea.vmem [#allocation0], 200
    %v404 = vld [vmem:[%s403] sm:%s255]
    %s405 = sshllo.u32 0, 2
    %s406 = smul.addr 2, 25
    %s407 = scalar_lea.vmem %s1, %s406
    %408 = vst [vmem:[%s407] sm:%s405] %v404
    %s409 = scalar_lea.vmem [#allocation0], 208
    %v410 = vld [vmem:[%s409] sm:%s255]
    %s411 = sshllo.u32 0, 2
    %s412 = smul.addr 2, 26
    %s413 = scalar_lea.vmem %s1, %s412
    %414 = vst [vmem:[%s413] sm:%s411] %v410
    %s415 = scalar_lea.vmem [#allocation0], 216
    %v416 = vld [vmem:[%s415] sm:%s255]
    %s417 = sshllo.u32 0, 2
    %s418 = smul.addr 2, 27
    %s419 = scalar_lea.vmem %s1, %s418
    %420 = vst [vmem:[%s419] sm:%s417] %v416
    %s421 = scalar_lea.vmem [#allocation0], 224
    %v422 = vld [vmem:[%s421] sm:%s255]
    %s423 = sshllo.u32 0, 2
    %s424 = smul.addr 2, 28
    %s425 = scalar_lea.vmem %s1, %s424
    %426 = vst [vmem:[%s425] sm:%s423] %v422
    %s427 = scalar_lea.vmem [#allocation0], 232
    %v428 = vld [vmem:[%s427] sm:%s255]
    %s429 = sshllo.u32 0, 2
    %s430 = smul.addr 2, 29
    %s431 = scalar_lea.vmem %s1, %s430
    %432 = vst [vmem:[%s431] sm:%s429] %v428
    %s433 = scalar_lea.vmem [#allocation0], 240
    %v434 = vld [vmem:[%s433] sm:%s255]
    %s435 = sshllo.u32 0, 2
    %s436 = smul.addr 2, 30
    %s437 = scalar_lea.vmem %s1, %s436
    %438 = vst [vmem:[%s437] sm:%s435] %v434
    %s439 = scalar_lea.vmem [#allocation0], 248
    %v440 = vld [vmem:[%s439] sm:%s255]
    %s441 = sshllo.u32 0, 2
    %s442 = smul.addr 2, 31
    %s443 = scalar_lea.vmem %s1, %s442
    %444 = vst [vmem:[%s443] sm:%s441] %v440
    %s445 = scalar_lea.vmem [#allocation0], 256
    %v446 = vld [vmem:[%s445] sm:%s255]
    %s447 = sshllo.u32 0, 2
    %s448 = smul.addr 2, 32
    %s449 = scalar_lea.vmem %s1, %s448
    %450 = vst [vmem:[%s449] sm:%s447] %v446
    %s451 = scalar_lea.vmem [#allocation0], 264
    %v452 = vld [vmem:[%s451] sm:%s255]
    %s453 = sshllo.u32 0, 2
    %s454 = smul.addr 2, 33
    %s455 = scalar_lea.vmem %s1, %s454
    %456 = vst [vmem:[%s455] sm:%s453] %v452
    %s457 = scalar_lea.vmem [#allocation0], 272
    %v458 = vld [vmem:[%s457] sm:%s255]
    %s459 = sshllo.u32 0, 2
    %s460 = smul.addr 2, 34
    %s461 = scalar_lea.vmem %s1, %s460
    %462 = vst [vmem:[%s461] sm:%s459] %v458
    %s463 = scalar_lea.vmem [#allocation0], 280
    %v464 = vld [vmem:[%s463] sm:%s255]
    %s465 = sshllo.u32 0, 2
    %s466 = smul.addr 2, 35
    %s467 = scalar_lea.vmem %s1, %s466
    %468 = vst [vmem:[%s467] sm:%s465] %v464
    %s469 = scalar_lea.vmem [#allocation0], 288
    %v470 = vld [vmem:[%s469] sm:%s255]
    %s471 = sshllo.u32 0, 2
    %s472 = smul.addr 2, 36
    %s473 = scalar_lea.vmem %s1, %s472
    %474 = vst [vmem:[%s473] sm:%s471] %v470
    %s475 = scalar_lea.vmem [#allocation0], 296
    %v476 = vld [vmem:[%s475] sm:%s255]
    %s477 = sshllo.u32 0, 2
    %s478 = smul.addr 2, 37
    %s479 = scalar_lea.vmem %s1, %s478
    %480 = vst [vmem:[%s479] sm:%s477] %v476
    %s481 = scalar_lea.vmem [#allocation0], 304
    %v482 = vld [vmem:[%s481] sm:%s255]
    %s483 = sshllo.u32 0, 2
    %s484 = smul.addr 2, 38
    %s485 = scalar_lea.vmem %s1, %s484
    %486 = vst [vmem:[%s485] sm:%s483] %v482
    %s487 = scalar_lea.vmem [#allocation0], 312
    %v488 = vld [vmem:[%s487] sm:%s255]
    %s489 = sshllo.u32 0, 2
    %s490 = smul.addr 2, 39
    %s491 = scalar_lea.vmem %s1, %s490
    %492 = vst [vmem:[%s491] sm:%s489] %v488
    %s493 = scalar_lea.vmem [#allocation0], 320
    %v494 = vld [vmem:[%s493] sm:%s255]
    %s495 = sshllo.u32 0, 2
    %s496 = smul.addr 2, 40
    %s497 = scalar_lea.vmem %s1, %s496
    %498 = vst [vmem:[%s497] sm:%s495] %v494
    %s499 = scalar_lea.vmem [#allocation0], 328
    %v500 = vld [vmem:[%s499] sm:%s255]
    %s501 = sshllo.u32 0, 2
    %s502 = smul.addr 2, 41
    %s503 = scalar_lea.vmem %s1, %s502
    %504 = vst [vmem:[%s503] sm:%s501] %v500
    %s505 = scalar_lea.vmem [#allocation0], 336
    %v506 = vld [vmem:[%s505] sm:%s255]
    %s507 = sshllo.u32 0, 2
    %s508 = smul.addr 2, 42
    %s509 = scalar_lea.vmem %s1, %s508
    %510 = vst [vmem:[%s509] sm:%s507] %v506
    %s511 = scalar_lea.vmem [#allocation0], 344
    %v512 = vld [vmem:[%s511] sm:%s255]
    %s513 = sshllo.u32 0, 2
    %s514 = smul.addr 2, 43
    %s515 = scalar_lea.vmem %s1, %s514
    %516 = vst [vmem:[%s515] sm:%s513] %v512
    %s517 = scalar_lea.vmem [#allocation0], 352
    %v518 = vld [vmem:[%s517] sm:%s255]
    %s519 = sshllo.u32 0, 2
    %s520 = smul.addr 2, 44
    %s521 = scalar_lea.vmem %s1, %s520
    %522 = vst [vmem:[%s521] sm:%s519] %v518
    %s523 = scalar_lea.vmem [#allocation0], 360
    %v524 = vld [vmem:[%s523] sm:%s255]
    %s525 = sshllo.u32 0, 2
    %s526 = smul.addr 2, 45
    %s527 = scalar_lea.vmem %s1, %s526
    %528 = vst [vmem:[%s527] sm:%s525] %v524
    %s529 = scalar_lea.vmem [#allocation0], 368
    %v530 = vld [vmem:[%s529] sm:%s255]
    %s531 = sshllo.u32 0, 2
    %s532 = smul.addr 2, 46
    %s533 = scalar_lea.vmem %s1, %s532
    %534 = vst [vmem:[%s533] sm:%s531] %v530
    %s535 = scalar_lea.vmem [#allocation0], 376
    %v536 = vld [vmem:[%s535] sm:%s255]
    %s537 = sshllo.u32 0, 2
    %s538 = smul.addr 2, 47
    %s539 = scalar_lea.vmem %s1, %s538
    %540 = vst [vmem:[%s539] sm:%s537] %v536
    %s541 = scalar_lea.vmem [#allocation0], 384
    %v542 = vld [vmem:[%s541] sm:%s255]
    %s543 = sshllo.u32 0, 2
    %s544 = smul.addr 2, 48
    %s545 = scalar_lea.vmem %s1, %s544
    %546 = vst [vmem:[%s545] sm:%s543] %v542
    %s547 = scalar_lea.vmem [#allocation0], 392
    %v548 = vld [vmem:[%s547] sm:%s255]
    %s549 = sshllo.u32 0, 2
    %s550 = smul.addr 2, 49
    %s551 = scalar_lea.vmem %s1, %s550
    %552 = vst [vmem:[%s551] sm:%s549] %v548
    %s553 = scalar_lea.vmem [#allocation0], 400
    %v554 = vld [vmem:[%s553] sm:%s255]
    %s555 = sshllo.u32 0, 2
    %s556 = smul.addr 2, 50
    %s557 = scalar_lea.vmem %s1, %s556
    %558 = vst [vmem:[%s557] sm:%s555] %v554
    %s559 = scalar_lea.vmem [#allocation0], 408
    %v560 = vld [vmem:[%s559] sm:%s255]
    %s561 = sshllo.u32 0, 2
    %s562 = smul.addr 2, 51
    %s563 = scalar_lea.vmem %s1, %s562
    %564 = vst [vmem:[%s563] sm:%s561] %v560
    %s565 = scalar_lea.vmem [#allocation0], 416
    %v566 = vld [vmem:[%s565] sm:%s255]
    %s567 = sshllo.u32 0, 2
    %s568 = smul.addr 2, 52
    %s569 = scalar_lea.vmem %s1, %s568
    %570 = vst [vmem:[%s569] sm:%s567] %v566
    %s571 = scalar_lea.vmem [#allocation0], 424
    %v572 = vld [vmem:[%s571] sm:%s255]
    %s573 = sshllo.u32 0, 2
    %s574 = smul.addr 2, 53
    %s575 = scalar_lea.vmem %s1, %s574
    %576 = vst [vmem:[%s575] sm:%s573] %v572
    %s577 = scalar_lea.vmem [#allocation0], 432
    %v578 = vld [vmem:[%s577] sm:%s255]
    %s579 = sshllo.u32 0, 2
    %s580 = smul.addr 2, 54
    %s581 = scalar_lea.vmem %s1, %s580
    %582 = vst [vmem:[%s581] sm:%s579] %v578
    %s583 = scalar_lea.vmem [#allocation0], 440
    %v584 = vld [vmem:[%s583] sm:%s255]
    %s585 = sshllo.u32 0, 2
    %s586 = smul.addr 2, 55
    %s587 = scalar_lea.vmem %s1, %s586
    %588 = vst [vmem:[%s587] sm:%s585] %v584
    %s589 = scalar_lea.vmem [#allocation0], 448
    %v590 = vld [vmem:[%s589] sm:%s255]
    %s591 = sshllo.u32 0, 2
    %s592 = smul.addr 2, 56
    %s593 = scalar_lea.vmem %s1, %s592
    %594 = vst [vmem:[%s593] sm:%s591] %v590
    %s595 = scalar_lea.vmem [#allocation0], 456
    %v596 = vld [vmem:[%s595] sm:%s255]
    %s597 = sshllo.u32 0, 2
    %s598 = smul.addr 2, 57
    %s599 = scalar_lea.vmem %s1, %s598
    %600 = vst [vmem:[%s599] sm:%s597] %v596
    %s601 = scalar_lea.vmem [#allocation0], 464
    %v602 = vld [vmem:[%s601] sm:%s255]
    %s603 = sshllo.u32 0, 2
    %s604 = smul.addr 2, 58
    %s605 = scalar_lea.vmem %s1, %s604
    %606 = vst [vmem:[%s605] sm:%s603] %v602
    %s607 = scalar_lea.vmem [#allocation0], 472
    %v608 = vld [vmem:[%s607] sm:%s255]
    %s609 = sshllo.u32 0, 2
    %s610 = smul.addr 2, 59
    %s611 = scalar_lea.vmem %s1, %s610
    %612 = vst [vmem:[%s611] sm:%s609] %v608
    %s613 = scalar_lea.vmem [#allocation0], 480
    %v614 = vld [vmem:[%s613] sm:%s255]
    %s615 = sshllo.u32 0, 2
    %s616 = smul.addr 2, 60
    %s617 = scalar_lea.vmem %s1, %s616
    %618 = vst [vmem:[%s617] sm:%s615] %v614
    %s619 = scalar_lea.vmem [#allocation0], 488
    %v620 = vld [vmem:[%s619] sm:%s255]
    %s621 = sshllo.u32 0, 2
    %s622 = smul.addr 2, 61
    %s623 = scalar_lea.vmem %s1, %s622
    %624 = vst [vmem:[%s623] sm:%s621] %v620
    %s625 = scalar_lea.vmem [#allocation0], 496
    %v626 = vld [vmem:[%s625] sm:%s255]
    %s627 = sshllo.u32 0, 2
    %s628 = smul.addr 2, 62
    %s629 = scalar_lea.vmem %s1, %s628
    %630 = vst [vmem:[%s629] sm:%s627] %v626
    %s631 = scalar_lea.vmem [#allocation0], 504
    %v632 = vld [vmem:[%s631] sm:%s255]
    %s633 = sshllo.u32 0, 2
    %s634 = smul.addr 2, 63
    %s635 = scalar_lea.vmem %s1, %s634
    %636 = vst [vmem:[%s635] sm:%s633] %v632
    %s637 = scalar_lea.vmem [#allocation0], 512
    %v638 = vld [vmem:[%s637] sm:%s255]
    %s639 = sshllo.u32 0, 2
    %s640 = smul.addr 2, 64
    %s641 = scalar_lea.vmem %s1, %s640
    %642 = vst [vmem:[%s641] sm:%s639] %v638
    %s643 = scalar_lea.vmem [#allocation0], 520
    %v644 = vld [vmem:[%s643] sm:%s255]
    %s645 = sshllo.u32 0, 2
    %s646 = smul.addr 2, 65
    %s647 = scalar_lea.vmem %s1, %s646
    %648 = vst [vmem:[%s647] sm:%s645] %v644
    %s649 = scalar_lea.vmem [#allocation0], 528
    %v650 = vld [vmem:[%s649] sm:%s255]
    %s651 = sshllo.u32 0, 2
    %s652 = smul.addr 2, 66
    %s653 = scalar_lea.vmem %s1, %s652
    %654 = vst [vmem:[%s653] sm:%s651] %v650
    %s655 = scalar_lea.vmem [#allocation0], 536
    %v656 = vld [vmem:[%s655] sm:%s255]
    %s657 = sshllo.u32 0, 2
    %s658 = smul.addr 2, 67
    %s659 = scalar_lea.vmem %s1, %s658
    %660 = vst [vmem:[%s659] sm:%s657] %v656
    %s661 = scalar_lea.vmem [#allocation0], 544
    %v662 = vld [vmem:[%s661] sm:%s255]
    %s663 = sshllo.u32 0, 2
    %s664 = smul.addr 2, 68
    %s665 = scalar_lea.vmem %s1, %s664
    %666 = vst [vmem:[%s665] sm:%s663] %v662
    %s667 = scalar_lea.vmem [#allocation0], 552
    %v668 = vld [vmem:[%s667] sm:%s255]
    %s669 = sshllo.u32 0, 2
    %s670 = smul.addr 2, 69
    %s671 = scalar_lea.vmem %s1, %s670
    %672 = vst [vmem:[%s671] sm:%s669] %v668
    %s673 = scalar_lea.vmem [#allocation0], 560
    %v674 = vld [vmem:[%s673] sm:%s255]
    %s675 = sshllo.u32 0, 2
    %s676 = smul.addr 2, 70
    %s677 = scalar_lea.vmem %s1, %s676
    %678 = vst [vmem:[%s677] sm:%s675] %v674
    %s679 = scalar_lea.vmem [#allocation0], 568
    %v680 = vld [vmem:[%s679] sm:%s255]
    %s681 = sshllo.u32 0, 2
    %s682 = smul.addr 2, 71
    %s683 = scalar_lea.vmem %s1, %s682
    %684 = vst [vmem:[%s683] sm:%s681] %v680
    %s685 = scalar_lea.vmem [#allocation0], 576
    %v686 = vld [vmem:[%s685] sm:%s255]
    %s687 = sshllo.u32 0, 2
    %s688 = smul.addr 2, 72
    %s689 = scalar_lea.vmem %s1, %s688
    %690 = vst [vmem:[%s689] sm:%s687] %v686
    %s691 = scalar_lea.vmem [#allocation0], 584
    %v692 = vld [vmem:[%s691] sm:%s255]
    %s693 = sshllo.u32 0, 2
    %s694 = smul.addr 2, 73
    %s695 = scalar_lea.vmem %s1, %s694
    %696 = vst [vmem:[%s695] sm:%s693] %v692
    %s697 = scalar_lea.vmem [#allocation0], 592
    %v698 = vld [vmem:[%s697] sm:%s255]
    %s699 = sshllo.u32 0, 2
    %s700 = smul.addr 2, 74
    %s701 = scalar_lea.vmem %s1, %s700
    %702 = vst [vmem:[%s701] sm:%s699] %v698
    %s703 = scalar_lea.vmem [#allocation0], 600
    %v704 = vld [vmem:[%s703] sm:%s255]
    %s705 = sshllo.u32 0, 2
    %s706 = smul.addr 2, 75
    %s707 = scalar_lea.vmem %s1, %s706
    %708 = vst [vmem:[%s707] sm:%s705] %v704
    %s709 = scalar_lea.vmem [#allocation0], 608
    %v710 = vld [vmem:[%s709] sm:%s255]
    %s711 = sshllo.u32 0, 2
    %s712 = smul.addr 2, 76
    %s713 = scalar_lea.vmem %s1, %s712
    %714 = vst [vmem:[%s713] sm:%s711] %v710
    %s715 = scalar_lea.vmem [#allocation0], 616
    %v716 = vld [vmem:[%s715] sm:%s255]
    %s717 = sshllo.u32 0, 2
    %s718 = smul.addr 2, 77
    %s719 = scalar_lea.vmem %s1, %s718
    %720 = vst [vmem:[%s719] sm:%s717] %v716
    %s721 = scalar_lea.vmem [#allocation0], 624
    %v722 = vld [vmem:[%s721] sm:%s255]
    %s723 = sshllo.u32 0, 2
    %s724 = smul.addr 2, 78
    %s725 = scalar_lea.vmem %s1, %s724
    %726 = vst [vmem:[%s725] sm:%s723] %v722
    %s727 = scalar_lea.vmem [#allocation0], 632
    %v728 = vld [vmem:[%s727] sm:%s255]
    %s729 = sshllo.u32 0, 2
    %s730 = smul.addr 2, 79
    %s731 = scalar_lea.vmem %s1, %s730
    %732 = vst [vmem:[%s731] sm:%s729] %v728
    %s733 = scalar_lea.vmem [#allocation0], 640
    %v734 = vld [vmem:[%s733] sm:%s255]
    %s735 = sshllo.u32 0, 2
    %s736 = smul.addr 2, 80
    %s737 = scalar_lea.vmem %s1, %s736
    %738 = vst [vmem:[%s737] sm:%s735] %v734
    %s739 = scalar_lea.vmem [#allocation0], 648
    %v740 = vld [vmem:[%s739] sm:%s255]
    %s741 = sshllo.u32 0, 2
    %s742 = smul.addr 2, 81
    %s743 = scalar_lea.vmem %s1, %s742
    %744 = vst [vmem:[%s743] sm:%s741] %v740
    %s745 = scalar_lea.vmem [#allocation0], 656
    %v746 = vld [vmem:[%s745] sm:%s255]
    %s747 = sshllo.u32 0, 2
    %s748 = smul.addr 2, 82
    %s749 = scalar_lea.vmem %s1, %s748
    %750 = vst [vmem:[%s749] sm:%s747] %v746
    %s751 = scalar_lea.vmem [#allocation0], 664
    %v752 = vld [vmem:[%s751] sm:%s255]
    %s753 = sshllo.u32 0, 2
    %s754 = smul.addr 2, 83
    %s755 = scalar_lea.vmem %s1, %s754
    %756 = vst [vmem:[%s755] sm:%s753] %v752
    %s757 = scalar_lea.vmem [#allocation0], 672
    %v758 = vld [vmem:[%s757] sm:%s255]
    %s759 = sshllo.u32 0, 2
    %s760 = smul.addr 2, 84
    %s761 = scalar_lea.vmem %s1, %s760
    %762 = vst [vmem:[%s761] sm:%s759] %v758
    %s763 = scalar_lea.vmem [#allocation0], 680
    %v764 = vld [vmem:[%s763] sm:%s255]
    %s765 = sshllo.u32 0, 2
    %s766 = smul.addr 2, 85
    %s767 = scalar_lea.vmem %s1, %s766
    %768 = vst [vmem:[%s767] sm:%s765] %v764
    %s769 = scalar_lea.vmem [#allocation0], 688
    %v770 = vld [vmem:[%s769] sm:%s255]
    %s771 = sshllo.u32 0, 2
    %s772 = smul.addr 2, 86
    %s773 = scalar_lea.vmem %s1, %s772
    %774 = vst [vmem:[%s773] sm:%s771] %v770
    %s775 = scalar_lea.vmem [#allocation0], 696
    %v776 = vld [vmem:[%s775] sm:%s255]
    %s777 = sshllo.u32 0, 2
    %s778 = smul.addr 2, 87
    %s779 = scalar_lea.vmem %s1, %s778
    %780 = vst [vmem:[%s779] sm:%s777] %v776
    %s781 = scalar_lea.vmem [#allocation0], 704
    %v782 = vld [vmem:[%s781] sm:%s255]
    %s783 = sshllo.u32 0, 2
    %s784 = smul.addr 2, 88
    %s785 = scalar_lea.vmem %s1, %s784
    %786 = vst [vmem:[%s785] sm:%s783] %v782
    %s787 = scalar_lea.vmem [#allocation0], 712
    %v788 = vld [vmem:[%s787] sm:%s255]
    %s789 = sshllo.u32 0, 2
    %s790 = smul.addr 2, 89
    %s791 = scalar_lea.vmem %s1, %s790
    %792 = vst [vmem:[%s791] sm:%s789] %v788
    %s793 = scalar_lea.vmem [#allocation0], 720
    %v794 = vld [vmem:[%s793] sm:%s255]
    %s795 = sshllo.u32 0, 2
    %s796 = smul.addr 2, 90
    %s797 = scalar_lea.vmem %s1, %s796
    %798 = vst [vmem:[%s797] sm:%s795] %v794
    %s799 = scalar_lea.vmem [#allocation0], 728
    %v800 = vld [vmem:[%s799] sm:%s255]
    %s801 = sshllo.u32 0, 2
    %s802 = smul.addr 2, 91
    %s803 = scalar_lea.vmem %s1, %s802
    %804 = vst [vmem:[%s803] sm:%s801] %v800
    %s805 = scalar_lea.vmem [#allocation0], 736
    %v806 = vld [vmem:[%s805] sm:%s255]
    %s807 = sshllo.u32 0, 2
    %s808 = smul.addr 2, 92
    %s809 = scalar_lea.vmem %s1, %s808
    %810 = vst [vmem:[%s809] sm:%s807] %v806
    %s811 = scalar_lea.vmem [#allocation0], 744
    %v812 = vld [vmem:[%s811] sm:%s255]
    %s813 = sshllo.u32 0, 2
    %s814 = smul.addr 2, 93
    %s815 = scalar_lea.vmem %s1, %s814
    %816 = vst [vmem:[%s815] sm:%s813] %v812
    %s817 = scalar_lea.vmem [#allocation0], 752
    %v818 = vld [vmem:[%s817] sm:%s255]
    %s819 = sshllo.u32 0, 2
    %s820 = smul.addr 2, 94
    %s821 = scalar_lea.vmem %s1, %s820
    %822 = vst [vmem:[%s821] sm:%s819] %v818
    %s823 = scalar_lea.vmem [#allocation0], 760
    %v824 = vld [vmem:[%s823] sm:%s255]
    %s825 = sshllo.u32 0, 2
    %s826 = smul.addr 2, 95
    %s827 = scalar_lea.vmem %s1, %s826
    %828 = vst [vmem:[%s827] sm:%s825] %v824
    %s829 = scalar_lea.vmem [#allocation0], 768
    %v830 = vld [vmem:[%s829] sm:%s255]
    %s831 = sshllo.u32 0, 2
    %s832 = smul.addr 2, 96
    %s833 = scalar_lea.vmem %s1, %s832
    %834 = vst [vmem:[%s833] sm:%s831] %v830
    %s835 = scalar_lea.vmem [#allocation0], 776
    %v836 = vld [vmem:[%s835] sm:%s255]
    %s837 = sshllo.u32 0, 2
    %s838 = smul.addr 2, 97
    %s839 = scalar_lea.vmem %s1, %s838
    %840 = vst [vmem:[%s839] sm:%s837] %v836
    %s841 = scalar_lea.vmem [#allocation0], 784
    %v842 = vld [vmem:[%s841] sm:%s255]
    %s843 = sshllo.u32 0, 2
    %s844 = smul.addr 2, 98
    %s845 = scalar_lea.vmem %s1, %s844
    %846 = vst [vmem:[%s845] sm:%s843] %v842
    %s847 = scalar_lea.vmem [#allocation0], 792
    %v848 = vld [vmem:[%s847] sm:%s255]
    %s849 = sshllo.u32 0, 2
    %s850 = smul.addr 2, 99
    %s851 = scalar_lea.vmem %s1, %s850
    %852 = vst [vmem:[%s851] sm:%s849] %v848
    %s853 = scalar_lea.vmem [#allocation0], 800
    %v854 = vld [vmem:[%s853] sm:%s255]
    %s855 = sshllo.u32 0, 2
    %s856 = smul.addr 2, 100
    %s857 = scalar_lea.vmem %s1, %s856
    %858 = vst [vmem:[%s857] sm:%s855] %v854
    %s859 = scalar_lea.vmem [#allocation0], 808
    %v860 = vld [vmem:[%s859] sm:%s255]
    %s861 = sshllo.u32 0, 2
    %s862 = smul.addr 2, 101
    %s863 = scalar_lea.vmem %s1, %s862
    %864 = vst [vmem:[%s863] sm:%s861] %v860
    %s865 = scalar_lea.vmem [#allocation0], 816
    %v866 = vld [vmem:[%s865] sm:%s255]
    %s867 = sshllo.u32 0, 2
    %s868 = smul.addr 2, 102
    %s869 = scalar_lea.vmem %s1, %s868
    %870 = vst [vmem:[%s869] sm:%s867] %v866
    %s871 = scalar_lea.vmem [#allocation0], 824
    %v872 = vld [vmem:[%s871] sm:%s255]
    %s873 = sshllo.u32 0, 2
    %s874 = smul.addr 2, 103
    %s875 = scalar_lea.vmem %s1, %s874
    %876 = vst [vmem:[%s875] sm:%s873] %v872
    %s877 = scalar_lea.vmem [#allocation0], 832
    %v878 = vld [vmem:[%s877] sm:%s255]
    %s879 = sshllo.u32 0, 2
    %s880 = smul.addr 2, 104
    %s881 = scalar_lea.vmem %s1, %s880
    %882 = vst [vmem:[%s881] sm:%s879] %v878
    %s883 = scalar_lea.vmem [#allocation0], 840
    %v884 = vld [vmem:[%s883] sm:%s255]
    %s885 = sshllo.u32 0, 2
    %s886 = smul.addr 2, 105
    %s887 = scalar_lea.vmem %s1, %s886
    %888 = vst [vmem:[%s887] sm:%s885] %v884
    %s889 = scalar_lea.vmem [#allocation0], 848
    %v890 = vld [vmem:[%s889] sm:%s255]
    %s891 = sshllo.u32 0, 2
    %s892 = smul.addr 2, 106
    %s893 = scalar_lea.vmem %s1, %s892
    %894 = vst [vmem:[%s893] sm:%s891] %v890
    %s895 = scalar_lea.vmem [#allocation0], 856
    %v896 = vld [vmem:[%s895] sm:%s255]
    %s897 = sshllo.u32 0, 2
    %s898 = smul.addr 2, 107
    %s899 = scalar_lea.vmem %s1, %s898
    %900 = vst [vmem:[%s899] sm:%s897] %v896
    %s901 = scalar_lea.vmem [#allocation0], 864
    %v902 = vld [vmem:[%s901] sm:%s255]
    %s903 = sshllo.u32 0, 2
    %s904 = smul.addr 2, 108
    %s905 = scalar_lea.vmem %s1, %s904
    %906 = vst [vmem:[%s905] sm:%s903] %v902
    %s907 = scalar_lea.vmem [#allocation0], 872
    %v908 = vld [vmem:[%s907] sm:%s255]
    %s909 = sshllo.u32 0, 2
    %s910 = smul.addr 2, 109
    %s911 = scalar_lea.vmem %s1, %s910
    %912 = vst [vmem:[%s911] sm:%s909] %v908
    %s913 = scalar_lea.vmem [#allocation0], 880
    %v914 = vld [vmem:[%s913] sm:%s255]
    %s915 = sshllo.u32 0, 2
    %s916 = smul.addr 2, 110
    %s917 = scalar_lea.vmem %s1, %s916
    %918 = vst [vmem:[%s917] sm:%s915] %v914
    %s919 = scalar_lea.vmem [#allocation0], 888
    %v920 = vld [vmem:[%s919] sm:%s255]
    %s921 = sshllo.u32 0, 2
    %s922 = smul.addr 2, 111
    %s923 = scalar_lea.vmem %s1, %s922
    %924 = vst [vmem:[%s923] sm:%s921] %v920
    %s925 = scalar_lea.vmem [#allocation0], 896
    %v926 = vld [vmem:[%s925] sm:%s255]
    %s927 = sshllo.u32 0, 2
    %s928 = smul.addr 2, 112
    %s929 = scalar_lea.vmem %s1, %s928
    %930 = vst [vmem:[%s929] sm:%s927] %v926
    %s931 = scalar_lea.vmem [#allocation0], 904
    %v932 = vld [vmem:[%s931] sm:%s255]
    %s933 = sshllo.u32 0, 2
    %s934 = smul.addr 2, 113
    %s935 = scalar_lea.vmem %s1, %s934
    %936 = vst [vmem:[%s935] sm:%s933] %v932
    %s937 = scalar_lea.vmem [#allocation0], 912
    %v938 = vld [vmem:[%s937] sm:%s255]
    %s939 = sshllo.u32 0, 2
    %s940 = smul.addr 2, 114
    %s941 = scalar_lea.vmem %s1, %s940
    %942 = vst [vmem:[%s941] sm:%s939] %v938
    %s943 = scalar_lea.vmem [#allocation0], 920
    %v944 = vld [vmem:[%s943] sm:%s255]
    %s945 = sshllo.u32 0, 2
    %s946 = smul.addr 2, 115
    %s947 = scalar_lea.vmem %s1, %s946
    %948 = vst [vmem:[%s947] sm:%s945] %v944
    %s949 = scalar_lea.vmem [#allocation0], 928
    %v950 = vld [vmem:[%s949] sm:%s255]
    %s951 = sshllo.u32 0, 2
    %s952 = smul.addr 2, 116
    %s953 = scalar_lea.vmem %s1, %s952
    %954 = vst [vmem:[%s953] sm:%s951] %v950
    %s955 = scalar_lea.vmem [#allocation0], 936
    %v956 = vld [vmem:[%s955] sm:%s255]
    %s957 = sshllo.u32 0, 2
    %s958 = smul.addr 2, 117
    %s959 = scalar_lea.vmem %s1, %s958
    %960 = vst [vmem:[%s959] sm:%s957] %v956
    %s961 = scalar_lea.vmem [#allocation0], 944
    %v962 = vld [vmem:[%s961] sm:%s255]
    %s963 = sshllo.u32 0, 2
    %s964 = smul.addr 2, 118
    %s965 = scalar_lea.vmem %s1, %s964
    %966 = vst [vmem:[%s965] sm:%s963] %v962
    %s967 = scalar_lea.vmem [#allocation0], 952
    %v968 = vld [vmem:[%s967] sm:%s255]
    %s969 = sshllo.u32 0, 2
    %s970 = smul.addr 2, 119
    %s971 = scalar_lea.vmem %s1, %s970
    %972 = vst [vmem:[%s971] sm:%s969] %v968
    %s973 = scalar_lea.vmem [#allocation0], 960
    %v974 = vld [vmem:[%s973] sm:%s255]
    %s975 = sshllo.u32 0, 2
    %s976 = smul.addr 2, 120
    %s977 = scalar_lea.vmem %s1, %s976
    %978 = vst [vmem:[%s977] sm:%s975] %v974
    %s979 = scalar_lea.vmem [#allocation0], 968
    %v980 = vld [vmem:[%s979] sm:%s255]
    %s981 = sshllo.u32 0, 2
    %s982 = smul.addr 2, 121
    %s983 = scalar_lea.vmem %s1, %s982
    %984 = vst [vmem:[%s983] sm:%s981] %v980
    %s985 = scalar_lea.vmem [#allocation0], 976
    %v986 = vld [vmem:[%s985] sm:%s255]
    %s987 = sshllo.u32 0, 2
    %s988 = smul.addr 2, 122
    %s989 = scalar_lea.vmem %s1, %s988
    %990 = vst [vmem:[%s989] sm:%s987] %v986
    %s991 = scalar_lea.vmem [#allocation0], 984
    %v992 = vld [vmem:[%s991] sm:%s255]
    %s993 = sshllo.u32 0, 2
    %s994 = smul.addr 2, 123
    %s995 = scalar_lea.vmem %s1, %s994
    %996 = vst [vmem:[%s995] sm:%s993] %v992
    %s997 = scalar_lea.vmem [#allocation0], 992
    %v998 = vld [vmem:[%s997] sm:%s255]
    %s999 = sshllo.u32 0, 2
    %s1000 = smul.addr 2, 124
    %s1001 = scalar_lea.vmem %s1, %s1000
    %1002 = vst [vmem:[%s1001] sm:%s999] %v998
    %s1003 = scalar_lea.vmem [#allocation0], 1000
    %v1004 = vld [vmem:[%s1003] sm:%s255]
    %s1005 = sshllo.u32 0, 2
    %s1006 = smul.addr 2, 125
    %s1007 = scalar_lea.vmem %s1, %s1006
    %1008 = vst [vmem:[%s1007] sm:%s1005] %v1004
    %s1009 = scalar_lea.vmem [#allocation0], 1008
    %v1010 = vld [vmem:[%s1009] sm:%s255]
    %s1011 = sshllo.u32 0, 2
    %s1012 = smul.addr 2, 126
    %s1013 = scalar_lea.vmem %s1, %s1012
    %1014 = vst [vmem:[%s1013] sm:%s1011] %v1010
    %s1015 = scalar_lea.vmem [#allocation0], 1016
    %v1016 = vld [vmem:[%s1015] sm:%s255]
    %s1017 = sshllo.u32 0, 2
    %s1018 = smul.addr 2, 127
    %s1019 = scalar_lea.vmem %s1, %s1018
    %1020 = vst [vmem:[%s1019] sm:%s1017] %v1016

// kernel: straightnet_back_lc_forward.3
$region0: #{straightnet_back_lc_forward.3}
  #allocation0 [shape = 'u32[]', space=smem, size = 0x4, offset = 0x4, fixed_abs, tag = 'smem constant byte address 0x4 - core index']
  #allocation1 [shape = 'u32[144,128]{1,0:T(1,128)}', space=vmem, size = 0x12000, scoped, tag = 'internal scratch']
  #allocation2 [shape = 'f32[32,128]{1,0:T(8,128)}', space=vmem, size = 0x4000, scoped, tag = 'scratch operand']
  #allocation3 [shape = 'f32[32,128]{1,0:T(8,128)}', space=vmem, size = 0x4000, scoped, tag = 'scratch operand']
  %s0 = inlined_call_operand.vmem [shape: bf16[4,32,1024], index: 0, kind: input, shape index: {}]
  %s1 = inlined_call_operand.vmem [shape: bf16[2,384,512], index: 1, kind: input, shape index: {}]
  %s2 = inlined_call_operand.vmem [shape: f32[2,4,32,128], index: 2, kind: output, shape index: {0}]
  %s3 = inlined_call_operand.vmem [shape: f32[2,32,128], index: 3, kind: output, shape index: {1}]
  %4 = xla_tuple %s2, %s3
  %s5 = sld [smem:[#allocation0]]
  $region76: #{straightnet_back_lc_forward.3} parent=0
    _
  %s7 = ssub.s32 1, %s5
  %s8 = scalar_select 0, %s7, %s5
  $region1: #{straightnet_back_lc_forward.3} parent=0
    #allocation4 [shape = 'u8[65536]{0}', space=vmem, size = 0x10000, scoped, tag = 'input window, operand 0']
    loop: start=0, step=1, limit=10
    $region2: #{straightnet_back_lc_forward.3} parent=1 // loop_pre_header
      _
    $region3: #{straightnet_back_lc_forward.3} parent=1 // loop_header
      %s10 = sphi 0, %s14
      %p11 = scmp.ge.s32.totalorder %s10, 10
      %s17 = sphi 0, %s29
      %s18 = sphi 0, %s25
      %s19 = sphi 0, %s17
      %s20 = sphi 0, %s18
      %s21 = sphi 0, %s19
      %s22 = sphi 0, %s20
      %s42 = sphi 0, %s44
      %s45 = sphi 0, %s42
      %s46 = sphi 0, %s45
      %s62 = sphi 0, %s46
      %s68 = sphi 0, %s70
      %s71 = sphi 0, %s68
      %s72 = sphi 0, %s71
      %s88 = sphi 0, %s72
      %s104 = sphi 0, %s106
      %s107 = sphi 0, %s104
      %s108 = sphi 0, %s107
      %s124 = sphi 0, %s108
      %s130 = sphi 0, %s132
      %s133 = sphi 0, %s130
      %s134 = sphi 0, %s133
      %s150 = sphi 0, %s134
    $region4: #{straightnet_back_lc_forward.3} parent=1 // loop_header_branch
      %13 = sbr.rel (%p11) target = $region8
    $region5: #{straightnet_back_lc_forward.3} parent=1 // loop_body
      %s15 = ssub.s32 %s10, 1
      %s16 = ssub.s32 %s10, 2
      %s23 = sadd.s32 1, %s18
      %p24 = scmp.ge.s32.totalorder %s23, 4
      %s25 = scalar_select %p24, 0, %s23
      %s26 = sadd.s32 1, %s17
      %s27 = scalar_select %p24, %s26, %s17
      %p28 = scmp.ge.s32.totalorder %s27, 2
      %s29 = scalar_select %p28, 0, %s27
      %s30 = smul.u32 %s18, 2
      %s31 = ssub.s32 3, %s30
      %s32 = smul.u32 %s17, %s31
      %s33 = sadd.s32 %s18, %s32
      %s34 = smul.u32 %s25, 2
      %s35 = ssub.s32 3, %s34
      %s36 = smul.u32 %s29, %s35
      %s37 = sadd.s32 %s25, %s36
      %s38 = ssub.s32 %s33, %s37
      %s39 = ssub.s32 %s17, %s29
      %s40 = sor.u32 %s38, %s39
      %p41 = scmp.eq.s32.totalorder %s40, 0
      %s43 = sadd.s32 %s42, 1
      %s44 = scalar_select %p41, %s42, %s43
      %p47 = pneg %p41
      %p48 = scmp.eq.s32.totalorder %s10, 7
      %p49 = por %p47, %p48
      %p50 = scmp.ne.s32.totalorder %s42, %s45
      %p51 = scmp.eq.s32.totalorder %s10, 0
      %p52 = por %p50, %p51
      %p53 = scmp.ne.s32.totalorder %s42, %s45
      %p54 = scmp.eq.s32.totalorder %s15, 7
      %p55 = por %p53, %p54
      %p56 = scmp.ne.s32.totalorder %s45, %s46
      %p57 = scmp.eq.s32.totalorder %s15, 0
      %p58 = por %p56, %p57
      %p59 = scmp.ne.s32.totalorder %s45, %s46
      %p60 = scmp.eq.s32.totalorder %s16, 7
      %p61 = por %p59, %p60
      %p63 = scmp.ne.s32.totalorder %s46, %s62
      %p64 = scmp.eq.s32.totalorder %s16, 0
      %p65 = por %p63, %p64
      %s66 = ssub.s32 %s17, %s29
      %p67 = scmp.eq.s32.totalorder %s66, 0
      %s69 = sadd.s32 %s68, 1
      %s70 = scalar_select %p67, %s68, %s69
      %p73 = pneg %p67
      %p74 = scmp.eq.s32.totalorder %s10, 7
      %p75 = por %p73, %p74
      %p76 = scmp.ne.s32.totalorder %s68, %s71
      %p77 = scmp.eq.s32.totalorder %s10, 0
      %p78 = por %p76, %p77
      %p79 = scmp.ne.s32.totalorder %s68, %s71
      %p80 = scmp.eq.s32.totalorder %s15, 7
      %p81 = por %p79, %p80
      %p82 = scmp.ne.s32.totalorder %s71, %s72
      %p83 = scmp.eq.s32.totalorder %s15, 0
      %p84 = por %p82, %p83
      %p85 = scmp.ne.s32.totalorder %s71, %s72
      %p86 = scmp.eq.s32.totalorder %s16, 7
      %p87 = por %p85, %p86
      %p89 = scmp.ne.s32.totalorder %s72, %s88
      %p90 = scmp.eq.s32.totalorder %s16, 0
      %p91 = por %p89, %p90
      %s92 = smul.u32 %s18, 2
      %s93 = ssub.s32 3, %s92
      %s94 = smul.u32 %s17, %s93
      %s95 = sadd.s32 %s18, %s94
      %s96 = smul.u32 %s25, 2
      %s97 = ssub.s32 3, %s96
      %s98 = smul.u32 %s29, %s97
      %s99 = sadd.s32 %s25, %s98
      %s100 = ssub.s32 %s17, %s29
      %s101 = ssub.s32 %s95, %s99
      %s102 = sor.u32 %s100, %s101
      %p103 = scmp.eq.s32.totalorder %s102, 0
      %s105 = sadd.s32 %s104, 1
      %s106 = scalar_select %p103, %s104, %s105
      %p109 = pneg %p103
      %p110 = scmp.eq.s32.totalorder %s10, 7
      %p111 = por %p109, %p110
      %p112 = scmp.ne.s32.totalorder %s104, %s107
      %p113 = scmp.eq.s32.totalorder %s10, 0
      %p114 = por %p112, %p113
      %p115 = scmp.ne.s32.totalorder %s104, %s107
      %p116 = scmp.eq.s32.totalorder %s15, 7
      %p117 = por %p115, %p116
      %p118 = scmp.ne.s32.totalorder %s107, %s108
      %p119 = scmp.eq.s32.totalorder %s15, 0
      %p120 = por %p118, %p119
      %p121 = scmp.ne.s32.totalorder %s107, %s108
      %p122 = scmp.eq.s32.totalorder %s16, 7
      %p123 = por %p121, %p122
      %p125 = scmp.ne.s32.totalorder %s108, %s124
      %p126 = scmp.eq.s32.totalorder %s16, 0
      %p127 = por %p125, %p126
      %s128 = ssub.s32 %s17, %s29
      %p129 = scmp.eq.s32.totalorder %s128, 0
      %s131 = sadd.s32 %s130, 1
      %s132 = scalar_select %p129, %s130, %s131
      %p135 = pneg %p129
      %p136 = scmp.eq.s32.totalorder %s10, 7
      %p137 = por %p135, %p136
      %p138 = scmp.ne.s32.totalorder %s130, %s133
      %p139 = scmp.eq.s32.totalorder %s10, 0
      %p140 = por %p138, %p139
      %p141 = scmp.ne.s32.totalorder %s130, %s133
      %p142 = scmp.eq.s32.totalorder %s15, 7
      %p143 = por %p141, %p142
      %p144 = scmp.ne.s32.totalorder %s133, %s134
      %p145 = scmp.eq.s32.totalorder %s15, 0
      %p146 = por %p144, %p145
      %p147 = scmp.ne.s32.totalorder %s133, %s134
      %p148 = scmp.eq.s32.totalorder %s16, 7
      %p149 = por %p147, %p148
      %p151 = scmp.ne.s32.totalorder %s134, %s150
      %p152 = scmp.eq.s32.totalorder %s16, 0
      %p153 = por %p151, %p152
      %p154 = scmp.le.s32.totalorder 1, %s10
      %p155 = scmp.lt.s32.totalorder %s10, 9
      %p156 = pnand %p154, %p155
      %p157 = pneg %p156
      // Predicated region
      $region9: #{straightnet_back_lc_forward.3} parent=5 // pred_check
        _
      $region10: #{straightnet_back_lc_forward.3} parent=5 // pred_check_branch
        %159 = sbr.rel (%p156) target = $region12
      $region11: #{straightnet_back_lc_forward.3} parent=5 // pred_region
        %s160 = ssub.s32 %s10, 1
      $region12: #{straightnet_back_lc_forward.3} parent=5 // pred_fallthru
        _
      %p161 = scmp.lt.s32.totalorder %s10, 8
      // Predicated region
      $region13: #{straightnet_back_lc_forward.3} parent=5 // pred_check
        %p162 = pneg %p161
      $region14: #{straightnet_back_lc_forward.3} parent=5 // pred_check_branch
        %164 = sbr.rel (%p162) target = $region16
      $region15: #{straightnet_back_lc_forward.3} parent=5 // pred_region
        // Predicated region
        $region17: #{straightnet_back_lc_forward.3} parent=15 // pred_check
          %p165 = pneg %p52
        $region18: #{straightnet_back_lc_forward.3} parent=15 // pred_check_branch
          %167 = sbr.rel (%p165) target = $region20
        $region19: #{straightnet_back_lc_forward.3} parent=15 // pred_region
          %s168 = sand.u32 %s42, 1
          %s169 = sand.u32 %s42, 1
          %s170 = smul.addr %s169, 64
          %s171 = scalar_lea.vmem [#allocation4], %s170
          %s172 = smul.u32 %s18, 2
          %s173 = ssub.s32 3, %s172
          %s174 = smul.u32 %s17, %s173
          %s175 = sadd.s32 %s18, %s174
          %s176 = smul.u32 4, %s17
          %s177 = smul.addr %s175, 32
          %s178 = sadd.s32 %s176, %s177
          %s179 = smul.addr %s178, 4
          %s180 = scalar_lea.vmem %s0, %s179
          // Predicated region
          $region21: #{straightnet_back_lc_forward.3} parent=19 // pred_check
            _
          $region22: #{straightnet_back_lc_forward.3} parent=19 // pred_check_branch
            %182 = sbr.rel (0) target = $region24
          $region23: #{straightnet_back_lc_forward.3} parent=19 // pred_region
            // Predicated region
            $region25: #{straightnet_back_lc_forward.3} parent=23 // pred_check
              _
            $region26: #{straightnet_back_lc_forward.3} parent=23 // pred_check_branch
              %184 = sbr.rel (0) target = $region28
            $region27: #{straightnet_back_lc_forward.3} parent=23 // pred_region
              loop: start=0, step=1, limit=1
              $region29: #{straightnet_back_lc_forward.3} parent=27 // loop_pre_header
                _
              $region30: #{straightnet_back_lc_forward.3} parent=27 // loop_header
                %s186 = sphi 0, %s190
                %p187 = scmp.ge.s32.totalorder %s186, 1
                %s191 = sphi %s180, %s180
                %s192 = sphi %s171, %s171
              $region31: #{straightnet_back_lc_forward.3} parent=27 // loop_header_branch
                %189 = sbr.rel (%p187) target = $region35
              $region32: #{straightnet_back_lc_forward.3} parent=27 // loop_body
                %v193 = vld [vmem:[%s191] sm:$0xff]
                %194 = vst [vmem:[%s192] sm:$0xff] %v193
                %v195 = vld [vmem:[%s191 + $0x8] sm:$0xff]
                %196 = vst [vmem:[%s192 + $0x8] sm:$0xff] %v195
                %v197 = vld [vmem:[%s191 + $0x20] sm:$0xff]
                %198 = vst [vmem:[%s192 + $0x10] sm:$0xff] %v197
                %v199 = vld [vmem:[%s191 + $0x28] sm:$0xff]
                %200 = vst [vmem:[%s192 + $0x18] sm:$0xff] %v199
                %v201 = vld [vmem:[%s191 + $0x40] sm:$0xff]
                %202 = vst [vmem:[%s192 + $0x20] sm:$0xff] %v201
                %v203 = vld [vmem:[%s191 + $0x48] sm:$0xff]
                %204 = vst [vmem:[%s192 + $0x28] sm:$0xff] %v203
                %v205 = vld [vmem:[%s191 + $0x60] sm:$0xff]
                %206 = vst [vmem:[%s192 + $0x30] sm:$0xff] %v205
                %v207 = vld [vmem:[%s191 + $0x68] sm:$0xff]
                %208 = vst [vmem:[%s192 + $0x38] sm:$0xff] %v207
              $region33: #{straightnet_back_lc_forward.3} parent=27 // loop_footer
                %s190 = sadd.s32 1, %s186
              $region34: #{straightnet_back_lc_forward.3} parent=27 // loop_footer_branch
                %185 = sbr.rel target = $region30
              $region35: #{straightnet_back_lc_forward.3} parent=27 // loop_exit
                _
            $region28: #{straightnet_back_lc_forward.3} parent=23 // pred_fallthru
              _
            // Predicated region
            $region36: #{straightnet_back_lc_forward.3} parent=23 // pred_check
              _
            $region37: #{straightnet_back_lc_forward.3} parent=23 // pred_check_branch
              %210 = sbr.rel target = $region39
            $region38: #{straightnet_back_lc_forward.3} parent=23 // pred_region
              _
            $region39: #{straightnet_back_lc_forward.3} parent=23 // pred_fallthru
              _
          $region24: #{straightnet_back_lc_forward.3} parent=19 // pred_fallthru
            _
          %211 = vnop
        $region20: #{straightnet_back_lc_forward.3} parent=15 // pred_fallthru
          _
        // Predicated region
        $region40: #{straightnet_back_lc_forward.3} parent=15 // pred_check
          %p212 = pneg %p78
        $region41: #{straightnet_back_lc_forward.3} parent=15 // pred_check_branch
          %214 = sbr.rel (%p212) target = $region43
        $region42: #{straightnet_back_lc_forward.3} parent=15 // pred_region
          %p215 = scmp.lt.s32.totalorder %s17, 1
          %s216 = scalar_select %p215, %s17, 1
          %s217 = smul.addr %s216, 192
          %s218 = smul.addr %s217, 4
          %s219 = scalar_lea.vmem %s1, %s218
        $region43: #{straightnet_back_lc_forward.3} parent=15 // pred_fallthru
          _
      $region16: #{straightnet_back_lc_forward.3} parent=5 // pred_fallthru
        _
      %p220 = scmp.le.s32.totalorder 1, %s10
      %p221 = scmp.lt.s32.totalorder %s10, 9
      %p222 = pnand %p220, %p221
      %p223 = pneg %p222
      // Predicated region
      $region44: #{straightnet_back_lc_forward.3} parent=5 // pred_check
        _
      $region45: #{straightnet_back_lc_forward.3} parent=5 // pred_check_branch
        %225 = sbr.rel (%p222) target = $region47
      $region46: #{straightnet_back_lc_forward.3} parent=5 // pred_region
        %s226 = ssub.s32 %s10, 1
        %s227 = sand.u32 %s45, 1
        %s228 = sand.u32 %s45, 1
        %s229 = smul.addr %s228, 64
        %s230 = scalar_lea.vmem [#allocation4], %s229
        // Predicated region
        $region48: #{straightnet_back_lc_forward.3} parent=46 // pred_check
          %p231 = pneg %p58
        $region49: #{straightnet_back_lc_forward.3} parent=46 // pred_check_branch
          %233 = sbr.rel (%p231) target = $region51
        $region50: #{straightnet_back_lc_forward.3} parent=46 // pred_region
          _
        $region51: #{straightnet_back_lc_forward.3} parent=46 // pred_fallthru
          _
        %s234 = sand.u32 %s45, 1
        %s235 = sand.u32 %s45, 1
        %s236 = smul.addr %s235, 64
        %s237 = scalar_lea.vmem [#allocation4], %s236
        %p238 = pneg %p58
        %p239 = pneg %p55
        %p240 = scmp.lt.s32.totalorder %s19, 1
        %s241 = scalar_select %p240, %s19, 1
        %s242 = smul.addr %s241, 192
        %s243 = smul.addr %s242, 4
        %s244 = scalar_lea.vmem %s1, %s243
        %p245 = pneg %p84
        %p246 = pneg %p81
        %p247 = pneg %p120
        %p248 = pneg %p117
        %s249 = smul.u32 %s20, 2
        %s250 = ssub.s32 3, %s249
        %s251 = smul.u32 %s19, %s250
        %s252 = sadd.s32 %s20, %s251
        %p253 = scmp.lt.s32.totalorder %s19, 1
        %s254 = scalar_select %p253, %s19, 1
        %p255 = scmp.lt.s32.totalorder %s252, 3
        %s256 = scalar_select %p255, %s252, 3
        %s257 = smul.addr %s256, 4
        %s258 = smul.addr %s254, 16
        %s259 = sadd.s32 %s257, %s258
        %s260 = smul.addr %s259, 8
        %s261 = scalar_lea.vmem %s2, %s260
        %p262 = pneg %p146
        %p263 = pneg %p143
        %p264 = scmp.lt.s32.totalorder %s19, 1
        %s265 = scalar_select %p264, %s19, 1
        %s266 = smul.addr %s265, 4
        %s267 = smul.addr %s266, 8
        %s268 = scalar_lea.vmem %s3, %s267
        %s269 = smul.u32 %s20, 2
        %s270 = ssub.s32 3, %s269
        %s271 = smul.u32 %s19, %s270
        %s272 = sadd.s32 %s20, %s271
        %s273 = smul.u32 4, %s19
        %p274 = scmp.lt.s32.totalorder %s19, 1
        %s275 = scalar_select %p274, %s19, 1
        %s276 = smul.addr %s275, 192
        %s277 = smul.addr %s276, 4
        %s278 = scalar_lea.vmem %s1, %s277
        %s279 = smul.u32 %s20, 2
        %s280 = ssub.s32 3, %s279
        %s281 = smul.u32 %s19, %s280
        %s282 = sadd.s32 %s20, %s281
        %p283 = scmp.lt.s32.totalorder %s19, 1
        %s284 = scalar_select %p283, %s19, 1
        %p285 = scmp.lt.s32.totalorder %s282, 3
        %s286 = scalar_select %p285, %s282, 3
        %s287 = smul.addr %s286, 4
        %s288 = smul.addr %s284, 16
        %s289 = sadd.s32 %s287, %s288
        %s290 = smul.addr %s289, 8
        %s291 = scalar_lea.vmem %s2, %s290
        %s292 = smul.u32 %s20, 2
        %s293 = ssub.s32 3, %s292
        %s294 = smul.u32 %s19, %s293
        %s295 = sadd.s32 %s20, %s294
        %p296 = scmp.lt.s32.totalorder %s19, 1
        %s297 = scalar_select %p296, %s19, 1
        %s298 = smul.addr %s297, 4
        %s299 = smul.addr %s298, 8
        %s300 = scalar_lea.vmem %s3, %s299
        %p302 = scmp.eq.s32.totalorder %s20, 0
        // Predicated region
        $region52: #{straightnet_back_lc_forward.3} parent=46 // pred_check
          %p303 = pneg %p302
        $region53: #{straightnet_back_lc_forward.3} parent=46 // pred_check_branch
          %305 = sbr.rel (%p303) target = $region55
        $region54: #{straightnet_back_lc_forward.3} parent=46 // pred_region
          %306 = vst [vmem:[#allocation2] sm:$0xff] 0.0
          %307 = vst [vmem:[#allocation2 + $0x8] sm:$0xff] 0.0
          %308 = vst [vmem:[#allocation2 + $0x10] sm:$0xff] 0.0
          %309 = vst [vmem:[#allocation2 + $0x18] sm:$0xff] 0.0
          %310 = vst [vmem:[#allocation3] sm:$0xff] 0.0
          %311 = vst [vmem:[#allocation3 + $0x8] sm:$0xff] 0.0
          %312 = vst [vmem:[#allocation3 + $0x10] sm:$0xff] 0.0
          %313 = vst [vmem:[#allocation3 + $0x18] sm:$0xff] 0.0
        $region55: #{straightnet_back_lc_forward.3} parent=46 // pred_fallthru
          _
        %v314 = vld [vmem:[#allocation2] sm:$0xff]
        %v315 = vld [vmem:[#allocation2 + $0x8] sm:$0xff]
        %v316 = vld [vmem:[#allocation2 + $0x10] sm:$0xff]
        %v317 = vld [vmem:[#allocation2 + $0x18] sm:$0xff]
        %v318 = vlaneseq
        %v319 = vshrl.u32 %v318, 7
        %v320 = vadd.s32 %v319, 8
        %v321 = vadd.s32 %v319, 16
        %v322 = vadd.s32 %v319, 24
        %vm323 = vcmp.lt.s32.totalorder %v319, 0
        %v324 = vsub.s32 0, %v319
        %v325 = vsel %vm323, %v324, %v319
        %v326 = vshrl.u32 %v325, 4
        %v327 = vand.u32 %v325, 15
        %v328 = vsub.s32 0, %v327
        %v329 = vsel %vm323, %v328, %v327
        %vm330 = vcmp.lt.s32.totalorder %v320, 0
        %v331 = vsub.s32 0, %v320
        %v332 = vsel %vm330, %v331, %v320
        %v333 = vshrl.u32 %v332, 4
        %v334 = vand.u32 %v332, 15
        %v335 = vsub.s32 0, %v334
        %v336 = vsel %vm330, %v335, %v334
        %vm337 = vcmp.lt.s32.totalorder %v321, 0
        %v338 = vsub.s32 0, %v321
        %v339 = vsel %vm337, %v338, %v321
        %v340 = vshrl.u32 %v339, 4
        %v341 = vand.u32 %v339, 15
        %v342 = vsub.s32 0, %v341
        %v343 = vsel %vm337, %v342, %v341
        %vm344 = vcmp.lt.s32.totalorder %v322, 0
        %v345 = vsub.s32 0, %v322
        %v346 = vsel %vm344, %v345, %v322
        %v347 = vshrl.u32 %v346, 4
        %v348 = vand.u32 %v346, 15
        %v349 = vsub.s32 0, %v348
        %v350 = vsel %vm344, %v349, %v348
        %vm351 = vcmp.ne.s32.totalorder %v329, 0
        %vm352 = vcmp.ne.s32.totalorder %v336, 0
        %vm353 = vcmp.ne.s32.totalorder %v343, 0
        %vm354 = vcmp.ne.s32.totalorder %v350, 0
        %vm355 = vcmp.lt.s32.totalorder %v329, 0
        %vm356 = vcmp.lt.s32.totalorder %v336, 0
        %vm357 = vcmp.lt.s32.totalorder %v343, 0
        %vm358 = vcmp.lt.s32.totalorder %v350, 0
        %vm359 = vmand %vm355, %vm351
        %vm360 = vmand %vm356, %vm352
        %vm361 = vmand %vm357, %vm353
        %vm362 = vmand %vm358, %vm354
        %v363 = vadd.s32 %v329, 16
        %v364 = vadd.s32 %v336, 16
        %v365 = vadd.s32 %v343, 16
        %v366 = vadd.s32 %v350, 16
        %v367 = vsel %vm359, %v363, %v329
        %v368 = vsel %vm360, %v364, %v336
        %v369 = vsel %vm361, %v365, %v343
        %v370 = vsel %vm362, %v366, %v350
        %vm371 = vcmp.ge.s32.totalorder %v367, 1
        %vm372 = vcmp.ge.s32.totalorder %v368, 1
        %vm373 = vcmp.ge.s32.totalorder %v369, 1
        %vm374 = vcmp.ge.s32.totalorder %v370, 1
        %v375 = vrot.slane %v314, 7
        %v376 = vrot.slane %v315, 7
        %v377 = vrot.slane %v316, 7
        %v378 = vrot.slane %v317, 7
        %vm379 = vcmp.lt.s32.totalorder %v319, 1
        %v380 = vsel %vm379, %v377, %v378
        %v381 = vsel %vm379, %v376, %v377
        %v382 = vsel %vm379, %v375, %v376
        %v383 = vsel %vm379, %v378, %v375
        %v384 = vsel %vm371, 1, 0
        %v385 = vsel %vm372, 1, 0
        %v386 = vsel %vm373, 1, 0
        %v387 = vsel %vm374, 1, 0
        %vm388 = vcmp.eq.s32.totalorder %v384, 1
        %vm389 = vcmp.eq.s32.totalorder %v385, 1
        %vm390 = vcmp.eq.s32.totalorder %v386, 1
        %vm391 = vcmp.eq.s32.totalorder %v387, 1
        %v392 = vsel %vm388, %v383, 0.0
        %v393 = vsel %vm389, %v382, 0.0
        %v394 = vsel %vm390, %v381, 0.0
        %v395 = vsel %vm391, %v380, 0.0
        %vm396 = vcmp.le.s32.totalorder %v367, 14
        %vm397 = vcmp.le.s32.totalorder %v368, 14
        %vm398 = vcmp.le.s32.totalorder %v369, 14
        %vm399 = vcmp.le.s32.totalorder %v370, 14
        %v400 = vrot.slane %v314, 1
        %v401 = vrot.slane %v315, 1
        %v402 = vrot.slane %v316, 1
        %v403 = vrot.slane %v317, 1
        %vm404 = vcmp.lt.s32.totalorder %v319, 7
        %v405 = vsel %vm404, %v402, %v403
        %v406 = vsel %vm404, %v401, %v402
        %v407 = vsel %vm404, %v400, %v401
        %v408 = vsel %vm404, %v403, %v400
        %v409 = vsel %vm396, 1, 0
        %v410 = vsel %vm397, 1, 0
        %v411 = vsel %vm398, 1, 0
        %v412 = vsel %vm399, 1, 0
        %vm413 = vcmp.eq.s32.totalorder %v409, 1
        %vm414 = vcmp.eq.s32.totalorder %v410, 1
        %vm415 = vcmp.eq.s32.totalorder %v411, 1
        %vm416 = vcmp.eq.s32.totalorder %v412, 1
        %v417 = vsel %vm413, %v407, 0.0
        %v418 = vsel %vm414, %v406, 0.0
        %v419 = vsel %vm415, %v405, 0.0
        %v420 = vsel %vm416, %v408, 0.0
        %v421 = vpack.c.bf16 %v393, %v392
        %v422 = vpack.c.bf16 %v315, %v314
        %v423 = vpack.c.bf16 %v418, %v417
        %v424 = vpack.c.bf16 %v395, %v394
        %v425 = vpack.c.bf16 %v317, %v316
        %v426 = vpack.c.bf16 %v420, %v419
        %v427 = vld [vmem:[%s230] sm:$0xff]
        %v428 = vld [vmem:[%s230 + $0x8] sm:$0xff]
        %v429 = vld [vmem:[%s230 + $0x10] sm:$0xff]
        %v430 = vld [vmem:[%s230 + $0x18] sm:$0xff]
        %v431 = vld [vmem:[%s230 + $0x20] sm:$0xff]
        %v432 = vld [vmem:[%s230 + $0x28] sm:$0xff]
        %v433 = vld [vmem:[%s230 + $0x30] sm:$0xff]
        %v434 = vld [vmem:[%s230 + $0x38] sm:$0xff]
        %v435 = vunpack.c.l.bf16 %v427
        %v436 = vunpack.c.h.bf16 %v427
        %v437 = vunpack.c.l.bf16 %v428
        %v438 = vunpack.c.h.bf16 %v428
        %v439 = vunpack.c.l.bf16 %v429
        %v440 = vunpack.c.h.bf16 %v429
        %v441 = vunpack.c.l.bf16 %v430
        %v442 = vunpack.c.h.bf16 %v430
        %v443 = vunpack.c.l.bf16 %v431
        %v444 = vunpack.c.h.bf16 %v431
        %v445 = vunpack.c.l.bf16 %v432
        %v446 = vunpack.c.h.bf16 %v432
        %v447 = vunpack.c.l.bf16 %v433
        %v448 = vunpack.c.h.bf16 %v433
        %v449 = vunpack.c.l.bf16 %v434
        %v450 = vunpack.c.h.bf16 %v434
        %v451 = vld [vmem:[%s278] sm:$0xff]
        %v452 = vld [vmem:[%s278 + $0x8] sm:$0xff]
        %v453 = vld [vmem:[%s278 + $0x10] sm:$0xff]
        %v454 = vld [vmem:[%s278 + $0x18] sm:$0xff]
        %v455 = vld [vmem:[%s278 + $0x20] sm:$0xff]
        %v456 = vld [vmem:[%s278 + $0x28] sm:$0xff]
        %v457 = vld [vmem:[%s278 + $0x30] sm:$0xff]
        %v458 = vld [vmem:[%s278 + $0x38] sm:$0xff]
        %v459 = vld [vmem:[%s278 + $0x40] sm:$0xff]
        %v460 = vld [vmem:[%s278 + $0x48] sm:$0xff]
        %v461 = vld [vmem:[%s278 + $0x50] sm:$0xff]
        %v462 = vld [vmem:[%s278 + $0x58] sm:$0xff]
        %v463 = vld [vmem:[%s278 + $0x60] sm:$0xff]
        %v464 = vld [vmem:[%s278 + $0x68] sm:$0xff]
        %v465 = vld [vmem:[%s278 + $0x70] sm:$0xff]
        %v466 = vld [vmem:[%s278 + $0x78] sm:$0xff]
        %v467 = vld [vmem:[%s278 + $0x80] sm:$0xff]
        %v468 = vld [vmem:[%s278 + $0x88] sm:$0xff]
        %v469 = vld [vmem:[%s278 + $0x90] sm:$0xff]
        %v470 = vld [vmem:[%s278 + $0x98] sm:$0xff]
        %v471 = vld [vmem:[%s278 + $0xa0] sm:$0xff]
        %v472 = vld [vmem:[%s278 + $0xa8] sm:$0xff]
        %v473 = vld [vmem:[%s278 + $0xb0] sm:$0xff]
        %v474 = vld [vmem:[%s278 + $0xb8] sm:$0xff]
        %v475 = vld [vmem:[%s278 + $0xc0] sm:$0xff]
        %v476 = vld [vmem:[%s278 + $0xc8] sm:$0xff]
        %v477 = vld [vmem:[%s278 + $0xd0] sm:$0xff]
        %v478 = vld [vmem:[%s278 + $0xd8] sm:$0xff]
        %v479 = vld [vmem:[%s278 + $0xe0] sm:$0xff]
        %v480 = vld [vmem:[%s278 + $0xe8] sm:$0xff]
        %v481 = vld [vmem:[%s278 + $0xf0] sm:$0xff]
        %v482 = vld [vmem:[%s278 + $0xf8] sm:$0xff]
        %v483 = vld [vmem:[%s278 + $0x100] sm:$0xff]
        %v484 = vld [vmem:[%s278 + $0x108] sm:$0xff]
        %v485 = vld [vmem:[%s278 + $0x110] sm:$0xff]
        %v486 = vld [vmem:[%s278 + $0x118] sm:$0xff]
        %v487 = vld [vmem:[%s278 + $0x120] sm:$0xff]
        %v488 = vld [vmem:[%s278 + $0x128] sm:$0xff]
        %v489 = vld [vmem:[%s278 + $0x130] sm:$0xff]
        %v490 = vld [vmem:[%s278 + $0x138] sm:$0xff]
        %v491 = vld [vmem:[%s278 + $0x140] sm:$0xff]
        %v492 = vld [vmem:[%s278 + $0x148] sm:$0xff]
        %v493 = vld [vmem:[%s278 + $0x150] sm:$0xff]
        %v494 = vld [vmem:[%s278 + $0x158] sm:$0xff]
        %v495 = vld [vmem:[%s278 + $0x160] sm:$0xff]
        %v496 = vld [vmem:[%s278 + $0x168] sm:$0xff]
        %v497 = vld [vmem:[%s278 + $0x170] sm:$0xff]
        %v498 = vld [vmem:[%s278 + $0x178] sm:$0xff]
        %v499 = vld [vmem:[%s278 + $0x180] sm:$0xff]
        %v500 = vld [vmem:[%s278 + $0x188] sm:$0xff]
        %v501 = vld [vmem:[%s278 + $0x190] sm:$0xff]
        %v502 = vld [vmem:[%s278 + $0x198] sm:$0xff]
        %v503 = vld [vmem:[%s278 + $0x1a0] sm:$0xff]
        %v504 = vld [vmem:[%s278 + $0x1a8] sm:$0xff]
        %v505 = vld [vmem:[%s278 + $0x1b0] sm:$0xff]
        %v506 = vld [vmem:[%s278 + $0x1b8] sm:$0xff]
        %v507 = vld [vmem:[%s278 + $0x1c0] sm:$0xff]
        %v508 = vld [vmem:[%s278 + $0x1c8] sm:$0xff]
        %v509 = vld [vmem:[%s278 + $0x1d0] sm:$0xff]
        %v510 = vld [vmem:[%s278 + $0x1d8] sm:$0xff]
        %v511 = vld [vmem:[%s278 + $0x1e0] sm:$0xff]
        %v512 = vld [vmem:[%s278 + $0x1e8] sm:$0xff]
        %v513 = vld [vmem:[%s278 + $0x1f0] sm:$0xff]
        %v514 = vld [vmem:[%s278 + $0x1f8] sm:$0xff]
        %v515 = vld [vmem:[%s278 + $0x200] sm:$0xff]
        %v516 = vld [vmem:[%s278 + $0x208] sm:$0xff]
        %v517 = vld [vmem:[%s278 + $0x210] sm:$0xff]
        %v518 = vld [vmem:[%s278 + $0x218] sm:$0xff]
        %v519 = vld [vmem:[%s278 + $0x220] sm:$0xff]
        %v520 = vld [vmem:[%s278 + $0x228] sm:$0xff]
        %v521 = vld [vmem:[%s278 + $0x230] sm:$0xff]
        %v522 = vld [vmem:[%s278 + $0x238] sm:$0xff]
        %v523 = vld [vmem:[%s278 + $0x240] sm:$0xff]
        %v524 = vld [vmem:[%s278 + $0x248] sm:$0xff]
        %v525 = vld [vmem:[%s278 + $0x250] sm:$0xff]
        %v526 = vld [vmem:[%s278 + $0x258] sm:$0xff]
        %v527 = vld [vmem:[%s278 + $0x260] sm:$0xff]
        %v528 = vld [vmem:[%s278 + $0x268] sm:$0xff]
        %v529 = vld [vmem:[%s278 + $0x270] sm:$0xff]
        %v530 = vld [vmem:[%s278 + $0x278] sm:$0xff]
        %v531 = vld [vmem:[%s278 + $0x280] sm:$0xff]
        %v532 = vld [vmem:[%s278 + $0x288] sm:$0xff]
        %v533 = vld [vmem:[%s278 + $0x290] sm:$0xff]
        %v534 = vld [vmem:[%s278 + $0x298] sm:$0xff]
        %v535 = vld [vmem:[%s278 + $0x2a0] sm:$0xff]
        %v536 = vld [vmem:[%s278 + $0x2a8] sm:$0xff]
        %v537 = vld [vmem:[%s278 + $0x2b0] sm:$0xff]
        %v538 = vld [vmem:[%s278 + $0x2b8] sm:$0xff]
        %v539 = vld [vmem:[%s278 + $0x2c0] sm:$0xff]
        %v540 = vld [vmem:[%s278 + $0x2c8] sm:$0xff]
        %v541 = vld [vmem:[%s278 + $0x2d0] sm:$0xff]
        %v542 = vld [vmem:[%s278 + $0x2d8] sm:$0xff]
        %v543 = vld [vmem:[%s278 + $0x2e0] sm:$0xff]
        %v544 = vld [vmem:[%s278 + $0x2e8] sm:$0xff]
        %v545 = vld [vmem:[%s278 + $0x2f0] sm:$0xff]
        %v546 = vld [vmem:[%s278 + $0x2f8] sm:$0xff]
        %v643 = vunpack.c.l.b16 %v451
        %v644 = vunpack.c.h.b16 %v451
        %v645 = vunpack.c.l.b16 %v452
        %v646 = vunpack.c.h.b16 %v452
        %v647 = vunpack.c.l.b16 %v453
        %v648 = vunpack.c.h.b16 %v453
        %v649 = vunpack.c.l.b16 %v454
        %v650 = vunpack.c.h.b16 %v454
        %v651 = vunpack.c.l.b16 %v455
        %v652 = vunpack.c.h.b16 %v455
        %v653 = vunpack.c.l.b16 %v456
        %v654 = vunpack.c.h.b16 %v456
        %v655 = vunpack.c.l.b16 %v457
        %v656 = vunpack.c.h.b16 %v457
        %v657 = vunpack.c.l.b16 %v458
        %v658 = vunpack.c.h.b16 %v458
        %v659 = vunpack.c.l.b16 %v459
        %v660 = vunpack.c.h.b16 %v459
        %v661 = vunpack.c.l.b16 %v460
        %v662 = vunpack.c.h.b16 %v460
        %v663 = vunpack.c.l.b16 %v461
        %v664 = vunpack.c.h.b16 %v461
        %v665 = vunpack.c.l.b16 %v462
        %v666 = vunpack.c.h.b16 %v462
        %v667 = vunpack.c.l.b16 %v463
        %v668 = vunpack.c.h.b16 %v463
        %v669 = vunpack.c.l.b16 %v464
        %v670 = vunpack.c.h.b16 %v464
        %v671 = vunpack.c.l.b16 %v465
        %v672 = vunpack.c.h.b16 %v465
        %v673 = vunpack.c.l.b16 %v466
        %v674 = vunpack.c.h.b16 %v466
        %v675 = vunpack.c.l.b16 %v467
        %v676 = vunpack.c.h.b16 %v467
        %v677 = vunpack.c.l.b16 %v468
        %v678 = vunpack.c.h.b16 %v468
        %v679 = vunpack.c.l.b16 %v469
        %v680 = vunpack.c.h.b16 %v469
        %v681 = vunpack.c.l.b16 %v470
        %v682 = vunpack.c.h.b16 %v470
        %v683 = vunpack.c.l.b16 %v471
        %v684 = vunpack.c.h.b16 %v471
        %v685 = vunpack.c.l.b16 %v472
        %v686 = vunpack.c.h.b16 %v472
        %v687 = vunpack.c.l.b16 %v473
        %v688 = vunpack.c.h.b16 %v473
        %v689 = vunpack.c.l.b16 %v474
        %v690 = vunpack.c.h.b16 %v474
        %v691 = vunpack.c.l.b16 %v475
        %v692 = vunpack.c.h.b16 %v475
        %v693 = vunpack.c.l.b16 %v476
        %v694 = vunpack.c.h.b16 %v476
        %v695 = vunpack.c.l.b16 %v477
        %v696 = vunpack.c.h.b16 %v477
        %v697 = vunpack.c.l.b16 %v478
        %v698 = vunpack.c.h.b16 %v478
        %v699 = vunpack.c.l.b16 %v479
        %v700 = vunpack.c.h.b16 %v479
        %v701 = vunpack.c.l.b16 %v480
        %v702 = vunpack.c.h.b16 %v480
        %v703 = vunpack.c.l.b16 %v481
        %v704 = vunpack.c.h.b16 %v481
        %v705 = vunpack.c.l.b16 %v482
        %v706 = vunpack.c.h.b16 %v482
        %v707 = vunpack.c.l.b16 %v483
        %v708 = vunpack.c.h.b16 %v483
        %v709 = vunpack.c.l.b16 %v484
        %v710 = vunpack.c.h.b16 %v484
        %v711 = vunpack.c.l.b16 %v485
        %v712 = vunpack.c.h.b16 %v485
        %v713 = vunpack.c.l.b16 %v486
        %v714 = vunpack.c.h.b16 %v486
        %v715 = vunpack.c.l.b16 %v487
        %v716 = vunpack.c.h.b16 %v487
        %v717 = vunpack.c.l.b16 %v488
        %v718 = vunpack.c.h.b16 %v488
        %v719 = vunpack.c.l.b16 %v489
        %v720 = vunpack.c.h.b16 %v489
        %v721 = vunpack.c.l.b16 %v490
        %v722 = vunpack.c.h.b16 %v490
        %v723 = vunpack.c.l.b16 %v491
        %v724 = vunpack.c.h.b16 %v491
        %v725 = vunpack.c.l.b16 %v492
        %v726 = vunpack.c.h.b16 %v492
        %v727 = vunpack.c.l.b16 %v493
        %v728 = vunpack.c.h.b16 %v493
        %v729 = vunpack.c.l.b16 %v494
        %v730 = vunpack.c.h.b16 %v494
        %v731 = vunpack.c.l.b16 %v495
        %v732 = vunpack.c.h.b16 %v495
        %v733 = vunpack.c.l.b16 %v496
        %v734 = vunpack.c.h.b16 %v496
        %v735 = vunpack.c.l.b16 %v497
        %v736 = vunpack.c.h.b16 %v497
        %v737 = vunpack.c.l.b16 %v498
        %v738 = vunpack.c.h.b16 %v498
        %v739 = vunpack.c.l.b16 %v499
        %v740 = vunpack.c.h.b16 %v499
        %v741 = vunpack.c.l.b16 %v500
        %v742 = vunpack.c.h.b16 %v500
        %v743 = vunpack.c.l.b16 %v501
        %v744 = vunpack.c.h.b16 %v501
        %v745 = vunpack.c.l.b16 %v502
        %v746 = vunpack.c.h.b16 %v502
        %v747 = vunpack.c.l.b16 %v503
        %v748 = vunpack.c.h.b16 %v503
        %v749 = vunpack.c.l.b16 %v504
        %v750 = vunpack.c.h.b16 %v504
        %v751 = vunpack.c.l.b16 %v505
        %v752 = vunpack.c.h.b16 %v505
        %v753 = vunpack.c.l.b16 %v506
        %v754 = vunpack.c.h.b16 %v506
        %v755 = vunpack.c.l.b16 %v507
        %v756 = vunpack.c.h.b16 %v507
        %v757 = vunpack.c.l.b16 %v508
        %v758 = vunpack.c.h.b16 %v508
        %v759 = vunpack.c.l.b16 %v509
        %v760 = vunpack.c.h.b16 %v509
        %v761 = vunpack.c.l.b16 %v510
        %v762 = vunpack.c.h.b16 %v510
        %v763 = vunpack.c.l.b16 %v511
        %v764 = vunpack.c.h.b16 %v511
        %v765 = vunpack.c.l.b16 %v512
        %v766 = vunpack.c.h.b16 %v512
        %v767 = vunpack.c.l.b16 %v513
        %v768 = vunpack.c.h.b16 %v513
        %v769 = vunpack.c.l.b16 %v514
        %v770 = vunpack.c.h.b16 %v514
        %v771 = vunpack.c.l.b16 %v515
        %v772 = vunpack.c.h.b16 %v515
        %v773 = vunpack.c.l.b16 %v516
        %v774 = vunpack.c.h.b16 %v516
        %v775 = vunpack.c.l.b16 %v517
        %v776 = vunpack.c.h.b16 %v517
        %v777 = vunpack.c.l.b16 %v518
        %v778 = vunpack.c.h.b16 %v518
        %v779 = vunpack.c.l.b16 %v519
        %v780 = vunpack.c.h.b16 %v519
        %v781 = vunpack.c.l.b16 %v520
        %v782 = vunpack.c.h.b16 %v520
        %v783 = vunpack.c.l.b16 %v521
        %v784 = vunpack.c.h.b16 %v521
        %v785 = vunpack.c.l.b16 %v522
        %v786 = vunpack.c.h.b16 %v522
        %v787 = vunpack.c.l.b16 %v523
        %v788 = vunpack.c.h.b16 %v523
        %v789 = vunpack.c.l.b16 %v524
        %v790 = vunpack.c.h.b16 %v524
        %v791 = vunpack.c.l.b16 %v525
        %v792 = vunpack.c.h.b16 %v525
        %v793 = vunpack.c.l.b16 %v526
        %v794 = vunpack.c.h.b16 %v526
        %v795 = vunpack.c.l.b16 %v527
        %v796 = vunpack.c.h.b16 %v527
        %v797 = vunpack.c.l.b16 %v528
        %v798 = vunpack.c.h.b16 %v528
        %v799 = vunpack.c.l.b16 %v529
        %v800 = vunpack.c.h.b16 %v529
        %v801 = vunpack.c.l.b16 %v530
        %v802 = vunpack.c.h.b16 %v530
        %v803 = vunpack.c.l.b16 %v531
        %v804 = vunpack.c.h.b16 %v531
        %v805 = vunpack.c.l.b16 %v532
        %v806 = vunpack.c.h.b16 %v532
        %v807 = vunpack.c.l.b16 %v533
        %v808 = vunpack.c.h.b16 %v533
        %v809 = vunpack.c.l.b16 %v534
        %v810 = vunpack.c.h.b16 %v534
        %v811 = vunpack.c.l.b16 %v535
        %v812 = vunpack.c.h.b16 %v535
        %v813 = vunpack.c.l.b16 %v536
        %v814 = vunpack.c.h.b16 %v536
        %v815 = vunpack.c.l.b16 %v537
        %v816 = vunpack.c.h.b16 %v537
        %v817 = vunpack.c.l.b16 %v538
        %v818 = vunpack.c.h.b16 %v538
        %v819 = vunpack.c.l.b16 %v539
        %v820 = vunpack.c.h.b16 %v539
        %v821 = vunpack.c.l.b16 %v540
        %v822 = vunpack.c.h.b16 %v540
        %v823 = vunpack.c.l.b16 %v541
        %v824 = vunpack.c.h.b16 %v541
        %v825 = vunpack.c.l.b16 %v542
        %v826 = vunpack.c.h.b16 %v542
        %v827 = vunpack.c.l.b16 %v543
        %v828 = vunpack.c.h.b16 %v543
        %v829 = vunpack.c.l.b16 %v544
        %v830 = vunpack.c.h.b16 %v544
        %v831 = vunpack.c.l.b16 %v545
        %v832 = vunpack.c.h.b16 %v545
        %v833 = vunpack.c.l.b16 %v546
        %v834 = vunpack.c.h.b16 %v546
        %v835 = vpack.c.b16 %v647, %v643
        %v836 = vpack.c.b16 %v648, %v644
        %v837 = vpack.c.b16 %v649, %v645
        %v838 = vpack.c.b16 %v650, %v646
        %v839 = vpack.c.b16 %v655, %v651
        %v840 = vpack.c.b16 %v656, %v652
        %v841 = vpack.c.b16 %v657, %v653
        %v842 = vpack.c.b16 %v658, %v654
        %v843 = vpack.c.b16 %v663, %v659
        %v844 = vpack.c.b16 %v664, %v660
        %v845 = vpack.c.b16 %v665, %v661
        %v846 = vpack.c.b16 %v666, %v662
        %v847 = vpack.c.b16 %v671, %v667
        %v848 = vpack.c.b16 %v672, %v668
        %v849 = vpack.c.b16 %v673, %v669
        %v850 = vpack.c.b16 %v674, %v670
        %v851 = vpack.c.b16 %v679, %v675
        %v852 = vpack.c.b16 %v680, %v676
        %v853 = vpack.c.b16 %v681, %v677
        %v854 = vpack.c.b16 %v682, %v678
        %v855 = vpack.c.b16 %v687, %v683
        %v856 = vpack.c.b16 %v688, %v684
        %v857 = vpack.c.b16 %v689, %v685
        %v858 = vpack.c.b16 %v690, %v686
        %v859 = vpack.c.b16 %v695, %v691
        %v860 = vpack.c.b16 %v696, %v692
        %v861 = vpack.c.b16 %v697, %v693
        %v862 = vpack.c.b16 %v698, %v694
        %v863 = vpack.c.b16 %v703, %v699
        %v864 = vpack.c.b16 %v704, %v700
        %v865 = vpack.c.b16 %v705, %v701
        %v866 = vpack.c.b16 %v706, %v702
        %v867 = vpack.c.b16 %v711, %v707
        %v868 = vpack.c.b16 %v712, %v708
        %v869 = vpack.c.b16 %v713, %v709
        %v870 = vpack.c.b16 %v714, %v710
        %v871 = vpack.c.b16 %v719, %v715
        %v872 = vpack.c.b16 %v720, %v716
        %v873 = vpack.c.b16 %v721, %v717
        %v874 = vpack.c.b16 %v722, %v718
        %v875 = vpack.c.b16 %v727, %v723
        %v876 = vpack.c.b16 %v728, %v724
        %v877 = vpack.c.b16 %v729, %v725
        %v878 = vpack.c.b16 %v730, %v726
        %v879 = vpack.c.b16 %v735, %v731
        %v880 = vpack.c.b16 %v736, %v732
        %v881 = vpack.c.b16 %v737, %v733
        %v882 = vpack.c.b16 %v738, %v734
        %v883 = vpack.c.b16 %v743, %v739
        %v884 = vpack.c.b16 %v744, %v740
        %v885 = vpack.c.b16 %v745, %v741
        %v886 = vpack.c.b16 %v746, %v742
        %v887 = vpack.c.b16 %v751, %v747
        %v888 = vpack.c.b16 %v752, %v748
        %v889 = vpack.c.b16 %v753, %v749
        %v890 = vpack.c.b16 %v754, %v750
        %v891 = vpack.c.b16 %v759, %v755
        %v892 = vpack.c.b16 %v760, %v756
        %v893 = vpack.c.b16 %v761, %v757
        %v894 = vpack.c.b16 %v762, %v758
        %v895 = vpack.c.b16 %v767, %v763
        %v896 = vpack.c.b16 %v768, %v764
        %v897 = vpack.c.b16 %v769, %v765
        %v898 = vpack.c.b16 %v770, %v766
        %v899 = vpack.c.b16 %v775, %v771
        %v900 = vpack.c.b16 %v776, %v772
        %v901 = vpack.c.b16 %v777, %v773
        %v902 = vpack.c.b16 %v778, %v774
        %v903 = vpack.c.b16 %v783, %v779
        %v904 = vpack.c.b16 %v784, %v780
        %v905 = vpack.c.b16 %v785, %v781
        %v906 = vpack.c.b16 %v786, %v782
        %v907 = vpack.c.b16 %v791, %v787
        %v908 = vpack.c.b16 %v792, %v788
        %v909 = vpack.c.b16 %v793, %v789
        %v910 = vpack.c.b16 %v794, %v790
        %v911 = vpack.c.b16 %v799, %v795
        %v912 = vpack.c.b16 %v800, %v796
        %v913 = vpack.c.b16 %v801, %v797
        %v914 = vpack.c.b16 %v802, %v798
        %v915 = vpack.c.b16 %v807, %v803
        %v916 = vpack.c.b16 %v808, %v804
        %v917 = vpack.c.b16 %v809, %v805
        %v918 = vpack.c.b16 %v810, %v806
        %v919 = vpack.c.b16 %v815, %v811
        %v920 = vpack.c.b16 %v816, %v812
        %v921 = vpack.c.b16 %v817, %v813
        %v922 = vpack.c.b16 %v818, %v814
        %v923 = vpack.c.b16 %v823, %v819
        %v924 = vpack.c.b16 %v824, %v820
        %v925 = vpack.c.b16 %v825, %v821
        %v926 = vpack.c.b16 %v826, %v822
        %v927 = vpack.c.b16 %v831, %v827
        %v928 = vpack.c.b16 %v832, %v828
        %v929 = vpack.c.b16 %v833, %v829
        %v930 = vpack.c.b16 %v834, %v830
        %1027 = vmatprep.subr.bf16.mxu0 %v836
        %1028 = vmatpush1.bf16.msra.mxu0 %v835
        %1029 = vmatprep.subr.bf16.mxu0 %v840
        %1030 = vmatpush1.bf16.msra.mxu0 %v839
        %1031 = vmatprep.subr.bf16.mxu0 %v844
        %1032 = vmatpush1.bf16.msra.mxu0 %v843
        %1033 = vmatprep.subr.bf16.mxu0 %v848
        %1034 = vmatpush1.bf16.msra.mxu0 %v847
        %1035 = vmatprep.subr.bf16.mxu0 %v852
        %1036 = vmatpush1.bf16.msra.mxu0 %v851
        %1037 = vmatprep.subr.bf16.mxu0 %v856
        %1038 = vmatpush1.bf16.msra.mxu0 %v855
        %1039 = vmatprep.subr.bf16.mxu0 %v860
        %1040 = vmatpush1.bf16.msra.mxu0 %v859
        %1041 = vmatprep.subr.bf16.mxu0 %v864
        %1042 = vmatpush1.bf16.msra.mxu0 %v863
        %1043 = vmatprep.subr.bf16.mxu0 %v868
        %1044 = vmatpush1.bf16.msra.mxu0 %v867
        %1045 = vmatprep.subr.bf16.mxu0 %v872
        %1046 = vmatpush1.bf16.msra.mxu0 %v871
        %1047 = vmatprep.subr.bf16.mxu0 %v876
        %1048 = vmatpush1.bf16.msra.mxu0 %v875
        %1049 = vmatprep.subr.bf16.mxu0 %v880
        %1050 = vmatpush1.bf16.msra.mxu0 %v879
        %1051 = vmatprep.subr.bf16.mxu0 %v884
        %1052 = vmatpush1.bf16.msra.mxu0 %v883
        %1053 = vmatprep.subr.bf16.mxu0 %v888
        %1054 = vmatpush1.bf16.msra.mxu0 %v887
        %1055 = vmatprep.subr.bf16.mxu0 %v892
        %1056 = vmatpush1.bf16.msra.mxu0 %v891
        %1057 = vmatprep.subr.bf16.mxu0 %v896
        %1058 = vmatpush1.bf16.msra.mxu0 %v895
        %1059 = vmatprep.mubr.bf16.mxu0 %v422
        %1060 = vmatmul.mubr.bf16.gmra.mrb[0].mxu0 %v421
        %v1061 = vpop.f32.mrb[0].mxu0
        %v1062 = vadd.f32 0.0, %v1061
        %v1063 = vpop.f32.mrb[0].mxu0
        %v1064 = vadd.f32 0.0, %v1063
        %v1065 = vpop.f32.mrb[0].mxu0
        %v1066 = vadd.f32 0.0, %v1065
        %v1067 = vpop.f32.mrb[0].mxu0
        %v1068 = vadd.f32 0.0, %v1067
        %1069 = vmatprep.mubr.bf16.mxu0 %v425
        %1070 = vmatmul.mubr.bf16.gmra.mrb[0].mxu0 %v424
        %v1071 = vpop.f32.mrb[0].mxu0
        %v1072 = vadd.f32 0.0, %v1071
        %v1073 = vpop.f32.mrb[0].mxu0
        %v1074 = vadd.f32 0.0, %v1073
        %v1075 = vpop.f32.mrb[0].mxu0
        %v1076 = vadd.f32 0.0, %v1075
        %v1077 = vpop.f32.mrb[0].mxu0
        %v1078 = vadd.f32 0.0, %v1077
        %1079 = vdwg.mxu0
        %1080 = vmatprep.subr.bf16.mxu0 %v900
        %1081 = vmatpush1.bf16.msra.mxu0 %v899
        %1082 = vmatprep.subr.bf16.mxu0 %v904
        %1083 = vmatpush1.bf16.msra.mxu0 %v903
        %1084 = vmatprep.subr.bf16.mxu0 %v908
        %1085 = vmatpush1.bf16.msra.mxu0 %v907
        %1086 = vmatprep.subr.bf16.mxu0 %v912
        %1087 = vmatpush1.bf16.msra.mxu0 %v911
        %1088 = vmatprep.subr.bf16.mxu0 %v916
        %1089 = vmatpush1.bf16.msra.mxu0 %v915
        %1090 = vmatprep.subr.bf16.mxu0 %v920
        %1091 = vmatpush1.bf16.msra.mxu0 %v919
        %1092 = vmatprep.subr.bf16.mxu0 %v924
        %1093 = vmatpush1.bf16.msra.mxu0 %v923
        %1094 = vmatprep.subr.bf16.mxu0 %v928
        %1095 = vmatpush1.bf16.msra.mxu0 %v927
        %1096 = vmatprep.subr.bf16.mxu0 0
        %1097 = vmatpush1.bf16.msra.mxu0 0
        %1098 = vmatprep.subr.bf16.mxu0 0
        %1099 = vmatpush1.bf16.msra.mxu0 0
        %1100 = vmatprep.subr.bf16.mxu0 0
        %1101 = vmatpush1.bf16.msra.mxu0 0
        %1102 = vmatprep.subr.bf16.mxu0 0
        %1103 = vmatpush1.bf16.msra.mxu0 0
        %1104 = vmatprep.subr.bf16.mxu0 0
        %1105 = vmatpush1.bf16.msra.mxu0 0
        %1106 = vmatprep.subr.bf16.mxu0 0
        %1107 = vmatpush1.bf16.msra.mxu0 0
        %1108 = vmatprep.subr.bf16.mxu0 0
        %1109 = vmatpush1.bf16.msra.mxu0 0
        %1110 = vmatprep.subr.bf16.mxu0 0
        %1111 = vmatpush1.bf16.msra.mxu0 0
        %1112 = vmatprep.mubr.bf16.mxu0 0
        %1113 = vmatmul.mubr.bf16.gmra.mrb[0].mxu0 %v423
        %v1114 = vpop.f32.mrb[0].mxu0
        %v1115 = vadd.f32 %v1062, %v1114
        %v1116 = vpop.f32.mrb[0].mxu0
        %v1117 = vadd.f32 %v1064, %v1116
        %v1118 = vpop.f32.mrb[0].mxu0
        %v1119 = vadd.f32 %v1066, %v1118
        %v1120 = vpop.f32.mrb[0].mxu0
        %v1121 = vadd.f32 %v1068, %v1120
        %1122 = vmatprep.mubr.bf16.mxu0 0
        %1123 = vmatmul.mubr.bf16.gmra.mrb[0].mxu0 %v426
        %v1124 = vpop.f32.mrb[0].mxu0
        %v1125 = vadd.f32 %v1072, %v1124
        %v1126 = vpop.f32.mrb[0].mxu0
        %v1127 = vadd.f32 %v1074, %v1126
        %v1128 = vpop.f32.mrb[0].mxu0
        %v1129 = vadd.f32 %v1076, %v1128
        %v1130 = vpop.f32.mrb[0].mxu0
        %v1131 = vadd.f32 %v1078, %v1130
        %1132 = vdwg.mxu0
        %1133 = vmatprep.subr.bf16.mxu0 %v838
        %1134 = vmatpush1.bf16.msra.mxu0 %v837
        %1135 = vmatprep.subr.bf16.mxu0 %v842
        %1136 = vmatpush1.bf16.msra.mxu0 %v841
        %1137 = vmatprep.subr.bf16.mxu0 %v846
        %1138 = vmatpush1.bf16.msra.mxu0 %v845
        %1139 = vmatprep.subr.bf16.mxu0 %v850
        %1140 = vmatpush1.bf16.msra.mxu0 %v849
        %1141 = vmatprep.subr.bf16.mxu0 %v854
        %1142 = vmatpush1.bf16.msra.mxu0 %v853
        %1143 = vmatprep.subr.bf16.mxu0 %v858
        %1144 = vmatpush1.bf16.msra.mxu0 %v857
        %1145 = vmatprep.subr.bf16.mxu0 %v862
        %1146 = vmatpush1.bf16.msra.mxu0 %v861
        %1147 = vmatprep.subr.bf16.mxu0 %v866
        %1148 = vmatpush1.bf16.msra.mxu0 %v865
        %1149 = vmatprep.subr.bf16.mxu0 %v870
        %1150 = vmatpush1.bf16.msra.mxu0 %v869
        %1151 = vmatprep.subr.bf16.mxu0 %v874
        %1152 = vmatpush1.bf16.msra.mxu0 %v873
        %1153 = vmatprep.subr.bf16.mxu0 %v878
        %1154 = vmatpush1.bf16.msra.mxu0 %v877
        %1155 = vmatprep.subr.bf16.mxu0 %v882
        %1156 = vmatpush1.bf16.msra.mxu0 %v881
        %1157 = vmatprep.subr.bf16.mxu0 %v886
        %1158 = vmatpush1.bf16.msra.mxu0 %v885
        %1159 = vmatprep.subr.bf16.mxu0 %v890
        %1160 = vmatpush1.bf16.msra.mxu0 %v889
        %1161 = vmatprep.subr.bf16.mxu0 %v894
        %1162 = vmatpush1.bf16.msra.mxu0 %v893
        %1163 = vmatprep.subr.bf16.mxu0 %v898
        %1164 = vmatpush1.bf16.msra.mxu0 %v897
        %1165 = vmatprep.mubr.bf16.mxu0 %v422
        %1166 = vmatmul.mubr.bf16.gmra.mrb[0].mxu0 %v421
        %v1167 = vpop.f32.mrb[0].mxu0
        %v1168 = vadd.f32 0.0, %v1167
        %v1169 = vpop.f32.mrb[0].mxu0
        %v1170 = vadd.f32 0.0, %v1169
        %v1171 = vpop.f32.mrb[0].mxu0
        %v1172 = vadd.f32 0.0, %v1171
        %v1173 = vpop.f32.mrb[0].mxu0
        %v1174 = vadd.f32 0.0, %v1173
        %1175 = vmatprep.mubr.bf16.mxu0 %v425
        %1176 = vmatmul.mubr.bf16.gmra.mrb[0].mxu0 %v424
        %v1177 = vpop.f32.mrb[0].mxu0
        %v1178 = vadd.f32 0.0, %v1177
        %v1179 = vpop.f32.mrb[0].mxu0
        %v1180 = vadd.f32 0.0, %v1179
        %v1181 = vpop.f32.mrb[0].mxu0
        %v1182 = vadd.f32 0.0, %v1181
        %v1183 = vpop.f32.mrb[0].mxu0
        %v1184 = vadd.f32 0.0, %v1183
        %1185 = vdwg.mxu0
        %1186 = vmatprep.subr.bf16.mxu0 %v902
        %1187 = vmatpush1.bf16.msra.mxu0 %v901
        %1188 = vmatprep.subr.bf16.mxu0 %v906
        %1189 = vmatpush1.bf16.msra.mxu0 %v905
        %1190 = vmatprep.subr.bf16.mxu0 %v910
        %1191 = vmatpush1.bf16.msra.mxu0 %v909
        %1192 = vmatprep.subr.bf16.mxu0 %v914
        %1193 = vmatpush1.bf16.msra.mxu0 %v913
        %1194 = vmatprep.subr.bf16.mxu0 %v918
        %1195 = vmatpush1.bf16.msra.mxu0 %v917
        %1196 = vmatprep.subr.bf16.mxu0 %v922
        %1197 = vmatpush1.bf16.msra.mxu0 %v921
        %1198 = vmatprep.subr.bf16.mxu0 %v926
        %1199 = vmatpush1.bf16.msra.mxu0 %v925
        %1200 = vmatprep.subr.bf16.mxu0 %v930
        %1201 = vmatpush1.bf16.msra.mxu0 %v929
        %1202 = vmatprep.subr.bf16.mxu0 0
        %1203 = vmatpush1.bf16.msra.mxu0 0
        %1204 = vmatprep.subr.bf16.mxu0 0
        %1205 = vmatpush1.bf16.msra.mxu0 0
        %1206 = vmatprep.subr.bf16.mxu0 0
        %1207 = vmatpush1.bf16.msra.mxu0 0
        %1208 = vmatprep.subr.bf16.mxu0 0
        %1209 = vmatpush1.bf16.msra.mxu0 0
        %1210 = vmatprep.subr.bf16.mxu0 0
        %1211 = vmatpush1.bf16.msra.mxu0 0
        %1212 = vmatprep.subr.bf16.mxu0 0
        %1213 = vmatpush1.bf16.msra.mxu0 0
        %1214 = vmatprep.subr.bf16.mxu0 0
        %1215 = vmatpush1.bf16.msra.mxu0 0
        %1216 = vmatprep.subr.bf16.mxu0 0
        %1217 = vmatpush1.bf16.msra.mxu0 0
        %1218 = vmatprep.mubr.bf16.mxu0 0
        %1219 = vmatmul.mubr.bf16.gmra.mrb[0].mxu0 %v423
        %v1220 = vpop.f32.mrb[0].mxu0
        %v1221 = vadd.f32 %v1168, %v1220
        %v1222 = vpop.f32.mrb[0].mxu0
        %v1223 = vadd.f32 %v1170, %v1222
        %v1224 = vpop.f32.mrb[0].mxu0
        %v1225 = vadd.f32 %v1172, %v1224
        %v1226 = vpop.f32.mrb[0].mxu0
        %v1227 = vadd.f32 %v1174, %v1226
        %1228 = vmatprep.mubr.bf16.mxu0 0
        %1229 = vmatmul.mubr.bf16.gmra.mrb[0].mxu0 %v426
        %v1230 = vpop.f32.mrb[0].mxu0
        %v1231 = vadd.f32 %v1178, %v1230
        %v1232 = vpop.f32.mrb[0].mxu0
        %v1233 = vadd.f32 %v1180, %v1232
        %v1234 = vpop.f32.mrb[0].mxu0
        %v1235 = vadd.f32 %v1182, %v1234
        %v1236 = vpop.f32.mrb[0].mxu0
        %v1237 = vadd.f32 %v1184, %v1236
        %1238 = vdwg.mxu0
        %v1239 = vadd.f32 %v435, %v1115
        %v1240 = vadd.f32 %v436, %v1117
        %v1241 = vadd.f32 %v437, %v1221
        %v1242 = vadd.f32 %v438, %v1223
        %v1243 = vadd.f32 %v439, %v1119
        %v1244 = vadd.f32 %v440, %v1121
        %v1245 = vadd.f32 %v441, %v1225
        %v1246 = vadd.f32 %v442, %v1227
        %v1247 = vadd.f32 %v443, %v1125
        %v1248 = vadd.f32 %v444, %v1127
        %v1249 = vadd.f32 %v445, %v1231
        %v1250 = vadd.f32 %v446, %v1233
        %v1251 = vadd.f32 %v447, %v1129
        %v1252 = vadd.f32 %v448, %v1131
        %v1253 = vadd.f32 %v449, %v1235
        %v1254 = vadd.f32 %v450, %v1237
        %v1255 = vxor.u32 %v1239, 2147483648
        %v1256 = vxor.u32 %v1243, 2147483648
        %v1257 = vxor.u32 %v1247, 2147483648
        %v1258 = vxor.u32 %v1251, 2147483648
        %v1259 = vmul.f32 %v1255, 1.442695
        %v1260 = vpow.pop %v1259
        %v1261 = vmul.f32 %v1256, 1.442695
        %v1262 = vpow.pop %v1261
        %v1263 = vmul.f32 %v1257, 1.442695
        %v1264 = vpow.pop %v1263
        %v1265 = vmul.f32 %v1258, 1.442695
        %v1266 = vpow.pop %v1265
        %v1267 = vadd.f32 %v1260, 1.0
        %v1268 = vadd.f32 %v1262, 1.0
        %v1269 = vadd.f32 %v1264, 1.0
        %v1270 = vadd.f32 %v1266, 1.0
        %v1271 = vrcp.pop %v1267
        %v1272 = vmul.f32 1.0, %v1271
        %v1273 = vrcp.pop %v1268
        %v1274 = vmul.f32 1.0, %v1273
        %v1275 = vrcp.pop %v1269
        %v1276 = vmul.f32 1.0, %v1275
        %v1277 = vrcp.pop %v1270
        %v1278 = vmul.f32 1.0, %v1277
        %v1279 = vxor.u32 %v1240, 2147483648
        %v1280 = vxor.u32 %v1244, 2147483648
        %v1281 = vxor.u32 %v1248, 2147483648
        %v1282 = vxor.u32 %v1252, 2147483648
        %v1283 = vmul.f32 %v1279, 1.442695
        %v1284 = vpow.pop %v1283
        %v1285 = vmul.f32 %v1280, 1.442695
        %v1286 = vpow.pop %v1285
        %v1287 = vmul.f32 %v1281, 1.442695
        %v1288 = vpow.pop %v1287
        %v1289 = vmul.f32 %v1282, 1.442695
        %v1290 = vpow.pop %v1289
        %v1291 = vadd.f32 %v1284, 1.0
        %v1292 = vadd.f32 %v1286, 1.0
        %v1293 = vadd.f32 %v1288, 1.0
        %v1294 = vadd.f32 %v1290, 1.0
        %v1295 = vrcp.pop %v1291
        %v1296 = vmul.f32 1.0, %v1295
        %v1297 = vrcp.pop %v1292
        %v1298 = vmul.f32 1.0, %v1297
        %v1299 = vrcp.pop %v1293
        %v1300 = vmul.f32 1.0, %v1299
        %v1301 = vrcp.pop %v1294
        %v1302 = vmul.f32 1.0, %v1301
        %v1303 = vtanh.pop %v1241
        %v1304 = vtanh.pop %v1245
        %v1305 = vtanh.pop %v1249
        %v1306 = vtanh.pop %v1253
        %v1307 = vxor.u32 %v1242, 2147483648
        %v1308 = vxor.u32 %v1246, 2147483648
        %v1309 = vxor.u32 %v1250, 2147483648
        %v1310 = vxor.u32 %v1254, 2147483648
        %v1311 = vmul.f32 %v1307, 1.442695
        %v1312 = vpow.pop %v1311
        %v1313 = vmul.f32 %v1308, 1.442695
        %v1314 = vpow.pop %v1313
        %v1315 = vmul.f32 %v1309, 1.442695
        %v1316 = vpow.pop %v1315
        %v1317 = vmul.f32 %v1310, 1.442695
        %v1318 = vpow.pop %v1317
        %v1319 = vadd.f32 %v1312, 1.0
        %v1320 = vadd.f32 %v1314, 1.0
        %v1321 = vadd.f32 %v1316, 1.0
        %v1322 = vadd.f32 %v1318, 1.0
        %v1323 = vrcp.pop %v1319
        %v1324 = vmul.f32 1.0, %v1323
        %v1325 = vrcp.pop %v1320
        %v1326 = vmul.f32 1.0, %v1325
        %v1327 = vrcp.pop %v1321
        %v1328 = vmul.f32 1.0, %v1327
        %v1329 = vrcp.pop %v1322
        %v1330 = vmul.f32 1.0, %v1329
        %v1331 = vld [vmem:[#allocation3] sm:$0xff]
        %v1332 = vld [vmem:[#allocation3 + $0x8] sm:$0xff]
        %v1333 = vld [vmem:[#allocation3 + $0x10] sm:$0xff]
        %v1334 = vld [vmem:[#allocation3 + $0x18] sm:$0xff]
        %v1335 = vmul.f32 %v1296, %v1331
        %v1336 = vmul.f32 %v1298, %v1332
        %v1337 = vmul.f32 %v1300, %v1333
        %v1338 = vmul.f32 %v1302, %v1334
        %v1339 = vmul.f32 %v1272, %v1303
        %v1340 = vmul.f32 %v1274, %v1304
        %v1341 = vmul.f32 %v1276, %v1305
        %v1342 = vmul.f32 %v1278, %v1306
        %v1343 = vadd.f32 %v1335, %v1339
        %v1344 = vadd.f32 %v1336, %v1340
        %v1345 = vadd.f32 %v1337, %v1341
        %v1346 = vadd.f32 %v1338, %v1342
        %v1347 = vtanh.pop %v1343
        %v1348 = vtanh.pop %v1344
        %v1349 = vtanh.pop %v1345
        %v1350 = vtanh.pop %v1346
        %v1351 = vmul.f32 %v1324, %v1347
        %v1352 = vmul.f32 %v1326, %v1348
        %v1353 = vmul.f32 %v1328, %v1349
        %v1354 = vmul.f32 %v1330, %v1350
        %1355 = vst [vmem:[#allocation2] sm:$0xff] %v1351
        %1356 = vst [vmem:[#allocation2 + $0x8] sm:$0xff] %v1352
        %1357 = vst [vmem:[#allocation2 + $0x10] sm:$0xff] %v1353
        %1358 = vst [vmem:[#allocation2 + $0x18] sm:$0xff] %v1354
        %1359 = vst [vmem:[#allocation3] sm:$0xff] %v1343
        %1360 = vst [vmem:[#allocation3 + $0x8] sm:$0xff] %v1344
        %1361 = vst [vmem:[#allocation3 + $0x10] sm:$0xff] %v1345
        %1362 = vst [vmem:[#allocation3 + $0x18] sm:$0xff] %v1346
        %1363 = vst [vmem:[%s291] sm:$0xff] %v1351
        %1364 = vst [vmem:[%s291 + $0x8] sm:$0xff] %v1352
        %1365 = vst [vmem:[%s291 + $0x10] sm:$0xff] %v1353
        %1366 = vst [vmem:[%s291 + $0x18] sm:$0xff] %v1354
        %1367 = vst [vmem:[%s300] sm:$0xff] %v1343
        %1368 = vst [vmem:[%s300 + $0x8] sm:$0xff] %v1344
        %1369 = vst [vmem:[%s300 + $0x10] sm:$0xff] %v1345
        %1370 = vst [vmem:[%s300 + $0x18] sm:$0xff] %v1346
        %s1371 = smul.u32 %s20, 2
        %s1372 = ssub.s32 3, %s1371
        %s1373 = smul.u32 %s19, %s1372
        %s1374 = sadd.s32 %s20, %s1373
        %p1375 = scmp.lt.s32.totalorder %s19, 1
        %s1376 = scalar_select %p1375, %s19, 1
        %p1377 = scmp.lt.s32.totalorder %s1374, 3
        %s1378 = scalar_select %p1377, %s1374, 3
        %s1379 = smul.addr %s1378, 4
        %s1380 = smul.addr %s1376, 16
        %s1381 = sadd.s32 %s1379, %s1380
        %s1382 = smul.addr %s1381, 8
        %s1383 = scalar_lea.vmem %s2, %s1382
        %p1384 = scmp.lt.s32.totalorder %s19, 1
        %s1385 = scalar_select %p1384, %s19, 1
        %s1386 = smul.addr %s1385, 4
        %s1387 = smul.addr %s1386, 8
        %s1388 = scalar_lea.vmem %s3, %s1387
        // Predicated region
        $region56: #{straightnet_back_lc_forward.3} parent=46 // pred_check
          %p1389 = pneg %p117
        $region57: #{straightnet_back_lc_forward.3} parent=46 // pred_check_branch
          %1391 = sbr.rel (%p1389) target = $region59
        $region58: #{straightnet_back_lc_forward.3} parent=46 // pred_region
          %s1392 = smul.u32 %s20, 2
          %s1393 = ssub.s32 3, %s1392
          %s1394 = smul.u32 %s19, %s1393
          %s1395 = sadd.s32 %s20, %s1394
        $region59: #{straightnet_back_lc_forward.3} parent=46 // pred_fallthru
          _
        // Predicated region
        $region60: #{straightnet_back_lc_forward.3} parent=46 // pred_check
          %p1396 = pneg %p143
        $region61: #{straightnet_back_lc_forward.3} parent=46 // pred_check_branch
          %1398 = sbr.rel (%p1396) target = $region63
        $region62: #{straightnet_back_lc_forward.3} parent=46 // pred_region
          _
        $region63: #{straightnet_back_lc_forward.3} parent=46 // pred_fallthru
          _
      $region47: #{straightnet_back_lc_forward.3} parent=5 // pred_fallthru
        _
      %p1399 = scmp.le.s32.totalorder 2, %s10
      // Predicated region
      $region64: #{straightnet_back_lc_forward.3} parent=5 // pred_check
        %p1400 = pneg %p1399
      $region65: #{straightnet_back_lc_forward.3} parent=5 // pred_check_branch
        %1402 = sbr.rel (%p1400) target = $region67
      $region66: #{straightnet_back_lc_forward.3} parent=5 // pred_region
        %s1403 = ssub.s32 %s10, 2
        // Predicated region
        $region68: #{straightnet_back_lc_forward.3} parent=66 // pred_check
          %p1404 = pneg %p123
        $region69: #{straightnet_back_lc_forward.3} parent=66 // pred_check_branch
          %1406 = sbr.rel (%p1404) target = $region71
        $region70: #{straightnet_back_lc_forward.3} parent=66 // pred_region
          %s1407 = smul.u32 %s22, 2
          %s1408 = ssub.s32 3, %s1407
          %s1409 = smul.u32 %s21, %s1408
          %s1410 = sadd.s32 %s22, %s1409
          %p1411 = scmp.lt.s32.totalorder %s21, 1
          %s1412 = scalar_select %p1411, %s21, 1
          %p1413 = scmp.lt.s32.totalorder %s1410, 3
          %s1414 = scalar_select %p1413, %s1410, 3
          %s1415 = smul.addr %s1414, 4
          %s1416 = smul.addr %s1412, 16
          %s1417 = sadd.s32 %s1415, %s1416
          %s1418 = smul.addr %s1417, 8
          %s1419 = scalar_lea.vmem %s2, %s1418
        $region71: #{straightnet_back_lc_forward.3} parent=66 // pred_fallthru
          _
        // Predicated region
        $region72: #{straightnet_back_lc_forward.3} parent=66 // pred_check
          %p1420 = pneg %p149
        $region73: #{straightnet_back_lc_forward.3} parent=66 // pred_check_branch
          %1422 = sbr.rel (%p1420) target = $region75
        $region74: #{straightnet_back_lc_forward.3} parent=66 // pred_region
          %p1423 = scmp.lt.s32.totalorder %s21, 1
          %s1424 = scalar_select %p1423, %s21, 1
          %s1425 = smul.addr %s1424, 4
          %s1426 = smul.addr %s1425, 8
          %s1427 = scalar_lea.vmem %s3, %s1426
        $region75: #{straightnet_back_lc_forward.3} parent=66 // pred_fallthru
          _
      $region67: #{straightnet_back_lc_forward.3} parent=5 // pred_fallthru
        _
    $region6: #{straightnet_back_lc_forward.3} parent=1 // loop_footer
      %s14 = sadd.s32 1, %s10
    $region7: #{straightnet_back_lc_forward.3} parent=1 // loop_footer_branch
      %9 = sbr.rel target = $region3
    $region8: #{straightnet_back_lc_forward.3} parent=1 // loop_exit
      _

// kernel: squeeze.11
$region0: #{squeeze.11}
  %s0 = inlined_call_operand.vmem [shape: f32[1,32,128], index: 0, kind: input, shape index: {}]
  %s1 = inlined_call_operand.vmem [shape: f32[2,16,16,8], index: 1, kind: output, shape index: {}]
  $region1: #{squeeze.11} parent=0
    #allocation0 [shape = 'u8[524288]{0}', space=vmem, size = 0x80000, scoped, tag = 'scoped mem for output reshape']
    %v2 = vld [vmem:[%s0] sm:$0xff]
    %vm3 = vcmask 130048
    %4 = vst.msk [vmem:[#allocation0] ss:$8 sm:$0xf] %vm3, %v2
    %5 = vst.msk [vmem:[#allocation0] ss:$8 sm:$0xf0] %vm3, %v2
    %s6 = scalar_lea.vmem %s0, 8
    %v7 = vld [vmem:[%s6] sm:$0xff]
    %vm8 = vcmask 130048
    %s9 = scalar_lea.vmem [#allocation0], 64
    %10 = vst.msk [vmem:[%s9] ss:$8 sm:$0xf] %vm8, %v7
    %s11 = scalar_lea.vmem [#allocation0], 64
    %12 = vst.msk [vmem:[%s11] ss:$8 sm:$0xf0] %vm8, %v7
    %s13 = scalar_lea.vmem %s0, 16
    %v14 = vld [vmem:[%s13] sm:$0xff]
    %vm15 = vcmask 130048
    %s16 = scalar_lea.vmem [#allocation0], 128
    %17 = vst.msk [vmem:[%s16] ss:$8 sm:$0xf] %vm15, %v14
    %s18 = scalar_lea.vmem [#allocation0], 128
    %19 = vst.msk [vmem:[%s18] ss:$8 sm:$0xf0] %vm15, %v14
    %s20 = scalar_lea.vmem %s0, 24
    %v21 = vld [vmem:[%s20] sm:$0xff]
    %vm22 = vcmask 130048
    %s23 = scalar_lea.vmem [#allocation0], 192
    %24 = vst.msk [vmem:[%s23] ss:$8 sm:$0xf] %vm22, %v21
    %s25 = scalar_lea.vmem [#allocation0], 192
    %26 = vst.msk [vmem:[%s25] ss:$8 sm:$0xf0] %vm22, %v21
    %s27 = scalar_lea.vmem %s0, 32
    %v28 = vld [vmem:[%s27] sm:$0xff]
    %vm29 = vcmask 130048
    %s30 = scalar_lea.vmem [#allocation0], 256
    %31 = vst.msk [vmem:[%s30] ss:$8 sm:$0xf] %vm29, %v28
    %s32 = scalar_lea.vmem [#allocation0], 256
    %33 = vst.msk [vmem:[%s32] ss:$8 sm:$0xf0] %vm29, %v28
    %s34 = scalar_lea.vmem %s0, 40
    %v35 = vld [vmem:[%s34] sm:$0xff]
    %vm36 = vcmask 130048
    %s37 = scalar_lea.vmem [#allocation0], 320
    %38 = vst.msk [vmem:[%s37] ss:$8 sm:$0xf] %vm36, %v35
    %s39 = scalar_lea.vmem [#allocation0], 320
    %40 = vst.msk [vmem:[%s39] ss:$8 sm:$0xf0] %vm36, %v35
    %s41 = scalar_lea.vmem %s0, 48
    %v42 = vld [vmem:[%s41] sm:$0xff]
    %vm43 = vcmask 130048
    %s44 = scalar_lea.vmem [#allocation0], 384
    %45 = vst.msk [vmem:[%s44] ss:$8 sm:$0xf] %vm43, %v42
    %s46 = scalar_lea.vmem [#allocation0], 384
    %47 = vst.msk [vmem:[%s46] ss:$8 sm:$0xf0] %vm43, %v42
    %s48 = scalar_lea.vmem %s0, 56
    %v49 = vld [vmem:[%s48] sm:$0xff]
    %vm50 = vcmask 130048
    %s51 = scalar_lea.vmem [#allocation0], 448
    %52 = vst.msk [vmem:[%s51] ss:$8 sm:$0xf] %vm50, %v49
    %s53 = scalar_lea.vmem [#allocation0], 448
    %54 = vst.msk [vmem:[%s53] ss:$8 sm:$0xf0] %vm50, %v49
    %s55 = scalar_lea.vmem %s0, 64
    %v56 = vld [vmem:[%s55] sm:$0xff]
    %vm57 = vcmask 130048
    %s58 = scalar_lea.vmem [#allocation0], 512
    %59 = vst.msk [vmem:[%s58] ss:$8 sm:$0xf] %vm57, %v56
    %s60 = scalar_lea.vmem [#allocation0], 512
    %61 = vst.msk [vmem:[%s60] ss:$8 sm:$0xf0] %vm57, %v56
    %s62 = scalar_lea.vmem %s0, 72
    %v63 = vld [vmem:[%s62] sm:$0xff]
    %vm64 = vcmask 130048
    %s65 = scalar_lea.vmem [#allocation0], 576
    %66 = vst.msk [vmem:[%s65] ss:$8 sm:$0xf] %vm64, %v63
    %s67 = scalar_lea.vmem [#allocation0], 576
    %68 = vst.msk [vmem:[%s67] ss:$8 sm:$0xf0] %vm64, %v63
    %s69 = scalar_lea.vmem %s0, 80
    %v70 = vld [vmem:[%s69] sm:$0xff]
    %vm71 = vcmask 130048
    %s72 = scalar_lea.vmem [#allocation0], 640
    %73 = vst.msk [vmem:[%s72] ss:$8 sm:$0xf] %vm71, %v70
    %s74 = scalar_lea.vmem [#allocation0], 640
    %75 = vst.msk [vmem:[%s74] ss:$8 sm:$0xf0] %vm71, %v70
    %s76 = scalar_lea.vmem %s0, 88
    %v77 = vld [vmem:[%s76] sm:$0xff]
    %vm78 = vcmask 130048
    %s79 = scalar_lea.vmem [#allocation0], 704
    %80 = vst.msk [vmem:[%s79] ss:$8 sm:$0xf] %vm78, %v77
    %s81 = scalar_lea.vmem [#allocation0], 704
    %82 = vst.msk [vmem:[%s81] ss:$8 sm:$0xf0] %vm78, %v77
    %s83 = scalar_lea.vmem %s0, 96
    %v84 = vld [vmem:[%s83] sm:$0xff]
    %vm85 = vcmask 130048
    %s86 = scalar_lea.vmem [#allocation0], 768
    %87 = vst.msk [vmem:[%s86] ss:$8 sm:$0xf] %vm85, %v84
    %s88 = scalar_lea.vmem [#allocation0], 768
    %89 = vst.msk [vmem:[%s88] ss:$8 sm:$0xf0] %vm85, %v84
    %s90 = scalar_lea.vmem %s0, 104
    %v91 = vld [vmem:[%s90] sm:$0xff]
    %vm92 = vcmask 130048
    %s93 = scalar_lea.vmem [#allocation0], 832
    %94 = vst.msk [vmem:[%s93] ss:$8 sm:$0xf] %vm92, %v91
    %s95 = scalar_lea.vmem [#allocation0], 832
    %96 = vst.msk [vmem:[%s95] ss:$8 sm:$0xf0] %vm92, %v91
    %s97 = scalar_lea.vmem %s0, 112
    %v98 = vld [vmem:[%s97] sm:$0xff]
    %vm99 = vcmask 130048
    %s100 = scalar_lea.vmem [#allocation0], 896
    %101 = vst.msk [vmem:[%s100] ss:$8 sm:$0xf] %vm99, %v98
    %s102 = scalar_lea.vmem [#allocation0], 896
    %103 = vst.msk [vmem:[%s102] ss:$8 sm:$0xf0] %vm99, %v98
    %s104 = scalar_lea.vmem %s0, 120
    %v105 = vld [vmem:[%s104] sm:$0xff]
    %vm106 = vcmask 130048
    %s107 = scalar_lea.vmem [#allocation0], 960
    %108 = vst.msk [vmem:[%s107] ss:$8 sm:$0xf] %vm106, %v105
    %s109 = scalar_lea.vmem [#allocation0], 960
    %110 = vst.msk [vmem:[%s109] ss:$8 sm:$0xf0] %vm106, %v105
    %v111 = vld [vmem:[%s0] sm:$0xff]
    %112 = vrot.lane.b32.xlu0 %v111, 112
    %v113 = vpop.permute.xlu0 %112
    %vm114 = vcmask 130048
    %s115 = scalar_lea.vmem [#allocation0], 1
    %116 = vst.msk [vmem:[%s115] ss:$8 sm:$0xf] %vm114, %v113
    %s117 = scalar_lea.vmem [#allocation0], 1
    %118 = vst.msk [vmem:[%s117] ss:$8 sm:$0xf0] %vm114, %v113
    %s119 = scalar_lea.vmem %s0, 8
    %v120 = vld [vmem:[%s119] sm:$0xff]
    %121 = vrot.lane.b32.xlu0 %v120, 112
    %v122 = vpop.permute.xlu0 %121
    %vm123 = vcmask 130048
    %s124 = scalar_lea.vmem [#allocation0], 65
    %125 = vst.msk [vmem:[%s124] ss:$8 sm:$0xf] %vm123, %v122
    %s126 = scalar_lea.vmem [#allocation0], 65
    %127 = vst.msk [vmem:[%s126] ss:$8 sm:$0xf0] %vm123, %v122
    %s128 = scalar_lea.vmem %s0, 16
    %v129 = vld [vmem:[%s128] sm:$0xff]
    %130 = vrot.lane.b32.xlu0 %v129, 112
    %v131 = vpop.permute.xlu0 %130
    %vm132 = vcmask 130048
    %s133 = scalar_lea.vmem [#allocation0], 129
    %134 = vst.msk [vmem:[%s133] ss:$8 sm:$0xf] %vm132, %v131
    %s135 = scalar_lea.vmem [#allocation0], 129
    %136 = vst.msk [vmem:[%s135] ss:$8 sm:$0xf0] %vm132, %v131
    %s137 = scalar_lea.vmem %s0, 24
    %v138 = vld [vmem:[%s137] sm:$0xff]
    %139 = vrot.lane.b32.xlu0 %v138, 112
    %v140 = vpop.permute.xlu0 %139
    %vm141 = vcmask 130048
    %s142 = scalar_lea.vmem [#allocation0], 193
    %143 = vst.msk [vmem:[%s142] ss:$8 sm:$0xf] %vm141, %v140
    %s144 = scalar_lea.vmem [#allocation0], 193
    %145 = vst.msk [vmem:[%s144] ss:$8 sm:$0xf0] %vm141, %v140
    %s146 = scalar_lea.vmem %s0, 32
    %v147 = vld [vmem:[%s146] sm:$0xff]
    %148 = vrot.lane.b32.xlu0 %v147, 112
    %v149 = vpop.permute.xlu0 %148
    %vm150 = vcmask 130048
    %s151 = scalar_lea.vmem [#allocation0], 257
    %152 = vst.msk [vmem:[%s151] ss:$8 sm:$0xf] %vm150, %v149
    %s153 = scalar_lea.vmem [#allocation0], 257
    %154 = vst.msk [vmem:[%s153] ss:$8 sm:$0xf0] %vm150, %v149
    %s155 = scalar_lea.vmem %s0, 40
    %v156 = vld [vmem:[%s155] sm:$0xff]
    %157 = vrot.lane.b32.xlu0 %v156, 112
    %v158 = vpop.permute.xlu0 %157
    %vm159 = vcmask 130048
    %s160 = scalar_lea.vmem [#allocation0], 321
    %161 = vst.msk [vmem:[%s160] ss:$8 sm:$0xf] %vm159, %v158
    %s162 = scalar_lea.vmem [#allocation0], 321
    %163 = vst.msk [vmem:[%s162] ss:$8 sm:$0xf0] %vm159, %v158
    %s164 = scalar_lea.vmem %s0, 48
    %v165 = vld [vmem:[%s164] sm:$0xff]
    %166 = vrot.lane.b32.xlu0 %v165, 112
    %v167 = vpop.permute.xlu0 %166
    %vm168 = vcmask 130048
    %s169 = scalar_lea.vmem [#allocation0], 385
    %170 = vst.msk [vmem:[%s169] ss:$8 sm:$0xf] %vm168, %v167
    %s171 = scalar_lea.vmem [#allocation0], 385
    %172 = vst.msk [vmem:[%s171] ss:$8 sm:$0xf0] %vm168, %v167
    %s173 = scalar_lea.vmem %s0, 56
    %v174 = vld [vmem:[%s173] sm:$0xff]
    %175 = vrot.lane.b32.xlu0 %v174, 112
    %v176 = vpop.permute.xlu0 %175
    %vm177 = vcmask 130048
    %s178 = scalar_lea.vmem [#allocation0], 449
    %179 = vst.msk [vmem:[%s178] ss:$8 sm:$0xf] %vm177, %v176
    %s180 = scalar_lea.vmem [#allocation0], 449
    %181 = vst.msk [vmem:[%s180] ss:$8 sm:$0xf0] %vm177, %v176
    %s182 = scalar_lea.vmem %s0, 64
    %v183 = vld [vmem:[%s182] sm:$0xff]
    %184 = vrot.lane.b32.xlu0 %v183, 112
    %v185 = vpop.permute.xlu0 %184
    %vm186 = vcmask 130048
    %s187 = scalar_lea.vmem [#allocation0], 513
    %188 = vst.msk [vmem:[%s187] ss:$8 sm:$0xf] %vm186, %v185
    %s189 = scalar_lea.vmem [#allocation0], 513
    %190 = vst.msk [vmem:[%s189] ss:$8 sm:$0xf0] %vm186, %v185
    %s191 = scalar_lea.vmem %s0, 72
    %v192 = vld [vmem:[%s191] sm:$0xff]
    %193 = vrot.lane.b32.xlu0 %v192, 112
    %v194 = vpop.permute.xlu0 %193
    %vm195 = vcmask 130048
    %s196 = scalar_lea.vmem [#allocation0], 577
    %197 = vst.msk [vmem:[%s196] ss:$8 sm:$0xf] %vm195, %v194
    %s198 = scalar_lea.vmem [#allocation0], 577
    %199 = vst.msk [vmem:[%s198] ss:$8 sm:$0xf0] %vm195, %v194
    %s200 = scalar_lea.vmem %s0, 80
    %v201 = vld [vmem:[%s200] sm:$0xff]
    %202 = vrot.lane.b32.xlu0 %v201, 112
    %v203 = vpop.permute.xlu0 %202
    %vm204 = vcmask 130048
    %s205 = scalar_lea.vmem [#allocation0], 641
    %206 = vst.msk [vmem:[%s205] ss:$8 sm:$0xf] %vm204, %v203
    %s207 = scalar_lea.vmem [#allocation0], 641
    %208 = vst.msk [vmem:[%s207] ss:$8 sm:$0xf0] %vm204, %v203
    %s209 = scalar_lea.vmem %s0, 88
    %v210 = vld [vmem:[%s209] sm:$0xff]
    %211 = vrot.lane.b32.xlu0 %v210, 112
    %v212 = vpop.permute.xlu0 %211
    %vm213 = vcmask 130048
    %s214 = scalar_lea.vmem [#allocation0], 705
    %215 = vst.msk [vmem:[%s214] ss:$8 sm:$0xf] %vm213, %v212
    %s216 = scalar_lea.vmem [#allocation0], 705
    %217 = vst.msk [vmem:[%s216] ss:$8 sm:$0xf0] %vm213, %v212
    %s218 = scalar_lea.vmem %s0, 96
    %v219 = vld [vmem:[%s218] sm:$0xff]
    %220 = vrot.lane.b32.xlu0 %v219, 112
    %v221 = vpop.permute.xlu0 %220
    %vm222 = vcmask 130048
    %s223 = scalar_lea.vmem [#allocation0], 769
    %224 = vst.msk [vmem:[%s223] ss:$8 sm:$0xf] %vm222, %v221
    %s225 = scalar_lea.vmem [#allocation0], 769
    %226 = vst.msk [vmem:[%s225] ss:$8 sm:$0xf0] %vm222, %v221
    %s227 = scalar_lea.vmem %s0, 104
    %v228 = vld [vmem:[%s227] sm:$0xff]
    %229 = vrot.lane.b32.xlu0 %v228, 112
    %v230 = vpop.permute.xlu0 %229
    %vm231 = vcmask 130048
    %s232 = scalar_lea.vmem [#allocation0], 833
    %233 = vst.msk [vmem:[%s232] ss:$8 sm:$0xf] %vm231, %v230
    %s234 = scalar_lea.vmem [#allocation0], 833
    %235 = vst.msk [vmem:[%s234] ss:$8 sm:$0xf0] %vm231, %v230
    %s236 = scalar_lea.vmem %s0, 112
    %v237 = vld [vmem:[%s236] sm:$0xff]
    %238 = vrot.lane.b32.xlu0 %v237, 112
    %v239 = vpop.permute.xlu0 %238
    %vm240 = vcmask 130048
    %s241 = scalar_lea.vmem [#allocation0], 897
    %242 = vst.msk [vmem:[%s241] ss:$8 sm:$0xf] %vm240, %v239
    %s243 = scalar_lea.vmem [#allocation0], 897
    %244 = vst.msk [vmem:[%s243] ss:$8 sm:$0xf0] %vm240, %v239
    %s245 = scalar_lea.vmem %s0, 120
    %v246 = vld [vmem:[%s245] sm:$0xff]
    %247 = vrot.lane.b32.xlu0 %v246, 112
    %v248 = vpop.permute.xlu0 %247
    %vm249 = vcmask 130048
    %s250 = scalar_lea.vmem [#allocation0], 961
    %251 = vst.msk [vmem:[%s250] ss:$8 sm:$0xf] %vm249, %v248
    %s252 = scalar_lea.vmem [#allocation0], 961
    %253 = vst.msk [vmem:[%s252] ss:$8 sm:$0xf0] %vm249, %v248
    %s255 = sshllo.u32 0, 2
    %v257 = vld [vmem:[#allocation0] sm:%s255]
    %s258 = sshllo.u32 0, 2
    %259 = vst [vmem:[%s1] sm:%s258] %v257
    %s260 = scalar_lea.vmem [#allocation0], 8
    %v261 = vld [vmem:[%s260] sm:%s255]
    %s262 = sshllo.u32 0, 2
    %s263 = scalar_lea.vmem %s1, 2
    %264 = vst [vmem:[%s263] sm:%s262] %v261
    %s265 = scalar_lea.vmem [#allocation0], 16
    %v266 = vld [vmem:[%s265] sm:%s255]
    %s267 = sshllo.u32 0, 2
    %s268 = smul.addr 2, 2
    %s269 = scalar_lea.vmem %s1, %s268
    %270 = vst [vmem:[%s269] sm:%s267] %v266
    %s271 = scalar_lea.vmem [#allocation0], 24
    %v272 = vld [vmem:[%s271] sm:%s255]
    %s273 = sshllo.u32 0, 2
    %s274 = smul.addr 2, 3
    %s275 = scalar_lea.vmem %s1, %s274
    %276 = vst [vmem:[%s275] sm:%s273] %v272
    %s277 = scalar_lea.vmem [#allocation0], 32
    %v278 = vld [vmem:[%s277] sm:%s255]
    %s279 = sshllo.u32 0, 2
    %s280 = smul.addr 2, 4
    %s281 = scalar_lea.vmem %s1, %s280
    %282 = vst [vmem:[%s281] sm:%s279] %v278
    %s283 = scalar_lea.vmem [#allocation0], 40
    %v284 = vld [vmem:[%s283] sm:%s255]
    %s285 = sshllo.u32 0, 2
    %s286 = smul.addr 2, 5
    %s287 = scalar_lea.vmem %s1, %s286
    %288 = vst [vmem:[%s287] sm:%s285] %v284
    %s289 = scalar_lea.vmem [#allocation0], 48
    %v290 = vld [vmem:[%s289] sm:%s255]
    %s291 = sshllo.u32 0, 2
    %s292 = smul.addr 2, 6
    %s293 = scalar_lea.vmem %s1, %s292
    %294 = vst [vmem:[%s293] sm:%s291] %v290
    %s295 = scalar_lea.vmem [#allocation0], 56
    %v296 = vld [vmem:[%s295] sm:%s255]
    %s297 = sshllo.u32 0, 2
    %s298 = smul.addr 2, 7
    %s299 = scalar_lea.vmem %s1, %s298
    %300 = vst [vmem:[%s299] sm:%s297] %v296
    %s301 = scalar_lea.vmem [#allocation0], 64
    %v302 = vld [vmem:[%s301] sm:%s255]
    %s303 = sshllo.u32 0, 2
    %s304 = smul.addr 2, 8
    %s305 = scalar_lea.vmem %s1, %s304
    %306 = vst [vmem:[%s305] sm:%s303] %v302
    %s307 = scalar_lea.vmem [#allocation0], 72
    %v308 = vld [vmem:[%s307] sm:%s255]
    %s309 = sshllo.u32 0, 2
    %s310 = smul.addr 2, 9
    %s311 = scalar_lea.vmem %s1, %s310
    %312 = vst [vmem:[%s311] sm:%s309] %v308
    %s313 = scalar_lea.vmem [#allocation0], 80
    %v314 = vld [vmem:[%s313] sm:%s255]
    %s315 = sshllo.u32 0, 2
    %s316 = smul.addr 2, 10
    %s317 = scalar_lea.vmem %s1, %s316
    %318 = vst [vmem:[%s317] sm:%s315] %v314
    %s319 = scalar_lea.vmem [#allocation0], 88
    %v320 = vld [vmem:[%s319] sm:%s255]
    %s321 = sshllo.u32 0, 2
    %s322 = smul.addr 2, 11
    %s323 = scalar_lea.vmem %s1, %s322
    %324 = vst [vmem:[%s323] sm:%s321] %v320
    %s325 = scalar_lea.vmem [#allocation0], 96
    %v326 = vld [vmem:[%s325] sm:%s255]
    %s327 = sshllo.u32 0, 2
    %s328 = smul.addr 2, 12
    %s329 = scalar_lea.vmem %s1, %s328
    %330 = vst [vmem:[%s329] sm:%s327] %v326
    %s331 = scalar_lea.vmem [#allocation0], 104
    %v332 = vld [vmem:[%s331] sm:%s255]
    %s333 = sshllo.u32 0, 2
    %s334 = smul.addr 2, 13
    %s335 = scalar_lea.vmem %s1, %s334
    %336 = vst [vmem:[%s335] sm:%s333] %v332
    %s337 = scalar_lea.vmem [#allocation0], 112
    %v338 = vld [vmem:[%s337] sm:%s255]
    %s339 = sshllo.u32 0, 2
    %s340 = smul.addr 2, 14
    %s341 = scalar_lea.vmem %s1, %s340
    %342 = vst [vmem:[%s341] sm:%s339] %v338
    %s343 = scalar_lea.vmem [#allocation0], 120
    %v344 = vld [vmem:[%s343] sm:%s255]
    %s345 = sshllo.u32 0, 2
    %s346 = smul.addr 2, 15
    %s347 = scalar_lea.vmem %s1, %s346
    %348 = vst [vmem:[%s347] sm:%s345] %v344
    %s349 = scalar_lea.vmem [#allocation0], 128
    %v350 = vld [vmem:[%s349] sm:%s255]
    %s351 = sshllo.u32 0, 2
    %s352 = smul.addr 2, 16
    %s353 = scalar_lea.vmem %s1, %s352
    %354 = vst [vmem:[%s353] sm:%s351] %v350
    %s355 = scalar_lea.vmem [#allocation0], 136
    %v356 = vld [vmem:[%s355] sm:%s255]
    %s357 = sshllo.u32 0, 2
    %s358 = smul.addr 2, 17
    %s359 = scalar_lea.vmem %s1, %s358
    %360 = vst [vmem:[%s359] sm:%s357] %v356
    %s361 = scalar_lea.vmem [#allocation0], 144
    %v362 = vld [vmem:[%s361] sm:%s255]
    %s363 = sshllo.u32 0, 2
    %s364 = smul.addr 2, 18
    %s365 = scalar_lea.vmem %s1, %s364
    %366 = vst [vmem:[%s365] sm:%s363] %v362
    %s367 = scalar_lea.vmem [#allocation0], 152
    %v368 = vld [vmem:[%s367] sm:%s255]
    %s369 = sshllo.u32 0, 2
    %s370 = smul.addr 2, 19
    %s371 = scalar_lea.vmem %s1, %s370
    %372 = vst [vmem:[%s371] sm:%s369] %v368
    %s373 = scalar_lea.vmem [#allocation0], 160
    %v374 = vld [vmem:[%s373] sm:%s255]
    %s375 = sshllo.u32 0, 2
    %s376 = smul.addr 2, 20
    %s377 = scalar_lea.vmem %s1, %s376
    %378 = vst [vmem:[%s377] sm:%s375] %v374
    %s379 = scalar_lea.vmem [#allocation0], 168
    %v380 = vld [vmem:[%s379] sm:%s255]
    %s381 = sshllo.u32 0, 2
    %s382 = smul.addr 2, 21
    %s383 = scalar_lea.vmem %s1, %s382
    %384 = vst [vmem:[%s383] sm:%s381] %v380
    %s385 = scalar_lea.vmem [#allocation0], 176
    %v386 = vld [vmem:[%s385] sm:%s255]
    %s387 = sshllo.u32 0, 2
    %s388 = smul.addr 2, 22
    %s389 = scalar_lea.vmem %s1, %s388
    %390 = vst [vmem:[%s389] sm:%s387] %v386
    %s391 = scalar_lea.vmem [#allocation0], 184
    %v392 = vld [vmem:[%s391] sm:%s255]
    %s393 = sshllo.u32 0, 2
    %s394 = smul.addr 2, 23
    %s395 = scalar_lea.vmem %s1, %s394
    %396 = vst [vmem:[%s395] sm:%s393] %v392
    %s397 = scalar_lea.vmem [#allocation0], 192
    %v398 = vld [vmem:[%s397] sm:%s255]
    %s399 = sshllo.u32 0, 2
    %s400 = smul.addr 2, 24
    %s401 = scalar_lea.vmem %s1, %s400
    %402 = vst [vmem:[%s401] sm:%s399] %v398
    %s403 = scalar_lea.vmem [#allocation0], 200
    %v404 = vld [vmem:[%s403] sm:%s255]
    %s405 = sshllo.u32 0, 2
    %s406 = smul.addr 2, 25
    %s407 = scalar_lea.vmem %s1, %s406
    %408 = vst [vmem:[%s407] sm:%s405] %v404
    %s409 = scalar_lea.vmem [#allocation0], 208
    %v410 = vld [vmem:[%s409] sm:%s255]
    %s411 = sshllo.u32 0, 2
    %s412 = smul.addr 2, 26
    %s413 = scalar_lea.vmem %s1, %s412
    %414 = vst [vmem:[%s413] sm:%s411] %v410
    %s415 = scalar_lea.vmem [#allocation0], 216
    %v416 = vld [vmem:[%s415] sm:%s255]
    %s417 = sshllo.u32 0, 2
    %s418 = smul.addr 2, 27
    %s419 = scalar_lea.vmem %s1, %s418
    %420 = vst [vmem:[%s419] sm:%s417] %v416
    %s421 = scalar_lea.vmem [#allocation0], 224
    %v422 = vld [vmem:[%s421] sm:%s255]
    %s423 = sshllo.u32 0, 2
    %s424 = smul.addr 2, 28
    %s425 = scalar_lea.vmem %s1, %s424
    %426 = vst [vmem:[%s425] sm:%s423] %v422
    %s427 = scalar_lea.vmem [#allocation0], 232
    %v428 = vld [vmem:[%s427] sm:%s255]
    %s429 = sshllo.u32 0, 2
    %s430 = smul.addr 2, 29
    %s431 = scalar_lea.vmem %s1, %s430
    %432 = vst [vmem:[%s431] sm:%s429] %v428
    %s433 = scalar_lea.vmem [#allocation0], 240
    %v434 = vld [vmem:[%s433] sm:%s255]
    %s435 = sshllo.u32 0, 2
    %s436 = smul.addr 2, 30
    %s437 = scalar_lea.vmem %s1, %s436
    %438 = vst [vmem:[%s437] sm:%s435] %v434
    %s439 = scalar_lea.vmem [#allocation0], 248
    %v440 = vld [vmem:[%s439] sm:%s255]
    %s441 = sshllo.u32 0, 2
    %s442 = smul.addr 2, 31
    %s443 = scalar_lea.vmem %s1, %s442
    %444 = vst [vmem:[%s443] sm:%s441] %v440
    %s445 = scalar_lea.vmem [#allocation0], 256
    %v446 = vld [vmem:[%s445] sm:%s255]
    %s447 = sshllo.u32 0, 2
    %s448 = smul.addr 2, 32
    %s449 = scalar_lea.vmem %s1, %s448
    %450 = vst [vmem:[%s449] sm:%s447] %v446
    %s451 = scalar_lea.vmem [#allocation0], 264
    %v452 = vld [vmem:[%s451] sm:%s255]
    %s453 = sshllo.u32 0, 2
    %s454 = smul.addr 2, 33
    %s455 = scalar_lea.vmem %s1, %s454
    %456 = vst [vmem:[%s455] sm:%s453] %v452
    %s457 = scalar_lea.vmem [#allocation0], 272
    %v458 = vld [vmem:[%s457] sm:%s255]
    %s459 = sshllo.u32 0, 2
    %s460 = smul.addr 2, 34
    %s461 = scalar_lea.vmem %s1, %s460
    %462 = vst [vmem:[%s461] sm:%s459] %v458
    %s463 = scalar_lea.vmem [#allocation0], 280
    %v464 = vld [vmem:[%s463] sm:%s255]
    %s465 = sshllo.u32 0, 2
    %s466 = smul.addr 2, 35
    %s467 = scalar_lea.vmem %s1, %s466
    %468 = vst [vmem:[%s467] sm:%s465] %v464
    %s469 = scalar_lea.vmem [#allocation0], 288
    %v470 = vld [vmem:[%s469] sm:%s255]
    %s471 = sshllo.u32 0, 2
    %s472 = smul.addr 2, 36
    %s473 = scalar_lea.vmem %s1, %s472
    %474 = vst [vmem:[%s473] sm:%s471] %v470
    %s475 = scalar_lea.vmem [#allocation0], 296
    %v476 = vld [vmem:[%s475] sm:%s255]
    %s477 = sshllo.u32 0, 2
    %s478 = smul.addr 2, 37
    %s479 = scalar_lea.vmem %s1, %s478
    %480 = vst [vmem:[%s479] sm:%s477] %v476
    %s481 = scalar_lea.vmem [#allocation0], 304
    %v482 = vld [vmem:[%s481] sm:%s255]
    %s483 = sshllo.u32 0, 2
    %s484 = smul.addr 2, 38
    %s485 = scalar_lea.vmem %s1, %s484
    %486 = vst [vmem:[%s485] sm:%s483] %v482
    %s487 = scalar_lea.vmem [#allocation0], 312
    %v488 = vld [vmem:[%s487] sm:%s255]
    %s489 = sshllo.u32 0, 2
    %s490 = smul.addr 2, 39
    %s491 = scalar_lea.vmem %s1, %s490
    %492 = vst [vmem:[%s491] sm:%s489] %v488
    %s493 = scalar_lea.vmem [#allocation0], 320
    %v494 = vld [vmem:[%s493] sm:%s255]
    %s495 = sshllo.u32 0, 2
    %s496 = smul.addr 2, 40
    %s497 = scalar_lea.vmem %s1, %s496
    %498 = vst [vmem:[%s497] sm:%s495] %v494
    %s499 = scalar_lea.vmem [#allocation0], 328
    %v500 = vld [vmem:[%s499] sm:%s255]
    %s501 = sshllo.u32 0, 2
    %s502 = smul.addr 2, 41
    %s503 = scalar_lea.vmem %s1, %s502
    %504 = vst [vmem:[%s503] sm:%s501] %v500
    %s505 = scalar_lea.vmem [#allocation0], 336
    %v506 = vld [vmem:[%s505] sm:%s255]
    %s507 = sshllo.u32 0, 2
    %s508 = smul.addr 2, 42
    %s509 = scalar_lea.vmem %s1, %s508
    %510 = vst [vmem:[%s509] sm:%s507] %v506
    %s511 = scalar_lea.vmem [#allocation0], 344
    %v512 = vld [vmem:[%s511] sm:%s255]
    %s513 = sshllo.u32 0, 2
    %s514 = smul.addr 2, 43
    %s515 = scalar_lea.vmem %s1, %s514
    %516 = vst [vmem:[%s515] sm:%s513] %v512
    %s517 = scalar_lea.vmem [#allocation0], 352
    %v518 = vld [vmem:[%s517] sm:%s255]
    %s519 = sshllo.u32 0, 2
    %s520 = smul.addr 2, 44
    %s521 = scalar_lea.vmem %s1, %s520
    %522 = vst [vmem:[%s521] sm:%s519] %v518
    %s523 = scalar_lea.vmem [#allocation0], 360
    %v524 = vld [vmem:[%s523] sm:%s255]
    %s525 = sshllo.u32 0, 2
    %s526 = smul.addr 2, 45
    %s527 = scalar_lea.vmem %s1, %s526
    %528 = vst [vmem:[%s527] sm:%s525] %v524
    %s529 = scalar_lea.vmem [#allocation0], 368
    %v530 = vld [vmem:[%s529] sm:%s255]
    %s531 = sshllo.u32 0, 2
    %s532 = smul.addr 2, 46
    %s533 = scalar_lea.vmem %s1, %s532
    %534 = vst [vmem:[%s533] sm:%s531] %v530
    %s535 = scalar_lea.vmem [#allocation0], 376
    %v536 = vld [vmem:[%s535] sm:%s255]
    %s537 = sshllo.u32 0, 2
    %s538 = smul.addr 2, 47
    %s539 = scalar_lea.vmem %s1, %s538
    %540 = vst [vmem:[%s539] sm:%s537] %v536
    %s541 = scalar_lea.vmem [#allocation0], 384
    %v542 = vld [vmem:[%s541] sm:%s255]
    %s543 = sshllo.u32 0, 2
    %s544 = smul.addr 2, 48
    %s545 = scalar_lea.vmem %s1, %s544
    %546 = vst [vmem:[%s545] sm:%s543] %v542
    %s547 = scalar_lea.vmem [#allocation0], 392
    %v548 = vld [vmem:[%s547] sm:%s255]
    %s549 = sshllo.u32 0, 2
    %s550 = smul.addr 2, 49
    %s551 = scalar_lea.vmem %s1, %s550
    %552 = vst [vmem:[%s551] sm:%s549] %v548
    %s553 = scalar_lea.vmem [#allocation0], 400
    %v554 = vld [vmem:[%s553] sm:%s255]
    %s555 = sshllo.u32 0, 2
    %s556 = smul.addr 2, 50
    %s557 = scalar_lea.vmem %s1, %s556
    %558 = vst [vmem:[%s557] sm:%s555] %v554
    %s559 = scalar_lea.vmem [#allocation0], 408
    %v560 = vld [vmem:[%s559] sm:%s255]
    %s561 = sshllo.u32 0, 2
    %s562 = smul.addr 2, 51
    %s563 = scalar_lea.vmem %s1, %s562
    %564 = vst [vmem:[%s563] sm:%s561] %v560
    %s565 = scalar_lea.vmem [#allocation0], 416
    %v566 = vld [vmem:[%s565] sm:%s255]
    %s567 = sshllo.u32 0, 2
    %s568 = smul.addr 2, 52
    %s569 = scalar_lea.vmem %s1, %s568
    %570 = vst [vmem:[%s569] sm:%s567] %v566
    %s571 = scalar_lea.vmem [#allocation0], 424
    %v572 = vld [vmem:[%s571] sm:%s255]
    %s573 = sshllo.u32 0, 2
    %s574 = smul.addr 2, 53
    %s575 = scalar_lea.vmem %s1, %s574
    %576 = vst [vmem:[%s575] sm:%s573] %v572
    %s577 = scalar_lea.vmem [#allocation0], 432
    %v578 = vld [vmem:[%s577] sm:%s255]
    %s579 = sshllo.u32 0, 2
    %s580 = smul.addr 2, 54
    %s581 = scalar_lea.vmem %s1, %s580
    %582 = vst [vmem:[%s581] sm:%s579] %v578
    %s583 = scalar_lea.vmem [#allocation0], 440
    %v584 = vld [vmem:[%s583] sm:%s255]
    %s585 = sshllo.u32 0, 2
    %s586 = smul.addr 2, 55
    %s587 = scalar_lea.vmem %s1, %s586
    %588 = vst [vmem:[%s587] sm:%s585] %v584
    %s589 = scalar_lea.vmem [#allocation0], 448
    %v590 = vld [vmem:[%s589] sm:%s255]
    %s591 = sshllo.u32 0, 2
    %s592 = smul.addr 2, 56
    %s593 = scalar_lea.vmem %s1, %s592
    %594 = vst [vmem:[%s593] sm:%s591] %v590
    %s595 = scalar_lea.vmem [#allocation0], 456
    %v596 = vld [vmem:[%s595] sm:%s255]
    %s597 = sshllo.u32 0, 2
    %s598 = smul.addr 2, 57
    %s599 = scalar_lea.vmem %s1, %s598
    %600 = vst [vmem:[%s599] sm:%s597] %v596
    %s601 = scalar_lea.vmem [#allocation0], 464
    %v602 = vld [vmem:[%s601] sm:%s255]
    %s603 = sshllo.u32 0, 2
    %s604 = smul.addr 2, 58
    %s605 = scalar_lea.vmem %s1, %s604
    %606 = vst [vmem:[%s605] sm:%s603] %v602
    %s607 = scalar_lea.vmem [#allocation0], 472
    %v608 = vld [vmem:[%s607] sm:%s255]
    %s609 = sshllo.u32 0, 2
    %s610 = smul.addr 2, 59
    %s611 = scalar_lea.vmem %s1, %s610
    %612 = vst [vmem:[%s611] sm:%s609] %v608
    %s613 = scalar_lea.vmem [#allocation0], 480
    %v614 = vld [vmem:[%s613] sm:%s255]
    %s615 = sshllo.u32 0, 2
    %s616 = smul.addr 2, 60
    %s617 = scalar_lea.vmem %s1, %s616
    %618 = vst [vmem:[%s617] sm:%s615] %v614
    %s619 = scalar_lea.vmem [#allocation0], 488
    %v620 = vld [vmem:[%s619] sm:%s255]
    %s621 = sshllo.u32 0, 2
    %s622 = smul.addr 2, 61
    %s623 = scalar_lea.vmem %s1, %s622
    %624 = vst [vmem:[%s623] sm:%s621] %v620
    %s625 = scalar_lea.vmem [#allocation0], 496
    %v626 = vld [vmem:[%s625] sm:%s255]
    %s627 = sshllo.u32 0, 2
    %s628 = smul.addr 2, 62
    %s629 = scalar_lea.vmem %s1, %s628
    %630 = vst [vmem:[%s629] sm:%s627] %v626
    %s631 = scalar_lea.vmem [#allocation0], 504
    %v632 = vld [vmem:[%s631] sm:%s255]
    %s633 = sshllo.u32 0, 2
    %s634 = smul.addr 2, 63
    %s635 = scalar_lea.vmem %s1, %s634
    %636 = vst [vmem:[%s635] sm:%s633] %v632
    %s637 = scalar_lea.vmem [#allocation0], 512
    %v638 = vld [vmem:[%s637] sm:%s255]
    %s639 = sshllo.u32 0, 2
    %s640 = smul.addr 2, 64
    %s641 = scalar_lea.vmem %s1, %s640
    %642 = vst [vmem:[%s641] sm:%s639] %v638
    %s643 = scalar_lea.vmem [#allocation0], 520
    %v644 = vld [vmem:[%s643] sm:%s255]
    %s645 = sshllo.u32 0, 2
    %s646 = smul.addr 2, 65
    %s647 = scalar_lea.vmem %s1, %s646
    %648 = vst [vmem:[%s647] sm:%s645] %v644
    %s649 = scalar_lea.vmem [#allocation0], 528
    %v650 = vld [vmem:[%s649] sm:%s255]
    %s651 = sshllo.u32 0, 2
    %s652 = smul.addr 2, 66
    %s653 = scalar_lea.vmem %s1, %s652
    %654 = vst [vmem:[%s653] sm:%s651] %v650
    %s655 = scalar_lea.vmem [#allocation0], 536
    %v656 = vld [vmem:[%s655] sm:%s255]
    %s657 = sshllo.u32 0, 2
    %s658 = smul.addr 2, 67
    %s659 = scalar_lea.vmem %s1, %s658
    %660 = vst [vmem:[%s659] sm:%s657] %v656
    %s661 = scalar_lea.vmem [#allocation0], 544
    %v662 = vld [vmem:[%s661] sm:%s255]
    %s663 = sshllo.u32 0, 2
    %s664 = smul.addr 2, 68
    %s665 = scalar_lea.vmem %s1, %s664
    %666 = vst [vmem:[%s665] sm:%s663] %v662
    %s667 = scalar_lea.vmem [#allocation0], 552
    %v668 = vld [vmem:[%s667] sm:%s255]
    %s669 = sshllo.u32 0, 2
    %s670 = smul.addr 2, 69
    %s671 = scalar_lea.vmem %s1, %s670
    %672 = vst [vmem:[%s671] sm:%s669] %v668
    %s673 = scalar_lea.vmem [#allocation0], 560
    %v674 = vld [vmem:[%s673] sm:%s255]
    %s675 = sshllo.u32 0, 2
    %s676 = smul.addr 2, 70
    %s677 = scalar_lea.vmem %s1, %s676
    %678 = vst [vmem:[%s677] sm:%s675] %v674
    %s679 = scalar_lea.vmem [#allocation0], 568
    %v680 = vld [vmem:[%s679] sm:%s255]
    %s681 = sshllo.u32 0, 2
    %s682 = smul.addr 2, 71
    %s683 = scalar_lea.vmem %s1, %s682
    %684 = vst [vmem:[%s683] sm:%s681] %v680
    %s685 = scalar_lea.vmem [#allocation0], 576
    %v686 = vld [vmem:[%s685] sm:%s255]
    %s687 = sshllo.u32 0, 2
    %s688 = smul.addr 2, 72
    %s689 = scalar_lea.vmem %s1, %s688
    %690 = vst [vmem:[%s689] sm:%s687] %v686
    %s691 = scalar_lea.vmem [#allocation0], 584
    %v692 = vld [vmem:[%s691] sm:%s255]
    %s693 = sshllo.u32 0, 2
    %s694 = smul.addr 2, 73
    %s695 = scalar_lea.vmem %s1, %s694
    %696 = vst [vmem:[%s695] sm:%s693] %v692
    %s697 = scalar_lea.vmem [#allocation0], 592
    %v698 = vld [vmem:[%s697] sm:%s255]
    %s699 = sshllo.u32 0, 2
    %s700 = smul.addr 2, 74
    %s701 = scalar_lea.vmem %s1, %s700
    %702 = vst [vmem:[%s701] sm:%s699] %v698
    %s703 = scalar_lea.vmem [#allocation0], 600
    %v704 = vld [vmem:[%s703] sm:%s255]
    %s705 = sshllo.u32 0, 2
    %s706 = smul.addr 2, 75
    %s707 = scalar_lea.vmem %s1, %s706
    %708 = vst [vmem:[%s707] sm:%s705] %v704
    %s709 = scalar_lea.vmem [#allocation0], 608
    %v710 = vld [vmem:[%s709] sm:%s255]
    %s711 = sshllo.u32 0, 2
    %s712 = smul.addr 2, 76
    %s713 = scalar_lea.vmem %s1, %s712
    %714 = vst [vmem:[%s713] sm:%s711] %v710
    %s715 = scalar_lea.vmem [#allocation0], 616
    %v716 = vld [vmem:[%s715] sm:%s255]
    %s717 = sshllo.u32 0, 2
    %s718 = smul.addr 2, 77
    %s719 = scalar_lea.vmem %s1, %s718
    %720 = vst [vmem:[%s719] sm:%s717] %v716
    %s721 = scalar_lea.vmem [#allocation0], 624
    %v722 = vld [vmem:[%s721] sm:%s255]
    %s723 = sshllo.u32 0, 2
    %s724 = smul.addr 2, 78
    %s725 = scalar_lea.vmem %s1, %s724
    %726 = vst [vmem:[%s725] sm:%s723] %v722
    %s727 = scalar_lea.vmem [#allocation0], 632
    %v728 = vld [vmem:[%s727] sm:%s255]
    %s729 = sshllo.u32 0, 2
    %s730 = smul.addr 2, 79
    %s731 = scalar_lea.vmem %s1, %s730
    %732 = vst [vmem:[%s731] sm:%s729] %v728
    %s733 = scalar_lea.vmem [#allocation0], 640
    %v734 = vld [vmem:[%s733] sm:%s255]
    %s735 = sshllo.u32 0, 2
    %s736 = smul.addr 2, 80
    %s737 = scalar_lea.vmem %s1, %s736
    %738 = vst [vmem:[%s737] sm:%s735] %v734
    %s739 = scalar_lea.vmem [#allocation0], 648
    %v740 = vld [vmem:[%s739] sm:%s255]
    %s741 = sshllo.u32 0, 2
    %s742 = smul.addr 2, 81
    %s743 = scalar_lea.vmem %s1, %s742
    %744 = vst [vmem:[%s743] sm:%s741] %v740
    %s745 = scalar_lea.vmem [#allocation0], 656
    %v746 = vld [vmem:[%s745] sm:%s255]
    %s747 = sshllo.u32 0, 2
    %s748 = smul.addr 2, 82
    %s749 = scalar_lea.vmem %s1, %s748
    %750 = vst [vmem:[%s749] sm:%s747] %v746
    %s751 = scalar_lea.vmem [#allocation0], 664
    %v752 = vld [vmem:[%s751] sm:%s255]
    %s753 = sshllo.u32 0, 2
    %s754 = smul.addr 2, 83
    %s755 = scalar_lea.vmem %s1, %s754
    %756 = vst [vmem:[%s755] sm:%s753] %v752
    %s757 = scalar_lea.vmem [#allocation0], 672
    %v758 = vld [vmem:[%s757] sm:%s255]
    %s759 = sshllo.u32 0, 2
    %s760 = smul.addr 2, 84
    %s761 = scalar_lea.vmem %s1, %s760
    %762 = vst [vmem:[%s761] sm:%s759] %v758
    %s763 = scalar_lea.vmem [#allocation0], 680
    %v764 = vld [vmem:[%s763] sm:%s255]
    %s765 = sshllo.u32 0, 2
    %s766 = smul.addr 2, 85
    %s767 = scalar_lea.vmem %s1, %s766
    %768 = vst [vmem:[%s767] sm:%s765] %v764
    %s769 = scalar_lea.vmem [#allocation0], 688
    %v770 = vld [vmem:[%s769] sm:%s255]
    %s771 = sshllo.u32 0, 2
    %s772 = smul.addr 2, 86
    %s773 = scalar_lea.vmem %s1, %s772
    %774 = vst [vmem:[%s773] sm:%s771] %v770
    %s775 = scalar_lea.vmem [#allocation0], 696
    %v776 = vld [vmem:[%s775] sm:%s255]
    %s777 = sshllo.u32 0, 2
    %s778 = smul.addr 2, 87
    %s779 = scalar_lea.vmem %s1, %s778
    %780 = vst [vmem:[%s779] sm:%s777] %v776
    %s781 = scalar_lea.vmem [#allocation0], 704
    %v782 = vld [vmem:[%s781] sm:%s255]
    %s783 = sshllo.u32 0, 2
    %s784 = smul.addr 2, 88
    %s785 = scalar_lea.vmem %s1, %s784
    %786 = vst [vmem:[%s785] sm:%s783] %v782
    %s787 = scalar_lea.vmem [#allocation0], 712
    %v788 = vld [vmem:[%s787] sm:%s255]
    %s789 = sshllo.u32 0, 2
    %s790 = smul.addr 2, 89
    %s791 = scalar_lea.vmem %s1, %s790
    %792 = vst [vmem:[%s791] sm:%s789] %v788
    %s793 = scalar_lea.vmem [#allocation0], 720
    %v794 = vld [vmem:[%s793] sm:%s255]
    %s795 = sshllo.u32 0, 2
    %s796 = smul.addr 2, 90
    %s797 = scalar_lea.vmem %s1, %s796
    %798 = vst [vmem:[%s797] sm:%s795] %v794
    %s799 = scalar_lea.vmem [#allocation0], 728
    %v800 = vld [vmem:[%s799] sm:%s255]
    %s801 = sshllo.u32 0, 2
    %s802 = smul.addr 2, 91
    %s803 = scalar_lea.vmem %s1, %s802
    %804 = vst [vmem:[%s803] sm:%s801] %v800
    %s805 = scalar_lea.vmem [#allocation0], 736
    %v806 = vld [vmem:[%s805] sm:%s255]
    %s807 = sshllo.u32 0, 2
    %s808 = smul.addr 2, 92
    %s809 = scalar_lea.vmem %s1, %s808
    %810 = vst [vmem:[%s809] sm:%s807] %v806
    %s811 = scalar_lea.vmem [#allocation0], 744
    %v812 = vld [vmem:[%s811] sm:%s255]
    %s813 = sshllo.u32 0, 2
    %s814 = smul.addr 2, 93
    %s815 = scalar_lea.vmem %s1, %s814
    %816 = vst [vmem:[%s815] sm:%s813] %v812
    %s817 = scalar_lea.vmem [#allocation0], 752
    %v818 = vld [vmem:[%s817] sm:%s255]
    %s819 = sshllo.u32 0, 2
    %s820 = smul.addr 2, 94
    %s821 = scalar_lea.vmem %s1, %s820
    %822 = vst [vmem:[%s821] sm:%s819] %v818
    %s823 = scalar_lea.vmem [#allocation0], 760
    %v824 = vld [vmem:[%s823] sm:%s255]
    %s825 = sshllo.u32 0, 2
    %s826 = smul.addr 2, 95
    %s827 = scalar_lea.vmem %s1, %s826
    %828 = vst [vmem:[%s827] sm:%s825] %v824
    %s829 = scalar_lea.vmem [#allocation0], 768
    %v830 = vld [vmem:[%s829] sm:%s255]
    %s831 = sshllo.u32 0, 2
    %s832 = smul.addr 2, 96
    %s833 = scalar_lea.vmem %s1, %s832
    %834 = vst [vmem:[%s833] sm:%s831] %v830
    %s835 = scalar_lea.vmem [#allocation0], 776
    %v836 = vld [vmem:[%s835] sm:%s255]
    %s837 = sshllo.u32 0, 2
    %s838 = smul.addr 2, 97
    %s839 = scalar_lea.vmem %s1, %s838
    %840 = vst [vmem:[%s839] sm:%s837] %v836
    %s841 = scalar_lea.vmem [#allocation0], 784
    %v842 = vld [vmem:[%s841] sm:%s255]
    %s843 = sshllo.u32 0, 2
    %s844 = smul.addr 2, 98
    %s845 = scalar_lea.vmem %s1, %s844
    %846 = vst [vmem:[%s845] sm:%s843] %v842
    %s847 = scalar_lea.vmem [#allocation0], 792
    %v848 = vld [vmem:[%s847] sm:%s255]
    %s849 = sshllo.u32 0, 2
    %s850 = smul.addr 2, 99
    %s851 = scalar_lea.vmem %s1, %s850
    %852 = vst [vmem:[%s851] sm:%s849] %v848
    %s853 = scalar_lea.vmem [#allocation0], 800
    %v854 = vld [vmem:[%s853] sm:%s255]
    %s855 = sshllo.u32 0, 2
    %s856 = smul.addr 2, 100
    %s857 = scalar_lea.vmem %s1, %s856
    %858 = vst [vmem:[%s857] sm:%s855] %v854
    %s859 = scalar_lea.vmem [#allocation0], 808
    %v860 = vld [vmem:[%s859] sm:%s255]
    %s861 = sshllo.u32 0, 2
    %s862 = smul.addr 2, 101
    %s863 = scalar_lea.vmem %s1, %s862
    %864 = vst [vmem:[%s863] sm:%s861] %v860
    %s865 = scalar_lea.vmem [#allocation0], 816
    %v866 = vld [vmem:[%s865] sm:%s255]
    %s867 = sshllo.u32 0, 2
    %s868 = smul.addr 2, 102
    %s869 = scalar_lea.vmem %s1, %s868
    %870 = vst [vmem:[%s869] sm:%s867] %v866
    %s871 = scalar_lea.vmem [#allocation0], 824
    %v872 = vld [vmem:[%s871] sm:%s255]
    %s873 = sshllo.u32 0, 2
    %s874 = smul.addr 2, 103
    %s875 = scalar_lea.vmem %s1, %s874
    %876 = vst [vmem:[%s875] sm:%s873] %v872
    %s877 = scalar_lea.vmem [#allocation0], 832
    %v878 = vld [vmem:[%s877] sm:%s255]
    %s879 = sshllo.u32 0, 2
    %s880 = smul.addr 2, 104
    %s881 = scalar_lea.vmem %s1, %s880
    %882 = vst [vmem:[%s881] sm:%s879] %v878
    %s883 = scalar_lea.vmem [#allocation0], 840
    %v884 = vld [vmem:[%s883] sm:%s255]
    %s885 = sshllo.u32 0, 2
    %s886 = smul.addr 2, 105
    %s887 = scalar_lea.vmem %s1, %s886
    %888 = vst [vmem:[%s887] sm:%s885] %v884
    %s889 = scalar_lea.vmem [#allocation0], 848
    %v890 = vld [vmem:[%s889] sm:%s255]
    %s891 = sshllo.u32 0, 2
    %s892 = smul.addr 2, 106
    %s893 = scalar_lea.vmem %s1, %s892
    %894 = vst [vmem:[%s893] sm:%s891] %v890
    %s895 = scalar_lea.vmem [#allocation0], 856
    %v896 = vld [vmem:[%s895] sm:%s255]
    %s897 = sshllo.u32 0, 2
    %s898 = smul.addr 2, 107
    %s899 = scalar_lea.vmem %s1, %s898
    %900 = vst [vmem:[%s899] sm:%s897] %v896
    %s901 = scalar_lea.vmem [#allocation0], 864
    %v902 = vld [vmem:[%s901] sm:%s255]
    %s903 = sshllo.u32 0, 2
    %s904 = smul.addr 2, 108
    %s905 = scalar_lea.vmem %s1, %s904
    %906 = vst [vmem:[%s905] sm:%s903] %v902
    %s907 = scalar_lea.vmem [#allocation0], 872
    %v908 = vld [vmem:[%s907] sm:%s255]
    %s909 = sshllo.u32 0, 2
    %s910 = smul.addr 2, 109
    %s911 = scalar_lea.vmem %s1, %s910
    %912 = vst [vmem:[%s911] sm:%s909] %v908
    %s913 = scalar_lea.vmem [#allocation0], 880
    %v914 = vld [vmem:[%s913] sm:%s255]
    %s915 = sshllo.u32 0, 2
    %s916 = smul.addr 2, 110
    %s917 = scalar_lea.vmem %s1, %s916
    %918 = vst [vmem:[%s917] sm:%s915] %v914
    %s919 = scalar_lea.vmem [#allocation0], 888
    %v920 = vld [vmem:[%s919] sm:%s255]
    %s921 = sshllo.u32 0, 2
    %s922 = smul.addr 2, 111
    %s923 = scalar_lea.vmem %s1, %s922
    %924 = vst [vmem:[%s923] sm:%s921] %v920
    %s925 = scalar_lea.vmem [#allocation0], 896
    %v926 = vld [vmem:[%s925] sm:%s255]
    %s927 = sshllo.u32 0, 2
    %s928 = smul.addr 2, 112
    %s929 = scalar_lea.vmem %s1, %s928
    %930 = vst [vmem:[%s929] sm:%s927] %v926
    %s931 = scalar_lea.vmem [#allocation0], 904
    %v932 = vld [vmem:[%s931] sm:%s255]
    %s933 = sshllo.u32 0, 2
    %s934 = smul.addr 2, 113
    %s935 = scalar_lea.vmem %s1, %s934
    %936 = vst [vmem:[%s935] sm:%s933] %v932
    %s937 = scalar_lea.vmem [#allocation0], 912
    %v938 = vld [vmem:[%s937] sm:%s255]
    %s939 = sshllo.u32 0, 2
    %s940 = smul.addr 2, 114
    %s941 = scalar_lea.vmem %s1, %s940
    %942 = vst [vmem:[%s941] sm:%s939] %v938
    %s943 = scalar_lea.vmem [#allocation0], 920
    %v944 = vld [vmem:[%s943] sm:%s255]
    %s945 = sshllo.u32 0, 2
    %s946 = smul.addr 2, 115
    %s947 = scalar_lea.vmem %s1, %s946
    %948 = vst [vmem:[%s947] sm:%s945] %v944
    %s949 = scalar_lea.vmem [#allocation0], 928
    %v950 = vld [vmem:[%s949] sm:%s255]
    %s951 = sshllo.u32 0, 2
    %s952 = smul.addr 2, 116
    %s953 = scalar_lea.vmem %s1, %s952
    %954 = vst [vmem:[%s953] sm:%s951] %v950
    %s955 = scalar_lea.vmem [#allocation0], 936
    %v956 = vld [vmem:[%s955] sm:%s255]
    %s957 = sshllo.u32 0, 2
    %s958 = smul.addr 2, 117
    %s959 = scalar_lea.vmem %s1, %s958
    %960 = vst [vmem:[%s959] sm:%s957] %v956
    %s961 = scalar_lea.vmem [#allocation0], 944
    %v962 = vld [vmem:[%s961] sm:%s255]
    %s963 = sshllo.u32 0, 2
    %s964 = smul.addr 2, 118
    %s965 = scalar_lea.vmem %s1, %s964
    %966 = vst [vmem:[%s965] sm:%s963] %v962
    %s967 = scalar_lea.vmem [#allocation0], 952
    %v968 = vld [vmem:[%s967] sm:%s255]
    %s969 = sshllo.u32 0, 2
    %s970 = smul.addr 2, 119
    %s971 = scalar_lea.vmem %s1, %s970
    %972 = vst [vmem:[%s971] sm:%s969] %v968
    %s973 = scalar_lea.vmem [#allocation0], 960
    %v974 = vld [vmem:[%s973] sm:%s255]
    %s975 = sshllo.u32 0, 2
    %s976 = smul.addr 2, 120
    %s977 = scalar_lea.vmem %s1, %s976
    %978 = vst [vmem:[%s977] sm:%s975] %v974
    %s979 = scalar_lea.vmem [#allocation0], 968
    %v980 = vld [vmem:[%s979] sm:%s255]
    %s981 = sshllo.u32 0, 2
    %s982 = smul.addr 2, 121
    %s983 = scalar_lea.vmem %s1, %s982
    %984 = vst [vmem:[%s983] sm:%s981] %v980
    %s985 = scalar_lea.vmem [#allocation0], 976
    %v986 = vld [vmem:[%s985] sm:%s255]
    %s987 = sshllo.u32 0, 2
    %s988 = smul.addr 2, 122
    %s989 = scalar_lea.vmem %s1, %s988
    %990 = vst [vmem:[%s989] sm:%s987] %v986
    %s991 = scalar_lea.vmem [#allocation0], 984
    %v992 = vld [vmem:[%s991] sm:%s255]
    %s993 = sshllo.u32 0, 2
    %s994 = smul.addr 2, 123
    %s995 = scalar_lea.vmem %s1, %s994
    %996 = vst [vmem:[%s995] sm:%s993] %v992
    %s997 = scalar_lea.vmem [#allocation0], 992
    %v998 = vld [vmem:[%s997] sm:%s255]
    %s999 = sshllo.u32 0, 2
    %s1000 = smul.addr 2, 124
    %s1001 = scalar_lea.vmem %s1, %s1000
    %1002 = vst [vmem:[%s1001] sm:%s999] %v998
    %s1003 = scalar_lea.vmem [#allocation0], 1000
    %v1004 = vld [vmem:[%s1003] sm:%s255]
    %s1005 = sshllo.u32 0, 2
    %s1006 = smul.addr 2, 125
    %s1007 = scalar_lea.vmem %s1, %s1006
    %1008 = vst [vmem:[%s1007] sm:%s1005] %v1004
    %s1009 = scalar_lea.vmem [#allocation0], 1008
    %v1010 = vld [vmem:[%s1009] sm:%s255]
    %s1011 = sshllo.u32 0, 2
    %s1012 = smul.addr 2, 126
    %s1013 = scalar_lea.vmem %s1, %s1012
    %1014 = vst [vmem:[%s1013] sm:%s1011] %v1010
    %s1015 = scalar_lea.vmem [#allocation0], 1016
    %v1016 = vld [vmem:[%s1015] sm:%s255]
    %s1017 = sshllo.u32 0, 2
    %s1018 = smul.addr 2, 127
    %s1019 = scalar_lea.vmem %s1, %s1018
    %1020 = vst [vmem:[%s1019] sm:%s1017] %v1016

// kernel: straightnet_back_lc_forward.2
$region0: #{straightnet_back_lc_forward.2}
  #allocation0 [shape = 'u32[]', space=smem, size = 0x4, offset = 0x4, fixed_abs, tag = 'smem constant byte address 0x4 - core index']
  #allocation1 [shape = 'u32[144,128]{1,0:T(1,128)}', space=vmem, size = 0x12000, scoped, tag = 'internal scratch']
  %s0 = inlined_call_operand.vmem [shape: f32[128,128], index: 0, kind: input, shape index: {}]
  %s1 = inlined_call_operand.vmem [shape: bf16[384,128], index: 1, kind: input, shape index: {}]
  %s2 = inlined_call_operand.vmem [shape: f32[1,128], index: 2, kind: input, shape index: {}]
  %s3 = inlined_call_operand.vmem [shape: f32[1,128], index: 3, kind: input, shape index: {}]
  %s4 = inlined_call_operand.vmem [shape: bf16[384,128], index: 4, kind: input, shape index: {}]
  %s5 = inlined_call_operand.vmem [shape: f32[1,128], index: 5, kind: input, shape index: {}]
  %s6 = inlined_call_operand.vmem [shape: f32[1,128], index: 6, kind: input, shape index: {}]
  %s7 = inlined_call_operand.vmem [shape: bf16[128,128], index: 7, kind: input, shape index: {}]
  %s8 = inlined_call_operand.vmem [shape: f32[1,128], index: 8, kind: input, shape index: {}]
  %s9 = inlined_call_operand.hbm [shape: bf16[384,128], index: 9, kind: input, shape index: {}]
  %s10 = inlined_call_operand.vmem [shape: f32[1,128], index: 10, kind: input, shape index: {}]
  %s11 = inlined_call_operand.vmem [shape: f32[1,128], index: 11, kind: input, shape index: {}]
  %s12 = inlined_call_operand.hbm [shape: bf16[384,128], index: 12, kind: input, shape index: {}]
  %s13 = inlined_call_operand.vmem [shape: f32[1,128], index: 13, kind: input, shape index: {}]
  %s14 = inlined_call_operand.vmem [shape: f32[1,128], index: 14, kind: input, shape index: {}]
  %s15 = inlined_call_operand.hbm [shape: bf16[384,128], index: 15, kind: input, shape index: {}]
  %s16 = inlined_call_operand.vmem [shape: f32[1,128], index: 16, kind: input, shape index: {}]
  %s17 = inlined_call_operand.vmem [shape: f32[1,128], index: 17, kind: input, shape index: {}]
  %s18 = inlined_call_operand.hbm [shape: bf16[384,128], index: 18, kind: input, shape index: {}]
  %s19 = inlined_call_operand.vmem [shape: f32[1,128], index: 19, kind: input, shape index: {}]
  %s20 = inlined_call_operand.vmem [shape: f32[1,128], index: 20, kind: input, shape index: {}]
  %s21 = inlined_call_operand.vmem [shape: bf16[384,1024], index: 21, kind: input, shape index: {}]
  %s22 = inlined_call_operand.vmem [shape: f32[1,1024], index: 22, kind: input, shape index: {}]
  %s23 = inlined_call_operand.vmem [shape: bf16[128,1024], index: 23, kind: output, shape index: {}]
  %s24 = sld [smem:[#allocation0]]
  $region141: #{straightnet_back_lc_forward.2} parent=0
    _
  %s26 = ssub.s32 1, %s24
  %s27 = scalar_select 0, %s26, %s24
  $region1: #{straightnet_back_lc_forward.2} parent=0
    #allocation2 [shape = 'u8[98304]{0}', space=vmem, size = 0x18000, scoped, tag = 'input window, operand 9, single buffered']
    #allocation3 [shape = 's32[2]{0}', space=sflag, size = 0x8, scoped, tag = 'scoped memory for straightnet_back_lc_forward.2']
    #allocation4 [shape = 'u8[98304]{0}', space=vmem, size = 0x18000, scoped, tag = 'input window, operand 12, single buffered']
    #allocation5 [shape = 's32[1]{0}', space=sflag, size = 0x4, scoped, tag = 'scoped memory for straightnet_back_lc_forward.2']
    #allocation6 [shape = 'u8[98304]{0}', space=vmem, size = 0x18000, scoped, tag = 'input window, operand 15, single buffered']
    #allocation7 [shape = 'u8[98304]{0}', space=vmem, size = 0x18000, scoped, tag = 'input window, operand 18, single buffered']
    #allocation8 [shape = 's32[1]{0}', space=sflag, size = 0x4, scoped, tag = 'scoped memory for straightnet_back_lc_forward.2']
    %28 = vsyncpa [#allocation3], 0
    %29 = vsyncpa [#allocation5], 0
    %30 = vsyncpa [#allocation8], 0
    loop: start=0, step=1, limit=4
    $region2: #{straightnet_back_lc_forward.2} parent=1 // loop_pre_header
      _
    $region3: #{straightnet_back_lc_forward.2} parent=1 // loop_header
      %s32 = sphi 0, %s36
      %p33 = scmp.ge.s32.totalorder %s32, 4
      %s42 = sphi 0, %s44
      %s45 = sphi 0, %s42
      %s46 = sphi 0, %s45
      %s62 = sphi 0, %s46
      %s66 = sphi 0, %s66
      %s68 = sphi 0, %s66
      %s69 = sphi 0, %s68
      %s83 = sphi 0, %s69
      %s87 = sphi 0, %s87
      %s89 = sphi 0, %s87
      %s90 = sphi 0, %s89
      %s104 = sphi 0, %s90
      %s108 = sphi 0, %s108
      %s110 = sphi 0, %s108
      %s111 = sphi 0, %s110
      %s125 = sphi 0, %s111
      %s129 = sphi 0, %s129
      %s131 = sphi 0, %s129
      %s132 = sphi 0, %s131
      %s146 = sphi 0, %s132
      %s150 = sphi 0, %s150
      %s152 = sphi 0, %s150
      %s153 = sphi 0, %s152
      %s167 = sphi 0, %s153
      %s171 = sphi 0, %s171
      %s173 = sphi 0, %s171
      %s174 = sphi 0, %s173
      %s188 = sphi 0, %s174
      %s192 = sphi 0, %s192
      %s194 = sphi 0, %s192
      %s195 = sphi 0, %s194
      %s209 = sphi 0, %s195
      %s213 = sphi 0, %s213
      %s215 = sphi 0, %s213
      %s216 = sphi 0, %s215
      %s230 = sphi 0, %s216
      %s234 = sphi 0, %s234
      %s236 = sphi 0, %s234
      %s237 = sphi 0, %s236
      %s251 = sphi 0, %s237
      %s255 = sphi 0, %s255
      %s257 = sphi 0, %s255
      %s258 = sphi 0, %s257
      %s272 = sphi 0, %s258
      %s276 = sphi 0, %s276
      %s278 = sphi 0, %s276
      %s279 = sphi 0, %s278
      %s293 = sphi 0, %s279
      %s297 = sphi 0, %s297
      %s299 = sphi 0, %s297
      %s300 = sphi 0, %s299
      %s314 = sphi 0, %s300
      %s318 = sphi 0, %s318
      %s320 = sphi 0, %s318
      %s321 = sphi 0, %s320
      %s335 = sphi 0, %s321
      %s339 = sphi 0, %s339
      %s341 = sphi 0, %s339
      %s342 = sphi 0, %s341
      %s356 = sphi 0, %s342
      %s360 = sphi 0, %s360
      %s362 = sphi 0, %s360
      %s363 = sphi 0, %s362
      %s377 = sphi 0, %s363
      %s381 = sphi 0, %s381
      %s383 = sphi 0, %s381
      %s384 = sphi 0, %s383
      %s398 = sphi 0, %s384
      %s402 = sphi 0, %s402
      %s404 = sphi 0, %s402
      %s405 = sphi 0, %s404
      %s419 = sphi 0, %s405
      %s423 = sphi 0, %s423
      %s425 = sphi 0, %s423
      %s426 = sphi 0, %s425
      %s440 = sphi 0, %s426
      %s444 = sphi 0, %s444
      %s446 = sphi 0, %s444
      %s447 = sphi 0, %s446
      %s461 = sphi 0, %s447
      %s465 = sphi 0, %s465
      %s467 = sphi 0, %s465
      %s468 = sphi 0, %s467
      %s482 = sphi 0, %s468
      %s486 = sphi 0, %s486
      %s488 = sphi 0, %s486
      %s489 = sphi 0, %s488
      %s503 = sphi 0, %s489
      %s507 = sphi 0, %s507
      %s509 = sphi 0, %s507
      %s510 = sphi 0, %s509
      %s524 = sphi 0, %s510
      %s530 = sphi 0, %s532
      %s533 = sphi 0, %s530
      %s534 = sphi 0, %s533
      %s550 = sphi 0, %s534
    $region4: #{straightnet_back_lc_forward.2} parent=1 // loop_header_branch
      %35 = sbr.rel (%p33) target = $region8
    $region5: #{straightnet_back_lc_forward.2} parent=1 // loop_body
      %s37 = ssub.s32 %s32, 1
      %s38 = ssub.s32 %s32, 2
      %s39 = sadd.s32 %s32, 1
      %s40 = ssub.s32 %s32, %s39
      %p41 = scmp.eq.s32.totalorder %s40, 0
      %s43 = sadd.s32 %s42, 1
      %s44 = scalar_select %p41, %s42, %s43
      %p47 = pneg %p41
      %p48 = scmp.eq.s32.totalorder %s32, 1
      %p49 = por %p47, %p48
      %p50 = scmp.ne.s32.totalorder %s42, %s45
      %p51 = scmp.eq.s32.totalorder %s32, 0
      %p52 = por %p50, %p51
      %p53 = scmp.ne.s32.totalorder %s42, %s45
      %p54 = scmp.eq.s32.totalorder %s37, 1
      %p55 = por %p53, %p54
      %p56 = scmp.ne.s32.totalorder %s45, %s46
      %p57 = scmp.eq.s32.totalorder %s37, 0
      %p58 = por %p56, %p57
      %p59 = scmp.ne.s32.totalorder %s45, %s46
      %p60 = scmp.eq.s32.totalorder %s38, 1
      %p61 = por %p59, %p60
      %p63 = scmp.ne.s32.totalorder %s46, %s62
      %p64 = scmp.eq.s32.totalorder %s38, 0
      %p65 = por %p63, %p64
      %s67 = sadd.s32 %s66, 1
      %p70 = scmp.eq.s32.totalorder %s32, 1
      %p71 = scmp.ne.s32.totalorder %s66, %s68
      %p72 = scmp.eq.s32.totalorder %s32, 0
      %p73 = por %p71, %p72
      %p74 = scmp.ne.s32.totalorder %s66, %s68
      %p75 = scmp.eq.s32.totalorder %s37, 1
      %p76 = por %p74, %p75
      %p77 = scmp.ne.s32.totalorder %s68, %s69
      %p78 = scmp.eq.s32.totalorder %s37, 0
      %p79 = por %p77, %p78
      %p80 = scmp.ne.s32.totalorder %s68, %s69
      %p81 = scmp.eq.s32.totalorder %s38, 1
      %p82 = por %p80, %p81
      %p84 = scmp.ne.s32.totalorder %s69, %s83
      %p85 = scmp.eq.s32.totalorder %s38, 0
      %p86 = por %p84, %p85
      %s88 = sadd.s32 %s87, 1
      %p91 = scmp.eq.s32.totalorder %s32, 1
      %p92 = scmp.ne.s32.totalorder %s87, %s89
      %p93 = scmp.eq.s32.totalorder %s32, 0
      %p94 = por %p92, %p93
      %p95 = scmp.ne.s32.totalorder %s87, %s89
      %p96 = scmp.eq.s32.totalorder %s37, 1
      %p97 = por %p95, %p96
      %p98 = scmp.ne.s32.totalorder %s89, %s90
      %p99 = scmp.eq.s32.totalorder %s37, 0
      %p100 = por %p98, %p99
      %p101 = scmp.ne.s32.totalorder %s89, %s90
      %p102 = scmp.eq.s32.totalorder %s38, 1
      %p103 = por %p101, %p102
      %p105 = scmp.ne.s32.totalorder %s90, %s104
      %p106 = scmp.eq.s32.totalorder %s38, 0
      %p107 = por %p105, %p106
      %s109 = sadd.s32 %s108, 1
      %p112 = scmp.eq.s32.totalorder %s32, 1
      %p113 = scmp.ne.s32.totalorder %s108, %s110
      %p114 = scmp.eq.s32.totalorder %s32, 0
      %p115 = por %p113, %p114
      %p116 = scmp.ne.s32.totalorder %s108, %s110
      %p117 = scmp.eq.s32.totalorder %s37, 1
      %p118 = por %p116, %p117
      %p119 = scmp.ne.s32.totalorder %s110, %s111
      %p120 = scmp.eq.s32.totalorder %s37, 0
      %p121 = por %p119, %p120
      %p122 = scmp.ne.s32.totalorder %s110, %s111
      %p123 = scmp.eq.s32.totalorder %s38, 1
      %p124 = por %p122, %p123
      %p126 = scmp.ne.s32.totalorder %s111, %s125
      %p127 = scmp.eq.s32.totalorder %s38, 0
      %p128 = por %p126, %p127
      %s130 = sadd.s32 %s129, 1
      %p133 = scmp.eq.s32.totalorder %s32, 1
      %p134 = scmp.ne.s32.totalorder %s129, %s131
      %p135 = scmp.eq.s32.totalorder %s32, 0
      %p136 = por %p134, %p135
      %p137 = scmp.ne.s32.totalorder %s129, %s131
      %p138 = scmp.eq.s32.totalorder %s37, 1
      %p139 = por %p137, %p138
      %p140 = scmp.ne.s32.totalorder %s131, %s132
      %p141 = scmp.eq.s32.totalorder %s37, 0
      %p142 = por %p140, %p141
      %p143 = scmp.ne.s32.totalorder %s131, %s132
      %p144 = scmp.eq.s32.totalorder %s38, 1
      %p145 = por %p143, %p144
      %p147 = scmp.ne.s32.totalorder %s132, %s146
      %p148 = scmp.eq.s32.totalorder %s38, 0
      %p149 = por %p147, %p148
      %s151 = sadd.s32 %s150, 1
      %p154 = scmp.eq.s32.totalorder %s32, 1
      %p155 = scmp.ne.s32.totalorder %s150, %s152
      %p156 = scmp.eq.s32.totalorder %s32, 0
      %p157 = por %p155, %p156
      %p158 = scmp.ne.s32.totalorder %s150, %s152
      %p159 = scmp.eq.s32.totalorder %s37, 1
      %p160 = por %p158, %p159
      %p161 = scmp.ne.s32.totalorder %s152, %s153
      %p162 = scmp.eq.s32.totalorder %s37, 0
      %p163 = por %p161, %p162
      %p164 = scmp.ne.s32.totalorder %s152, %s153
      %p165 = scmp.eq.s32.totalorder %s38, 1
      %p166 = por %p164, %p165
      %p168 = scmp.ne.s32.totalorder %s153, %s167
      %p169 = scmp.eq.s32.totalorder %s38, 0
      %p170 = por %p168, %p169
      %s172 = sadd.s32 %s171, 1
      %p175 = scmp.eq.s32.totalorder %s32, 1
      %p176 = scmp.ne.s32.totalorder %s171, %s173
      %p177 = scmp.eq.s32.totalorder %s32, 0
      %p178 = por %p176, %p177
      %p179 = scmp.ne.s32.totalorder %s171, %s173
      %p180 = scmp.eq.s32.totalorder %s37, 1
      %p181 = por %p179, %p180
      %p182 = scmp.ne.s32.totalorder %s173, %s174
      %p183 = scmp.eq.s32.totalorder %s37, 0
      %p184 = por %p182, %p183
      %p185 = scmp.ne.s32.totalorder %s173, %s174
      %p186 = scmp.eq.s32.totalorder %s38, 1
      %p187 = por %p185, %p186
      %p189 = scmp.ne.s32.totalorder %s174, %s188
      %p190 = scmp.eq.s32.totalorder %s38, 0
      %p191 = por %p189, %p190
      %s193 = sadd.s32 %s192, 1
      %p196 = scmp.eq.s32.totalorder %s32, 1
      %p197 = scmp.ne.s32.totalorder %s192, %s194
      %p198 = scmp.eq.s32.totalorder %s32, 0
      %p199 = por %p197, %p198
      %p200 = scmp.ne.s32.totalorder %s192, %s194
      %p201 = scmp.eq.s32.totalorder %s37, 1
      %p202 = por %p200, %p201
      %p203 = scmp.ne.s32.totalorder %s194, %s195
      %p204 = scmp.eq.s32.totalorder %s37, 0
      %p205 = por %p203, %p204
      %p206 = scmp.ne.s32.totalorder %s194, %s195
      %p207 = scmp.eq.s32.totalorder %s38, 1
      %p208 = por %p206, %p207
      %p210 = scmp.ne.s32.totalorder %s195, %s209
      %p211 = scmp.eq.s32.totalorder %s38, 0
      %p212 = por %p210, %p211
      %s214 = sadd.s32 %s213, 1
      %p217 = scmp.eq.s32.totalorder %s32, 1
      %p218 = scmp.ne.s32.totalorder %s213, %s215
      %p219 = scmp.eq.s32.totalorder %s32, 0
      %p220 = por %p218, %p219
      %p221 = scmp.ne.s32.totalorder %s213, %s215
      %p222 = scmp.eq.s32.totalorder %s37, 1
      %p223 = por %p221, %p222
      %p224 = scmp.ne.s32.totalorder %s215, %s216
      %p225 = scmp.eq.s32.totalorder %s37, 0
      %p226 = por %p224, %p225
      %p227 = scmp.ne.s32.totalorder %s215, %s216
      %p228 = scmp.eq.s32.totalorder %s38, 1
      %p229 = por %p227, %p228
      %p231 = scmp.ne.s32.totalorder %s216, %s230
      %p232 = scmp.eq.s32.totalorder %s38, 0
      %p233 = por %p231, %p232
      %s235 = sadd.s32 %s234, 1
      %p238 = scmp.eq.s32.totalorder %s32, 1
      %p239 = scmp.ne.s32.totalorder %s234, %s236
      %p240 = scmp.eq.s32.totalorder %s32, 0
      %p241 = por %p239, %p240
      %p242 = scmp.ne.s32.totalorder %s234, %s236
      %p243 = scmp.eq.s32.totalorder %s37, 1
      %p244 = por %p242, %p243
      %p245 = scmp.ne.s32.totalorder %s236, %s237
      %p246 = scmp.eq.s32.totalorder %s37, 0
      %p247 = por %p245, %p246
      %p248 = scmp.ne.s32.totalorder %s236, %s237
      %p249 = scmp.eq.s32.totalorder %s38, 1
      %p250 = por %p248, %p249
      %p252 = scmp.ne.s32.totalorder %s237, %s251
      %p253 = scmp.eq.s32.totalorder %s38, 0
      %p254 = por %p252, %p253
      %s256 = sadd.s32 %s255, 1
      %p259 = scmp.eq.s32.totalorder %s32, 1
      %p260 = scmp.ne.s32.totalorder %s255, %s257
      %p261 = scmp.eq.s32.totalorder %s32, 0
      %p262 = por %p260, %p261
      %p263 = scmp.ne.s32.totalorder %s255, %s257
      %p264 = scmp.eq.s32.totalorder %s37, 1
      %p265 = por %p263, %p264
      %p266 = scmp.ne.s32.totalorder %s257, %s258
      %p267 = scmp.eq.s32.totalorder %s37, 0
      %p268 = por %p266, %p267
      %p269 = scmp.ne.s32.totalorder %s257, %s258
      %p270 = scmp.eq.s32.totalorder %s38, 1
      %p271 = por %p269, %p270
      %p273 = scmp.ne.s32.totalorder %s258, %s272
      %p274 = scmp.eq.s32.totalorder %s38, 0
      %p275 = por %p273, %p274
      %s277 = sadd.s32 %s276, 1
      %p280 = scmp.eq.s32.totalorder %s32, 1
      %p281 = scmp.ne.s32.totalorder %s276, %s278
      %p282 = scmp.eq.s32.totalorder %s32, 0
      %p283 = por %p281, %p282
      %p284 = scmp.ne.s32.totalorder %s276, %s278
      %p285 = scmp.eq.s32.totalorder %s37, 1
      %p286 = por %p284, %p285
      %p287 = scmp.ne.s32.totalorder %s278, %s279
      %p288 = scmp.eq.s32.totalorder %s37, 0
      %p289 = por %p287, %p288
      %p290 = scmp.ne.s32.totalorder %s278, %s279
      %p291 = scmp.eq.s32.totalorder %s38, 1
      %p292 = por %p290, %p291
      %p294 = scmp.ne.s32.totalorder %s279, %s293
      %p295 = scmp.eq.s32.totalorder %s38, 0
      %p296 = por %p294, %p295
      %s298 = sadd.s32 %s297, 1
      %p301 = scmp.eq.s32.totalorder %s32, 1
      %p302 = scmp.ne.s32.totalorder %s297, %s299
      %p303 = scmp.eq.s32.totalorder %s32, 0
      %p304 = por %p302, %p303
      %p305 = scmp.ne.s32.totalorder %s297, %s299
      %p306 = scmp.eq.s32.totalorder %s37, 1
      %p307 = por %p305, %p306
      %p308 = scmp.ne.s32.totalorder %s299, %s300
      %p309 = scmp.eq.s32.totalorder %s37, 0
      %p310 = por %p308, %p309
      %p311 = scmp.ne.s32.totalorder %s299, %s300
      %p312 = scmp.eq.s32.totalorder %s38, 1
      %p313 = por %p311, %p312
      %p315 = scmp.ne.s32.totalorder %s300, %s314
      %p316 = scmp.eq.s32.totalorder %s38, 0
      %p317 = por %p315, %p316
      %s319 = sadd.s32 %s318, 1
      %p322 = scmp.eq.s32.totalorder %s32, 1
      %p323 = scmp.ne.s32.totalorder %s318, %s320
      %p324 = scmp.eq.s32.totalorder %s32, 0
      %p325 = por %p323, %p324
      %p326 = scmp.ne.s32.totalorder %s318, %s320
      %p327 = scmp.eq.s32.totalorder %s37, 1
      %p328 = por %p326, %p327
      %p329 = scmp.ne.s32.totalorder %s320, %s321
      %p330 = scmp.eq.s32.totalorder %s37, 0
      %p331 = por %p329, %p330
      %p332 = scmp.ne.s32.totalorder %s320, %s321
      %p333 = scmp.eq.s32.totalorder %s38, 1
      %p334 = por %p332, %p333
      %p336 = scmp.ne.s32.totalorder %s321, %s335
      %p337 = scmp.eq.s32.totalorder %s38, 0
      %p338 = por %p336, %p337
      %s340 = sadd.s32 %s339, 1
      %p343 = scmp.eq.s32.totalorder %s32, 1
      %p344 = scmp.ne.s32.totalorder %s339, %s341
      %p345 = scmp.eq.s32.totalorder %s32, 0
      %p346 = por %p344, %p345
      %p347 = scmp.ne.s32.totalorder %s339, %s341
      %p348 = scmp.eq.s32.totalorder %s37, 1
      %p349 = por %p347, %p348
      %p350 = scmp.ne.s32.totalorder %s341, %s342
      %p351 = scmp.eq.s32.totalorder %s37, 0
      %p352 = por %p350, %p351
      %p353 = scmp.ne.s32.totalorder %s341, %s342
      %p354 = scmp.eq.s32.totalorder %s38, 1
      %p355 = por %p353, %p354
      %p357 = scmp.ne.s32.totalorder %s342, %s356
      %p358 = scmp.eq.s32.totalorder %s38, 0
      %p359 = por %p357, %p358
      %s361 = sadd.s32 %s360, 1
      %p364 = scmp.eq.s32.totalorder %s32, 1
      %p365 = scmp.ne.s32.totalorder %s360, %s362
      %p366 = scmp.eq.s32.totalorder %s32, 0
      %p367 = por %p365, %p366
      %p368 = scmp.ne.s32.totalorder %s360, %s362
      %p369 = scmp.eq.s32.totalorder %s37, 1
      %p370 = por %p368, %p369
      %p371 = scmp.ne.s32.totalorder %s362, %s363
      %p372 = scmp.eq.s32.totalorder %s37, 0
      %p373 = por %p371, %p372
      %p374 = scmp.ne.s32.totalorder %s362, %s363
      %p375 = scmp.eq.s32.totalorder %s38, 1
      %p376 = por %p374, %p375
      %p378 = scmp.ne.s32.totalorder %s363, %s377
      %p379 = scmp.eq.s32.totalorder %s38, 0
      %p380 = por %p378, %p379
      %s382 = sadd.s32 %s381, 1
      %p385 = scmp.eq.s32.totalorder %s32, 1
      %p386 = scmp.ne.s32.totalorder %s381, %s383
      %p387 = scmp.eq.s32.totalorder %s32, 0
      %p388 = por %p386, %p387
      %p389 = scmp.ne.s32.totalorder %s381, %s383
      %p390 = scmp.eq.s32.totalorder %s37, 1
      %p391 = por %p389, %p390
      %p392 = scmp.ne.s32.totalorder %s383, %s384
      %p393 = scmp.eq.s32.totalorder %s37, 0
      %p394 = por %p392, %p393
      %p395 = scmp.ne.s32.totalorder %s383, %s384
      %p396 = scmp.eq.s32.totalorder %s38, 1
      %p397 = por %p395, %p396
      %p399 = scmp.ne.s32.totalorder %s384, %s398
      %p400 = scmp.eq.s32.totalorder %s38, 0
      %p401 = por %p399, %p400
      %s403 = sadd.s32 %s402, 1
      %p406 = scmp.eq.s32.totalorder %s32, 1
      %p407 = scmp.ne.s32.totalorder %s402, %s404
      %p408 = scmp.eq.s32.totalorder %s32, 0
      %p409 = por %p407, %p408
      %p410 = scmp.ne.s32.totalorder %s402, %s404
      %p411 = scmp.eq.s32.totalorder %s37, 1
      %p412 = por %p410, %p411
      %p413 = scmp.ne.s32.totalorder %s404, %s405
      %p414 = scmp.eq.s32.totalorder %s37, 0
      %p415 = por %p413, %p414
      %p416 = scmp.ne.s32.totalorder %s404, %s405
      %p417 = scmp.eq.s32.totalorder %s38, 1
      %p418 = por %p416, %p417
      %p420 = scmp.ne.s32.totalorder %s405, %s419
      %p421 = scmp.eq.s32.totalorder %s38, 0
      %p422 = por %p420, %p421
      %s424 = sadd.s32 %s423, 1
      %p427 = scmp.eq.s32.totalorder %s32, 1
      %p428 = scmp.ne.s32.totalorder %s423, %s425
      %p429 = scmp.eq.s32.totalorder %s32, 0
      %p430 = por %p428, %p429
      %p431 = scmp.ne.s32.totalorder %s423, %s425
      %p432 = scmp.eq.s32.totalorder %s37, 1
      %p433 = por %p431, %p432
      %p434 = scmp.ne.s32.totalorder %s425, %s426
      %p435 = scmp.eq.s32.totalorder %s37, 0
      %p436 = por %p434, %p435
      %p437 = scmp.ne.s32.totalorder %s425, %s426
      %p438 = scmp.eq.s32.totalorder %s38, 1
      %p439 = por %p437, %p438
      %p441 = scmp.ne.s32.totalorder %s426, %s440
      %p442 = scmp.eq.s32.totalorder %s38, 0
      %p443 = por %p441, %p442
      %s445 = sadd.s32 %s444, 1
      %p448 = scmp.eq.s32.totalorder %s32, 1
      %p449 = scmp.ne.s32.totalorder %s444, %s446
      %p450 = scmp.eq.s32.totalorder %s32, 0
      %p451 = por %p449, %p450
      %p452 = scmp.ne.s32.totalorder %s444, %s446
      %p453 = scmp.eq.s32.totalorder %s37, 1
      %p454 = por %p452, %p453
      %p455 = scmp.ne.s32.totalorder %s446, %s447
      %p456 = scmp.eq.s32.totalorder %s37, 0
      %p457 = por %p455, %p456
      %p458 = scmp.ne.s32.totalorder %s446, %s447
      %p459 = scmp.eq.s32.totalorder %s38, 1
      %p460 = por %p458, %p459
      %p462 = scmp.ne.s32.totalorder %s447, %s461
      %p463 = scmp.eq.s32.totalorder %s38, 0
      %p464 = por %p462, %p463
      %s466 = sadd.s32 %s465, 1
      %p469 = scmp.eq.s32.totalorder %s32, 1
      %p470 = scmp.ne.s32.totalorder %s465, %s467
      %p471 = scmp.eq.s32.totalorder %s32, 0
      %p472 = por %p470, %p471
      %p473 = scmp.ne.s32.totalorder %s465, %s467
      %p474 = scmp.eq.s32.totalorder %s37, 1
      %p475 = por %p473, %p474
      %p476 = scmp.ne.s32.totalorder %s467, %s468
      %p477 = scmp.eq.s32.totalorder %s37, 0
      %p478 = por %p476, %p477
      %p479 = scmp.ne.s32.totalorder %s467, %s468
      %p480 = scmp.eq.s32.totalorder %s38, 1
      %p481 = por %p479, %p480
      %p483 = scmp.ne.s32.totalorder %s468, %s482
      %p484 = scmp.eq.s32.totalorder %s38, 0
      %p485 = por %p483, %p484
      %s487 = sadd.s32 %s486, 1
      %p490 = scmp.eq.s32.totalorder %s32, 1
      %p491 = scmp.ne.s32.totalorder %s486, %s488
      %p492 = scmp.eq.s32.totalorder %s32, 0
      %p493 = por %p491, %p492
      %p494 = scmp.ne.s32.totalorder %s486, %s488
      %p495 = scmp.eq.s32.totalorder %s37, 1
      %p496 = por %p494, %p495
      %p497 = scmp.ne.s32.totalorder %s488, %s489
      %p498 = scmp.eq.s32.totalorder %s37, 0
      %p499 = por %p497, %p498
      %p500 = scmp.ne.s32.totalorder %s488, %s489
      %p501 = scmp.eq.s32.totalorder %s38, 1
      %p502 = por %p500, %p501
      %p504 = scmp.ne.s32.totalorder %s489, %s503
      %p505 = scmp.eq.s32.totalorder %s38, 0
      %p506 = por %p504, %p505
      %s508 = sadd.s32 %s507, 1
      %p511 = scmp.eq.s32.totalorder %s32, 1
      %p512 = scmp.ne.s32.totalorder %s507, %s509
      %p513 = scmp.eq.s32.totalorder %s32, 0
      %p514 = por %p512, %p513
      %p515 = scmp.ne.s32.totalorder %s507, %s509
      %p516 = scmp.eq.s32.totalorder %s37, 1
      %p517 = por %p515, %p516
      %p518 = scmp.ne.s32.totalorder %s509, %s510
      %p519 = scmp.eq.s32.totalorder %s37, 0
      %p520 = por %p518, %p519
      %p521 = scmp.ne.s32.totalorder %s509, %s510
      %p522 = scmp.eq.s32.totalorder %s38, 1
      %p523 = por %p521, %p522
      %p525 = scmp.ne.s32.totalorder %s510, %s524
      %p526 = scmp.eq.s32.totalorder %s38, 0
      %p527 = por %p525, %p526
      %s528 = ssub.s32 %s32, %s39
      %p529 = scmp.eq.s32.totalorder %s528, 0
      %s531 = sadd.s32 %s530, 1
      %s532 = scalar_select %p529, %s530, %s531
      %p535 = pneg %p529
      %p536 = scmp.eq.s32.totalorder %s32, 1
      %p537 = por %p535, %p536
      %p538 = scmp.ne.s32.totalorder %s530, %s533
      %p539 = scmp.eq.s32.totalorder %s32, 0
      %p540 = por %p538, %p539
      %p541 = scmp.ne.s32.totalorder %s530, %s533
      %p542 = scmp.eq.s32.totalorder %s37, 1
      %p543 = por %p541, %p542
      %p544 = scmp.ne.s32.totalorder %s533, %s534
      %p545 = scmp.eq.s32.totalorder %s37, 0
      %p546 = por %p544, %p545
      %p547 = scmp.ne.s32.totalorder %s533, %s534
      %p548 = scmp.eq.s32.totalorder %s38, 1
      %p549 = por %p547, %p548
      %p551 = scmp.ne.s32.totalorder %s534, %s550
      %p552 = scmp.eq.s32.totalorder %s38, 0
      %p553 = por %p551, %p552
      %p554 = scmp.le.s32.totalorder 1, %s32
      %p555 = scmp.lt.s32.totalorder %s32, 3
      %p556 = pnand %p554, %p555
      %p557 = pneg %p556
      // Predicated region
      $region9: #{straightnet_back_lc_forward.2} parent=5 // pred_check
        _
      $region10: #{straightnet_back_lc_forward.2} parent=5 // pred_check_branch
        %559 = sbr.rel (%p556) target = $region12
      $region11: #{straightnet_back_lc_forward.2} parent=5 // pred_region
        %s560 = ssub.s32 %s32, 1
        // Predicated region
        $region13: #{straightnet_back_lc_forward.2} parent=11 // pred_check
          %p561 = pneg %p79
        $region14: #{straightnet_back_lc_forward.2} parent=11 // pred_check_branch
          %563 = sbr.rel (%p561) target = $region16
        $region15: #{straightnet_back_lc_forward.2} parent=11 // pred_region
          _
        $region16: #{straightnet_back_lc_forward.2} parent=11 // pred_fallthru
          _
        // Predicated region
        $region17: #{straightnet_back_lc_forward.2} parent=11 // pred_check
          %p564 = pneg %p100
        $region18: #{straightnet_back_lc_forward.2} parent=11 // pred_check_branch
          %566 = sbr.rel (%p564) target = $region20
        $region19: #{straightnet_back_lc_forward.2} parent=11 // pred_region
          _
        $region20: #{straightnet_back_lc_forward.2} parent=11 // pred_fallthru
          _
        // Predicated region
        $region21: #{straightnet_back_lc_forward.2} parent=11 // pred_check
          %p567 = pneg %p121
        $region22: #{straightnet_back_lc_forward.2} parent=11 // pred_check_branch
          %569 = sbr.rel (%p567) target = $region24
        $region23: #{straightnet_back_lc_forward.2} parent=11 // pred_region
          _
        $region24: #{straightnet_back_lc_forward.2} parent=11 // pred_fallthru
          _
        // Predicated region
        $region25: #{straightnet_back_lc_forward.2} parent=11 // pred_check
          %p570 = pneg %p142
        $region26: #{straightnet_back_lc_forward.2} parent=11 // pred_check_branch
          %572 = sbr.rel (%p570) target = $region28
        $region27: #{straightnet_back_lc_forward.2} parent=11 // pred_region
          _
        $region28: #{straightnet_back_lc_forward.2} parent=11 // pred_fallthru
          _
        // Predicated region
        $region29: #{straightnet_back_lc_forward.2} parent=11 // pred_check
          %p573 = pneg %p163
        $region30: #{straightnet_back_lc_forward.2} parent=11 // pred_check_branch
          %575 = sbr.rel (%p573) target = $region32
        $region31: #{straightnet_back_lc_forward.2} parent=11 // pred_region
          _
        $region32: #{straightnet_back_lc_forward.2} parent=11 // pred_fallthru
          _
        // Predicated region
        $region33: #{straightnet_back_lc_forward.2} parent=11 // pred_check
          %p576 = pneg %p184
        $region34: #{straightnet_back_lc_forward.2} parent=11 // pred_check_branch
          %578 = sbr.rel (%p576) target = $region36
        $region35: #{straightnet_back_lc_forward.2} parent=11 // pred_region
          _
        $region36: #{straightnet_back_lc_forward.2} parent=11 // pred_fallthru
          _
        // Predicated region
        $region37: #{straightnet_back_lc_forward.2} parent=11 // pred_check
          %p579 = pneg %p205
        $region38: #{straightnet_back_lc_forward.2} parent=11 // pred_check_branch
          %581 = sbr.rel (%p579) target = $region40
        $region39: #{straightnet_back_lc_forward.2} parent=11 // pred_region
          _
        $region40: #{straightnet_back_lc_forward.2} parent=11 // pred_fallthru
          _
        // Predicated region
        $region41: #{straightnet_back_lc_forward.2} parent=11 // pred_check
          %p582 = pneg %p226
        $region42: #{straightnet_back_lc_forward.2} parent=11 // pred_check_branch
          %584 = sbr.rel (%p582) target = $region44
        $region43: #{straightnet_back_lc_forward.2} parent=11 // pred_region
          _
        $region44: #{straightnet_back_lc_forward.2} parent=11 // pred_fallthru
          _
        // Predicated region
        $region45: #{straightnet_back_lc_forward.2} parent=11 // pred_check
          %p585 = pneg %p247
        $region46: #{straightnet_back_lc_forward.2} parent=11 // pred_check_branch
          %587 = sbr.rel (%p585) target = $region48
        $region47: #{straightnet_back_lc_forward.2} parent=11 // pred_region
          %s589 = ssub.s32 3072, 3072
          %590 = vsyncadd [#allocation3], %s589
          %s591 = sshll.u32 [#allocation2], 4
          %s592 = int_to_ptr.vmem [resolvable:$true] %s591
          %597 = dma.hbm_to_vmem [thread:$0]  %s9, 3072, %s592, [#allocation3], 64, 64, 4
        $region48: #{straightnet_back_lc_forward.2} parent=11 // pred_fallthru
          _
        // Predicated region
        $region49: #{straightnet_back_lc_forward.2} parent=11 // pred_check
          %p598 = pneg %p268
        $region50: #{straightnet_back_lc_forward.2} parent=11 // pred_check_branch
          %600 = sbr.rel (%p598) target = $region52
        $region51: #{straightnet_back_lc_forward.2} parent=11 // pred_region
          _
        $region52: #{straightnet_back_lc_forward.2} parent=11 // pred_fallthru
          _
        // Predicated region
        $region53: #{straightnet_back_lc_forward.2} parent=11 // pred_check
          %p601 = pneg %p289
        $region54: #{straightnet_back_lc_forward.2} parent=11 // pred_check_branch
          %603 = sbr.rel (%p601) target = $region56
        $region55: #{straightnet_back_lc_forward.2} parent=11 // pred_region
          _
        $region56: #{straightnet_back_lc_forward.2} parent=11 // pred_fallthru
          _
        // Predicated region
        $region57: #{straightnet_back_lc_forward.2} parent=11 // pred_check
          %p604 = pneg %p310
        $region58: #{straightnet_back_lc_forward.2} parent=11 // pred_check_branch
          %606 = sbr.rel (%p604) target = $region60
        $region59: #{straightnet_back_lc_forward.2} parent=11 // pred_region
          %s608 = ssub.s32 3072, 3072
          %609 = vsyncadd [#allocation5], %s608
          %s610 = sshll.u32 [#allocation4], 4
          %s611 = int_to_ptr.vmem [resolvable:$true] %s610
          %616 = dma.hbm_to_vmem [thread:$0]  %s12, 3072, %s611, [#allocation5], 64, 64, 4
        $region60: #{straightnet_back_lc_forward.2} parent=11 // pred_fallthru
          _
        // Predicated region
        $region61: #{straightnet_back_lc_forward.2} parent=11 // pred_check
          %p617 = pneg %p331
        $region62: #{straightnet_back_lc_forward.2} parent=11 // pred_check_branch
          %619 = sbr.rel (%p617) target = $region64
        $region63: #{straightnet_back_lc_forward.2} parent=11 // pred_region
          _
        $region64: #{straightnet_back_lc_forward.2} parent=11 // pred_fallthru
          _
        // Predicated region
        $region65: #{straightnet_back_lc_forward.2} parent=11 // pred_check
          %p620 = pneg %p352
        $region66: #{straightnet_back_lc_forward.2} parent=11 // pred_check_branch
          %622 = sbr.rel (%p620) target = $region68
        $region67: #{straightnet_back_lc_forward.2} parent=11 // pred_region
          _
        $region68: #{straightnet_back_lc_forward.2} parent=11 // pred_fallthru
          _
        // Predicated region
        $region69: #{straightnet_back_lc_forward.2} parent=11 // pred_check
          %p623 = pneg %p373
        $region70: #{straightnet_back_lc_forward.2} parent=11 // pred_check_branch
          %625 = sbr.rel (%p623) target = $region72
        $region71: #{straightnet_back_lc_forward.2} parent=11 // pred_region
          %s627 = ssub.s32 3072, 3072
          %628 = vsyncadd [#allocation5], %s627
          %s629 = sshll.u32 [#allocation6], 4
          %s630 = int_to_ptr.vmem [resolvable:$true] %s629
          %635 = dma.hbm_to_vmem [thread:$0]  %s15, 3072, %s630, [#allocation5], 64, 64, 4
        $region72: #{straightnet_back_lc_forward.2} parent=11 // pred_fallthru
          _
        // Predicated region
        $region73: #{straightnet_back_lc_forward.2} parent=11 // pred_check
          %p636 = pneg %p394
        $region74: #{straightnet_back_lc_forward.2} parent=11 // pred_check_branch
          %638 = sbr.rel (%p636) target = $region76
        $region75: #{straightnet_back_lc_forward.2} parent=11 // pred_region
          _
        $region76: #{straightnet_back_lc_forward.2} parent=11 // pred_fallthru
          _
        // Predicated region
        $region77: #{straightnet_back_lc_forward.2} parent=11 // pred_check
          %p639 = pneg %p415
        $region78: #{straightnet_back_lc_forward.2} parent=11 // pred_check_branch
          %641 = sbr.rel (%p639) target = $region80
        $region79: #{straightnet_back_lc_forward.2} parent=11 // pred_region
          _
        $region80: #{straightnet_back_lc_forward.2} parent=11 // pred_fallthru
          _
        // Predicated region
        $region81: #{straightnet_back_lc_forward.2} parent=11 // pred_check
          %p642 = pneg %p436
        $region82: #{straightnet_back_lc_forward.2} parent=11 // pred_check_branch
          %644 = sbr.rel (%p642) target = $region84
        $region83: #{straightnet_back_lc_forward.2} parent=11 // pred_region
          %s646 = ssub.s32 3072, 3072
          %647 = vsyncadd [#allocation8], %s646
          %s648 = sshll.u32 [#allocation7], 4
          %s649 = int_to_ptr.vmem [resolvable:$true] %s648
          %654 = dma.hbm_to_vmem [thread:$0]  %s18, 3072, %s649, [#allocation8], 64, 64, 4
        $region84: #{straightnet_back_lc_forward.2} parent=11 // pred_fallthru
          _
        // Predicated region
        $region85: #{straightnet_back_lc_forward.2} parent=11 // pred_check
          %p655 = pneg %p457
        $region86: #{straightnet_back_lc_forward.2} parent=11 // pred_check_branch
          %657 = sbr.rel (%p655) target = $region88
        $region87: #{straightnet_back_lc_forward.2} parent=11 // pred_region
          _
        $region88: #{straightnet_back_lc_forward.2} parent=11 // pred_fallthru
          _
        // Predicated region
        $region89: #{straightnet_back_lc_forward.2} parent=11 // pred_check
          %p658 = pneg %p478
        $region90: #{straightnet_back_lc_forward.2} parent=11 // pred_check_branch
          %660 = sbr.rel (%p658) target = $region92
        $region91: #{straightnet_back_lc_forward.2} parent=11 // pred_region
          _
        $region92: #{straightnet_back_lc_forward.2} parent=11 // pred_fallthru
          _
        // Predicated region
        $region93: #{straightnet_back_lc_forward.2} parent=11 // pred_check
          %p661 = pneg %p499
        $region94: #{straightnet_back_lc_forward.2} parent=11 // pred_check_branch
          %663 = sbr.rel (%p661) target = $region96
        $region95: #{straightnet_back_lc_forward.2} parent=11 // pred_region
          _
        $region96: #{straightnet_back_lc_forward.2} parent=11 // pred_fallthru
          _
        // Predicated region
        $region97: #{straightnet_back_lc_forward.2} parent=11 // pred_check
          %p664 = pneg %p520
        $region98: #{straightnet_back_lc_forward.2} parent=11 // pred_check_branch
          %666 = sbr.rel (%p664) target = $region100
        $region99: #{straightnet_back_lc_forward.2} parent=11 // pred_region
          _
        $region100: #{straightnet_back_lc_forward.2} parent=11 // pred_fallthru
          _
      $region12: #{straightnet_back_lc_forward.2} parent=5 // pred_fallthru
        _
      %p667 = scmp.lt.s32.totalorder %s32, 2
      // Predicated region
      $region101: #{straightnet_back_lc_forward.2} parent=5 // pred_check
        %p668 = pneg %p667
      $region102: #{straightnet_back_lc_forward.2} parent=5 // pred_check_branch
        %670 = sbr.rel (%p668) target = $region104
      $region103: #{straightnet_back_lc_forward.2} parent=5 // pred_region
        // Predicated region
        $region105: #{straightnet_back_lc_forward.2} parent=103 // pred_check
          %p671 = pneg %p52
        $region106: #{straightnet_back_lc_forward.2} parent=103 // pred_check_branch
          %673 = sbr.rel (%p671) target = $region108
        $region107: #{straightnet_back_lc_forward.2} parent=103 // pred_region
          %s674 = smul.u32 8, %s32
          %p675 = scmp.lt.s32.totalorder %s674, 15
          %s676 = scalar_select %p675, %s674, 15
          %s677 = smul.addr %s676, 8
          %s678 = scalar_lea.vmem %s0, %s677
          %s679 = smul.u32 8, %s32
        $region108: #{straightnet_back_lc_forward.2} parent=103 // pred_fallthru
          _
      $region104: #{straightnet_back_lc_forward.2} parent=5 // pred_fallthru
        _
      %p680 = scmp.le.s32.totalorder 1, %s32
      %p681 = scmp.lt.s32.totalorder %s32, 3
      %p682 = pnand %p680, %p681
      %p683 = pneg %p682
      // Predicated region
      $region109: #{straightnet_back_lc_forward.2} parent=5 // pred_check
        _
      $region110: #{straightnet_back_lc_forward.2} parent=5 // pred_check_branch
        %685 = sbr.rel (%p682) target = $region112
      $region111: #{straightnet_back_lc_forward.2} parent=5 // pred_region
        %s686 = ssub.s32 %s32, 1
        // Predicated region
        $region113: #{straightnet_back_lc_forward.2} parent=111 // pred_check
          %p687 = pneg %p247
        $region114: #{straightnet_back_lc_forward.2} parent=111 // pred_check_branch
          %689 = sbr.rel (%p687) target = $region116
        $region115: #{straightnet_back_lc_forward.2} parent=111 // pred_region
          %690 = dma.done [#allocation3], 3072
        $region116: #{straightnet_back_lc_forward.2} parent=111 // pred_fallthru
          _
        // Predicated region
        $region117: #{straightnet_back_lc_forward.2} parent=111 // pred_check
          %p691 = pneg %p310
        $region118: #{straightnet_back_lc_forward.2} parent=111 // pred_check_branch
          %693 = sbr.rel (%p691) target = $region120
        $region119: #{straightnet_back_lc_forward.2} parent=111 // pred_region
          %694 = dma.done [#allocation5], 3072
        $region120: #{straightnet_back_lc_forward.2} parent=111 // pred_fallthru
          _
        // Predicated region
        $region121: #{straightnet_back_lc_forward.2} parent=111 // pred_check
          %p695 = pneg %p373
        $region122: #{straightnet_back_lc_forward.2} parent=111 // pred_check_branch
          %697 = sbr.rel (%p695) target = $region124
        $region123: #{straightnet_back_lc_forward.2} parent=111 // pred_region
          %698 = dma.done [#allocation5], 3072
        $region124: #{straightnet_back_lc_forward.2} parent=111 // pred_fallthru
          _
        // Predicated region
        $region125: #{straightnet_back_lc_forward.2} parent=111 // pred_check
          %p699 = pneg %p436
        $region126: #{straightnet_back_lc_forward.2} parent=111 // pred_check_branch
          %701 = sbr.rel (%p699) target = $region128
        $region127: #{straightnet_back_lc_forward.2} parent=111 // pred_region
          %702 = dma.done [#allocation8], 3072
        $region128: #{straightnet_back_lc_forward.2} parent=111 // pred_fallthru
          _
        %s703 = smul.u32 8, %s37
        %p704 = scmp.lt.s32.totalorder %s703, 15
        %s705 = scalar_select %p704, %s703, 15
        %s706 = smul.addr %s705, 8
        %s707 = scalar_lea.vmem %s0, %s706
        %p708 = pneg %p58
        %p709 = pneg %p55
        %p710 = pneg %p79
        %p711 = pneg %p76
        %p712 = pneg %p100
        %p713 = pneg %p97
        %p714 = pneg %p121
        %p715 = pneg %p118
        %p716 = pneg %p142
        %p717 = pneg %p139
        %p718 = pneg %p163
        %p719 = pneg %p160
        %p720 = pneg %p184
        %p721 = pneg %p181
        %p722 = pneg %p205
        %p723 = pneg %p202
        %p724 = pneg %p226
        %p725 = pneg %p223
        %p726 = pneg %p247
        %p727 = pneg %p244
        %p728 = pneg %p268
        %p729 = pneg %p265
        %p730 = pneg %p289
        %p731 = pneg %p286
        %p732 = pneg %p310
        %p733 = pneg %p307
        %p734 = pneg %p331
        %p735 = pneg %p328
        %p736 = pneg %p352
        %p737 = pneg %p349
        %p738 = pneg %p373
        %p739 = pneg %p370
        %p740 = pneg %p394
        %p741 = pneg %p391
        %p742 = pneg %p415
        %p743 = pneg %p412
        %p744 = pneg %p436
        %p745 = pneg %p433
        %p746 = pneg %p457
        %p747 = pneg %p454
        %p748 = pneg %p478
        %p749 = pneg %p475
        %p750 = pneg %p499
        %p751 = pneg %p496
        %p752 = pneg %p520
        %p753 = pneg %p517
        %p754 = pneg %p546
        %p755 = pneg %p543
        %s756 = smul.u32 8, %s37
        %p757 = scmp.lt.s32.totalorder %s756, 15
        %s758 = scalar_select %p757, %s756, 15
        %s759 = smul.addr %s758, 8
        %s760 = smul.addr %s759, 4
        %s761 = scalar_lea.vmem %s23, %s760
        %s762 = smul.u32 8, %s37
        %p763 = scmp.lt.s32.totalorder %s762, 15
        %s764 = scalar_select %p763, %s762, 15
        %s765 = smul.addr %s764, 8
        %s766 = scalar_lea.vmem %s0, %s765
        %s767 = smul.u32 8, %s37
        %s768 = smul.u32 8, %s37
        %p769 = scmp.lt.s32.totalorder %s768, 15
        %s770 = scalar_select %p769, %s768, 15
        %s771 = smul.addr %s770, 8
        %s772 = smul.addr %s771, 4
        %s773 = scalar_lea.vmem %s23, %s772
        %s774 = smul.u32 8, %s37
        %v776 = vld [vmem:[%s766] sm:$0xff]
        %v777 = vld [vmem:[%s766 + $0x8] sm:$0xff]
        %v778 = vld [vmem:[%s766 + $0x10] sm:$0xff]
        %v779 = vld [vmem:[%s766 + $0x18] sm:$0xff]
        %v780 = vld [vmem:[%s766 + $0x20] sm:$0xff]
        %v781 = vld [vmem:[%s766 + $0x28] sm:$0xff]
        %v782 = vld [vmem:[%s766 + $0x30] sm:$0xff]
        %v783 = vld [vmem:[%s766 + $0x38] sm:$0xff]
        %v784 = vlaneseq
        %v785 = vshrl.u32 %v784, 7
        %v786 = vadd.s32 %v785, 8
        %v787 = vadd.s32 %v785, 16
        %v788 = vadd.s32 %v785, 24
        %v789 = vadd.s32 %v785, 32
        %v790 = vadd.s32 %v785, 40
        %v791 = vadd.s32 %v785, 48
        %v792 = vadd.s32 %v785, 56
        %vm793 = vcmp.lt.s32.totalorder %v785, 0
        %v794 = vsub.s32 0, %v785
        %v795 = vsel %vm793, %v794, %v785
        %v796 = vshrl.u32 %v795, 4
        %v797 = vand.u32 %v795, 15
        %v798 = vsub.s32 0, %v797
        %v799 = vsel %vm793, %v798, %v797
        %vm800 = vcmp.lt.s32.totalorder %v786, 0
        %v801 = vsub.s32 0, %v786
        %v802 = vsel %vm800, %v801, %v786
        %v803 = vshrl.u32 %v802, 4
        %v804 = vand.u32 %v802, 15
        %v805 = vsub.s32 0, %v804
        %v806 = vsel %vm800, %v805, %v804
        %vm807 = vcmp.lt.s32.totalorder %v787, 0
        %v808 = vsub.s32 0, %v787
        %v809 = vsel %vm807, %v808, %v787
        %v810 = vshrl.u32 %v809, 4
        %v811 = vand.u32 %v809, 15
        %v812 = vsub.s32 0, %v811
        %v813 = vsel %vm807, %v812, %v811
        %vm814 = vcmp.lt.s32.totalorder %v788, 0
        %v815 = vsub.s32 0, %v788
        %v816 = vsel %vm814, %v815, %v788
        %v817 = vshrl.u32 %v816, 4
        %v818 = vand.u32 %v816, 15
        %v819 = vsub.s32 0, %v818
        %v820 = vsel %vm814, %v819, %v818
        %vm821 = vcmp.lt.s32.totalorder %v789, 0
        %v822 = vsub.s32 0, %v789
        %v823 = vsel %vm821, %v822, %v789
        %v824 = vshrl.u32 %v823, 4
        %v825 = vand.u32 %v823, 15
        %v826 = vsub.s32 0, %v825
        %v827 = vsel %vm821, %v826, %v825
        %vm828 = vcmp.lt.s32.totalorder %v790, 0
        %v829 = vsub.s32 0, %v790
        %v830 = vsel %vm828, %v829, %v790
        %v831 = vshrl.u32 %v830, 4
        %v832 = vand.u32 %v830, 15
        %v833 = vsub.s32 0, %v832
        %v834 = vsel %vm828, %v833, %v832
        %vm835 = vcmp.lt.s32.totalorder %v791, 0
        %v836 = vsub.s32 0, %v791
        %v837 = vsel %vm835, %v836, %v791
        %v838 = vshrl.u32 %v837, 4
        %v839 = vand.u32 %v837, 15
        %v840 = vsub.s32 0, %v839
        %v841 = vsel %vm835, %v840, %v839
        %vm842 = vcmp.lt.s32.totalorder %v792, 0
        %v843 = vsub.s32 0, %v792
        %v844 = vsel %vm842, %v843, %v792
        %v845 = vshrl.u32 %v844, 4
        %v846 = vand.u32 %v844, 15
        %v847 = vsub.s32 0, %v846
        %v848 = vsel %vm842, %v847, %v846
        %vm849 = vcmp.ne.s32.totalorder %v799, 0
        %vm850 = vcmp.ne.s32.totalorder %v806, 0
        %vm851 = vcmp.ne.s32.totalorder %v813, 0
        %vm852 = vcmp.ne.s32.totalorder %v820, 0
        %vm853 = vcmp.ne.s32.totalorder %v827, 0
        %vm854 = vcmp.ne.s32.totalorder %v834, 0
        %vm855 = vcmp.ne.s32.totalorder %v841, 0
        %vm856 = vcmp.ne.s32.totalorder %v848, 0
        %vm857 = vcmp.lt.s32.totalorder %v799, 0
        %vm858 = vcmp.lt.s32.totalorder %v806, 0
        %vm859 = vcmp.lt.s32.totalorder %v813, 0
        %vm860 = vcmp.lt.s32.totalorder %v820, 0
        %vm861 = vcmp.lt.s32.totalorder %v827, 0
        %vm862 = vcmp.lt.s32.totalorder %v834, 0
        %vm863 = vcmp.lt.s32.totalorder %v841, 0
        %vm864 = vcmp.lt.s32.totalorder %v848, 0
        %vm865 = vmand %vm857, %vm849
        %vm866 = vmand %vm858, %vm850
        %vm867 = vmand %vm859, %vm851
        %vm868 = vmand %vm860, %vm852
        %vm869 = vmand %vm861, %vm853
        %vm870 = vmand %vm862, %vm854
        %vm871 = vmand %vm863, %vm855
        %vm872 = vmand %vm864, %vm856
        %v873 = vadd.s32 %v799, 16
        %v874 = vadd.s32 %v806, 16
        %v875 = vadd.s32 %v813, 16
        %v876 = vadd.s32 %v820, 16
        %v877 = vadd.s32 %v827, 16
        %v878 = vadd.s32 %v834, 16
        %v879 = vadd.s32 %v841, 16
        %v880 = vadd.s32 %v848, 16
        %v881 = vsel %vm865, %v873, %v799
        %v882 = vsel %vm866, %v874, %v806
        %v883 = vsel %vm867, %v875, %v813
        %v884 = vsel %vm868, %v876, %v820
        %v885 = vsel %vm869, %v877, %v827
        %v886 = vsel %vm870, %v878, %v834
        %v887 = vsel %vm871, %v879, %v841
        %v888 = vsel %vm872, %v880, %v848
        %vm889 = vcmp.ge.s32.totalorder %v881, 1
        %vm890 = vcmp.ge.s32.totalorder %v882, 1
        %vm891 = vcmp.ge.s32.totalorder %v883, 1
        %vm892 = vcmp.ge.s32.totalorder %v884, 1
        %vm893 = vcmp.ge.s32.totalorder %v885, 1
        %vm894 = vcmp.ge.s32.totalorder %v886, 1
        %vm895 = vcmp.ge.s32.totalorder %v887, 1
        %vm896 = vcmp.ge.s32.totalorder %v888, 1
        %vm897 = vcmp.le.s32.totalorder %v881, 14
        %vm898 = vcmp.le.s32.totalorder %v882, 14
        %vm899 = vcmp.le.s32.totalorder %v883, 14
        %vm900 = vcmp.le.s32.totalorder %v884, 14
        %vm901 = vcmp.le.s32.totalorder %v885, 14
        %vm902 = vcmp.le.s32.totalorder %v886, 14
        %vm903 = vcmp.le.s32.totalorder %v887, 14
        %vm904 = vcmp.le.s32.totalorder %v888, 14
        %v905 = vrot.slane %v776, 7
        %v906 = vrot.slane %v777, 7
        %v907 = vrot.slane %v778, 7
        %v908 = vrot.slane %v779, 7
        %v909 = vrot.slane %v780, 7
        %v910 = vrot.slane %v781, 7
        %v911 = vrot.slane %v782, 7
        %v912 = vrot.slane %v783, 7
        %vm913 = vcmp.lt.s32.totalorder %v785, 1
        %v914 = vsel %vm913, %v911, %v912
        %v915 = vsel %vm913, %v910, %v911
        %v916 = vsel %vm913, %v909, %v910
        %v917 = vsel %vm913, %v908, %v909
        %v918 = vsel %vm913, %v907, %v908
        %v919 = vsel %vm913, %v906, %v907
        %v920 = vsel %vm913, %v905, %v906
        %v921 = vsel %vm913, %v912, %v905
        %v922 = vsel %vm889, 1, 0
        %v923 = vsel %vm890, 1, 0
        %v924 = vsel %vm891, 1, 0
        %v925 = vsel %vm892, 1, 0
        %v926 = vsel %vm893, 1, 0
        %v927 = vsel %vm894, 1, 0
        %v928 = vsel %vm895, 1, 0
        %v929 = vsel %vm896, 1, 0
        %vm930 = vcmp.eq.s32.totalorder %v922, 1
        %vm931 = vcmp.eq.s32.totalorder %v923, 1
        %vm932 = vcmp.eq.s32.totalorder %v924, 1
        %vm933 = vcmp.eq.s32.totalorder %v925, 1
        %vm934 = vcmp.eq.s32.totalorder %v926, 1
        %vm935 = vcmp.eq.s32.totalorder %v927, 1
        %vm936 = vcmp.eq.s32.totalorder %v928, 1
        %vm937 = vcmp.eq.s32.totalorder %v929, 1
        %v938 = vsel %vm930, %v921, 0.0
        %v939 = vsel %vm931, %v920, 0.0
        %v940 = vsel %vm932, %v919, 0.0
        %v941 = vsel %vm933, %v918, 0.0
        %v942 = vsel %vm934, %v917, 0.0
        %v943 = vsel %vm935, %v916, 0.0
        %v944 = vsel %vm936, %v915, 0.0
        %v945 = vsel %vm937, %v914, 0.0
        %v946 = vrot.slane %v776, 1
        %v947 = vrot.slane %v777, 1
        %v948 = vrot.slane %v778, 1
        %v949 = vrot.slane %v779, 1
        %v950 = vrot.slane %v780, 1
        %v951 = vrot.slane %v781, 1
        %v952 = vrot.slane %v782, 1
        %v953 = vrot.slane %v783, 1
        %vm954 = vcmp.lt.s32.totalorder %v785, 7
        %v955 = vsel %vm954, %v952, %v953
        %v956 = vsel %vm954, %v951, %v952
        %v957 = vsel %vm954, %v950, %v951
        %v958 = vsel %vm954, %v949, %v950
        %v959 = vsel %vm954, %v948, %v949
        %v960 = vsel %vm954, %v947, %v948
        %v961 = vsel %vm954, %v946, %v947
        %v962 = vsel %vm954, %v953, %v946
        %v963 = vsel %vm897, 1, 0
        %v964 = vsel %vm898, 1, 0
        %v965 = vsel %vm899, 1, 0
        %v966 = vsel %vm900, 1, 0
        %v967 = vsel %vm901, 1, 0
        %v968 = vsel %vm902, 1, 0
        %v969 = vsel %vm903, 1, 0
        %v970 = vsel %vm904, 1, 0
        %vm971 = vcmp.eq.s32.totalorder %v963, 1
        %vm972 = vcmp.eq.s32.totalorder %v964, 1
        %vm973 = vcmp.eq.s32.totalorder %v965, 1
        %vm974 = vcmp.eq.s32.totalorder %v966, 1
        %vm975 = vcmp.eq.s32.totalorder %v967, 1
        %vm976 = vcmp.eq.s32.totalorder %v968, 1
        %vm977 = vcmp.eq.s32.totalorder %v969, 1
        %vm978 = vcmp.eq.s32.totalorder %v970, 1
        %v979 = vsel %vm971, %v961, 0.0
        %v980 = vsel %vm972, %v960, 0.0
        %v981 = vsel %vm973, %v959, 0.0
        %v982 = vsel %vm974, %v958, 0.0
        %v983 = vsel %vm975, %v957, 0.0
        %v984 = vsel %vm976, %v956, 0.0
        %v985 = vsel %vm977, %v955, 0.0
        %v986 = vsel %vm978, %v962, 0.0
        %v987 = vpack.c.bf16 %v939, %v938
        %v988 = vpack.c.bf16 %v777, %v776
        %v989 = vpack.c.bf16 %v980, %v979
        %v990 = vpack.c.bf16 %v941, %v940
        %v991 = vpack.c.bf16 %v779, %v778
        %v992 = vpack.c.bf16 %v982, %v981
        %v993 = vpack.c.bf16 %v943, %v942
        %v994 = vpack.c.bf16 %v781, %v780
        %v995 = vpack.c.bf16 %v984, %v983
        %v996 = vpack.c.bf16 %v945, %v944
        %v997 = vpack.c.bf16 %v783, %v782
        %v998 = vpack.c.bf16 %v986, %v985
        %v999 = vld [vmem:[%s1] sm:$0xf]
        %v1000 = vld [vmem:[%s1 + $0x4] sm:$0xf]
        %v1001 = vld [vmem:[%s1 + $0x8] sm:$0xf]
        %v1002 = vld [vmem:[%s1 + $0xc] sm:$0xf]
        %v1003 = vld [vmem:[%s1 + $0x10] sm:$0xf]
        %v1004 = vld [vmem:[%s1 + $0x14] sm:$0xf]
        %v1005 = vld [vmem:[%s1 + $0x18] sm:$0xf]
        %v1006 = vld [vmem:[%s1 + $0x1c] sm:$0xf]
        %v1007 = vld [vmem:[%s1 + $0x20] sm:$0xf]
        %v1008 = vld [vmem:[%s1 + $0x24] sm:$0xf]
        %v1009 = vld [vmem:[%s1 + $0x28] sm:$0xf]
        %v1010 = vld [vmem:[%s1 + $0x2c] sm:$0xf]
        %v1011 = vld [vmem:[%s1 + $0x30] sm:$0xf]
        %v1012 = vld [vmem:[%s1 + $0x34] sm:$0xf]
        %v1013 = vld [vmem:[%s1 + $0x38] sm:$0xf]
        %v1014 = vld [vmem:[%s1 + $0x3c] sm:$0xf]
        %v1015 = vld [vmem:[%s1 + $0x40] sm:$0xf]
        %v1016 = vld [vmem:[%s1 + $0x44] sm:$0xf]
        %v1017 = vld [vmem:[%s1 + $0x48] sm:$0xf]
        %v1018 = vld [vmem:[%s1 + $0x4c] sm:$0xf]
        %v1019 = vld [vmem:[%s1 + $0x50] sm:$0xf]
        %v1020 = vld [vmem:[%s1 + $0x54] sm:$0xf]
        %v1021 = vld [vmem:[%s1 + $0x58] sm:$0xf]
        %v1022 = vld [vmem:[%s1 + $0x5c] sm:$0xf]
        %v1023 = vld [vmem:[%s1 + $0x60] sm:$0xf]
        %v1024 = vld [vmem:[%s1 + $0x64] sm:$0xf]
        %v1025 = vld [vmem:[%s1 + $0x68] sm:$0xf]
        %v1026 = vld [vmem:[%s1 + $0x6c] sm:$0xf]
        %v1027 = vld [vmem:[%s1 + $0x70] sm:$0xf]
        %v1028 = vld [vmem:[%s1 + $0x74] sm:$0xf]
        %v1029 = vld [vmem:[%s1 + $0x78] sm:$0xf]
        %v1030 = vld [vmem:[%s1 + $0x7c] sm:$0xf]
        %v1031 = vld [vmem:[%s1 + $0x80] sm:$0xf]
        %v1032 = vld [vmem:[%s1 + $0x84] sm:$0xf]
        %v1033 = vld [vmem:[%s1 + $0x88] sm:$0xf]
        %v1034 = vld [vmem:[%s1 + $0x8c] sm:$0xf]
        %v1035 = vld [vmem:[%s1 + $0x90] sm:$0xf]
        %v1036 = vld [vmem:[%s1 + $0x94] sm:$0xf]
        %v1037 = vld [vmem:[%s1 + $0x98] sm:$0xf]
        %v1038 = vld [vmem:[%s1 + $0x9c] sm:$0xf]
        %v1039 = vld [vmem:[%s1 + $0xa0] sm:$0xf]
        %v1040 = vld [vmem:[%s1 + $0xa4] sm:$0xf]
        %v1041 = vld [vmem:[%s1 + $0xa8] sm:$0xf]
        %v1042 = vld [vmem:[%s1 + $0xac] sm:$0xf]
        %v1043 = vld [vmem:[%s1 + $0xb0] sm:$0xf]
        %v1044 = vld [vmem:[%s1 + $0xb4] sm:$0xf]
        %v1045 = vld [vmem:[%s1 + $0xb8] sm:$0xf]
        %v1046 = vld [vmem:[%s1 + $0xbc] sm:$0xf]
        %v1095 = vunpack.c.l.b16 %v999
        %v1096 = vunpack.c.l.b16 %v1000
        %v1097 = vunpack.c.l.b16 %v1001
        %v1098 = vunpack.c.l.b16 %v1002
        %v1099 = vunpack.c.l.b16 %v1003
        %v1100 = vunpack.c.l.b16 %v1004
        %v1101 = vunpack.c.l.b16 %v1005
        %v1102 = vunpack.c.l.b16 %v1006
        %v1103 = vunpack.c.l.b16 %v1007
        %v1104 = vunpack.c.l.b16 %v1008
        %v1105 = vunpack.c.l.b16 %v1009
        %v1106 = vunpack.c.l.b16 %v1010
        %v1107 = vunpack.c.l.b16 %v1011
        %v1108 = vunpack.c.l.b16 %v1012
        %v1109 = vunpack.c.l.b16 %v1013
        %v1110 = vunpack.c.l.b16 %v1014
        %v1111 = vunpack.c.l.b16 %v1015
        %v1112 = vunpack.c.l.b16 %v1016
        %v1113 = vunpack.c.l.b16 %v1017
        %v1114 = vunpack.c.l.b16 %v1018
        %v1115 = vunpack.c.l.b16 %v1019
        %v1116 = vunpack.c.l.b16 %v1020
        %v1117 = vunpack.c.l.b16 %v1021
        %v1118 = vunpack.c.l.b16 %v1022
        %v1119 = vunpack.c.l.b16 %v1023
        %v1120 = vunpack.c.l.b16 %v1024
        %v1121 = vunpack.c.l.b16 %v1025
        %v1122 = vunpack.c.l.b16 %v1026
        %v1123 = vunpack.c.l.b16 %v1027
        %v1124 = vunpack.c.l.b16 %v1028
        %v1125 = vunpack.c.l.b16 %v1029
        %v1126 = vunpack.c.l.b16 %v1030
        %v1127 = vunpack.c.l.b16 %v1031
        %v1128 = vunpack.c.l.b16 %v1032
        %v1129 = vunpack.c.l.b16 %v1033
        %v1130 = vunpack.c.l.b16 %v1034
        %v1131 = vunpack.c.l.b16 %v1035
        %v1132 = vunpack.c.l.b16 %v1036
        %v1133 = vunpack.c.l.b16 %v1037
        %v1134 = vunpack.c.l.b16 %v1038
        %v1135 = vunpack.c.l.b16 %v1039
        %v1136 = vunpack.c.l.b16 %v1040
        %v1137 = vunpack.c.l.b16 %v1041
        %v1138 = vunpack.c.l.b16 %v1042
        %v1139 = vunpack.c.l.b16 %v1043
        %v1140 = vunpack.c.l.b16 %v1044
        %v1141 = vunpack.c.l.b16 %v1045
        %v1142 = vunpack.c.l.b16 %v1046
        %v1143 = vpack.c.b16 %v1096, %v1095
        %v1144 = vpack.c.b16 %v1098, %v1097
        %v1145 = vpack.c.b16 %v1100, %v1099
        %v1146 = vpack.c.b16 %v1102, %v1101
        %v1147 = vpack.c.b16 %v1104, %v1103
        %v1148 = vpack.c.b16 %v1106, %v1105
        %v1149 = vpack.c.b16 %v1108, %v1107
        %v1150 = vpack.c.b16 %v1110, %v1109
        %v1151 = vpack.c.b16 %v1112, %v1111
        %v1152 = vpack.c.b16 %v1114, %v1113
        %v1153 = vpack.c.b16 %v1116, %v1115
        %v1154 = vpack.c.b16 %v1118, %v1117
        %v1155 = vpack.c.b16 %v1120, %v1119
        %v1156 = vpack.c.b16 %v1122, %v1121
        %v1157 = vpack.c.b16 %v1124, %v1123
        %v1158 = vpack.c.b16 %v1126, %v1125
        %v1159 = vpack.c.b16 %v1128, %v1127
        %v1160 = vpack.c.b16 %v1130, %v1129
        %v1161 = vpack.c.b16 %v1132, %v1131
        %v1162 = vpack.c.b16 %v1134, %v1133
        %v1163 = vpack.c.b16 %v1136, %v1135
        %v1164 = vpack.c.b16 %v1138, %v1137
        %v1165 = vpack.c.b16 %v1140, %v1139
        %v1166 = vpack.c.b16 %v1142, %v1141
        %1191 = vmatprep.subr.bf16.mxu0 0
        %1192 = vmatpush1.bf16.msra.mxu0 %v1143
        %1193 = vmatprep.subr.bf16.mxu0 0
        %1194 = vmatpush1.bf16.msra.mxu0 %v1144
        %1195 = vmatprep.subr.bf16.mxu0 0
        %1196 = vmatpush1.bf16.msra.mxu0 %v1145
        %1197 = vmatprep.subr.bf16.mxu0 0
        %1198 = vmatpush1.bf16.msra.mxu0 %v1146
        %1199 = vmatprep.subr.bf16.mxu0 0
        %1200 = vmatpush1.bf16.msra.mxu0 %v1147
        %1201 = vmatprep.subr.bf16.mxu0 0
        %1202 = vmatpush1.bf16.msra.mxu0 %v1148
        %1203 = vmatprep.subr.bf16.mxu0 0
        %1204 = vmatpush1.bf16.msra.mxu0 %v1149
        %1205 = vmatprep.subr.bf16.mxu0 0
        %1206 = vmatpush1.bf16.msra.mxu0 %v1150
        %1207 = vmatprep.subr.bf16.mxu0 0
        %1208 = vmatpush1.bf16.msra.mxu0 %v1151
        %1209 = vmatprep.subr.bf16.mxu0 0
        %1210 = vmatpush1.bf16.msra.mxu0 %v1152
        %1211 = vmatprep.subr.bf16.mxu0 0
        %1212 = vmatpush1.bf16.msra.mxu0 %v1153
        %1213 = vmatprep.subr.bf16.mxu0 0
        %1214 = vmatpush1.bf16.msra.mxu0 %v1154
        %1215 = vmatprep.subr.bf16.mxu0 0
        %1216 = vmatpush1.bf16.msra.mxu0 %v1155
        %1217 = vmatprep.subr.bf16.mxu0 0
        %1218 = vmatpush1.bf16.msra.mxu0 %v1156
        %1219 = vmatprep.subr.bf16.mxu0 0
        %1220 = vmatpush1.bf16.msra.mxu0 %v1157
        %1221 = vmatprep.subr.bf16.mxu0 0
        %1222 = vmatpush1.bf16.msra.mxu0 %v1158
        %1223 = vmatprep.mubr.bf16.mxu0 %v988
        %1224 = vmatmul.mubr.bf16.gmra.mrb[0].mxu0 %v987
        %v1225 = vpop.f32.mrb[0].mxu0
        %v1226 = vadd.f32 0.0, %v1225
        %v1227 = vpop.f32.mrb[0].mxu0
        %v1228 = vpop.f32.mrb[0].mxu0
        %v1229 = vadd.f32 0.0, %v1228
        %v1230 = vpop.f32.mrb[0].mxu0
        %1231 = vmatprep.mubr.bf16.mxu0 %v991
        %1232 = vmatmul.mubr.bf16.gmra.mrb[0].mxu0 %v990
        %v1233 = vpop.f32.mrb[0].mxu0
        %v1234 = vadd.f32 0.0, %v1233
        %v1235 = vpop.f32.mrb[0].mxu0
        %v1236 = vpop.f32.mrb[0].mxu0
        %v1237 = vadd.f32 0.0, %v1236
        %v1238 = vpop.f32.mrb[0].mxu0
        %1239 = vmatprep.mubr.bf16.mxu0 %v994
        %1240 = vmatmul.mubr.bf16.gmra.mrb[0].mxu0 %v993
        %v1241 = vpop.f32.mrb[0].mxu0
        %v1242 = vadd.f32 0.0, %v1241
        %v1243 = vpop.f32.mrb[0].mxu0
        %v1244 = vpop.f32.mrb[0].mxu0
        %v1245 = vadd.f32 0.0, %v1244
        %v1246 = vpop.f32.mrb[0].mxu0
        %1247 = vmatprep.mubr.bf16.mxu0 %v997
        %1248 = vmatmul.mubr.bf16.gmra.mrb[0].mxu0 %v996
        %v1249 = vpop.f32.mrb[0].mxu0
        %v1250 = vadd.f32 0.0, %v1249
        %v1251 = vpop.f32.mrb[0].mxu0
        %v1252 = vpop.f32.mrb[0].mxu0
        %v1253 = vadd.f32 0.0, %v1252
        %v1254 = vpop.f32.mrb[0].mxu0
        %1255 = vdwg.mxu0
        %1256 = vmatprep.subr.bf16.mxu0 0
        %1257 = vmatpush1.bf16.msra.mxu0 %v1159
        %1258 = vmatprep.subr.bf16.mxu0 0
        %1259 = vmatpush1.bf16.msra.mxu0 %v1160
        %1260 = vmatprep.subr.bf16.mxu0 0
        %1261 = vmatpush1.bf16.msra.mxu0 %v1161
        %1262 = vmatprep.subr.bf16.mxu0 0
        %1263 = vmatpush1.bf16.msra.mxu0 %v1162
        %1264 = vmatprep.subr.bf16.mxu0 0
        %1265 = vmatpush1.bf16.msra.mxu0 %v1163
        %1266 = vmatprep.subr.bf16.mxu0 0
        %1267 = vmatpush1.bf16.msra.mxu0 %v1164
        %1268 = vmatprep.subr.bf16.mxu0 0
        %1269 = vmatpush1.bf16.msra.mxu0 %v1165
        %1270 = vmatprep.subr.bf16.mxu0 0
        %1271 = vmatpush1.bf16.msra.mxu0 %v1166
        %1272 = vmatprep.subr.bf16.mxu0 0
        %1273 = vmatpush1.bf16.msra.mxu0 0
        %1274 = vmatprep.subr.bf16.mxu0 0
        %1275 = vmatpush1.bf16.msra.mxu0 0
        %1276 = vmatprep.subr.bf16.mxu0 0
        %1277 = vmatpush1.bf16.msra.mxu0 0
        %1278 = vmatprep.subr.bf16.mxu0 0
        %1279 = vmatpush1.bf16.msra.mxu0 0
        %1280 = vmatprep.subr.bf16.mxu0 0
        %1281 = vmatpush1.bf16.msra.mxu0 0
        %1282 = vmatprep.subr.bf16.mxu0 0
        %1283 = vmatpush1.bf16.msra.mxu0 0
        %1284 = vmatprep.subr.bf16.mxu0 0
        %1285 = vmatpush1.bf16.msra.mxu0 0
        %1286 = vmatprep.subr.bf16.mxu0 0
        %1287 = vmatpush1.bf16.msra.mxu0 0
        %1288 = vmatprep.mubr.bf16.mxu0 0
        %1289 = vmatmul.mubr.bf16.gmra.mrb[0].mxu0 %v989
        %v1290 = vpop.f32.mrb[0].mxu0
        %v1291 = vadd.f32 %v1226, %v1290
        %v1292 = vpop.f32.mrb[0].mxu0
        %v1293 = vpop.f32.mrb[0].mxu0
        %v1294 = vadd.f32 %v1229, %v1293
        %v1295 = vpop.f32.mrb[0].mxu0
        %1296 = vmatprep.mubr.bf16.mxu0 0
        %1297 = vmatmul.mubr.bf16.gmra.mrb[0].mxu0 %v992
        %v1298 = vpop.f32.mrb[0].mxu0
        %v1299 = vadd.f32 %v1234, %v1298
        %v1300 = vpop.f32.mrb[0].mxu0
        %v1301 = vpop.f32.mrb[0].mxu0
        %v1302 = vadd.f32 %v1237, %v1301
        %v1303 = vpop.f32.mrb[0].mxu0
        %1304 = vmatprep.mubr.bf16.mxu0 0
        %1305 = vmatmul.mubr.bf16.gmra.mrb[0].mxu0 %v995
        %v1306 = vpop.f32.mrb[0].mxu0
        %v1307 = vadd.f32 %v1242, %v1306
        %v1308 = vpop.f32.mrb[0].mxu0
        %v1309 = vpop.f32.mrb[0].mxu0
        %v1310 = vadd.f32 %v1245, %v1309
        %v1311 = vpop.f32.mrb[0].mxu0
        %1312 = vmatprep.mubr.bf16.mxu0 0
        %1313 = vmatmul.mubr.bf16.gmra.mrb[0].mxu0 %v998
        %v1314 = vpop.f32.mrb[0].mxu0
        %v1315 = vadd.f32 %v1250, %v1314
        %v1316 = vpop.f32.mrb[0].mxu0
        %v1317 = vpop.f32.mrb[0].mxu0
        %v1318 = vadd.f32 %v1253, %v1317
        %v1319 = vpop.f32.mrb[0].mxu0
        %1320 = vdwg.mxu0
        %v1321 = vld [vmem:[%s2] sm:$0x1]
        %v1323 = vlaneseq
        %v1324 = vshrl.u32 %v1323, 7
        %v1325 = vsub.s32 0, %v1324
        %v1326 = vrot.slane %v1321, %v1325
        %v1328 = vmul.f32 %v1291, %v1326
        %v1329 = vmul.f32 %v1294, %v1326
        %v1330 = vmul.f32 %v1299, %v1326
        %v1331 = vmul.f32 %v1302, %v1326
        %v1332 = vmul.f32 %v1307, %v1326
        %v1333 = vmul.f32 %v1310, %v1326
        %v1334 = vmul.f32 %v1315, %v1326
        %v1335 = vmul.f32 %v1318, %v1326
        %v1336 = vld [vmem:[%s3] sm:$0x1]
        %v1338 = vlaneseq
        %v1339 = vshrl.u32 %v1338, 7
        %v1340 = vsub.s32 0, %v1339
        %v1341 = vrot.slane %v1336, %v1340
        %v1343 = vadd.f32 %v1328, %v1341
        %v1344 = vadd.f32 %v1329, %v1341
        %v1345 = vadd.f32 %v1330, %v1341
        %v1346 = vadd.f32 %v1331, %v1341
        %v1347 = vadd.f32 %v1332, %v1341
        %v1348 = vadd.f32 %v1333, %v1341
        %v1349 = vadd.f32 %v1334, %v1341
        %v1350 = vadd.f32 %v1335, %v1341
        %v1351 = vmax.f32 %v1343, 0.0
        %v1352 = vmax.f32 %v1344, 0.0
        %v1353 = vmax.f32 %v1345, 0.0
        %v1354 = vmax.f32 %v1346, 0.0
        %v1355 = vmax.f32 %v1347, 0.0
        %v1356 = vmax.f32 %v1348, 0.0
        %v1357 = vmax.f32 %v1349, 0.0
        %v1358 = vmax.f32 %v1350, 0.0
        %v1359 = vrot.slane %v1351, 7
        %v1360 = vrot.slane %v1352, 7
        %v1361 = vrot.slane %v1353, 7
        %v1362 = vrot.slane %v1354, 7
        %v1363 = vrot.slane %v1355, 7
        %v1364 = vrot.slane %v1356, 7
        %v1365 = vrot.slane %v1357, 7
        %v1366 = vrot.slane %v1358, 7
        %v1367 = vsel %vm913, %v1365, %v1366
        %v1368 = vsel %vm913, %v1364, %v1365
        %v1369 = vsel %vm913, %v1363, %v1364
        %v1370 = vsel %vm913, %v1362, %v1363
        %v1371 = vsel %vm913, %v1361, %v1362
        %v1372 = vsel %vm913, %v1360, %v1361
        %v1373 = vsel %vm913, %v1359, %v1360
        %v1374 = vsel %vm913, %v1366, %v1359
        %v1375 = vsel %vm930, %v1374, 0.0
        %v1376 = vsel %vm931, %v1373, 0.0
        %v1377 = vsel %vm932, %v1372, 0.0
        %v1378 = vsel %vm933, %v1371, 0.0
        %v1379 = vsel %vm934, %v1370, 0.0
        %v1380 = vsel %vm935, %v1369, 0.0
        %v1381 = vsel %vm936, %v1368, 0.0
        %v1382 = vsel %vm937, %v1367, 0.0
        %v1383 = vrot.slane %v1351, 1
        %v1384 = vrot.slane %v1352, 1
        %v1385 = vrot.slane %v1353, 1
        %v1386 = vrot.slane %v1354, 1
        %v1387 = vrot.slane %v1355, 1
        %v1388 = vrot.slane %v1356, 1
        %v1389 = vrot.slane %v1357, 1
        %v1390 = vrot.slane %v1358, 1
        %v1391 = vsel %vm954, %v1389, %v1390
        %v1392 = vsel %vm954, %v1388, %v1389
        %v1393 = vsel %vm954, %v1387, %v1388
        %v1394 = vsel %vm954, %v1386, %v1387
        %v1395 = vsel %vm954, %v1385, %v1386
        %v1396 = vsel %vm954, %v1384, %v1385
        %v1397 = vsel %vm954, %v1383, %v1384
        %v1398 = vsel %vm954, %v1390, %v1383
        %v1399 = vsel %vm971, %v1397, 0.0
        %v1400 = vsel %vm972, %v1396, 0.0
        %v1401 = vsel %vm973, %v1395, 0.0
        %v1402 = vsel %vm974, %v1394, 0.0
        %v1403 = vsel %vm975, %v1393, 0.0
        %v1404 = vsel %vm976, %v1392, 0.0
        %v1405 = vsel %vm977, %v1391, 0.0
        %v1406 = vsel %vm978, %v1398, 0.0
        %v1407 = vpack.c.bf16 %v1376, %v1375
        %v1408 = vpack.c.bf16 %v1352, %v1351
        %v1409 = vpack.c.bf16 %v1400, %v1399
        %v1410 = vpack.c.bf16 %v1378, %v1377
        %v1411 = vpack.c.bf16 %v1354, %v1353
        %v1412 = vpack.c.bf16 %v1402, %v1401
        %v1413 = vpack.c.bf16 %v1380, %v1379
        %v1414 = vpack.c.bf16 %v1356, %v1355
        %v1415 = vpack.c.bf16 %v1404, %v1403
        %v1416 = vpack.c.bf16 %v1382, %v1381
        %v1417 = vpack.c.bf16 %v1358, %v1357
        %v1418 = vpack.c.bf16 %v1406, %v1405
        %v1419 = vld [vmem:[%s4] sm:$0xf]
        %v1420 = vld [vmem:[%s4 + $0x4] sm:$0xf]
        %v1421 = vld [vmem:[%s4 + $0x8] sm:$0xf]
        %v1422 = vld [vmem:[%s4 + $0xc] sm:$0xf]
        %v1423 = vld [vmem:[%s4 + $0x10] sm:$0xf]
        %v1424 = vld [vmem:[%s4 + $0x14] sm:$0xf]
        %v1425 = vld [vmem:[%s4 + $0x18] sm:$0xf]
        %v1426 = vld [vmem:[%s4 + $0x1c] sm:$0xf]
        %v1427 = vld [vmem:[%s4 + $0x20] sm:$0xf]
        %v1428 = vld [vmem:[%s4 + $0x24] sm:$0xf]
        %v1429 = vld [vmem:[%s4 + $0x28] sm:$0xf]
        %v1430 = vld [vmem:[%s4 + $0x2c] sm:$0xf]
        %v1431 = vld [vmem:[%s4 + $0x30] sm:$0xf]
        %v1432 = vld [vmem:[%s4 + $0x34] sm:$0xf]
        %v1433 = vld [vmem:[%s4 + $0x38] sm:$0xf]
        %v1434 = vld [vmem:[%s4 + $0x3c] sm:$0xf]
        %v1435 = vld [vmem:[%s4 + $0x40] sm:$0xf]
        %v1436 = vld [vmem:[%s4 + $0x44] sm:$0xf]
        %v1437 = vld [vmem:[%s4 + $0x48] sm:$0xf]
        %v1438 = vld [vmem:[%s4 + $0x4c] sm:$0xf]
        %v1439 = vld [vmem:[%s4 + $0x50] sm:$0xf]
        %v1440 = vld [vmem:[%s4 + $0x54] sm:$0xf]
        %v1441 = vld [vmem:[%s4 + $0x58] sm:$0xf]
        %v1442 = vld [vmem:[%s4 + $0x5c] sm:$0xf]
        %v1443 = vld [vmem:[%s4 + $0x60] sm:$0xf]
        %v1444 = vld [vmem:[%s4 + $0x64] sm:$0xf]
        %v1445 = vld [vmem:[%s4 + $0x68] sm:$0xf]
        %v1446 = vld [vmem:[%s4 + $0x6c] sm:$0xf]
        %v1447 = vld [vmem:[%s4 + $0x70] sm:$0xf]
        %v1448 = vld [vmem:[%s4 + $0x74] sm:$0xf]
        %v1449 = vld [vmem:[%s4 + $0x78] sm:$0xf]
        %v1450 = vld [vmem:[%s4 + $0x7c] sm:$0xf]
        %v1451 = vld [vmem:[%s4 + $0x80] sm:$0xf]
        %v1452 = vld [vmem:[%s4 + $0x84] sm:$0xf]
        %v1453 = vld [vmem:[%s4 + $0x88] sm:$0xf]
        %v1454 = vld [vmem:[%s4 + $0x8c] sm:$0xf]
        %v1455 = vld [vmem:[%s4 + $0x90] sm:$0xf]
        %v1456 = vld [vmem:[%s4 + $0x94] sm:$0xf]
        %v1457 = vld [vmem:[%s4 + $0x98] sm:$0xf]
        %v1458 = vld [vmem:[%s4 + $0x9c] sm:$0xf]
        %v1459 = vld [vmem:[%s4 + $0xa0] sm:$0xf]
        %v1460 = vld [vmem:[%s4 + $0xa4] sm:$0xf]
        %v1461 = vld [vmem:[%s4 + $0xa8] sm:$0xf]
        %v1462 = vld [vmem:[%s4 + $0xac] sm:$0xf]
        %v1463 = vld [vmem:[%s4 + $0xb0] sm:$0xf]
        %v1464 = vld [vmem:[%s4 + $0xb4] sm:$0xf]
        %v1465 = vld [vmem:[%s4 + $0xb8] sm:$0xf]
        %v1466 = vld [vmem:[%s4 + $0xbc] sm:$0xf]
        %v1515 = vunpack.c.l.b16 %v1419
        %v1516 = vunpack.c.l.b16 %v1420
        %v1517 = vunpack.c.l.b16 %v1421
        %v1518 = vunpack.c.l.b16 %v1422
        %v1519 = vunpack.c.l.b16 %v1423
        %v1520 = vunpack.c.l.b16 %v1424
        %v1521 = vunpack.c.l.b16 %v1425
        %v1522 = vunpack.c.l.b16 %v1426
        %v1523 = vunpack.c.l.b16 %v1427
        %v1524 = vunpack.c.l.b16 %v1428
        %v1525 = vunpack.c.l.b16 %v1429
        %v1526 = vunpack.c.l.b16 %v1430
        %v1527 = vunpack.c.l.b16 %v1431
        %v1528 = vunpack.c.l.b16 %v1432
        %v1529 = vunpack.c.l.b16 %v1433
        %v1530 = vunpack.c.l.b16 %v1434
        %v1531 = vunpack.c.l.b16 %v1435
        %v1532 = vunpack.c.l.b16 %v1436
        %v1533 = vunpack.c.l.b16 %v1437
        %v1534 = vunpack.c.l.b16 %v1438
        %v1535 = vunpack.c.l.b16 %v1439
        %v1536 = vunpack.c.l.b16 %v1440
        %v1537 = vunpack.c.l.b16 %v1441
        %v1538 = vunpack.c.l.b16 %v1442
        %v1539 = vunpack.c.l.b16 %v1443
        %v1540 = vunpack.c.l.b16 %v1444
        %v1541 = vunpack.c.l.b16 %v1445
        %v1542 = vunpack.c.l.b16 %v1446
        %v1543 = vunpack.c.l.b16 %v1447
        %v1544 = vunpack.c.l.b16 %v1448
        %v1545 = vunpack.c.l.b16 %v1449
        %v1546 = vunpack.c.l.b16 %v1450
        %v1547 = vunpack.c.l.b16 %v1451
        %v1548 = vunpack.c.l.b16 %v1452
        %v1549 = vunpack.c.l.b16 %v1453
        %v1550 = vunpack.c.l.b16 %v1454
        %v1551 = vunpack.c.l.b16 %v1455
        %v1552 = vunpack.c.l.b16 %v1456
        %v1553 = vunpack.c.l.b16 %v1457
        %v1554 = vunpack.c.l.b16 %v1458
        %v1555 = vunpack.c.l.b16 %v1459
        %v1556 = vunpack.c.l.b16 %v1460
        %v1557 = vunpack.c.l.b16 %v1461
        %v1558 = vunpack.c.l.b16 %v1462
        %v1559 = vunpack.c.l.b16 %v1463
        %v1560 = vunpack.c.l.b16 %v1464
        %v1561 = vunpack.c.l.b16 %v1465
        %v1562 = vunpack.c.l.b16 %v1466
        %v1563 = vpack.c.b16 %v1516, %v1515
        %v1564 = vpack.c.b16 %v1518, %v1517
        %v1565 = vpack.c.b16 %v1520, %v1519
        %v1566 = vpack.c.b16 %v1522, %v1521
        %v1567 = vpack.c.b16 %v1524, %v1523
        %v1568 = vpack.c.b16 %v1526, %v1525
        %v1569 = vpack.c.b16 %v1528, %v1527
        %v1570 = vpack.c.b16 %v1530, %v1529
        %v1571 = vpack.c.b16 %v1532, %v1531
        %v1572 = vpack.c.b16 %v1534, %v1533
        %v1573 = vpack.c.b16 %v1536, %v1535
        %v1574 = vpack.c.b16 %v1538, %v1537
        %v1575 = vpack.c.b16 %v1540, %v1539
        %v1576 = vpack.c.b16 %v1542, %v1541
        %v1577 = vpack.c.b16 %v1544, %v1543
        %v1578 = vpack.c.b16 %v1546, %v1545
        %v1579 = vpack.c.b16 %v1548, %v1547
        %v1580 = vpack.c.b16 %v1550, %v1549
        %v1581 = vpack.c.b16 %v1552, %v1551
        %v1582 = vpack.c.b16 %v1554, %v1553
        %v1583 = vpack.c.b16 %v1556, %v1555
        %v1584 = vpack.c.b16 %v1558, %v1557
        %v1585 = vpack.c.b16 %v1560, %v1559
        %v1586 = vpack.c.b16 %v1562, %v1561
        %1611 = vmatprep.subr.bf16.mxu0 0
        %1612 = vmatpush1.bf16.msra.mxu0 %v1563
        %1613 = vmatprep.subr.bf16.mxu0 0
        %1614 = vmatpush1.bf16.msra.mxu0 %v1564
        %1615 = vmatprep.subr.bf16.mxu0 0
        %1616 = vmatpush1.bf16.msra.mxu0 %v1565
        %1617 = vmatprep.subr.bf16.mxu0 0
        %1618 = vmatpush1.bf16.msra.mxu0 %v1566
        %1619 = vmatprep.subr.bf16.mxu0 0
        %1620 = vmatpush1.bf16.msra.mxu0 %v1567
        %1621 = vmatprep.subr.bf16.mxu0 0
        %1622 = vmatpush1.bf16.msra.mxu0 %v1568
        %1623 = vmatprep.subr.bf16.mxu0 0
        %1624 = vmatpush1.bf16.msra.mxu0 %v1569
        %1625 = vmatprep.subr.bf16.mxu0 0
        %1626 = vmatpush1.bf16.msra.mxu0 %v1570
        %1627 = vmatprep.subr.bf16.mxu0 0
        %1628 = vmatpush1.bf16.msra.mxu0 %v1571
        %1629 = vmatprep.subr.bf16.mxu0 0
        %1630 = vmatpush1.bf16.msra.mxu0 %v1572
        %1631 = vmatprep.subr.bf16.mxu0 0
        %1632 = vmatpush1.bf16.msra.mxu0 %v1573
        %1633 = vmatprep.subr.bf16.mxu0 0
        %1634 = vmatpush1.bf16.msra.mxu0 %v1574
        %1635 = vmatprep.subr.bf16.mxu0 0
        %1636 = vmatpush1.bf16.msra.mxu0 %v1575
        %1637 = vmatprep.subr.bf16.mxu0 0
        %1638 = vmatpush1.bf16.msra.mxu0 %v1576
        %1639 = vmatprep.subr.bf16.mxu0 0
        %1640 = vmatpush1.bf16.msra.mxu0 %v1577
        %1641 = vmatprep.subr.bf16.mxu0 0
        %1642 = vmatpush1.bf16.msra.mxu0 %v1578
        %1643 = vmatprep.mubr.bf16.mxu0 %v1408
        %1644 = vmatmul.mubr.bf16.gmra.mrb[0].mxu0 %v1407
        %v1645 = vpop.f32.mrb[0].mxu0
        %v1646 = vadd.f32 0.0, %v1645
        %v1647 = vpop.f32.mrb[0].mxu0
        %v1648 = vpop.f32.mrb[0].mxu0
        %v1649 = vadd.f32 0.0, %v1648
        %v1650 = vpop.f32.mrb[0].mxu0
        %1651 = vmatprep.mubr.bf16.mxu0 %v1411
        %1652 = vmatmul.mubr.bf16.gmra.mrb[0].mxu0 %v1410
        %v1653 = vpop.f32.mrb[0].mxu0
        %v1654 = vadd.f32 0.0, %v1653
        %v1655 = vpop.f32.mrb[0].mxu0
        %v1656 = vpop.f32.mrb[0].mxu0
        %v1657 = vadd.f32 0.0, %v1656
        %v1658 = vpop.f32.mrb[0].mxu0
        %1659 = vmatprep.mubr.bf16.mxu0 %v1414
        %1660 = vmatmul.mubr.bf16.gmra.mrb[0].mxu0 %v1413
        %v1661 = vpop.f32.mrb[0].mxu0
        %v1662 = vadd.f32 0.0, %v1661
        %v1663 = vpop.f32.mrb[0].mxu0
        %v1664 = vpop.f32.mrb[0].mxu0
        %v1665 = vadd.f32 0.0, %v1664
        %v1666 = vpop.f32.mrb[0].mxu0
        %1667 = vmatprep.mubr.bf16.mxu0 %v1417
        %1668 = vmatmul.mubr.bf16.gmra.mrb[0].mxu0 %v1416
        %v1669 = vpop.f32.mrb[0].mxu0
        %v1670 = vadd.f32 0.0, %v1669
        %v1671 = vpop.f32.mrb[0].mxu0
        %v1672 = vpop.f32.mrb[0].mxu0
        %v1673 = vadd.f32 0.0, %v1672
        %v1674 = vpop.f32.mrb[0].mxu0
        %1675 = vdwg.mxu0
        %1676 = vmatprep.subr.bf16.mxu0 0
        %1677 = vmatpush1.bf16.msra.mxu0 %v1579
        %1678 = vmatprep.subr.bf16.mxu0 0
        %1679 = vmatpush1.bf16.msra.mxu0 %v1580
        %1680 = vmatprep.subr.bf16.mxu0 0
        %1681 = vmatpush1.bf16.msra.mxu0 %v1581
        %1682 = vmatprep.subr.bf16.mxu0 0
        %1683 = vmatpush1.bf16.msra.mxu0 %v1582
        %1684 = vmatprep.subr.bf16.mxu0 0
        %1685 = vmatpush1.bf16.msra.mxu0 %v1583
        %1686 = vmatprep.subr.bf16.mxu0 0
        %1687 = vmatpush1.bf16.msra.mxu0 %v1584
        %1688 = vmatprep.subr.bf16.mxu0 0
        %1689 = vmatpush1.bf16.msra.mxu0 %v1585
        %1690 = vmatprep.subr.bf16.mxu0 0
        %1691 = vmatpush1.bf16.msra.mxu0 %v1586
        %1692 = vmatprep.subr.bf16.mxu0 0
        %1693 = vmatpush1.bf16.msra.mxu0 0
        %1694 = vmatprep.subr.bf16.mxu0 0
        %1695 = vmatpush1.bf16.msra.mxu0 0
        %1696 = vmatprep.subr.bf16.mxu0 0
        %1697 = vmatpush1.bf16.msra.mxu0 0
        %1698 = vmatprep.subr.bf16.mxu0 0
        %1699 = vmatpush1.bf16.msra.mxu0 0
        %1700 = vmatprep.subr.bf16.mxu0 0
        %1701 = vmatpush1.bf16.msra.mxu0 0
        %1702 = vmatprep.subr.bf16.mxu0 0
        %1703 = vmatpush1.bf16.msra.mxu0 0
        %1704 = vmatprep.subr.bf16.mxu0 0
        %1705 = vmatpush1.bf16.msra.mxu0 0
        %1706 = vmatprep.subr.bf16.mxu0 0
        %1707 = vmatpush1.bf16.msra.mxu0 0
        %1708 = vmatprep.mubr.bf16.mxu0 0
        %1709 = vmatmul.mubr.bf16.gmra.mrb[0].mxu0 %v1409
        %v1710 = vpop.f32.mrb[0].mxu0
        %v1711 = vadd.f32 %v1646, %v1710
        %v1712 = vpop.f32.mrb[0].mxu0
        %v1713 = vpop.f32.mrb[0].mxu0
        %v1714 = vadd.f32 %v1649, %v1713
        %v1715 = vpop.f32.mrb[0].mxu0
        %1716 = vmatprep.mubr.bf16.mxu0 0
        %1717 = vmatmul.mubr.bf16.gmra.mrb[0].mxu0 %v1412
        %v1718 = vpop.f32.mrb[0].mxu0
        %v1719 = vadd.f32 %v1654, %v1718
        %v1720 = vpop.f32.mrb[0].mxu0
        %v1721 = vpop.f32.mrb[0].mxu0
        %v1722 = vadd.f32 %v1657, %v1721
        %v1723 = vpop.f32.mrb[0].mxu0
        %1724 = vmatprep.mubr.bf16.mxu0 0
        %1725 = vmatmul.mubr.bf16.gmra.mrb[0].mxu0 %v1415
        %v1726 = vpop.f32.mrb[0].mxu0
        %v1727 = vadd.f32 %v1662, %v1726
        %v1728 = vpop.f32.mrb[0].mxu0
        %v1729 = vpop.f32.mrb[0].mxu0
        %v1730 = vadd.f32 %v1665, %v1729
        %v1731 = vpop.f32.mrb[0].mxu0
        %1732 = vmatprep.mubr.bf16.mxu0 0
        %1733 = vmatmul.mubr.bf16.gmra.mrb[0].mxu0 %v1418
        %v1734 = vpop.f32.mrb[0].mxu0
        %v1735 = vadd.f32 %v1670, %v1734
        %v1736 = vpop.f32.mrb[0].mxu0
        %v1737 = vpop.f32.mrb[0].mxu0
        %v1738 = vadd.f32 %v1673, %v1737
        %v1739 = vpop.f32.mrb[0].mxu0
        %1740 = vdwg.mxu0
        %v1741 = vld [vmem:[%s5] sm:$0x1]
        %v1743 = vlaneseq
        %v1744 = vshrl.u32 %v1743, 7
        %v1745 = vsub.s32 0, %v1744
        %v1746 = vrot.slane %v1741, %v1745
        %v1748 = vmul.f32 %v1711, %v1746
        %v1749 = vmul.f32 %v1714, %v1746
        %v1750 = vmul.f32 %v1719, %v1746
        %v1751 = vmul.f32 %v1722, %v1746
        %v1752 = vmul.f32 %v1727, %v1746
        %v1753 = vmul.f32 %v1730, %v1746
        %v1754 = vmul.f32 %v1735, %v1746
        %v1755 = vmul.f32 %v1738, %v1746
        %v1756 = vld [vmem:[%s6] sm:$0x1]
        %v1758 = vlaneseq
        %v1759 = vshrl.u32 %v1758, 7
        %v1760 = vsub.s32 0, %v1759
        %v1761 = vrot.slane %v1756, %v1760
        %v1763 = vadd.f32 %v1748, %v1761
        %v1764 = vadd.f32 %v1749, %v1761
        %v1765 = vadd.f32 %v1750, %v1761
        %v1766 = vadd.f32 %v1751, %v1761
        %v1767 = vadd.f32 %v1752, %v1761
        %v1768 = vadd.f32 %v1753, %v1761
        %v1769 = vadd.f32 %v1754, %v1761
        %v1770 = vadd.f32 %v1755, %v1761
        %v1771 = vld [vmem:[%s7] sm:$0xf]
        %v1772 = vld [vmem:[%s7 + $0x4] sm:$0xf]
        %v1773 = vld [vmem:[%s7 + $0x8] sm:$0xf]
        %v1774 = vld [vmem:[%s7 + $0xc] sm:$0xf]
        %v1775 = vld [vmem:[%s7 + $0x10] sm:$0xf]
        %v1776 = vld [vmem:[%s7 + $0x14] sm:$0xf]
        %v1777 = vld [vmem:[%s7 + $0x18] sm:$0xf]
        %v1778 = vld [vmem:[%s7 + $0x1c] sm:$0xf]
        %v1779 = vld [vmem:[%s7 + $0x20] sm:$0xf]
        %v1780 = vld [vmem:[%s7 + $0x24] sm:$0xf]
        %v1781 = vld [vmem:[%s7 + $0x28] sm:$0xf]
        %v1782 = vld [vmem:[%s7 + $0x2c] sm:$0xf]
        %v1783 = vld [vmem:[%s7 + $0x30] sm:$0xf]
        %v1784 = vld [vmem:[%s7 + $0x34] sm:$0xf]
        %v1785 = vld [vmem:[%s7 + $0x38] sm:$0xf]
        %v1786 = vld [vmem:[%s7 + $0x3c] sm:$0xf]
        %v1787 = vld [vmem:[%s8] sm:$0x1]
        %v1789 = vlaneseq
        %v1790 = vshrl.u32 %v1789, 7
        %v1791 = vsub.s32 0, %v1790
        %v1792 = vrot.slane %v1787, %v1791
        %v1810 = vunpack.c.l.b16 %v1771
        %v1811 = vunpack.c.l.b16 %v1772
        %v1812 = vunpack.c.l.b16 %v1773
        %v1813 = vunpack.c.l.b16 %v1774
        %v1814 = vunpack.c.l.b16 %v1775
        %v1815 = vunpack.c.l.b16 %v1776
        %v1816 = vunpack.c.l.b16 %v1777
        %v1817 = vunpack.c.l.b16 %v1778
        %v1818 = vunpack.c.l.b16 %v1779
        %v1819 = vunpack.c.l.b16 %v1780
        %v1820 = vunpack.c.l.b16 %v1781
        %v1821 = vunpack.c.l.b16 %v1782
        %v1822 = vunpack.c.l.b16 %v1783
        %v1823 = vunpack.c.l.b16 %v1784
        %v1824 = vunpack.c.l.b16 %v1785
        %v1825 = vunpack.c.l.b16 %v1786
        %v1826 = vpack.c.b16 %v1811, %v1810
        %v1827 = vpack.c.b16 %v1813, %v1812
        %v1828 = vpack.c.b16 %v1815, %v1814
        %v1829 = vpack.c.b16 %v1817, %v1816
        %v1830 = vpack.c.b16 %v1819, %v1818
        %v1831 = vpack.c.b16 %v1821, %v1820
        %v1832 = vpack.c.b16 %v1823, %v1822
        %v1833 = vpack.c.b16 %v1825, %v1824
        %1842 = vmatprep.subr.bf16.mxu0 0
        %1843 = vmatpush1.bf16.msra.mxu0 %v1826
        %1844 = vmatprep.subr.bf16.mxu0 0
        %1845 = vmatpush1.bf16.msra.mxu0 %v1827
        %1846 = vmatprep.subr.bf16.mxu0 0
        %1847 = vmatpush1.bf16.msra.mxu0 %v1828
        %1848 = vmatprep.subr.bf16.mxu0 0
        %1849 = vmatpush1.bf16.msra.mxu0 %v1829
        %1850 = vmatprep.subr.bf16.mxu0 0
        %1851 = vmatpush1.bf16.msra.mxu0 %v1830
        %1852 = vmatprep.subr.bf16.mxu0 0
        %1853 = vmatpush1.bf16.msra.mxu0 %v1831
        %1854 = vmatprep.subr.bf16.mxu0 0
        %1855 = vmatpush1.bf16.msra.mxu0 %v1832
        %1856 = vmatprep.subr.bf16.mxu0 0
        %1857 = vmatpush1.bf16.msra.mxu0 %v1833
        %1858 = vmatprep.subr.bf16.mxu0 0
        %1859 = vmatpush1.bf16.msra.mxu0 0
        %1860 = vmatprep.subr.bf16.mxu0 0
        %1861 = vmatpush1.bf16.msra.mxu0 0
        %1862 = vmatprep.subr.bf16.mxu0 0
        %1863 = vmatpush1.bf16.msra.mxu0 0
        %1864 = vmatprep.subr.bf16.mxu0 0
        %1865 = vmatpush1.bf16.msra.mxu0 0
        %1866 = vmatprep.subr.bf16.mxu0 0
        %1867 = vmatpush1.bf16.msra.mxu0 0
        %1868 = vmatprep.subr.bf16.mxu0 0
        %1869 = vmatpush1.bf16.msra.mxu0 0
        %1870 = vmatprep.subr.bf16.mxu0 0
        %1871 = vmatpush1.bf16.msra.mxu0 0
        %1872 = vmatprep.subr.bf16.mxu0 0
        %1873 = vmatpush1.bf16.msra.mxu0 0
        %1874 = vmatprep.mubr.bf16.mxu0 0
        %1875 = vmatmul.mubr.bf16.gmra.mrb[0].mxu0 %v988
        %v1876 = vpop.f32.mrb[0].mxu0
        %v1877 = vadd.f32 %v1792, %v1876
        %v1878 = vpop.f32.mrb[0].mxu0
        %v1879 = vpop.f32.mrb[0].mxu0
        %v1880 = vadd.f32 %v1792, %v1879
        %v1881 = vpop.f32.mrb[0].mxu0
        %1882 = vmatprep.mubr.bf16.mxu0 0
        %1883 = vmatmul.mubr.bf16.gmra.mrb[0].mxu0 %v991
        %v1884 = vpop.f32.mrb[0].mxu0
        %v1885 = vadd.f32 %v1792, %v1884
        %v1886 = vpop.f32.mrb[0].mxu0
        %v1887 = vpop.f32.mrb[0].mxu0
        %v1888 = vadd.f32 %v1792, %v1887
        %v1889 = vpop.f32.mrb[0].mxu0
        %1890 = vmatprep.mubr.bf16.mxu0 0
        %1891 = vmatmul.mubr.bf16.gmra.mrb[0].mxu0 %v994
        %v1892 = vpop.f32.mrb[0].mxu0
        %v1893 = vadd.f32 %v1792, %v1892
        %v1894 = vpop.f32.mrb[0].mxu0
        %v1895 = vpop.f32.mrb[0].mxu0
        %v1896 = vadd.f32 %v1792, %v1895
        %v1897 = vpop.f32.mrb[0].mxu0
        %1898 = vmatprep.mubr.bf16.mxu0 0
        %1899 = vmatmul.mubr.bf16.gmra.mrb[0].mxu0 %v997
        %v1900 = vpop.f32.mrb[0].mxu0
        %v1901 = vadd.f32 %v1792, %v1900
        %v1902 = vpop.f32.mrb[0].mxu0
        %v1903 = vpop.f32.mrb[0].mxu0
        %v1904 = vadd.f32 %v1792, %v1903
        %v1905 = vpop.f32.mrb[0].mxu0
        %1906 = vdwg.mxu0
        %v1907 = vadd.f32 %v1763, %v1877
        %v1908 = vadd.f32 %v1764, %v1880
        %v1909 = vadd.f32 %v1765, %v1885
        %v1910 = vadd.f32 %v1766, %v1888
        %v1911 = vadd.f32 %v1767, %v1893
        %v1912 = vadd.f32 %v1768, %v1896
        %v1913 = vadd.f32 %v1769, %v1901
        %v1914 = vadd.f32 %v1770, %v1904
        %v1915 = vmax.f32 %v1907, 0.0
        %v1916 = vmax.f32 %v1908, 0.0
        %v1917 = vmax.f32 %v1909, 0.0
        %v1918 = vmax.f32 %v1910, 0.0
        %v1919 = vmax.f32 %v1911, 0.0
        %v1920 = vmax.f32 %v1912, 0.0
        %v1921 = vmax.f32 %v1913, 0.0
        %v1922 = vmax.f32 %v1914, 0.0
        %v1923 = vrot.slane %v1915, 7
        %v1924 = vrot.slane %v1916, 7
        %v1925 = vrot.slane %v1917, 7
        %v1926 = vrot.slane %v1918, 7
        %v1927 = vrot.slane %v1919, 7
        %v1928 = vrot.slane %v1920, 7
        %v1929 = vrot.slane %v1921, 7
        %v1930 = vrot.slane %v1922, 7
        %v1931 = vsel %vm913, %v1929, %v1930
        %v1932 = vsel %vm913, %v1928, %v1929
        %v1933 = vsel %vm913, %v1927, %v1928
        %v1934 = vsel %vm913, %v1926, %v1927
        %v1935 = vsel %vm913, %v1925, %v1926
        %v1936 = vsel %vm913, %v1924, %v1925
        %v1937 = vsel %vm913, %v1923, %v1924
        %v1938 = vsel %vm913, %v1930, %v1923
        %v1939 = vsel %vm930, %v1938, 0.0
        %v1940 = vsel %vm931, %v1937, 0.0
        %v1941 = vsel %vm932, %v1936, 0.0
        %v1942 = vsel %vm933, %v1935, 0.0
        %v1943 = vsel %vm934, %v1934, 0.0
        %v1944 = vsel %vm935, %v1933, 0.0
        %v1945 = vsel %vm936, %v1932, 0.0
        %v1946 = vsel %vm937, %v1931, 0.0
        %v1947 = vrot.slane %v1915, 1
        %v1948 = vrot.slane %v1916, 1
        %v1949 = vrot.slane %v1917, 1
        %v1950 = vrot.slane %v1918, 1
        %v1951 = vrot.slane %v1919, 1
        %v1952 = vrot.slane %v1920, 1
        %v1953 = vrot.slane %v1921, 1
        %v1954 = vrot.slane %v1922, 1
        %v1955 = vsel %vm954, %v1953, %v1954
        %v1956 = vsel %vm954, %v1952, %v1953
        %v1957 = vsel %vm954, %v1951, %v1952
        %v1958 = vsel %vm954, %v1950, %v1951
        %v1959 = vsel %vm954, %v1949, %v1950
        %v1960 = vsel %vm954, %v1948, %v1949
        %v1961 = vsel %vm954, %v1947, %v1948
        %v1962 = vsel %vm954, %v1954, %v1947
        %v1963 = vsel %vm971, %v1961, 0.0
        %v1964 = vsel %vm972, %v1960, 0.0
        %v1965 = vsel %vm973, %v1959, 0.0
        %v1966 = vsel %vm974, %v1958, 0.0
        %v1967 = vsel %vm975, %v1957, 0.0
        %v1968 = vsel %vm976, %v1956, 0.0
        %v1969 = vsel %vm977, %v1955, 0.0
        %v1970 = vsel %vm978, %v1962, 0.0
        %v1971 = vpack.c.bf16 %v1940, %v1939
        %v1972 = vpack.c.bf16 %v1916, %v1915
        %v1973 = vpack.c.bf16 %v1964, %v1963
        %v1974 = vpack.c.bf16 %v1942, %v1941
        %v1975 = vpack.c.bf16 %v1918, %v1917
        %v1976 = vpack.c.bf16 %v1966, %v1965
        %v1977 = vpack.c.bf16 %v1944, %v1943
        %v1978 = vpack.c.bf16 %v1920, %v1919
        %v1979 = vpack.c.bf16 %v1968, %v1967
        %v1980 = vpack.c.bf16 %v1946, %v1945
        %v1981 = vpack.c.bf16 %v1922, %v1921
        %v1982 = vpack.c.bf16 %v1970, %v1969
        %v1983 = vld [vmem:[#allocation2] sm:$0xf]
        %v1984 = vld [vmem:[#allocation2 + $0x4] sm:$0xf]
        %v1985 = vld [vmem:[#allocation2 + $0x8] sm:$0xf]
        %v1986 = vld [vmem:[#allocation2 + $0xc] sm:$0xf]
        %v1987 = vld [vmem:[#allocation2 + $0x10] sm:$0xf]
        %v1988 = vld [vmem:[#allocation2 + $0x14] sm:$0xf]
        %v1989 = vld [vmem:[#allocation2 + $0x18] sm:$0xf]
        %v1990 = vld [vmem:[#allocation2 + $0x1c] sm:$0xf]
        %v1991 = vld [vmem:[#allocation2 + $0x20] sm:$0xf]
        %v1992 = vld [vmem:[#allocation2 + $0x24] sm:$0xf]
        %v1993 = vld [vmem:[#allocation2 + $0x28] sm:$0xf]
        %v1994 = vld [vmem:[#allocation2 + $0x2c] sm:$0xf]
        %v1995 = vld [vmem:[#allocation2 + $0x30] sm:$0xf]
        %v1996 = vld [vmem:[#allocation2 + $0x34] sm:$0xf]
        %v1997 = vld [vmem:[#allocation2 + $0x38] sm:$0xf]
        %v1998 = vld [vmem:[#allocation2 + $0x3c] sm:$0xf]
        %v1999 = vld [vmem:[#allocation2 + $0x40] sm:$0xf]
        %v2000 = vld [vmem:[#allocation2 + $0x44] sm:$0xf]
        %v2001 = vld [vmem:[#allocation2 + $0x48] sm:$0xf]
        %v2002 = vld [vmem:[#allocation2 + $0x4c] sm:$0xf]
        %v2003 = vld [vmem:[#allocation2 + $0x50] sm:$0xf]
        %v2004 = vld [vmem:[#allocation2 + $0x54] sm:$0xf]
        %v2005 = vld [vmem:[#allocation2 + $0x58] sm:$0xf]
        %v2006 = vld [vmem:[#allocation2 + $0x5c] sm:$0xf]
        %v2007 = vld [vmem:[#allocation2 + $0x60] sm:$0xf]
        %v2008 = vld [vmem:[#allocation2 + $0x64] sm:$0xf]
        %v2009 = vld [vmem:[#allocation2 + $0x68] sm:$0xf]
        %v2010 = vld [vmem:[#allocation2 + $0x6c] sm:$0xf]
        %v2011 = vld [vmem:[#allocation2 + $0x70] sm:$0xf]
        %v2012 = vld [vmem:[#allocation2 + $0x74] sm:$0xf]
        %v2013 = vld [vmem:[#allocation2 + $0x78] sm:$0xf]
        %v2014 = vld [vmem:[#allocation2 + $0x7c] sm:$0xf]
        %v2015 = vld [vmem:[#allocation2 + $0x80] sm:$0xf]
        %v2016 = vld [vmem:[#allocation2 + $0x84] sm:$0xf]
        %v2017 = vld [vmem:[#allocation2 + $0x88] sm:$0xf]
        %v2018 = vld [vmem:[#allocation2 + $0x8c] sm:$0xf]
        %v2019 = vld [vmem:[#allocation2 + $0x90] sm:$0xf]
        %v2020 = vld [vmem:[#allocation2 + $0x94] sm:$0xf]
        %v2021 = vld [vmem:[#allocation2 + $0x98] sm:$0xf]
        %v2022 = vld [vmem:[#allocation2 + $0x9c] sm:$0xf]
        %v2023 = vld [vmem:[#allocation2 + $0xa0] sm:$0xf]
        %v2024 = vld [vmem:[#allocation2 + $0xa4] sm:$0xf]
        %v2025 = vld [vmem:[#allocation2 + $0xa8] sm:$0xf]
        %v2026 = vld [vmem:[#allocation2 + $0xac] sm:$0xf]
        %v2027 = vld [vmem:[#allocation2 + $0xb0] sm:$0xf]
        %v2028 = vld [vmem:[#allocation2 + $0xb4] sm:$0xf]
        %v2029 = vld [vmem:[#allocation2 + $0xb8] sm:$0xf]
        %v2030 = vld [vmem:[#allocation2 + $0xbc] sm:$0xf]
        %v2079 = vunpack.c.l.b16 %v1983
        %v2080 = vunpack.c.l.b16 %v1984
        %v2081 = vunpack.c.l.b16 %v1985
        %v2082 = vunpack.c.l.b16 %v1986
        %v2083 = vunpack.c.l.b16 %v1987
        %v2084 = vunpack.c.l.b16 %v1988
        %v2085 = vunpack.c.l.b16 %v1989
        %v2086 = vunpack.c.l.b16 %v1990
        %v2087 = vunpack.c.l.b16 %v1991
        %v2088 = vunpack.c.l.b16 %v1992
        %v2089 = vunpack.c.l.b16 %v1993
        %v2090 = vunpack.c.l.b16 %v1994
        %v2091 = vunpack.c.l.b16 %v1995
        %v2092 = vunpack.c.l.b16 %v1996
        %v2093 = vunpack.c.l.b16 %v1997
        %v2094 = vunpack.c.l.b16 %v1998
        %v2095 = vunpack.c.l.b16 %v1999
        %v2096 = vunpack.c.l.b16 %v2000
        %v2097 = vunpack.c.l.b16 %v2001
        %v2098 = vunpack.c.l.b16 %v2002
        %v2099 = vunpack.c.l.b16 %v2003
        %v2100 = vunpack.c.l.b16 %v2004
        %v2101 = vunpack.c.l.b16 %v2005
        %v2102 = vunpack.c.l.b16 %v2006
        %v2103 = vunpack.c.l.b16 %v2007
        %v2104 = vunpack.c.l.b16 %v2008
        %v2105 = vunpack.c.l.b16 %v2009
        %v2106 = vunpack.c.l.b16 %v2010
        %v2107 = vunpack.c.l.b16 %v2011
        %v2108 = vunpack.c.l.b16 %v2012
        %v2109 = vunpack.c.l.b16 %v2013
        %v2110 = vunpack.c.l.b16 %v2014
        %v2111 = vunpack.c.l.b16 %v2015
        %v2112 = vunpack.c.l.b16 %v2016
        %v2113 = vunpack.c.l.b16 %v2017
        %v2114 = vunpack.c.l.b16 %v2018
        %v2115 = vunpack.c.l.b16 %v2019
        %v2116 = vunpack.c.l.b16 %v2020
        %v2117 = vunpack.c.l.b16 %v2021
        %v2118 = vunpack.c.l.b16 %v2022
        %v2119 = vunpack.c.l.b16 %v2023
        %v2120 = vunpack.c.l.b16 %v2024
        %v2121 = vunpack.c.l.b16 %v2025
        %v2122 = vunpack.c.l.b16 %v2026
        %v2123 = vunpack.c.l.b16 %v2027
        %v2124 = vunpack.c.l.b16 %v2028
        %v2125 = vunpack.c.l.b16 %v2029
        %v2126 = vunpack.c.l.b16 %v2030
        %v2127 = vpack.c.b16 %v2080, %v2079
        %v2128 = vpack.c.b16 %v2082, %v2081
        %v2129 = vpack.c.b16 %v2084, %v2083
        %v2130 = vpack.c.b16 %v2086, %v2085
        %v2131 = vpack.c.b16 %v2088, %v2087
        %v2132 = vpack.c.b16 %v2090, %v2089
        %v2133 = vpack.c.b16 %v2092, %v2091
        %v2134 = vpack.c.b16 %v2094, %v2093
        %v2135 = vpack.c.b16 %v2096, %v2095
        %v2136 = vpack.c.b16 %v2098, %v2097
        %v2137 = vpack.c.b16 %v2100, %v2099
        %v2138 = vpack.c.b16 %v2102, %v2101
        %v2139 = vpack.c.b16 %v2104, %v2103
        %v2140 = vpack.c.b16 %v2106, %v2105
        %v2141 = vpack.c.b16 %v2108, %v2107
        %v2142 = vpack.c.b16 %v2110, %v2109
        %v2143 = vpack.c.b16 %v2112, %v2111
        %v2144 = vpack.c.b16 %v2114, %v2113
        %v2145 = vpack.c.b16 %v2116, %v2115
        %v2146 = vpack.c.b16 %v2118, %v2117
        %v2147 = vpack.c.b16 %v2120, %v2119
        %v2148 = vpack.c.b16 %v2122, %v2121
        %v2149 = vpack.c.b16 %v2124, %v2123
        %v2150 = vpack.c.b16 %v2126, %v2125
        %2175 = vmatprep.subr.bf16.mxu0 0
        %2176 = vmatpush1.bf16.msra.mxu0 %v2127
        %2177 = vmatprep.subr.bf16.mxu0 0
        %2178 = vmatpush1.bf16.msra.mxu0 %v2128
        %2179 = vmatprep.subr.bf16.mxu0 0
        %2180 = vmatpush1.bf16.msra.mxu0 %v2129
        %2181 = vmatprep.subr.bf16.mxu0 0
        %2182 = vmatpush1.bf16.msra.mxu0 %v2130
        %2183 = vmatprep.subr.bf16.mxu0 0
        %2184 = vmatpush1.bf16.msra.mxu0 %v2131
        %2185 = vmatprep.subr.bf16.mxu0 0
        %2186 = vmatpush1.bf16.msra.mxu0 %v2132
        %2187 = vmatprep.subr.bf16.mxu0 0
        %2188 = vmatpush1.bf16.msra.mxu0 %v2133
        %2189 = vmatprep.subr.bf16.mxu0 0
        %2190 = vmatpush1.bf16.msra.mxu0 %v2134
        %2191 = vmatprep.subr.bf16.mxu0 0
        %2192 = vmatpush1.bf16.msra.mxu0 %v2135
        %2193 = vmatprep.subr.bf16.mxu0 0
        %2194 = vmatpush1.bf16.msra.mxu0 %v2136
        %2195 = vmatprep.subr.bf16.mxu0 0
        %2196 = vmatpush1.bf16.msra.mxu0 %v2137
        %2197 = vmatprep.subr.bf16.mxu0 0
        %2198 = vmatpush1.bf16.msra.mxu0 %v2138
        %2199 = vmatprep.subr.bf16.mxu0 0
        %2200 = vmatpush1.bf16.msra.mxu0 %v2139
        %2201 = vmatprep.subr.bf16.mxu0 0
        %2202 = vmatpush1.bf16.msra.mxu0 %v2140
        %2203 = vmatprep.subr.bf16.mxu0 0
        %2204 = vmatpush1.bf16.msra.mxu0 %v2141
        %2205 = vmatprep.subr.bf16.mxu0 0
        %2206 = vmatpush1.bf16.msra.mxu0 %v2142
        %2207 = vmatprep.mubr.bf16.mxu0 %v1972
        %2208 = vmatmul.mubr.bf16.gmra.mrb[0].mxu0 %v1971
        %v2209 = vpop.f32.mrb[0].mxu0
        %v2210 = vadd.f32 0.0, %v2209
        %v2211 = vpop.f32.mrb[0].mxu0
        %v2212 = vpop.f32.mrb[0].mxu0
        %v2213 = vadd.f32 0.0, %v2212
        %v2214 = vpop.f32.mrb[0].mxu0
        %2215 = vmatprep.mubr.bf16.mxu0 %v1975
        %2216 = vmatmul.mubr.bf16.gmra.mrb[0].mxu0 %v1974
        %v2217 = vpop.f32.mrb[0].mxu0
        %v2218 = vadd.f32 0.0, %v2217
        %v2219 = vpop.f32.mrb[0].mxu0
        %v2220 = vpop.f32.mrb[0].mxu0
        %v2221 = vadd.f32 0.0, %v2220
        %v2222 = vpop.f32.mrb[0].mxu0
        %2223 = vmatprep.mubr.bf16.mxu0 %v1978
        %2224 = vmatmul.mubr.bf16.gmra.mrb[0].mxu0 %v1977
        %v2225 = vpop.f32.mrb[0].mxu0
        %v2226 = vadd.f32 0.0, %v2225
        %v2227 = vpop.f32.mrb[0].mxu0
        %v2228 = vpop.f32.mrb[0].mxu0
        %v2229 = vadd.f32 0.0, %v2228
        %v2230 = vpop.f32.mrb[0].mxu0
        %2231 = vmatprep.mubr.bf16.mxu0 %v1981
        %2232 = vmatmul.mubr.bf16.gmra.mrb[0].mxu0 %v1980
        %v2233 = vpop.f32.mrb[0].mxu0
        %v2234 = vadd.f32 0.0, %v2233
        %v2235 = vpop.f32.mrb[0].mxu0
        %v2236 = vpop.f32.mrb[0].mxu0
        %v2237 = vadd.f32 0.0, %v2236
        %v2238 = vpop.f32.mrb[0].mxu0
        %2239 = vdwg.mxu0
        %2240 = vmatprep.subr.bf16.mxu0 0
        %2241 = vmatpush1.bf16.msra.mxu0 %v2143
        %2242 = vmatprep.subr.bf16.mxu0 0
        %2243 = vmatpush1.bf16.msra.mxu0 %v2144
        %2244 = vmatprep.subr.bf16.mxu0 0
        %2245 = vmatpush1.bf16.msra.mxu0 %v2145
        %2246 = vmatprep.subr.bf16.mxu0 0
        %2247 = vmatpush1.bf16.msra.mxu0 %v2146
        %2248 = vmatprep.subr.bf16.mxu0 0
        %2249 = vmatpush1.bf16.msra.mxu0 %v2147
        %2250 = vmatprep.subr.bf16.mxu0 0
        %2251 = vmatpush1.bf16.msra.mxu0 %v2148
        %2252 = vmatprep.subr.bf16.mxu0 0
        %2253 = vmatpush1.bf16.msra.mxu0 %v2149
        %2254 = vmatprep.subr.bf16.mxu0 0
        %2255 = vmatpush1.bf16.msra.mxu0 %v2150
        %2256 = vmatprep.subr.bf16.mxu0 0
        %2257 = vmatpush1.bf16.msra.mxu0 0
        %2258 = vmatprep.subr.bf16.mxu0 0
        %2259 = vmatpush1.bf16.msra.mxu0 0
        %2260 = vmatprep.subr.bf16.mxu0 0
        %2261 = vmatpush1.bf16.msra.mxu0 0
        %2262 = vmatprep.subr.bf16.mxu0 0
        %2263 = vmatpush1.bf16.msra.mxu0 0
        %2264 = vmatprep.subr.bf16.mxu0 0
        %2265 = vmatpush1.bf16.msra.mxu0 0
        %2266 = vmatprep.subr.bf16.mxu0 0
        %2267 = vmatpush1.bf16.msra.mxu0 0
        %2268 = vmatprep.subr.bf16.mxu0 0
        %2269 = vmatpush1.bf16.msra.mxu0 0
        %2270 = vmatprep.subr.bf16.mxu0 0
        %2271 = vmatpush1.bf16.msra.mxu0 0
        %2272 = vmatprep.mubr.bf16.mxu0 0
        %2273 = vmatmul.mubr.bf16.gmra.mrb[0].mxu0 %v1973
        %v2274 = vpop.f32.mrb[0].mxu0
        %v2275 = vadd.f32 %v2210, %v2274
        %v2276 = vpop.f32.mrb[0].mxu0
        %v2277 = vpop.f32.mrb[0].mxu0
        %v2278 = vadd.f32 %v2213, %v2277
        %v2279 = vpop.f32.mrb[0].mxu0
        %2280 = vmatprep.mubr.bf16.mxu0 0
        %2281 = vmatmul.mubr.bf16.gmra.mrb[0].mxu0 %v1976
        %v2282 = vpop.f32.mrb[0].mxu0
        %v2283 = vadd.f32 %v2218, %v2282
        %v2284 = vpop.f32.mrb[0].mxu0
        %v2285 = vpop.f32.mrb[0].mxu0
        %v2286 = vadd.f32 %v2221, %v2285
        %v2287 = vpop.f32.mrb[0].mxu0
        %2288 = vmatprep.mubr.bf16.mxu0 0
        %2289 = vmatmul.mubr.bf16.gmra.mrb[0].mxu0 %v1979
        %v2290 = vpop.f32.mrb[0].mxu0
        %v2291 = vadd.f32 %v2226, %v2290
        %v2292 = vpop.f32.mrb[0].mxu0
        %v2293 = vpop.f32.mrb[0].mxu0
        %v2294 = vadd.f32 %v2229, %v2293
        %v2295 = vpop.f32.mrb[0].mxu0
        %2296 = vmatprep.mubr.bf16.mxu0 0
        %2297 = vmatmul.mubr.bf16.gmra.mrb[0].mxu0 %v1982
        %v2298 = vpop.f32.mrb[0].mxu0
        %v2299 = vadd.f32 %v2234, %v2298
        %v2300 = vpop.f32.mrb[0].mxu0
        %v2301 = vpop.f32.mrb[0].mxu0
        %v2302 = vadd.f32 %v2237, %v2301
        %v2303 = vpop.f32.mrb[0].mxu0
        %2304 = vdwg.mxu0
        %v2305 = vld [vmem:[%s10] sm:$0x1]
        %v2307 = vlaneseq
        %v2308 = vshrl.u32 %v2307, 7
        %v2309 = vsub.s32 0, %v2308
        %v2310 = vrot.slane %v2305, %v2309
        %v2312 = vmul.f32 %v2275, %v2310
        %v2313 = vmul.f32 %v2278, %v2310
        %v2314 = vmul.f32 %v2283, %v2310
        %v2315 = vmul.f32 %v2286, %v2310
        %v2316 = vmul.f32 %v2291, %v2310
        %v2317 = vmul.f32 %v2294, %v2310
        %v2318 = vmul.f32 %v2299, %v2310
        %v2319 = vmul.f32 %v2302, %v2310
        %v2320 = vld [vmem:[%s11] sm:$0x1]
        %v2322 = vlaneseq
        %v2323 = vshrl.u32 %v2322, 7
        %v2324 = vsub.s32 0, %v2323
        %v2325 = vrot.slane %v2320, %v2324
        %v2327 = vadd.f32 %v2312, %v2325
        %v2328 = vadd.f32 %v2313, %v2325
        %v2329 = vadd.f32 %v2314, %v2325
        %v2330 = vadd.f32 %v2315, %v2325
        %v2331 = vadd.f32 %v2316, %v2325
        %v2332 = vadd.f32 %v2317, %v2325
        %v2333 = vadd.f32 %v2318, %v2325
        %v2334 = vadd.f32 %v2319, %v2325
        %v2335 = vmax.f32 %v2327, 0.0
        %v2336 = vmax.f32 %v2328, 0.0
        %v2337 = vmax.f32 %v2329, 0.0
        %v2338 = vmax.f32 %v2330, 0.0
        %v2339 = vmax.f32 %v2331, 0.0
        %v2340 = vmax.f32 %v2332, 0.0
        %v2341 = vmax.f32 %v2333, 0.0
        %v2342 = vmax.f32 %v2334, 0.0
        %v2343 = vrot.slane %v2335, 7
        %v2344 = vrot.slane %v2336, 7
        %v2345 = vrot.slane %v2337, 7
        %v2346 = vrot.slane %v2338, 7
        %v2347 = vrot.slane %v2339, 7
        %v2348 = vrot.slane %v2340, 7
        %v2349 = vrot.slane %v2341, 7
        %v2350 = vrot.slane %v2342, 7
        %v2351 = vsel %vm913, %v2349, %v2350
        %v2352 = vsel %vm913, %v2348, %v2349
        %v2353 = vsel %vm913, %v2347, %v2348
        %v2354 = vsel %vm913, %v2346, %v2347
        %v2355 = vsel %vm913, %v2345, %v2346
        %v2356 = vsel %vm913, %v2344, %v2345
        %v2357 = vsel %vm913, %v2343, %v2344
        %v2358 = vsel %vm913, %v2350, %v2343
        %v2359 = vsel %vm930, %v2358, 0.0
        %v2360 = vsel %vm931, %v2357, 0.0
        %v2361 = vsel %vm932, %v2356, 0.0
        %v2362 = vsel %vm933, %v2355, 0.0
        %v2363 = vsel %vm934, %v2354, 0.0
        %v2364 = vsel %vm935, %v2353, 0.0
        %v2365 = vsel %vm936, %v2352, 0.0
        %v2366 = vsel %vm937, %v2351, 0.0
        %v2367 = vrot.slane %v2335, 1
        %v2368 = vrot.slane %v2336, 1
        %v2369 = vrot.slane %v2337, 1
        %v2370 = vrot.slane %v2338, 1
        %v2371 = vrot.slane %v2339, 1
        %v2372 = vrot.slane %v2340, 1
        %v2373 = vrot.slane %v2341, 1
        %v2374 = vrot.slane %v2342, 1
        %v2375 = vsel %vm954, %v2373, %v2374
        %v2376 = vsel %vm954, %v2372, %v2373
        %v2377 = vsel %vm954, %v2371, %v2372
        %v2378 = vsel %vm954, %v2370, %v2371
        %v2379 = vsel %vm954, %v2369, %v2370
        %v2380 = vsel %vm954, %v2368, %v2369
        %v2381 = vsel %vm954, %v2367, %v2368
        %v2382 = vsel %vm954, %v2374, %v2367
        %v2383 = vsel %vm971, %v2381, 0.0
        %v2384 = vsel %vm972, %v2380, 0.0
        %v2385 = vsel %vm973, %v2379, 0.0
        %v2386 = vsel %vm974, %v2378, 0.0
        %v2387 = vsel %vm975, %v2377, 0.0
        %v2388 = vsel %vm976, %v2376, 0.0
        %v2389 = vsel %vm977, %v2375, 0.0
        %v2390 = vsel %vm978, %v2382, 0.0
        %v2391 = vpack.c.bf16 %v2360, %v2359
        %v2392 = vpack.c.bf16 %v2336, %v2335
        %v2393 = vpack.c.bf16 %v2384, %v2383
        %v2394 = vpack.c.bf16 %v2362, %v2361
        %v2395 = vpack.c.bf16 %v2338, %v2337
        %v2396 = vpack.c.bf16 %v2386, %v2385
        %v2397 = vpack.c.bf16 %v2364, %v2363
        %v2398 = vpack.c.bf16 %v2340, %v2339
        %v2399 = vpack.c.bf16 %v2388, %v2387
        %v2400 = vpack.c.bf16 %v2366, %v2365
        %v2401 = vpack.c.bf16 %v2342, %v2341
        %v2402 = vpack.c.bf16 %v2390, %v2389
        %v2403 = vld [vmem:[#allocation4] sm:$0xf]
        %v2404 = vld [vmem:[#allocation4 + $0x4] sm:$0xf]
        %v2405 = vld [vmem:[#allocation4 + $0x8] sm:$0xf]
        %v2406 = vld [vmem:[#allocation4 + $0xc] sm:$0xf]
        %v2407 = vld [vmem:[#allocation4 + $0x10] sm:$0xf]
        %v2408 = vld [vmem:[#allocation4 + $0x14] sm:$0xf]
        %v2409 = vld [vmem:[#allocation4 + $0x18] sm:$0xf]
        %v2410 = vld [vmem:[#allocation4 + $0x1c] sm:$0xf]
        %v2411 = vld [vmem:[#allocation4 + $0x20] sm:$0xf]
        %v2412 = vld [vmem:[#allocation4 + $0x24] sm:$0xf]
        %v2413 = vld [vmem:[#allocation4 + $0x28] sm:$0xf]
        %v2414 = vld [vmem:[#allocation4 + $0x2c] sm:$0xf]
        %v2415 = vld [vmem:[#allocation4 + $0x30] sm:$0xf]
        %v2416 = vld [vmem:[#allocation4 + $0x34] sm:$0xf]
        %v2417 = vld [vmem:[#allocation4 + $0x38] sm:$0xf]
        %v2418 = vld [vmem:[#allocation4 + $0x3c] sm:$0xf]
        %v2419 = vld [vmem:[#allocation4 + $0x40] sm:$0xf]
        %v2420 = vld [vmem:[#allocation4 + $0x44] sm:$0xf]
        %v2421 = vld [vmem:[#allocation4 + $0x48] sm:$0xf]
        %v2422 = vld [vmem:[#allocation4 + $0x4c] sm:$0xf]
        %v2423 = vld [vmem:[#allocation4 + $0x50] sm:$0xf]
        %v2424 = vld [vmem:[#allocation4 + $0x54] sm:$0xf]
        %v2425 = vld [vmem:[#allocation4 + $0x58] sm:$0xf]
        %v2426 = vld [vmem:[#allocation4 + $0x5c] sm:$0xf]
        %v2427 = vld [vmem:[#allocation4 + $0x60] sm:$0xf]
        %v2428 = vld [vmem:[#allocation4 + $0x64] sm:$0xf]
        %v2429 = vld [vmem:[#allocation4 + $0x68] sm:$0xf]
        %v2430 = vld [vmem:[#allocation4 + $0x6c] sm:$0xf]
        %v2431 = vld [vmem:[#allocation4 + $0x70] sm:$0xf]
        %v2432 = vld [vmem:[#allocation4 + $0x74] sm:$0xf]
        %v2433 = vld [vmem:[#allocation4 + $0x78] sm:$0xf]
        %v2434 = vld [vmem:[#allocation4 + $0x7c] sm:$0xf]
        %v2435 = vld [vmem:[#allocation4 + $0x80] sm:$0xf]
        %v2436 = vld [vmem:[#allocation4 + $0x84] sm:$0xf]
        %v2437 = vld [vmem:[#allocation4 + $0x88] sm:$0xf]
        %v2438 = vld [vmem:[#allocation4 + $0x8c] sm:$0xf]
        %v2439 = vld [vmem:[#allocation4 + $0x90] sm:$0xf]
        %v2440 = vld [vmem:[#allocation4 + $0x94] sm:$0xf]
        %v2441 = vld [vmem:[#allocation4 + $0x98] sm:$0xf]
        %v2442 = vld [vmem:[#allocation4 + $0x9c] sm:$0xf]
        %v2443 = vld [vmem:[#allocation4 + $0xa0] sm:$0xf]
        %v2444 = vld [vmem:[#allocation4 + $0xa4] sm:$0xf]
        %v2445 = vld [vmem:[#allocation4 + $0xa8] sm:$0xf]
        %v2446 = vld [vmem:[#allocation4 + $0xac] sm:$0xf]
        %v2447 = vld [vmem:[#allocation4 + $0xb0] sm:$0xf]
        %v2448 = vld [vmem:[#allocation4 + $0xb4] sm:$0xf]
        %v2449 = vld [vmem:[#allocation4 + $0xb8] sm:$0xf]
        %v2450 = vld [vmem:[#allocation4 + $0xbc] sm:$0xf]
        %v2499 = vunpack.c.l.b16 %v2403
        %v2500 = vunpack.c.l.b16 %v2404
        %v2501 = vunpack.c.l.b16 %v2405
        %v2502 = vunpack.c.l.b16 %v2406
        %v2503 = vunpack.c.l.b16 %v2407
        %v2504 = vunpack.c.l.b16 %v2408
        %v2505 = vunpack.c.l.b16 %v2409
        %v2506 = vunpack.c.l.b16 %v2410
        %v2507 = vunpack.c.l.b16 %v2411
        %v2508 = vunpack.c.l.b16 %v2412
        %v2509 = vunpack.c.l.b16 %v2413
        %v2510 = vunpack.c.l.b16 %v2414
        %v2511 = vunpack.c.l.b16 %v2415
        %v2512 = vunpack.c.l.b16 %v2416
        %v2513 = vunpack.c.l.b16 %v2417
        %v2514 = vunpack.c.l.b16 %v2418
        %v2515 = vunpack.c.l.b16 %v2419
        %v2516 = vunpack.c.l.b16 %v2420
        %v2517 = vunpack.c.l.b16 %v2421
        %v2518 = vunpack.c.l.b16 %v2422
        %v2519 = vunpack.c.l.b16 %v2423
        %v2520 = vunpack.c.l.b16 %v2424
        %v2521 = vunpack.c.l.b16 %v2425
        %v2522 = vunpack.c.l.b16 %v2426
        %v2523 = vunpack.c.l.b16 %v2427
        %v2524 = vunpack.c.l.b16 %v2428
        %v2525 = vunpack.c.l.b16 %v2429
        %v2526 = vunpack.c.l.b16 %v2430
        %v2527 = vunpack.c.l.b16 %v2431
        %v2528 = vunpack.c.l.b16 %v2432
        %v2529 = vunpack.c.l.b16 %v2433
        %v2530 = vunpack.c.l.b16 %v2434
        %v2531 = vunpack.c.l.b16 %v2435
        %v2532 = vunpack.c.l.b16 %v2436
        %v2533 = vunpack.c.l.b16 %v2437
        %v2534 = vunpack.c.l.b16 %v2438
        %v2535 = vunpack.c.l.b16 %v2439
        %v2536 = vunpack.c.l.b16 %v2440
        %v2537 = vunpack.c.l.b16 %v2441
        %v2538 = vunpack.c.l.b16 %v2442
        %v2539 = vunpack.c.l.b16 %v2443
        %v2540 = vunpack.c.l.b16 %v2444
        %v2541 = vunpack.c.l.b16 %v2445
        %v2542 = vunpack.c.l.b16 %v2446
        %v2543 = vunpack.c.l.b16 %v2447
        %v2544 = vunpack.c.l.b16 %v2448
        %v2545 = vunpack.c.l.b16 %v2449
        %v2546 = vunpack.c.l.b16 %v2450
        %v2547 = vpack.c.b16 %v2500, %v2499
        %v2548 = vpack.c.b16 %v2502, %v2501
        %v2549 = vpack.c.b16 %v2504, %v2503
        %v2550 = vpack.c.b16 %v2506, %v2505
        %v2551 = vpack.c.b16 %v2508, %v2507
        %v2552 = vpack.c.b16 %v2510, %v2509
        %v2553 = vpack.c.b16 %v2512, %v2511
        %v2554 = vpack.c.b16 %v2514, %v2513
        %v2555 = vpack.c.b16 %v2516, %v2515
        %v2556 = vpack.c.b16 %v2518, %v2517
        %v2557 = vpack.c.b16 %v2520, %v2519
        %v2558 = vpack.c.b16 %v2522, %v2521
        %v2559 = vpack.c.b16 %v2524, %v2523
        %v2560 = vpack.c.b16 %v2526, %v2525
        %v2561 = vpack.c.b16 %v2528, %v2527
        %v2562 = vpack.c.b16 %v2530, %v2529
        %v2563 = vpack.c.b16 %v2532, %v2531
        %v2564 = vpack.c.b16 %v2534, %v2533
        %v2565 = vpack.c.b16 %v2536, %v2535
        %v2566 = vpack.c.b16 %v2538, %v2537
        %v2567 = vpack.c.b16 %v2540, %v2539
        %v2568 = vpack.c.b16 %v2542, %v2541
        %v2569 = vpack.c.b16 %v2544, %v2543
        %v2570 = vpack.c.b16 %v2546, %v2545
        %2595 = vmatprep.subr.bf16.mxu0 0
        %2596 = vmatpush1.bf16.msra.mxu0 %v2547
        %2597 = vmatprep.subr.bf16.mxu0 0
        %2598 = vmatpush1.bf16.msra.mxu0 %v2548
        %2599 = vmatprep.subr.bf16.mxu0 0
        %2600 = vmatpush1.bf16.msra.mxu0 %v2549
        %2601 = vmatprep.subr.bf16.mxu0 0
        %2602 = vmatpush1.bf16.msra.mxu0 %v2550
        %2603 = vmatprep.subr.bf16.mxu0 0
        %2604 = vmatpush1.bf16.msra.mxu0 %v2551
        %2605 = vmatprep.subr.bf16.mxu0 0
        %2606 = vmatpush1.bf16.msra.mxu0 %v2552
        %2607 = vmatprep.subr.bf16.mxu0 0
        %2608 = vmatpush1.bf16.msra.mxu0 %v2553
        %2609 = vmatprep.subr.bf16.mxu0 0
        %2610 = vmatpush1.bf16.msra.mxu0 %v2554
        %2611 = vmatprep.subr.bf16.mxu0 0
        %2612 = vmatpush1.bf16.msra.mxu0 %v2555
        %2613 = vmatprep.subr.bf16.mxu0 0
        %2614 = vmatpush1.bf16.msra.mxu0 %v2556
        %2615 = vmatprep.subr.bf16.mxu0 0
        %2616 = vmatpush1.bf16.msra.mxu0 %v2557
        %2617 = vmatprep.subr.bf16.mxu0 0
        %2618 = vmatpush1.bf16.msra.mxu0 %v2558
        %2619 = vmatprep.subr.bf16.mxu0 0
        %2620 = vmatpush1.bf16.msra.mxu0 %v2559
        %2621 = vmatprep.subr.bf16.mxu0 0
        %2622 = vmatpush1.bf16.msra.mxu0 %v2560
        %2623 = vmatprep.subr.bf16.mxu0 0
        %2624 = vmatpush1.bf16.msra.mxu0 %v2561
        %2625 = vmatprep.subr.bf16.mxu0 0
        %2626 = vmatpush1.bf16.msra.mxu0 %v2562
        %2627 = vmatprep.mubr.bf16.mxu0 %v2392
        %2628 = vmatmul.mubr.bf16.gmra.mrb[0].mxu0 %v2391
        %v2629 = vpop.f32.mrb[0].mxu0
        %v2630 = vadd.f32 0.0, %v2629
        %v2631 = vpop.f32.mrb[0].mxu0
        %v2632 = vpop.f32.mrb[0].mxu0
        %v2633 = vadd.f32 0.0, %v2632
        %v2634 = vpop.f32.mrb[0].mxu0
        %2635 = vmatprep.mubr.bf16.mxu0 %v2395
        %2636 = vmatmul.mubr.bf16.gmra.mrb[0].mxu0 %v2394
        %v2637 = vpop.f32.mrb[0].mxu0
        %v2638 = vadd.f32 0.0, %v2637
        %v2639 = vpop.f32.mrb[0].mxu0
        %v2640 = vpop.f32.mrb[0].mxu0
        %v2641 = vadd.f32 0.0, %v2640
        %v2642 = vpop.f32.mrb[0].mxu0
        %2643 = vmatprep.mubr.bf16.mxu0 %v2398
        %2644 = vmatmul.mubr.bf16.gmra.mrb[0].mxu0 %v2397
        %v2645 = vpop.f32.mrb[0].mxu0
        %v2646 = vadd.f32 0.0, %v2645
        %v2647 = vpop.f32.mrb[0].mxu0
        %v2648 = vpop.f32.mrb[0].mxu0
        %v2649 = vadd.f32 0.0, %v2648
        %v2650 = vpop.f32.mrb[0].mxu0
        %2651 = vmatprep.mubr.bf16.mxu0 %v2401
        %2652 = vmatmul.mubr.bf16.gmra.mrb[0].mxu0 %v2400
        %v2653 = vpop.f32.mrb[0].mxu0
        %v2654 = vadd.f32 0.0, %v2653
        %v2655 = vpop.f32.mrb[0].mxu0
        %v2656 = vpop.f32.mrb[0].mxu0
        %v2657 = vadd.f32 0.0, %v2656
        %v2658 = vpop.f32.mrb[0].mxu0
        %2659 = vdwg.mxu0
        %2660 = vmatprep.subr.bf16.mxu0 0
        %2661 = vmatpush1.bf16.msra.mxu0 %v2563
        %2662 = vmatprep.subr.bf16.mxu0 0
        %2663 = vmatpush1.bf16.msra.mxu0 %v2564
        %2664 = vmatprep.subr.bf16.mxu0 0
        %2665 = vmatpush1.bf16.msra.mxu0 %v2565
        %2666 = vmatprep.subr.bf16.mxu0 0
        %2667 = vmatpush1.bf16.msra.mxu0 %v2566
        %2668 = vmatprep.subr.bf16.mxu0 0
        %2669 = vmatpush1.bf16.msra.mxu0 %v2567
        %2670 = vmatprep.subr.bf16.mxu0 0
        %2671 = vmatpush1.bf16.msra.mxu0 %v2568
        %2672 = vmatprep.subr.bf16.mxu0 0
        %2673 = vmatpush1.bf16.msra.mxu0 %v2569
        %2674 = vmatprep.subr.bf16.mxu0 0
        %2675 = vmatpush1.bf16.msra.mxu0 %v2570
        %2676 = vmatprep.subr.bf16.mxu0 0
        %2677 = vmatpush1.bf16.msra.mxu0 0
        %2678 = vmatprep.subr.bf16.mxu0 0
        %2679 = vmatpush1.bf16.msra.mxu0 0
        %2680 = vmatprep.subr.bf16.mxu0 0
        %2681 = vmatpush1.bf16.msra.mxu0 0
        %2682 = vmatprep.subr.bf16.mxu0 0
        %2683 = vmatpush1.bf16.msra.mxu0 0
        %2684 = vmatprep.subr.bf16.mxu0 0
        %2685 = vmatpush1.bf16.msra.mxu0 0
        %2686 = vmatprep.subr.bf16.mxu0 0
        %2687 = vmatpush1.bf16.msra.mxu0 0
        %2688 = vmatprep.subr.bf16.mxu0 0
        %2689 = vmatpush1.bf16.msra.mxu0 0
        %2690 = vmatprep.subr.bf16.mxu0 0
        %2691 = vmatpush1.bf16.msra.mxu0 0
        %2692 = vmatprep.mubr.bf16.mxu0 0
        %2693 = vmatmul.mubr.bf16.gmra.mrb[0].mxu0 %v2393
        %v2694 = vpop.f32.mrb[0].mxu0
        %v2695 = vadd.f32 %v2630, %v2694
        %v2696 = vpop.f32.mrb[0].mxu0
        %v2697 = vpop.f32.mrb[0].mxu0
        %v2698 = vadd.f32 %v2633, %v2697
        %v2699 = vpop.f32.mrb[0].mxu0
        %2700 = vmatprep.mubr.bf16.mxu0 0
        %2701 = vmatmul.mubr.bf16.gmra.mrb[0].mxu0 %v2396
        %v2702 = vpop.f32.mrb[0].mxu0
        %v2703 = vadd.f32 %v2638, %v2702
        %v2704 = vpop.f32.mrb[0].mxu0
        %v2705 = vpop.f32.mrb[0].mxu0
        %v2706 = vadd.f32 %v2641, %v2705
        %v2707 = vpop.f32.mrb[0].mxu0
        %2708 = vmatprep.mubr.bf16.mxu0 0
        %2709 = vmatmul.mubr.bf16.gmra.mrb[0].mxu0 %v2399
        %v2710 = vpop.f32.mrb[0].mxu0
        %v2711 = vadd.f32 %v2646, %v2710
        %v2712 = vpop.f32.mrb[0].mxu0
        %v2713 = vpop.f32.mrb[0].mxu0
        %v2714 = vadd.f32 %v2649, %v2713
        %v2715 = vpop.f32.mrb[0].mxu0
        %2716 = vmatprep.mubr.bf16.mxu0 0
        %2717 = vmatmul.mubr.bf16.gmra.mrb[0].mxu0 %v2402
        %v2718 = vpop.f32.mrb[0].mxu0
        %v2719 = vadd.f32 %v2654, %v2718
        %v2720 = vpop.f32.mrb[0].mxu0
        %v2721 = vpop.f32.mrb[0].mxu0
        %v2722 = vadd.f32 %v2657, %v2721
        %v2723 = vpop.f32.mrb[0].mxu0
        %2724 = vdwg.mxu0
        %v2725 = vld [vmem:[%s13] sm:$0x1]
        %v2727 = vlaneseq
        %v2728 = vshrl.u32 %v2727, 7
        %v2729 = vsub.s32 0, %v2728
        %v2730 = vrot.slane %v2725, %v2729
        %v2732 = vmul.f32 %v2695, %v2730
        %v2733 = vmul.f32 %v2698, %v2730
        %v2734 = vmul.f32 %v2703, %v2730
        %v2735 = vmul.f32 %v2706, %v2730
        %v2736 = vmul.f32 %v2711, %v2730
        %v2737 = vmul.f32 %v2714, %v2730
        %v2738 = vmul.f32 %v2719, %v2730
        %v2739 = vmul.f32 %v2722, %v2730
        %v2740 = vld [vmem:[%s14] sm:$0x1]
        %v2742 = vlaneseq
        %v2743 = vshrl.u32 %v2742, 7
        %v2744 = vsub.s32 0, %v2743
        %v2745 = vrot.slane %v2740, %v2744
        %v2747 = vadd.f32 %v2732, %v2745
        %v2748 = vadd.f32 %v2733, %v2745
        %v2749 = vadd.f32 %v2734, %v2745
        %v2750 = vadd.f32 %v2735, %v2745
        %v2751 = vadd.f32 %v2736, %v2745
        %v2752 = vadd.f32 %v2737, %v2745
        %v2753 = vadd.f32 %v2738, %v2745
        %v2754 = vadd.f32 %v2739, %v2745
        %v2755 = vadd.f32 %v2747, %v1915
        %v2756 = vadd.f32 %v2748, %v1916
        %v2757 = vadd.f32 %v2749, %v1917
        %v2758 = vadd.f32 %v2750, %v1918
        %v2759 = vadd.f32 %v2751, %v1919
        %v2760 = vadd.f32 %v2752, %v1920
        %v2761 = vadd.f32 %v2753, %v1921
        %v2762 = vadd.f32 %v2754, %v1922
        %v2763 = vmax.f32 %v2755, 0.0
        %v2764 = vmax.f32 %v2756, 0.0
        %v2765 = vmax.f32 %v2757, 0.0
        %v2766 = vmax.f32 %v2758, 0.0
        %v2767 = vmax.f32 %v2759, 0.0
        %v2768 = vmax.f32 %v2760, 0.0
        %v2769 = vmax.f32 %v2761, 0.0
        %v2770 = vmax.f32 %v2762, 0.0
        %v2771 = vrot.slane %v2763, 7
        %v2772 = vrot.slane %v2764, 7
        %v2773 = vrot.slane %v2765, 7
        %v2774 = vrot.slane %v2766, 7
        %v2775 = vrot.slane %v2767, 7
        %v2776 = vrot.slane %v2768, 7
        %v2777 = vrot.slane %v2769, 7
        %v2778 = vrot.slane %v2770, 7
        %v2779 = vsel %vm913, %v2777, %v2778
        %v2780 = vsel %vm913, %v2776, %v2777
        %v2781 = vsel %vm913, %v2775, %v2776
        %v2782 = vsel %vm913, %v2774, %v2775
        %v2783 = vsel %vm913, %v2773, %v2774
        %v2784 = vsel %vm913, %v2772, %v2773
        %v2785 = vsel %vm913, %v2771, %v2772
        %v2786 = vsel %vm913, %v2778, %v2771
        %v2787 = vsel %vm930, %v2786, 0.0
        %v2788 = vsel %vm931, %v2785, 0.0
        %v2789 = vsel %vm932, %v2784, 0.0
        %v2790 = vsel %vm933, %v2783, 0.0
        %v2791 = vsel %vm934, %v2782, 0.0
        %v2792 = vsel %vm935, %v2781, 0.0
        %v2793 = vsel %vm936, %v2780, 0.0
        %v2794 = vsel %vm937, %v2779, 0.0
        %v2795 = vrot.slane %v2763, 1
        %v2796 = vrot.slane %v2764, 1
        %v2797 = vrot.slane %v2765, 1
        %v2798 = vrot.slane %v2766, 1
        %v2799 = vrot.slane %v2767, 1
        %v2800 = vrot.slane %v2768, 1
        %v2801 = vrot.slane %v2769, 1
        %v2802 = vrot.slane %v2770, 1
        %v2803 = vsel %vm954, %v2801, %v2802
        %v2804 = vsel %vm954, %v2800, %v2801
        %v2805 = vsel %vm954, %v2799, %v2800
        %v2806 = vsel %vm954, %v2798, %v2799
        %v2807 = vsel %vm954, %v2797, %v2798
        %v2808 = vsel %vm954, %v2796, %v2797
        %v2809 = vsel %vm954, %v2795, %v2796
        %v2810 = vsel %vm954, %v2802, %v2795
        %v2811 = vsel %vm971, %v2809, 0.0
        %v2812 = vsel %vm972, %v2808, 0.0
        %v2813 = vsel %vm973, %v2807, 0.0
        %v2814 = vsel %vm974, %v2806, 0.0
        %v2815 = vsel %vm975, %v2805, 0.0
        %v2816 = vsel %vm976, %v2804, 0.0
        %v2817 = vsel %vm977, %v2803, 0.0
        %v2818 = vsel %vm978, %v2810, 0.0
        %v2819 = vpack.c.bf16 %v2788, %v2787
        %v2820 = vpack.c.bf16 %v2764, %v2763
        %v2821 = vpack.c.bf16 %v2812, %v2811
        %v2822 = vpack.c.bf16 %v2790, %v2789
        %v2823 = vpack.c.bf16 %v2766, %v2765
        %v2824 = vpack.c.bf16 %v2814, %v2813
        %v2825 = vpack.c.bf16 %v2792, %v2791
        %v2826 = vpack.c.bf16 %v2768, %v2767
        %v2827 = vpack.c.bf16 %v2816, %v2815
        %v2828 = vpack.c.bf16 %v2794, %v2793
        %v2829 = vpack.c.bf16 %v2770, %v2769
        %v2830 = vpack.c.bf16 %v2818, %v2817
        %v2831 = vld [vmem:[#allocation6] sm:$0xf]
        %v2832 = vld [vmem:[#allocation6 + $0x4] sm:$0xf]
        %v2833 = vld [vmem:[#allocation6 + $0x8] sm:$0xf]
        %v2834 = vld [vmem:[#allocation6 + $0xc] sm:$0xf]
        %v2835 = vld [vmem:[#allocation6 + $0x10] sm:$0xf]
        %v2836 = vld [vmem:[#allocation6 + $0x14] sm:$0xf]
        %v2837 = vld [vmem:[#allocation6 + $0x18] sm:$0xf]
        %v2838 = vld [vmem:[#allocation6 + $0x1c] sm:$0xf]
        %v2839 = vld [vmem:[#allocation6 + $0x20] sm:$0xf]
        %v2840 = vld [vmem:[#allocation6 + $0x24] sm:$0xf]
        %v2841 = vld [vmem:[#allocation6 + $0x28] sm:$0xf]
        %v2842 = vld [vmem:[#allocation6 + $0x2c] sm:$0xf]
        %v2843 = vld [vmem:[#allocation6 + $0x30] sm:$0xf]
        %v2844 = vld [vmem:[#allocation6 + $0x34] sm:$0xf]
        %v2845 = vld [vmem:[#allocation6 + $0x38] sm:$0xf]
        %v2846 = vld [vmem:[#allocation6 + $0x3c] sm:$0xf]
        %v2847 = vld [vmem:[#allocation6 + $0x40] sm:$0xf]
        %v2848 = vld [vmem:[#allocation6 + $0x44] sm:$0xf]
        %v2849 = vld [vmem:[#allocation6 + $0x48] sm:$0xf]
        %v2850 = vld [vmem:[#allocation6 + $0x4c] sm:$0xf]
        %v2851 = vld [vmem:[#allocation6 + $0x50] sm:$0xf]
        %v2852 = vld [vmem:[#allocation6 + $0x54] sm:$0xf]
        %v2853 = vld [vmem:[#allocation6 + $0x58] sm:$0xf]
        %v2854 = vld [vmem:[#allocation6 + $0x5c] sm:$0xf]
        %v2855 = vld [vmem:[#allocation6 + $0x60] sm:$0xf]
        %v2856 = vld [vmem:[#allocation6 + $0x64] sm:$0xf]
        %v2857 = vld [vmem:[#allocation6 + $0x68] sm:$0xf]
        %v2858 = vld [vmem:[#allocation6 + $0x6c] sm:$0xf]
        %v2859 = vld [vmem:[#allocation6 + $0x70] sm:$0xf]
        %v2860 = vld [vmem:[#allocation6 + $0x74] sm:$0xf]
        %v2861 = vld [vmem:[#allocation6 + $0x78] sm:$0xf]
        %v2862 = vld [vmem:[#allocation6 + $0x7c] sm:$0xf]
        %v2863 = vld [vmem:[#allocation6 + $0x80] sm:$0xf]
        %v2864 = vld [vmem:[#allocation6 + $0x84] sm:$0xf]
        %v2865 = vld [vmem:[#allocation6 + $0x88] sm:$0xf]
        %v2866 = vld [vmem:[#allocation6 + $0x8c] sm:$0xf]
        %v2867 = vld [vmem:[#allocation6 + $0x90] sm:$0xf]
        %v2868 = vld [vmem:[#allocation6 + $0x94] sm:$0xf]
        %v2869 = vld [vmem:[#allocation6 + $0x98] sm:$0xf]
        %v2870 = vld [vmem:[#allocation6 + $0x9c] sm:$0xf]
        %v2871 = vld [vmem:[#allocation6 + $0xa0] sm:$0xf]
        %v2872 = vld [vmem:[#allocation6 + $0xa4] sm:$0xf]
        %v2873 = vld [vmem:[#allocation6 + $0xa8] sm:$0xf]
        %v2874 = vld [vmem:[#allocation6 + $0xac] sm:$0xf]
        %v2875 = vld [vmem:[#allocation6 + $0xb0] sm:$0xf]
        %v2876 = vld [vmem:[#allocation6 + $0xb4] sm:$0xf]
        %v2877 = vld [vmem:[#allocation6 + $0xb8] sm:$0xf]
        %v2878 = vld [vmem:[#allocation6 + $0xbc] sm:$0xf]
        %v2927 = vunpack.c.l.b16 %v2831
        %v2928 = vunpack.c.l.b16 %v2832
        %v2929 = vunpack.c.l.b16 %v2833
        %v2930 = vunpack.c.l.b16 %v2834
        %v2931 = vunpack.c.l.b16 %v2835
        %v2932 = vunpack.c.l.b16 %v2836
        %v2933 = vunpack.c.l.b16 %v2837
        %v2934 = vunpack.c.l.b16 %v2838
        %v2935 = vunpack.c.l.b16 %v2839
        %v2936 = vunpack.c.l.b16 %v2840
        %v2937 = vunpack.c.l.b16 %v2841
        %v2938 = vunpack.c.l.b16 %v2842
        %v2939 = vunpack.c.l.b16 %v2843
        %v2940 = vunpack.c.l.b16 %v2844
        %v2941 = vunpack.c.l.b16 %v2845
        %v2942 = vunpack.c.l.b16 %v2846
        %v2943 = vunpack.c.l.b16 %v2847
        %v2944 = vunpack.c.l.b16 %v2848
        %v2945 = vunpack.c.l.b16 %v2849
        %v2946 = vunpack.c.l.b16 %v2850
        %v2947 = vunpack.c.l.b16 %v2851
        %v2948 = vunpack.c.l.b16 %v2852
        %v2949 = vunpack.c.l.b16 %v2853
        %v2950 = vunpack.c.l.b16 %v2854
        %v2951 = vunpack.c.l.b16 %v2855
        %v2952 = vunpack.c.l.b16 %v2856
        %v2953 = vunpack.c.l.b16 %v2857
        %v2954 = vunpack.c.l.b16 %v2858
        %v2955 = vunpack.c.l.b16 %v2859
        %v2956 = vunpack.c.l.b16 %v2860
        %v2957 = vunpack.c.l.b16 %v2861
        %v2958 = vunpack.c.l.b16 %v2862
        %v2959 = vunpack.c.l.b16 %v2863
        %v2960 = vunpack.c.l.b16 %v2864
        %v2961 = vunpack.c.l.b16 %v2865
        %v2962 = vunpack.c.l.b16 %v2866
        %v2963 = vunpack.c.l.b16 %v2867
        %v2964 = vunpack.c.l.b16 %v2868
        %v2965 = vunpack.c.l.b16 %v2869
        %v2966 = vunpack.c.l.b16 %v2870
        %v2967 = vunpack.c.l.b16 %v2871
        %v2968 = vunpack.c.l.b16 %v2872
        %v2969 = vunpack.c.l.b16 %v2873
        %v2970 = vunpack.c.l.b16 %v2874
        %v2971 = vunpack.c.l.b16 %v2875
        %v2972 = vunpack.c.l.b16 %v2876
        %v2973 = vunpack.c.l.b16 %v2877
        %v2974 = vunpack.c.l.b16 %v2878
        %v2975 = vpack.c.b16 %v2928, %v2927
        %v2976 = vpack.c.b16 %v2930, %v2929
        %v2977 = vpack.c.b16 %v2932, %v2931
        %v2978 = vpack.c.b16 %v2934, %v2933
        %v2979 = vpack.c.b16 %v2936, %v2935
        %v2980 = vpack.c.b16 %v2938, %v2937
        %v2981 = vpack.c.b16 %v2940, %v2939
        %v2982 = vpack.c.b16 %v2942, %v2941
        %v2983 = vpack.c.b16 %v2944, %v2943
        %v2984 = vpack.c.b16 %v2946, %v2945
        %v2985 = vpack.c.b16 %v2948, %v2947
        %v2986 = vpack.c.b16 %v2950, %v2949
        %v2987 = vpack.c.b16 %v2952, %v2951
        %v2988 = vpack.c.b16 %v2954, %v2953
        %v2989 = vpack.c.b16 %v2956, %v2955
        %v2990 = vpack.c.b16 %v2958, %v2957
        %v2991 = vpack.c.b16 %v2960, %v2959
        %v2992 = vpack.c.b16 %v2962, %v2961
        %v2993 = vpack.c.b16 %v2964, %v2963
        %v2994 = vpack.c.b16 %v2966, %v2965
        %v2995 = vpack.c.b16 %v2968, %v2967
        %v2996 = vpack.c.b16 %v2970, %v2969
        %v2997 = vpack.c.b16 %v2972, %v2971
        %v2998 = vpack.c.b16 %v2974, %v2973
        %3023 = vmatprep.subr.bf16.mxu0 0
        %3024 = vmatpush1.bf16.msra.mxu0 %v2975
        %3025 = vmatprep.subr.bf16.mxu0 0
        %3026 = vmatpush1.bf16.msra.mxu0 %v2976
        %3027 = vmatprep.subr.bf16.mxu0 0
        %3028 = vmatpush1.bf16.msra.mxu0 %v2977
        %3029 = vmatprep.subr.bf16.mxu0 0
        %3030 = vmatpush1.bf16.msra.mxu0 %v2978
        %3031 = vmatprep.subr.bf16.mxu0 0
        %3032 = vmatpush1.bf16.msra.mxu0 %v2979
        %3033 = vmatprep.subr.bf16.mxu0 0
        %3034 = vmatpush1.bf16.msra.mxu0 %v2980
        %3035 = vmatprep.subr.bf16.mxu0 0
        %3036 = vmatpush1.bf16.msra.mxu0 %v2981
        %3037 = vmatprep.subr.bf16.mxu0 0
        %3038 = vmatpush1.bf16.msra.mxu0 %v2982
        %3039 = vmatprep.subr.bf16.mxu0 0
        %3040 = vmatpush1.bf16.msra.mxu0 %v2983
        %3041 = vmatprep.subr.bf16.mxu0 0
        %3042 = vmatpush1.bf16.msra.mxu0 %v2984
        %3043 = vmatprep.subr.bf16.mxu0 0
        %3044 = vmatpush1.bf16.msra.mxu0 %v2985
        %3045 = vmatprep.subr.bf16.mxu0 0
        %3046 = vmatpush1.bf16.msra.mxu0 %v2986
        %3047 = vmatprep.subr.bf16.mxu0 0
        %3048 = vmatpush1.bf16.msra.mxu0 %v2987
        %3049 = vmatprep.subr.bf16.mxu0 0
        %3050 = vmatpush1.bf16.msra.mxu0 %v2988
        %3051 = vmatprep.subr.bf16.mxu0 0
        %3052 = vmatpush1.bf16.msra.mxu0 %v2989
        %3053 = vmatprep.subr.bf16.mxu0 0
        %3054 = vmatpush1.bf16.msra.mxu0 %v2990
        %3055 = vmatprep.mubr.bf16.mxu0 %v2820
        %3056 = vmatmul.mubr.bf16.gmra.mrb[0].mxu0 %v2819
        %v3057 = vpop.f32.mrb[0].mxu0
        %v3058 = vadd.f32 0.0, %v3057
        %v3059 = vpop.f32.mrb[0].mxu0
        %v3060 = vpop.f32.mrb[0].mxu0
        %v3061 = vadd.f32 0.0, %v3060
        %v3062 = vpop.f32.mrb[0].mxu0
        %3063 = vmatprep.mubr.bf16.mxu0 %v2823
        %3064 = vmatmul.mubr.bf16.gmra.mrb[0].mxu0 %v2822
        %v3065 = vpop.f32.mrb[0].mxu0
        %v3066 = vadd.f32 0.0, %v3065
        %v3067 = vpop.f32.mrb[0].mxu0
        %v3068 = vpop.f32.mrb[0].mxu0
        %v3069 = vadd.f32 0.0, %v3068
        %v3070 = vpop.f32.mrb[0].mxu0
        %3071 = vmatprep.mubr.bf16.mxu0 %v2826
        %3072 = vmatmul.mubr.bf16.gmra.mrb[0].mxu0 %v2825
        %v3073 = vpop.f32.mrb[0].mxu0
        %v3074 = vadd.f32 0.0, %v3073
        %v3075 = vpop.f32.mrb[0].mxu0
        %v3076 = vpop.f32.mrb[0].mxu0
        %v3077 = vadd.f32 0.0, %v3076
        %v3078 = vpop.f32.mrb[0].mxu0
        %3079 = vmatprep.mubr.bf16.mxu0 %v2829
        %3080 = vmatmul.mubr.bf16.gmra.mrb[0].mxu0 %v2828
        %v3081 = vpop.f32.mrb[0].mxu0
        %v3082 = vadd.f32 0.0, %v3081
        %v3083 = vpop.f32.mrb[0].mxu0
        %v3084 = vpop.f32.mrb[0].mxu0
        %v3085 = vadd.f32 0.0, %v3084
        %v3086 = vpop.f32.mrb[0].mxu0
        %3087 = vdwg.mxu0
        %3088 = vmatprep.subr.bf16.mxu0 0
        %3089 = vmatpush1.bf16.msra.mxu0 %v2991
        %3090 = vmatprep.subr.bf16.mxu0 0
        %3091 = vmatpush1.bf16.msra.mxu0 %v2992
        %3092 = vmatprep.subr.bf16.mxu0 0
        %3093 = vmatpush1.bf16.msra.mxu0 %v2993
        %3094 = vmatprep.subr.bf16.mxu0 0
        %3095 = vmatpush1.bf16.msra.mxu0 %v2994
        %3096 = vmatprep.subr.bf16.mxu0 0
        %3097 = vmatpush1.bf16.msra.mxu0 %v2995
        %3098 = vmatprep.subr.bf16.mxu0 0
        %3099 = vmatpush1.bf16.msra.mxu0 %v2996
        %3100 = vmatprep.subr.bf16.mxu0 0
        %3101 = vmatpush1.bf16.msra.mxu0 %v2997
        %3102 = vmatprep.subr.bf16.mxu0 0
        %3103 = vmatpush1.bf16.msra.mxu0 %v2998
        %3104 = vmatprep.subr.bf16.mxu0 0
        %3105 = vmatpush1.bf16.msra.mxu0 0
        %3106 = vmatprep.subr.bf16.mxu0 0
        %3107 = vmatpush1.bf16.msra.mxu0 0
        %3108 = vmatprep.subr.bf16.mxu0 0
        %3109 = vmatpush1.bf16.msra.mxu0 0
        %3110 = vmatprep.subr.bf16.mxu0 0
        %3111 = vmatpush1.bf16.msra.mxu0 0
        %3112 = vmatprep.subr.bf16.mxu0 0
        %3113 = vmatpush1.bf16.msra.mxu0 0
        %3114 = vmatprep.subr.bf16.mxu0 0
        %3115 = vmatpush1.bf16.msra.mxu0 0
        %3116 = vmatprep.subr.bf16.mxu0 0
        %3117 = vmatpush1.bf16.msra.mxu0 0
        %3118 = vmatprep.subr.bf16.mxu0 0
        %3119 = vmatpush1.bf16.msra.mxu0 0
        %3120 = vmatprep.mubr.bf16.mxu0 0
        %3121 = vmatmul.mubr.bf16.gmra.mrb[0].mxu0 %v2821
        %v3122 = vpop.f32.mrb[0].mxu0
        %v3123 = vadd.f32 %v3058, %v3122
        %v3124 = vpop.f32.mrb[0].mxu0
        %v3125 = vpop.f32.mrb[0].mxu0
        %v3126 = vadd.f32 %v3061, %v3125
        %v3127 = vpop.f32.mrb[0].mxu0
        %3128 = vmatprep.mubr.bf16.mxu0 0
        %3129 = vmatmul.mubr.bf16.gmra.mrb[0].mxu0 %v2824
        %v3130 = vpop.f32.mrb[0].mxu0
        %v3131 = vadd.f32 %v3066, %v3130
        %v3132 = vpop.f32.mrb[0].mxu0
        %v3133 = vpop.f32.mrb[0].mxu0
        %v3134 = vadd.f32 %v3069, %v3133
        %v3135 = vpop.f32.mrb[0].mxu0
        %3136 = vmatprep.mubr.bf16.mxu0 0
        %3137 = vmatmul.mubr.bf16.gmra.mrb[0].mxu0 %v2827
        %v3138 = vpop.f32.mrb[0].mxu0
        %v3139 = vadd.f32 %v3074, %v3138
        %v3140 = vpop.f32.mrb[0].mxu0
        %v3141 = vpop.f32.mrb[0].mxu0
        %v3142 = vadd.f32 %v3077, %v3141
        %v3143 = vpop.f32.mrb[0].mxu0
        %3144 = vmatprep.mubr.bf16.mxu0 0
        %3145 = vmatmul.mubr.bf16.gmra.mrb[0].mxu0 %v2830
        %v3146 = vpop.f32.mrb[0].mxu0
        %v3147 = vadd.f32 %v3082, %v3146
        %v3148 = vpop.f32.mrb[0].mxu0
        %v3149 = vpop.f32.mrb[0].mxu0
        %v3150 = vadd.f32 %v3085, %v3149
        %v3151 = vpop.f32.mrb[0].mxu0
        %3152 = vdwg.mxu0
        %v3153 = vld [vmem:[%s16] sm:$0x1]
        %v3155 = vlaneseq
        %v3156 = vshrl.u32 %v3155, 7
        %v3157 = vsub.s32 0, %v3156
        %v3158 = vrot.slane %v3153, %v3157
        %v3160 = vmul.f32 %v3123, %v3158
        %v3161 = vmul.f32 %v3126, %v3158
        %v3162 = vmul.f32 %v3131, %v3158
        %v3163 = vmul.f32 %v3134, %v3158
        %v3164 = vmul.f32 %v3139, %v3158
        %v3165 = vmul.f32 %v3142, %v3158
        %v3166 = vmul.f32 %v3147, %v3158
        %v3167 = vmul.f32 %v3150, %v3158
        %v3168 = vld [vmem:[%s17] sm:$0x1]
        %v3170 = vlaneseq
        %v3171 = vshrl.u32 %v3170, 7
        %v3172 = vsub.s32 0, %v3171
        %v3173 = vrot.slane %v3168, %v3172
        %v3175 = vadd.f32 %v3160, %v3173
        %v3176 = vadd.f32 %v3161, %v3173
        %v3177 = vadd.f32 %v3162, %v3173
        %v3178 = vadd.f32 %v3163, %v3173
        %v3179 = vadd.f32 %v3164, %v3173
        %v3180 = vadd.f32 %v3165, %v3173
        %v3181 = vadd.f32 %v3166, %v3173
        %v3182 = vadd.f32 %v3167, %v3173
        %v3183 = vmax.f32 %v3175, 0.0
        %v3184 = vmax.f32 %v3176, 0.0
        %v3185 = vmax.f32 %v3177, 0.0
        %v3186 = vmax.f32 %v3178, 0.0
        %v3187 = vmax.f32 %v3179, 0.0
        %v3188 = vmax.f32 %v3180, 0.0
        %v3189 = vmax.f32 %v3181, 0.0
        %v3190 = vmax.f32 %v3182, 0.0
        %v3191 = vrot.slane %v3183, 7
        %v3192 = vrot.slane %v3184, 7
        %v3193 = vrot.slane %v3185, 7
        %v3194 = vrot.slane %v3186, 7
        %v3195 = vrot.slane %v3187, 7
        %v3196 = vrot.slane %v3188, 7
        %v3197 = vrot.slane %v3189, 7
        %v3198 = vrot.slane %v3190, 7
        %v3199 = vsel %vm913, %v3197, %v3198
        %v3200 = vsel %vm913, %v3196, %v3197
        %v3201 = vsel %vm913, %v3195, %v3196
        %v3202 = vsel %vm913, %v3194, %v3195
        %v3203 = vsel %vm913, %v3193, %v3194
        %v3204 = vsel %vm913, %v3192, %v3193
        %v3205 = vsel %vm913, %v3191, %v3192
        %v3206 = vsel %vm913, %v3198, %v3191
        %v3207 = vsel %vm930, %v3206, 0.0
        %v3208 = vsel %vm931, %v3205, 0.0
        %v3209 = vsel %vm932, %v3204, 0.0
        %v3210 = vsel %vm933, %v3203, 0.0
        %v3211 = vsel %vm934, %v3202, 0.0
        %v3212 = vsel %vm935, %v3201, 0.0
        %v3213 = vsel %vm936, %v3200, 0.0
        %v3214 = vsel %vm937, %v3199, 0.0
        %v3215 = vrot.slane %v3183, 1
        %v3216 = vrot.slane %v3184, 1
        %v3217 = vrot.slane %v3185, 1
        %v3218 = vrot.slane %v3186, 1
        %v3219 = vrot.slane %v3187, 1
        %v3220 = vrot.slane %v3188, 1
        %v3221 = vrot.slane %v3189, 1
        %v3222 = vrot.slane %v3190, 1
        %v3223 = vsel %vm954, %v3221, %v3222
        %v3224 = vsel %vm954, %v3220, %v3221
        %v3225 = vsel %vm954, %v3219, %v3220
        %v3226 = vsel %vm954, %v3218, %v3219
        %v3227 = vsel %vm954, %v3217, %v3218
        %v3228 = vsel %vm954, %v3216, %v3217
        %v3229 = vsel %vm954, %v3215, %v3216
        %v3230 = vsel %vm954, %v3222, %v3215
        %v3231 = vsel %vm971, %v3229, 0.0
        %v3232 = vsel %vm972, %v3228, 0.0
        %v3233 = vsel %vm973, %v3227, 0.0
        %v3234 = vsel %vm974, %v3226, 0.0
        %v3235 = vsel %vm975, %v3225, 0.0
        %v3236 = vsel %vm976, %v3224, 0.0
        %v3237 = vsel %vm977, %v3223, 0.0
        %v3238 = vsel %vm978, %v3230, 0.0
        %v3239 = vpack.c.bf16 %v3208, %v3207
        %v3240 = vpack.c.bf16 %v3184, %v3183
        %v3241 = vpack.c.bf16 %v3232, %v3231
        %v3242 = vpack.c.bf16 %v3210, %v3209
        %v3243 = vpack.c.bf16 %v3186, %v3185
        %v3244 = vpack.c.bf16 %v3234, %v3233
        %v3245 = vpack.c.bf16 %v3212, %v3211
        %v3246 = vpack.c.bf16 %v3188, %v3187
        %v3247 = vpack.c.bf16 %v3236, %v3235
        %v3248 = vpack.c.bf16 %v3214, %v3213
        %v3249 = vpack.c.bf16 %v3190, %v3189
        %v3250 = vpack.c.bf16 %v3238, %v3237
        %v3251 = vld [vmem:[#allocation7] sm:$0xf]
        %v3252 = vld [vmem:[#allocation7 + $0x4] sm:$0xf]
        %v3253 = vld [vmem:[#allocation7 + $0x8] sm:$0xf]
        %v3254 = vld [vmem:[#allocation7 + $0xc] sm:$0xf]
        %v3255 = vld [vmem:[#allocation7 + $0x10] sm:$0xf]
        %v3256 = vld [vmem:[#allocation7 + $0x14] sm:$0xf]
        %v3257 = vld [vmem:[#allocation7 + $0x18] sm:$0xf]
        %v3258 = vld [vmem:[#allocation7 + $0x1c] sm:$0xf]
        %v3259 = vld [vmem:[#allocation7 + $0x20] sm:$0xf]
        %v3260 = vld [vmem:[#allocation7 + $0x24] sm:$0xf]
        %v3261 = vld [vmem:[#allocation7 + $0x28] sm:$0xf]
        %v3262 = vld [vmem:[#allocation7 + $0x2c] sm:$0xf]
        %v3263 = vld [vmem:[#allocation7 + $0x30] sm:$0xf]
        %v3264 = vld [vmem:[#allocation7 + $0x34] sm:$0xf]
        %v3265 = vld [vmem:[#allocation7 + $0x38] sm:$0xf]
        %v3266 = vld [vmem:[#allocation7 + $0x3c] sm:$0xf]
        %v3267 = vld [vmem:[#allocation7 + $0x40] sm:$0xf]
        %v3268 = vld [vmem:[#allocation7 + $0x44] sm:$0xf]
        %v3269 = vld [vmem:[#allocation7 + $0x48] sm:$0xf]
        %v3270 = vld [vmem:[#allocation7 + $0x4c] sm:$0xf]
        %v3271 = vld [vmem:[#allocation7 + $0x50] sm:$0xf]
        %v3272 = vld [vmem:[#allocation7 + $0x54] sm:$0xf]
        %v3273 = vld [vmem:[#allocation7 + $0x58] sm:$0xf]
        %v3274 = vld [vmem:[#allocation7 + $0x5c] sm:$0xf]
        %v3275 = vld [vmem:[#allocation7 + $0x60] sm:$0xf]
        %v3276 = vld [vmem:[#allocation7 + $0x64] sm:$0xf]
        %v3277 = vld [vmem:[#allocation7 + $0x68] sm:$0xf]
        %v3278 = vld [vmem:[#allocation7 + $0x6c] sm:$0xf]
        %v3279 = vld [vmem:[#allocation7 + $0x70] sm:$0xf]
        %v3280 = vld [vmem:[#allocation7 + $0x74] sm:$0xf]
        %v3281 = vld [vmem:[#allocation7 + $0x78] sm:$0xf]
        %v3282 = vld [vmem:[#allocation7 + $0x7c] sm:$0xf]
        %v3283 = vld [vmem:[#allocation7 + $0x80] sm:$0xf]
        %v3284 = vld [vmem:[#allocation7 + $0x84] sm:$0xf]
        %v3285 = vld [vmem:[#allocation7 + $0x88] sm:$0xf]
        %v3286 = vld [vmem:[#allocation7 + $0x8c] sm:$0xf]
        %v3287 = vld [vmem:[#allocation7 + $0x90] sm:$0xf]
        %v3288 = vld [vmem:[#allocation7 + $0x94] sm:$0xf]
        %v3289 = vld [vmem:[#allocation7 + $0x98] sm:$0xf]
        %v3290 = vld [vmem:[#allocation7 + $0x9c] sm:$0xf]
        %v3291 = vld [vmem:[#allocation7 + $0xa0] sm:$0xf]
        %v3292 = vld [vmem:[#allocation7 + $0xa4] sm:$0xf]
        %v3293 = vld [vmem:[#allocation7 + $0xa8] sm:$0xf]
        %v3294 = vld [vmem:[#allocation7 + $0xac] sm:$0xf]
        %v3295 = vld [vmem:[#allocation7 + $0xb0] sm:$0xf]
        %v3296 = vld [vmem:[#allocation7 + $0xb4] sm:$0xf]
        %v3297 = vld [vmem:[#allocation7 + $0xb8] sm:$0xf]
        %v3298 = vld [vmem:[#allocation7 + $0xbc] sm:$0xf]
        %v3347 = vunpack.c.l.b16 %v3251
        %v3348 = vunpack.c.l.b16 %v3252
        %v3349 = vunpack.c.l.b16 %v3253
        %v3350 = vunpack.c.l.b16 %v3254
        %v3351 = vunpack.c.l.b16 %v3255
        %v3352 = vunpack.c.l.b16 %v3256
        %v3353 = vunpack.c.l.b16 %v3257
        %v3354 = vunpack.c.l.b16 %v3258
        %v3355 = vunpack.c.l.b16 %v3259
        %v3356 = vunpack.c.l.b16 %v3260
        %v3357 = vunpack.c.l.b16 %v3261
        %v3358 = vunpack.c.l.b16 %v3262
        %v3359 = vunpack.c.l.b16 %v3263
        %v3360 = vunpack.c.l.b16 %v3264
        %v3361 = vunpack.c.l.b16 %v3265
        %v3362 = vunpack.c.l.b16 %v3266
        %v3363 = vunpack.c.l.b16 %v3267
        %v3364 = vunpack.c.l.b16 %v3268
        %v3365 = vunpack.c.l.b16 %v3269
        %v3366 = vunpack.c.l.b16 %v3270
        %v3367 = vunpack.c.l.b16 %v3271
        %v3368 = vunpack.c.l.b16 %v3272
        %v3369 = vunpack.c.l.b16 %v3273
        %v3370 = vunpack.c.l.b16 %v3274
        %v3371 = vunpack.c.l.b16 %v3275
        %v3372 = vunpack.c.l.b16 %v3276
        %v3373 = vunpack.c.l.b16 %v3277
        %v3374 = vunpack.c.l.b16 %v3278
        %v3375 = vunpack.c.l.b16 %v3279
        %v3376 = vunpack.c.l.b16 %v3280
        %v3377 = vunpack.c.l.b16 %v3281
        %v3378 = vunpack.c.l.b16 %v3282
        %v3379 = vunpack.c.l.b16 %v3283
        %v3380 = vunpack.c.l.b16 %v3284
        %v3381 = vunpack.c.l.b16 %v3285
        %v3382 = vunpack.c.l.b16 %v3286
        %v3383 = vunpack.c.l.b16 %v3287
        %v3384 = vunpack.c.l.b16 %v3288
        %v3385 = vunpack.c.l.b16 %v3289
        %v3386 = vunpack.c.l.b16 %v3290
        %v3387 = vunpack.c.l.b16 %v3291
        %v3388 = vunpack.c.l.b16 %v3292
        %v3389 = vunpack.c.l.b16 %v3293
        %v3390 = vunpack.c.l.b16 %v3294
        %v3391 = vunpack.c.l.b16 %v3295
        %v3392 = vunpack.c.l.b16 %v3296
        %v3393 = vunpack.c.l.b16 %v3297
        %v3394 = vunpack.c.l.b16 %v3298
        %v3395 = vpack.c.b16 %v3348, %v3347
        %v3396 = vpack.c.b16 %v3350, %v3349
        %v3397 = vpack.c.b16 %v3352, %v3351
        %v3398 = vpack.c.b16 %v3354, %v3353
        %v3399 = vpack.c.b16 %v3356, %v3355
        %v3400 = vpack.c.b16 %v3358, %v3357
        %v3401 = vpack.c.b16 %v3360, %v3359
        %v3402 = vpack.c.b16 %v3362, %v3361
        %v3403 = vpack.c.b16 %v3364, %v3363
        %v3404 = vpack.c.b16 %v3366, %v3365
        %v3405 = vpack.c.b16 %v3368, %v3367
        %v3406 = vpack.c.b16 %v3370, %v3369
        %v3407 = vpack.c.b16 %v3372, %v3371
        %v3408 = vpack.c.b16 %v3374, %v3373
        %v3409 = vpack.c.b16 %v3376, %v3375
        %v3410 = vpack.c.b16 %v3378, %v3377
        %v3411 = vpack.c.b16 %v3380, %v3379
        %v3412 = vpack.c.b16 %v3382, %v3381
        %v3413 = vpack.c.b16 %v3384, %v3383
        %v3414 = vpack.c.b16 %v3386, %v3385
        %v3415 = vpack.c.b16 %v3388, %v3387
        %v3416 = vpack.c.b16 %v3390, %v3389
        %v3417 = vpack.c.b16 %v3392, %v3391
        %v3418 = vpack.c.b16 %v3394, %v3393
        %3443 = vmatprep.subr.bf16.mxu0 0
        %3444 = vmatpush1.bf16.msra.mxu0 %v3395
        %3445 = vmatprep.subr.bf16.mxu0 0
        %3446 = vmatpush1.bf16.msra.mxu0 %v3396
        %3447 = vmatprep.subr.bf16.mxu0 0
        %3448 = vmatpush1.bf16.msra.mxu0 %v3397
        %3449 = vmatprep.subr.bf16.mxu0 0
        %3450 = vmatpush1.bf16.msra.mxu0 %v3398
        %3451 = vmatprep.subr.bf16.mxu0 0
        %3452 = vmatpush1.bf16.msra.mxu0 %v3399
        %3453 = vmatprep.subr.bf16.mxu0 0
        %3454 = vmatpush1.bf16.msra.mxu0 %v3400
        %3455 = vmatprep.subr.bf16.mxu0 0
        %3456 = vmatpush1.bf16.msra.mxu0 %v3401
        %3457 = vmatprep.subr.bf16.mxu0 0
        %3458 = vmatpush1.bf16.msra.mxu0 %v3402
        %3459 = vmatprep.subr.bf16.mxu0 0
        %3460 = vmatpush1.bf16.msra.mxu0 %v3403
        %3461 = vmatprep.subr.bf16.mxu0 0
        %3462 = vmatpush1.bf16.msra.mxu0 %v3404
        %3463 = vmatprep.subr.bf16.mxu0 0
        %3464 = vmatpush1.bf16.msra.mxu0 %v3405
        %3465 = vmatprep.subr.bf16.mxu0 0
        %3466 = vmatpush1.bf16.msra.mxu0 %v3406
        %3467 = vmatprep.subr.bf16.mxu0 0
        %3468 = vmatpush1.bf16.msra.mxu0 %v3407
        %3469 = vmatprep.subr.bf16.mxu0 0
        %3470 = vmatpush1.bf16.msra.mxu0 %v3408
        %3471 = vmatprep.subr.bf16.mxu0 0
        %3472 = vmatpush1.bf16.msra.mxu0 %v3409
        %3473 = vmatprep.subr.bf16.mxu0 0
        %3474 = vmatpush1.bf16.msra.mxu0 %v3410
        %3475 = vmatprep.mubr.bf16.mxu0 %v3240
        %3476 = vmatmul.mubr.bf16.gmra.mrb[0].mxu0 %v3239
        %v3477 = vpop.f32.mrb[0].mxu0
        %v3478 = vadd.f32 0.0, %v3477
        %v3479 = vpop.f32.mrb[0].mxu0
        %v3480 = vpop.f32.mrb[0].mxu0
        %v3481 = vadd.f32 0.0, %v3480
        %v3482 = vpop.f32.mrb[0].mxu0
        %3483 = vmatprep.mubr.bf16.mxu0 %v3243
        %3484 = vmatmul.mubr.bf16.gmra.mrb[0].mxu0 %v3242
        %v3485 = vpop.f32.mrb[0].mxu0
        %v3486 = vadd.f32 0.0, %v3485
        %v3487 = vpop.f32.mrb[0].mxu0
        %v3488 = vpop.f32.mrb[0].mxu0
        %v3489 = vadd.f32 0.0, %v3488
        %v3490 = vpop.f32.mrb[0].mxu0
        %3491 = vmatprep.mubr.bf16.mxu0 %v3246
        %3492 = vmatmul.mubr.bf16.gmra.mrb[0].mxu0 %v3245
        %v3493 = vpop.f32.mrb[0].mxu0
        %v3494 = vadd.f32 0.0, %v3493
        %v3495 = vpop.f32.mrb[0].mxu0
        %v3496 = vpop.f32.mrb[0].mxu0
        %v3497 = vadd.f32 0.0, %v3496
        %v3498 = vpop.f32.mrb[0].mxu0
        %3499 = vmatprep.mubr.bf16.mxu0 %v3249
        %3500 = vmatmul.mubr.bf16.gmra.mrb[0].mxu0 %v3248
        %v3501 = vpop.f32.mrb[0].mxu0
        %v3502 = vadd.f32 0.0, %v3501
        %v3503 = vpop.f32.mrb[0].mxu0
        %v3504 = vpop.f32.mrb[0].mxu0
        %v3505 = vadd.f32 0.0, %v3504
        %v3506 = vpop.f32.mrb[0].mxu0
        %3507 = vdwg.mxu0
        %3508 = vmatprep.subr.bf16.mxu0 0
        %3509 = vmatpush1.bf16.msra.mxu0 %v3411
        %3510 = vmatprep.subr.bf16.mxu0 0
        %3511 = vmatpush1.bf16.msra.mxu0 %v3412
        %3512 = vmatprep.subr.bf16.mxu0 0
        %3513 = vmatpush1.bf16.msra.mxu0 %v3413
        %3514 = vmatprep.subr.bf16.mxu0 0
        %3515 = vmatpush1.bf16.msra.mxu0 %v3414
        %3516 = vmatprep.subr.bf16.mxu0 0
        %3517 = vmatpush1.bf16.msra.mxu0 %v3415
        %3518 = vmatprep.subr.bf16.mxu0 0
        %3519 = vmatpush1.bf16.msra.mxu0 %v3416
        %3520 = vmatprep.subr.bf16.mxu0 0
        %3521 = vmatpush1.bf16.msra.mxu0 %v3417
        %3522 = vmatprep.subr.bf16.mxu0 0
        %3523 = vmatpush1.bf16.msra.mxu0 %v3418
        %3524 = vmatprep.subr.bf16.mxu0 0
        %3525 = vmatpush1.bf16.msra.mxu0 0
        %3526 = vmatprep.subr.bf16.mxu0 0
        %3527 = vmatpush1.bf16.msra.mxu0 0
        %3528 = vmatprep.subr.bf16.mxu0 0
        %3529 = vmatpush1.bf16.msra.mxu0 0
        %3530 = vmatprep.subr.bf16.mxu0 0
        %3531 = vmatpush1.bf16.msra.mxu0 0
        %3532 = vmatprep.subr.bf16.mxu0 0
        %3533 = vmatpush1.bf16.msra.mxu0 0
        %3534 = vmatprep.subr.bf16.mxu0 0
        %3535 = vmatpush1.bf16.msra.mxu0 0
        %3536 = vmatprep.subr.bf16.mxu0 0
        %3537 = vmatpush1.bf16.msra.mxu0 0
        %3538 = vmatprep.subr.bf16.mxu0 0
        %3539 = vmatpush1.bf16.msra.mxu0 0
        %3540 = vmatprep.mubr.bf16.mxu0 0
        %3541 = vmatmul.mubr.bf16.gmra.mrb[0].mxu0 %v3241
        %v3542 = vpop.f32.mrb[0].mxu0
        %v3543 = vadd.f32 %v3478, %v3542
        %v3544 = vpop.f32.mrb[0].mxu0
        %v3545 = vpop.f32.mrb[0].mxu0
        %v3546 = vadd.f32 %v3481, %v3545
        %v3547 = vpop.f32.mrb[0].mxu0
        %3548 = vmatprep.mubr.bf16.mxu0 0
        %3549 = vmatmul.mubr.bf16.gmra.mrb[0].mxu0 %v3244
        %v3550 = vpop.f32.mrb[0].mxu0
        %v3551 = vadd.f32 %v3486, %v3550
        %v3552 = vpop.f32.mrb[0].mxu0
        %v3553 = vpop.f32.mrb[0].mxu0
        %v3554 = vadd.f32 %v3489, %v3553
        %v3555 = vpop.f32.mrb[0].mxu0
        %3556 = vmatprep.mubr.bf16.mxu0 0
        %3557 = vmatmul.mubr.bf16.gmra.mrb[0].mxu0 %v3247
        %v3558 = vpop.f32.mrb[0].mxu0
        %v3559 = vadd.f32 %v3494, %v3558
        %v3560 = vpop.f32.mrb[0].mxu0
        %v3561 = vpop.f32.mrb[0].mxu0
        %v3562 = vadd.f32 %v3497, %v3561
        %v3563 = vpop.f32.mrb[0].mxu0
        %3564 = vmatprep.mubr.bf16.mxu0 0
        %3565 = vmatmul.mubr.bf16.gmra.mrb[0].mxu0 %v3250
        %v3566 = vpop.f32.mrb[0].mxu0
        %v3567 = vadd.f32 %v3502, %v3566
        %v3568 = vpop.f32.mrb[0].mxu0
        %v3569 = vpop.f32.mrb[0].mxu0
        %v3570 = vadd.f32 %v3505, %v3569
        %v3571 = vpop.f32.mrb[0].mxu0
        %3572 = vdwg.mxu0
        %v3573 = vld [vmem:[%s19] sm:$0x1]
        %v3575 = vlaneseq
        %v3576 = vshrl.u32 %v3575, 7
        %v3577 = vsub.s32 0, %v3576
        %v3578 = vrot.slane %v3573, %v3577
        %v3580 = vmul.f32 %v3543, %v3578
        %v3581 = vmul.f32 %v3546, %v3578
        %v3582 = vmul.f32 %v3551, %v3578
        %v3583 = vmul.f32 %v3554, %v3578
        %v3584 = vmul.f32 %v3559, %v3578
        %v3585 = vmul.f32 %v3562, %v3578
        %v3586 = vmul.f32 %v3567, %v3578
        %v3587 = vmul.f32 %v3570, %v3578
        %v3588 = vld [vmem:[%s20] sm:$0x1]
        %v3590 = vlaneseq
        %v3591 = vshrl.u32 %v3590, 7
        %v3592 = vsub.s32 0, %v3591
        %v3593 = vrot.slane %v3588, %v3592
        %v3595 = vadd.f32 %v3580, %v3593
        %v3596 = vadd.f32 %v3581, %v3593
        %v3597 = vadd.f32 %v3582, %v3593
        %v3598 = vadd.f32 %v3583, %v3593
        %v3599 = vadd.f32 %v3584, %v3593
        %v3600 = vadd.f32 %v3585, %v3593
        %v3601 = vadd.f32 %v3586, %v3593
        %v3602 = vadd.f32 %v3587, %v3593
        %v3603 = vadd.f32 %v3595, %v2763
        %v3604 = vadd.f32 %v3596, %v2764
        %v3605 = vadd.f32 %v3597, %v2765
        %v3606 = vadd.f32 %v3598, %v2766
        %v3607 = vadd.f32 %v3599, %v2767
        %v3608 = vadd.f32 %v3600, %v2768
        %v3609 = vadd.f32 %v3601, %v2769
        %v3610 = vadd.f32 %v3602, %v2770
        %v3611 = vmax.f32 %v3603, 0.0
        %v3612 = vmax.f32 %v3604, 0.0
        %v3613 = vmax.f32 %v3605, 0.0
        %v3614 = vmax.f32 %v3606, 0.0
        %v3615 = vmax.f32 %v3607, 0.0
        %v3616 = vmax.f32 %v3608, 0.0
        %v3617 = vmax.f32 %v3609, 0.0
        %v3618 = vmax.f32 %v3610, 0.0
        %v3619 = vrot.slane %v3611, 7
        %v3620 = vrot.slane %v3612, 7
        %v3621 = vrot.slane %v3613, 7
        %v3622 = vrot.slane %v3614, 7
        %v3623 = vrot.slane %v3615, 7
        %v3624 = vrot.slane %v3616, 7
        %v3625 = vrot.slane %v3617, 7
        %v3626 = vrot.slane %v3618, 7
        %v3627 = vsel %vm913, %v3625, %v3626
        %v3628 = vsel %vm913, %v3624, %v3625
        %v3629 = vsel %vm913, %v3623, %v3624
        %v3630 = vsel %vm913, %v3622, %v3623
        %v3631 = vsel %vm913, %v3621, %v3622
        %v3632 = vsel %vm913, %v3620, %v3621
        %v3633 = vsel %vm913, %v3619, %v3620
        %v3634 = vsel %vm913, %v3626, %v3619
        %v3635 = vsel %vm930, %v3634, 0.0
        %v3636 = vsel %vm931, %v3633, 0.0
        %v3637 = vsel %vm932, %v3632, 0.0
        %v3638 = vsel %vm933, %v3631, 0.0
        %v3639 = vsel %vm934, %v3630, 0.0
        %v3640 = vsel %vm935, %v3629, 0.0
        %v3641 = vsel %vm936, %v3628, 0.0
        %v3642 = vsel %vm937, %v3627, 0.0
        %v3643 = vrot.slane %v3611, 1
        %v3644 = vrot.slane %v3612, 1
        %v3645 = vrot.slane %v3613, 1
        %v3646 = vrot.slane %v3614, 1
        %v3647 = vrot.slane %v3615, 1
        %v3648 = vrot.slane %v3616, 1
        %v3649 = vrot.slane %v3617, 1
        %v3650 = vrot.slane %v3618, 1
        %v3651 = vsel %vm954, %v3649, %v3650
        %v3652 = vsel %vm954, %v3648, %v3649
        %v3653 = vsel %vm954, %v3647, %v3648
        %v3654 = vsel %vm954, %v3646, %v3647
        %v3655 = vsel %vm954, %v3645, %v3646
        %v3656 = vsel %vm954, %v3644, %v3645
        %v3657 = vsel %vm954, %v3643, %v3644
        %v3658 = vsel %vm954, %v3650, %v3643
        %v3659 = vsel %vm971, %v3657, 0.0
        %v3660 = vsel %vm972, %v3656, 0.0
        %v3661 = vsel %vm973, %v3655, 0.0
        %v3662 = vsel %vm974, %v3654, 0.0
        %v3663 = vsel %vm975, %v3653, 0.0
        %v3664 = vsel %vm976, %v3652, 0.0
        %v3665 = vsel %vm977, %v3651, 0.0
        %v3666 = vsel %vm978, %v3658, 0.0
        %v3667 = vpack.c.bf16 %v3636, %v3635
        %v3668 = vpack.c.bf16 %v3612, %v3611
        %v3669 = vpack.c.bf16 %v3660, %v3659
        %v3670 = vpack.c.bf16 %v3638, %v3637
        %v3671 = vpack.c.bf16 %v3614, %v3613
        %v3672 = vpack.c.bf16 %v3662, %v3661
        %v3673 = vpack.c.bf16 %v3640, %v3639
        %v3674 = vpack.c.bf16 %v3616, %v3615
        %v3675 = vpack.c.bf16 %v3664, %v3663
        %v3676 = vpack.c.bf16 %v3642, %v3641
        %v3677 = vpack.c.bf16 %v3618, %v3617
        %v3678 = vpack.c.bf16 %v3666, %v3665
        %v3679 = vld [vmem:[%s21] sm:$0xff]
        %v3680 = vld [vmem:[%s21 + $0x8] sm:$0xff]
        %v3681 = vld [vmem:[%s21 + $0x10] sm:$0xff]
        %v3682 = vld [vmem:[%s21 + $0x18] sm:$0xff]
        %v3683 = vld [vmem:[%s21 + $0x20] sm:$0xff]
        %v3684 = vld [vmem:[%s21 + $0x28] sm:$0xff]
        %v3685 = vld [vmem:[%s21 + $0x30] sm:$0xff]
        %v3686 = vld [vmem:[%s21 + $0x38] sm:$0xff]
        %v3687 = vld [vmem:[%s21 + $0x40] sm:$0xff]
        %v3688 = vld [vmem:[%s21 + $0x48] sm:$0xff]
        %v3689 = vld [vmem:[%s21 + $0x50] sm:$0xff]
        %v3690 = vld [vmem:[%s21 + $0x58] sm:$0xff]
        %v3691 = vld [vmem:[%s21 + $0x60] sm:$0xff]
        %v3692 = vld [vmem:[%s21 + $0x68] sm:$0xff]
        %v3693 = vld [vmem:[%s21 + $0x70] sm:$0xff]
        %v3694 = vld [vmem:[%s21 + $0x78] sm:$0xff]
        %v3695 = vld [vmem:[%s21 + $0x80] sm:$0xff]
        %v3696 = vld [vmem:[%s21 + $0x88] sm:$0xff]
        %v3697 = vld [vmem:[%s21 + $0x90] sm:$0xff]
        %v3698 = vld [vmem:[%s21 + $0x98] sm:$0xff]
        %v3699 = vld [vmem:[%s21 + $0xa0] sm:$0xff]
        %v3700 = vld [vmem:[%s21 + $0xa8] sm:$0xff]
        %v3701 = vld [vmem:[%s21 + $0xb0] sm:$0xff]
        %v3702 = vld [vmem:[%s21 + $0xb8] sm:$0xff]
        %v3703 = vld [vmem:[%s21 + $0xc0] sm:$0xff]
        %v3704 = vld [vmem:[%s21 + $0xc8] sm:$0xff]
        %v3705 = vld [vmem:[%s21 + $0xd0] sm:$0xff]
        %v3706 = vld [vmem:[%s21 + $0xd8] sm:$0xff]
        %v3707 = vld [vmem:[%s21 + $0xe0] sm:$0xff]
        %v3708 = vld [vmem:[%s21 + $0xe8] sm:$0xff]
        %v3709 = vld [vmem:[%s21 + $0xf0] sm:$0xff]
        %v3710 = vld [vmem:[%s21 + $0xf8] sm:$0xff]
        %v3711 = vld [vmem:[%s21 + $0x100] sm:$0xff]
        %v3712 = vld [vmem:[%s21 + $0x108] sm:$0xff]
        %v3713 = vld [vmem:[%s21 + $0x110] sm:$0xff]
        %v3714 = vld [vmem:[%s21 + $0x118] sm:$0xff]
        %v3715 = vld [vmem:[%s21 + $0x120] sm:$0xff]
        %v3716 = vld [vmem:[%s21 + $0x128] sm:$0xff]
        %v3717 = vld [vmem:[%s21 + $0x130] sm:$0xff]
        %v3718 = vld [vmem:[%s21 + $0x138] sm:$0xff]
        %v3719 = vld [vmem:[%s21 + $0x140] sm:$0xff]
        %v3720 = vld [vmem:[%s21 + $0x148] sm:$0xff]
        %v3721 = vld [vmem:[%s21 + $0x150] sm:$0xff]
        %v3722 = vld [vmem:[%s21 + $0x158] sm:$0xff]
        %v3723 = vld [vmem:[%s21 + $0x160] sm:$0xff]
        %v3724 = vld [vmem:[%s21 + $0x168] sm:$0xff]
        %v3725 = vld [vmem:[%s21 + $0x170] sm:$0xff]
        %v3726 = vld [vmem:[%s21 + $0x178] sm:$0xff]
        %v3727 = vld [vmem:[%s21 + $0x180] sm:$0xff]
        %v3728 = vld [vmem:[%s21 + $0x188] sm:$0xff]
        %v3729 = vld [vmem:[%s21 + $0x190] sm:$0xff]
        %v3730 = vld [vmem:[%s21 + $0x198] sm:$0xff]
        %v3731 = vld [vmem:[%s21 + $0x1a0] sm:$0xff]
        %v3732 = vld [vmem:[%s21 + $0x1a8] sm:$0xff]
        %v3733 = vld [vmem:[%s21 + $0x1b0] sm:$0xff]
        %v3734 = vld [vmem:[%s21 + $0x1b8] sm:$0xff]
        %v3735 = vld [vmem:[%s21 + $0x1c0] sm:$0xff]
        %v3736 = vld [vmem:[%s21 + $0x1c8] sm:$0xff]
        %v3737 = vld [vmem:[%s21 + $0x1d0] sm:$0xff]
        %v3738 = vld [vmem:[%s21 + $0x1d8] sm:$0xff]
        %v3739 = vld [vmem:[%s21 + $0x1e0] sm:$0xff]
        %v3740 = vld [vmem:[%s21 + $0x1e8] sm:$0xff]
        %v3741 = vld [vmem:[%s21 + $0x1f0] sm:$0xff]
        %v3742 = vld [vmem:[%s21 + $0x1f8] sm:$0xff]
        %v3743 = vld [vmem:[%s21 + $0x200] sm:$0xff]
        %v3744 = vld [vmem:[%s21 + $0x208] sm:$0xff]
        %v3745 = vld [vmem:[%s21 + $0x210] sm:$0xff]
        %v3746 = vld [vmem:[%s21 + $0x218] sm:$0xff]
        %v3747 = vld [vmem:[%s21 + $0x220] sm:$0xff]
        %v3748 = vld [vmem:[%s21 + $0x228] sm:$0xff]
        %v3749 = vld [vmem:[%s21 + $0x230] sm:$0xff]
        %v3750 = vld [vmem:[%s21 + $0x238] sm:$0xff]
        %v3751 = vld [vmem:[%s21 + $0x240] sm:$0xff]
        %v3752 = vld [vmem:[%s21 + $0x248] sm:$0xff]
        %v3753 = vld [vmem:[%s21 + $0x250] sm:$0xff]
        %v3754 = vld [vmem:[%s21 + $0x258] sm:$0xff]
        %v3755 = vld [vmem:[%s21 + $0x260] sm:$0xff]
        %v3756 = vld [vmem:[%s21 + $0x268] sm:$0xff]
        %v3757 = vld [vmem:[%s21 + $0x270] sm:$0xff]
        %v3758 = vld [vmem:[%s21 + $0x278] sm:$0xff]
        %v3759 = vld [vmem:[%s21 + $0x280] sm:$0xff]
        %v3760 = vld [vmem:[%s21 + $0x288] sm:$0xff]
        %v3761 = vld [vmem:[%s21 + $0x290] sm:$0xff]
        %v3762 = vld [vmem:[%s21 + $0x298] sm:$0xff]
        %v3763 = vld [vmem:[%s21 + $0x2a0] sm:$0xff]
        %v3764 = vld [vmem:[%s21 + $0x2a8] sm:$0xff]
        %v3765 = vld [vmem:[%s21 + $0x2b0] sm:$0xff]
        %v3766 = vld [vmem:[%s21 + $0x2b8] sm:$0xff]
        %v3767 = vld [vmem:[%s21 + $0x2c0] sm:$0xff]
        %v3768 = vld [vmem:[%s21 + $0x2c8] sm:$0xff]
        %v3769 = vld [vmem:[%s21 + $0x2d0] sm:$0xff]
        %v3770 = vld [vmem:[%s21 + $0x2d8] sm:$0xff]
        %v3771 = vld [vmem:[%s21 + $0x2e0] sm:$0xff]
        %v3772 = vld [vmem:[%s21 + $0x2e8] sm:$0xff]
        %v3773 = vld [vmem:[%s21 + $0x2f0] sm:$0xff]
        %v3774 = vld [vmem:[%s21 + $0x2f8] sm:$0xff]
        %v3775 = vld [vmem:[%s21 + $0x300] sm:$0xff]
        %v3776 = vld [vmem:[%s21 + $0x308] sm:$0xff]
        %v3777 = vld [vmem:[%s21 + $0x310] sm:$0xff]
        %v3778 = vld [vmem:[%s21 + $0x318] sm:$0xff]
        %v3779 = vld [vmem:[%s21 + $0x320] sm:$0xff]
        %v3780 = vld [vmem:[%s21 + $0x328] sm:$0xff]
        %v3781 = vld [vmem:[%s21 + $0x330] sm:$0xff]
        %v3782 = vld [vmem:[%s21 + $0x338] sm:$0xff]
        %v3783 = vld [vmem:[%s21 + $0x340] sm:$0xff]
        %v3784 = vld [vmem:[%s21 + $0x348] sm:$0xff]
        %v3785 = vld [vmem:[%s21 + $0x350] sm:$0xff]
        %v3786 = vld [vmem:[%s21 + $0x358] sm:$0xff]
        %v3787 = vld [vmem:[%s21 + $0x360] sm:$0xff]
        %v3788 = vld [vmem:[%s21 + $0x368] sm:$0xff]
        %v3789 = vld [vmem:[%s21 + $0x370] sm:$0xff]
        %v3790 = vld [vmem:[%s21 + $0x378] sm:$0xff]
        %v3791 = vld [vmem:[%s21 + $0x380] sm:$0xff]
        %v3792 = vld [vmem:[%s21 + $0x388] sm:$0xff]
        %v3793 = vld [vmem:[%s21 + $0x390] sm:$0xff]
        %v3794 = vld [vmem:[%s21 + $0x398] sm:$0xff]
        %v3795 = vld [vmem:[%s21 + $0x3a0] sm:$0xff]
        %v3796 = vld [vmem:[%s21 + $0x3a8] sm:$0xff]
        %v3797 = vld [vmem:[%s21 + $0x3b0] sm:$0xff]
        %v3798 = vld [vmem:[%s21 + $0x3b8] sm:$0xff]
        %v3799 = vld [vmem:[%s21 + $0x3c0] sm:$0xff]
        %v3800 = vld [vmem:[%s21 + $0x3c8] sm:$0xff]
        %v3801 = vld [vmem:[%s21 + $0x3d0] sm:$0xff]
        %v3802 = vld [vmem:[%s21 + $0x3d8] sm:$0xff]
        %v3803 = vld [vmem:[%s21 + $0x3e0] sm:$0xff]
        %v3804 = vld [vmem:[%s21 + $0x3e8] sm:$0xff]
        %v3805 = vld [vmem:[%s21 + $0x3f0] sm:$0xff]
        %v3806 = vld [vmem:[%s21 + $0x3f8] sm:$0xff]
        %v3807 = vld [vmem:[%s21 + $0x400] sm:$0xff]
        %v3808 = vld [vmem:[%s21 + $0x408] sm:$0xff]
        %v3809 = vld [vmem:[%s21 + $0x410] sm:$0xff]
        %v3810 = vld [vmem:[%s21 + $0x418] sm:$0xff]
        %v3811 = vld [vmem:[%s21 + $0x420] sm:$0xff]
        %v3812 = vld [vmem:[%s21 + $0x428] sm:$0xff]
        %v3813 = vld [vmem:[%s21 + $0x430] sm:$0xff]
        %v3814 = vld [vmem:[%s21 + $0x438] sm:$0xff]
        %v3815 = vld [vmem:[%s21 + $0x440] sm:$0xff]
        %v3816 = vld [vmem:[%s21 + $0x448] sm:$0xff]
        %v3817 = vld [vmem:[%s21 + $0x450] sm:$0xff]
        %v3818 = vld [vmem:[%s21 + $0x458] sm:$0xff]
        %v3819 = vld [vmem:[%s21 + $0x460] sm:$0xff]
        %v3820 = vld [vmem:[%s21 + $0x468] sm:$0xff]
        %v3821 = vld [vmem:[%s21 + $0x470] sm:$0xff]
        %v3822 = vld [vmem:[%s21 + $0x478] sm:$0xff]
        %v3823 = vld [vmem:[%s21 + $0x480] sm:$0xff]
        %v3824 = vld [vmem:[%s21 + $0x488] sm:$0xff]
        %v3825 = vld [vmem:[%s21 + $0x490] sm:$0xff]
        %v3826 = vld [vmem:[%s21 + $0x498] sm:$0xff]
        %v3827 = vld [vmem:[%s21 + $0x4a0] sm:$0xff]
        %v3828 = vld [vmem:[%s21 + $0x4a8] sm:$0xff]
        %v3829 = vld [vmem:[%s21 + $0x4b0] sm:$0xff]
        %v3830 = vld [vmem:[%s21 + $0x4b8] sm:$0xff]
        %v3831 = vld [vmem:[%s21 + $0x4c0] sm:$0xff]
        %v3832 = vld [vmem:[%s21 + $0x4c8] sm:$0xff]
        %v3833 = vld [vmem:[%s21 + $0x4d0] sm:$0xff]
        %v3834 = vld [vmem:[%s21 + $0x4d8] sm:$0xff]
        %v3835 = vld [vmem:[%s21 + $0x4e0] sm:$0xff]
        %v3836 = vld [vmem:[%s21 + $0x4e8] sm:$0xff]
        %v3837 = vld [vmem:[%s21 + $0x4f0] sm:$0xff]
        %v3838 = vld [vmem:[%s21 + $0x4f8] sm:$0xff]
        %v3839 = vld [vmem:[%s21 + $0x500] sm:$0xff]
        %v3840 = vld [vmem:[%s21 + $0x508] sm:$0xff]
        %v3841 = vld [vmem:[%s21 + $0x510] sm:$0xff]
        %v3842 = vld [vmem:[%s21 + $0x518] sm:$0xff]
        %v3843 = vld [vmem:[%s21 + $0x520] sm:$0xff]
        %v3844 = vld [vmem:[%s21 + $0x528] sm:$0xff]
        %v3845 = vld [vmem:[%s21 + $0x530] sm:$0xff]
        %v3846 = vld [vmem:[%s21 + $0x538] sm:$0xff]
        %v3847 = vld [vmem:[%s21 + $0x540] sm:$0xff]
        %v3848 = vld [vmem:[%s21 + $0x548] sm:$0xff]
        %v3849 = vld [vmem:[%s21 + $0x550] sm:$0xff]
        %v3850 = vld [vmem:[%s21 + $0x558] sm:$0xff]
        %v3851 = vld [vmem:[%s21 + $0x560] sm:$0xff]
        %v3852 = vld [vmem:[%s21 + $0x568] sm:$0xff]
        %v3853 = vld [vmem:[%s21 + $0x570] sm:$0xff]
        %v3854 = vld [vmem:[%s21 + $0x578] sm:$0xff]
        %v3855 = vld [vmem:[%s21 + $0x580] sm:$0xff]
        %v3856 = vld [vmem:[%s21 + $0x588] sm:$0xff]
        %v3857 = vld [vmem:[%s21 + $0x590] sm:$0xff]
        %v3858 = vld [vmem:[%s21 + $0x598] sm:$0xff]
        %v3859 = vld [vmem:[%s21 + $0x5a0] sm:$0xff]
        %v3860 = vld [vmem:[%s21 + $0x5a8] sm:$0xff]
        %v3861 = vld [vmem:[%s21 + $0x5b0] sm:$0xff]
        %v3862 = vld [vmem:[%s21 + $0x5b8] sm:$0xff]
        %v3863 = vld [vmem:[%s21 + $0x5c0] sm:$0xff]
        %v3864 = vld [vmem:[%s21 + $0x5c8] sm:$0xff]
        %v3865 = vld [vmem:[%s21 + $0x5d0] sm:$0xff]
        %v3866 = vld [vmem:[%s21 + $0x5d8] sm:$0xff]
        %v3867 = vld [vmem:[%s21 + $0x5e0] sm:$0xff]
        %v3868 = vld [vmem:[%s21 + $0x5e8] sm:$0xff]
        %v3869 = vld [vmem:[%s21 + $0x5f0] sm:$0xff]
        %v3870 = vld [vmem:[%s21 + $0x5f8] sm:$0xff]
        %v3871 = vld [vmem:[%s22] sm:$0xff]
        %v3873 = vlaneseq
        %v3874 = vshrl.u32 %v3873, 7
        %v3875 = vsub.s32 0, %v3874
        %v3876 = vrot.slane %v3871, %v3875
        %v3877 = vlaneseq
        %v3878 = vshrl.u32 %v3877, 7
        %v3879 = vsub.s32 1, %v3878
        %v3880 = vrot.slane %v3871, %v3879
        %v3881 = vlaneseq
        %v3882 = vshrl.u32 %v3881, 7
        %v3883 = vsub.s32 2, %v3882
        %v3884 = vrot.slane %v3871, %v3883
        %v3885 = vlaneseq
        %v3886 = vshrl.u32 %v3885, 7
        %v3887 = vsub.s32 3, %v3886
        %v3888 = vrot.slane %v3871, %v3887
        %v3889 = vlaneseq
        %v3890 = vshrl.u32 %v3889, 7
        %v3891 = vsub.s32 4, %v3890
        %v3892 = vrot.slane %v3871, %v3891
        %v3893 = vlaneseq
        %v3894 = vshrl.u32 %v3893, 7
        %v3895 = vsub.s32 5, %v3894
        %v3896 = vrot.slane %v3871, %v3895
        %v3897 = vlaneseq
        %v3898 = vshrl.u32 %v3897, 7
        %v3899 = vsub.s32 6, %v3898
        %v3900 = vrot.slane %v3871, %v3899
        %v3901 = vlaneseq
        %v3902 = vshrl.u32 %v3901, 7
        %v3903 = vsub.s32 7, %v3902
        %v3904 = vrot.slane %v3871, %v3903
        %v4105 = vunpack.c.l.b16 %v3679
        %v4106 = vunpack.c.h.b16 %v3679
        %v4107 = vunpack.c.l.b16 %v3680
        %v4108 = vunpack.c.h.b16 %v3680
        %v4109 = vunpack.c.l.b16 %v3681
        %v4110 = vunpack.c.h.b16 %v3681
        %v4111 = vunpack.c.l.b16 %v3682
        %v4112 = vunpack.c.h.b16 %v3682
        %v4113 = vunpack.c.l.b16 %v3683
        %v4114 = vunpack.c.h.b16 %v3683
        %v4115 = vunpack.c.l.b16 %v3684
        %v4116 = vunpack.c.h.b16 %v3684
        %v4117 = vunpack.c.l.b16 %v3685
        %v4118 = vunpack.c.h.b16 %v3685
        %v4119 = vunpack.c.l.b16 %v3686
        %v4120 = vunpack.c.h.b16 %v3686
        %v4121 = vunpack.c.l.b16 %v3687
        %v4122 = vunpack.c.h.b16 %v3687
        %v4123 = vunpack.c.l.b16 %v3688
        %v4124 = vunpack.c.h.b16 %v3688
        %v4125 = vunpack.c.l.b16 %v3689
        %v4126 = vunpack.c.h.b16 %v3689
        %v4127 = vunpack.c.l.b16 %v3690
        %v4128 = vunpack.c.h.b16 %v3690
        %v4129 = vunpack.c.l.b16 %v3691
        %v4130 = vunpack.c.h.b16 %v3691
        %v4131 = vunpack.c.l.b16 %v3692
        %v4132 = vunpack.c.h.b16 %v3692
        %v4133 = vunpack.c.l.b16 %v3693
        %v4134 = vunpack.c.h.b16 %v3693
        %v4135 = vunpack.c.l.b16 %v3694
        %v4136 = vunpack.c.h.b16 %v3694
        %v4137 = vunpack.c.l.b16 %v3695
        %v4138 = vunpack.c.h.b16 %v3695
        %v4139 = vunpack.c.l.b16 %v3696
        %v4140 = vunpack.c.h.b16 %v3696
        %v4141 = vunpack.c.l.b16 %v3697
        %v4142 = vunpack.c.h.b16 %v3697
        %v4143 = vunpack.c.l.b16 %v3698
        %v4144 = vunpack.c.h.b16 %v3698
        %v4145 = vunpack.c.l.b16 %v3699
        %v4146 = vunpack.c.h.b16 %v3699
        %v4147 = vunpack.c.l.b16 %v3700
        %v4148 = vunpack.c.h.b16 %v3700
        %v4149 = vunpack.c.l.b16 %v3701
        %v4150 = vunpack.c.h.b16 %v3701
        %v4151 = vunpack.c.l.b16 %v3702
        %v4152 = vunpack.c.h.b16 %v3702
        %v4153 = vunpack.c.l.b16 %v3703
        %v4154 = vunpack.c.h.b16 %v3703
        %v4155 = vunpack.c.l.b16 %v3704
        %v4156 = vunpack.c.h.b16 %v3704
        %v4157 = vunpack.c.l.b16 %v3705
        %v4158 = vunpack.c.h.b16 %v3705
        %v4159 = vunpack.c.l.b16 %v3706
        %v4160 = vunpack.c.h.b16 %v3706
        %v4161 = vunpack.c.l.b16 %v3707
        %v4162 = vunpack.c.h.b16 %v3707
        %v4163 = vunpack.c.l.b16 %v3708
        %v4164 = vunpack.c.h.b16 %v3708
        %v4165 = vunpack.c.l.b16 %v3709
        %v4166 = vunpack.c.h.b16 %v3709
        %v4167 = vunpack.c.l.b16 %v3710
        %v4168 = vunpack.c.h.b16 %v3710
        %v4169 = vunpack.c.l.b16 %v3711
        %v4170 = vunpack.c.h.b16 %v3711
        %v4171 = vunpack.c.l.b16 %v3712
        %v4172 = vunpack.c.h.b16 %v3712
        %v4173 = vunpack.c.l.b16 %v3713
        %v4174 = vunpack.c.h.b16 %v3713
        %v4175 = vunpack.c.l.b16 %v3714
        %v4176 = vunpack.c.h.b16 %v3714
        %v4177 = vunpack.c.l.b16 %v3715
        %v4178 = vunpack.c.h.b16 %v3715
        %v4179 = vunpack.c.l.b16 %v3716
        %v4180 = vunpack.c.h.b16 %v3716
        %v4181 = vunpack.c.l.b16 %v3717
        %v4182 = vunpack.c.h.b16 %v3717
        %v4183 = vunpack.c.l.b16 %v3718
        %v4184 = vunpack.c.h.b16 %v3718
        %v4185 = vunpack.c.l.b16 %v3719
        %v4186 = vunpack.c.h.b16 %v3719
        %v4187 = vunpack.c.l.b16 %v3720
        %v4188 = vunpack.c.h.b16 %v3720
        %v4189 = vunpack.c.l.b16 %v3721
        %v4190 = vunpack.c.h.b16 %v3721
        %v4191 = vunpack.c.l.b16 %v3722
        %v4192 = vunpack.c.h.b16 %v3722
        %v4193 = vunpack.c.l.b16 %v3723
        %v4194 = vunpack.c.h.b16 %v3723
        %v4195 = vunpack.c.l.b16 %v3724
        %v4196 = vunpack.c.h.b16 %v3724
        %v4197 = vunpack.c.l.b16 %v3725
        %v4198 = vunpack.c.h.b16 %v3725
        %v4199 = vunpack.c.l.b16 %v3726
        %v4200 = vunpack.c.h.b16 %v3726
        %v4201 = vunpack.c.l.b16 %v3727
        %v4202 = vunpack.c.h.b16 %v3727
        %v4203 = vunpack.c.l.b16 %v3728
        %v4204 = vunpack.c.h.b16 %v3728
        %v4205 = vunpack.c.l.b16 %v3729
        %v4206 = vunpack.c.h.b16 %v3729
        %v4207 = vunpack.c.l.b16 %v3730
        %v4208 = vunpack.c.h.b16 %v3730
        %v4209 = vunpack.c.l.b16 %v3731
        %v4210 = vunpack.c.h.b16 %v3731
        %v4211 = vunpack.c.l.b16 %v3732
        %v4212 = vunpack.c.h.b16 %v3732
        %v4213 = vunpack.c.l.b16 %v3733
        %v4214 = vunpack.c.h.b16 %v3733
        %v4215 = vunpack.c.l.b16 %v3734
        %v4216 = vunpack.c.h.b16 %v3734
        %v4217 = vunpack.c.l.b16 %v3735
        %v4218 = vunpack.c.h.b16 %v3735
        %v4219 = vunpack.c.l.b16 %v3736
        %v4220 = vunpack.c.h.b16 %v3736
        %v4221 = vunpack.c.l.b16 %v3737
        %v4222 = vunpack.c.h.b16 %v3737
        %v4223 = vunpack.c.l.b16 %v3738
        %v4224 = vunpack.c.h.b16 %v3738
        %v4225 = vunpack.c.l.b16 %v3739
        %v4226 = vunpack.c.h.b16 %v3739
        %v4227 = vunpack.c.l.b16 %v3740
        %v4228 = vunpack.c.h.b16 %v3740
        %v4229 = vunpack.c.l.b16 %v3741
        %v4230 = vunpack.c.h.b16 %v3741
        %v4231 = vunpack.c.l.b16 %v3742
        %v4232 = vunpack.c.h.b16 %v3742
        %v4233 = vunpack.c.l.b16 %v3743
        %v4234 = vunpack.c.h.b16 %v3743
        %v4235 = vunpack.c.l.b16 %v3744
        %v4236 = vunpack.c.h.b16 %v3744
        %v4237 = vunpack.c.l.b16 %v3745
        %v4238 = vunpack.c.h.b16 %v3745
        %v4239 = vunpack.c.l.b16 %v3746
        %v4240 = vunpack.c.h.b16 %v3746
        %v4241 = vunpack.c.l.b16 %v3747
        %v4242 = vunpack.c.h.b16 %v3747
        %v4243 = vunpack.c.l.b16 %v3748
        %v4244 = vunpack.c.h.b16 %v3748
        %v4245 = vunpack.c.l.b16 %v3749
        %v4246 = vunpack.c.h.b16 %v3749
        %v4247 = vunpack.c.l.b16 %v3750
        %v4248 = vunpack.c.h.b16 %v3750
        %v4249 = vunpack.c.l.b16 %v3751
        %v4250 = vunpack.c.h.b16 %v3751
        %v4251 = vunpack.c.l.b16 %v3752
        %v4252 = vunpack.c.h.b16 %v3752
        %v4253 = vunpack.c.l.b16 %v3753
        %v4254 = vunpack.c.h.b16 %v3753
        %v4255 = vunpack.c.l.b16 %v3754
        %v4256 = vunpack.c.h.b16 %v3754
        %v4257 = vunpack.c.l.b16 %v3755
        %v4258 = vunpack.c.h.b16 %v3755
        %v4259 = vunpack.c.l.b16 %v3756
        %v4260 = vunpack.c.h.b16 %v3756
        %v4261 = vunpack.c.l.b16 %v3757
        %v4262 = vunpack.c.h.b16 %v3757
        %v4263 = vunpack.c.l.b16 %v3758
        %v4264 = vunpack.c.h.b16 %v3758
        %v4265 = vunpack.c.l.b16 %v3759
        %v4266 = vunpack.c.h.b16 %v3759
        %v4267 = vunpack.c.l.b16 %v3760
        %v4268 = vunpack.c.h.b16 %v3760
        %v4269 = vunpack.c.l.b16 %v3761
        %v4270 = vunpack.c.h.b16 %v3761
        %v4271 = vunpack.c.l.b16 %v3762
        %v4272 = vunpack.c.h.b16 %v3762
        %v4273 = vunpack.c.l.b16 %v3763
        %v4274 = vunpack.c.h.b16 %v3763
        %v4275 = vunpack.c.l.b16 %v3764
        %v4276 = vunpack.c.h.b16 %v3764
        %v4277 = vunpack.c.l.b16 %v3765
        %v4278 = vunpack.c.h.b16 %v3765
        %v4279 = vunpack.c.l.b16 %v3766
        %v4280 = vunpack.c.h.b16 %v3766
        %v4281 = vunpack.c.l.b16 %v3767
        %v4282 = vunpack.c.h.b16 %v3767
        %v4283 = vunpack.c.l.b16 %v3768
        %v4284 = vunpack.c.h.b16 %v3768
        %v4285 = vunpack.c.l.b16 %v3769
        %v4286 = vunpack.c.h.b16 %v3769
        %v4287 = vunpack.c.l.b16 %v3770
        %v4288 = vunpack.c.h.b16 %v3770
        %v4289 = vunpack.c.l.b16 %v3771
        %v4290 = vunpack.c.h.b16 %v3771
        %v4291 = vunpack.c.l.b16 %v3772
        %v4292 = vunpack.c.h.b16 %v3772
        %v4293 = vunpack.c.l.b16 %v3773
        %v4294 = vunpack.c.h.b16 %v3773
        %v4295 = vunpack.c.l.b16 %v3774
        %v4296 = vunpack.c.h.b16 %v3774
        %v4297 = vunpack.c.l.b16 %v3775
        %v4298 = vunpack.c.h.b16 %v3775
        %v4299 = vunpack.c.l.b16 %v3776
        %v4300 = vunpack.c.h.b16 %v3776
        %v4301 = vunpack.c.l.b16 %v3777
        %v4302 = vunpack.c.h.b16 %v3777
        %v4303 = vunpack.c.l.b16 %v3778
        %v4304 = vunpack.c.h.b16 %v3778
        %v4305 = vunpack.c.l.b16 %v3779
        %v4306 = vunpack.c.h.b16 %v3779
        %v4307 = vunpack.c.l.b16 %v3780
        %v4308 = vunpack.c.h.b16 %v3780
        %v4309 = vunpack.c.l.b16 %v3781
        %v4310 = vunpack.c.h.b16 %v3781
        %v4311 = vunpack.c.l.b16 %v3782
        %v4312 = vunpack.c.h.b16 %v3782
        %v4313 = vunpack.c.l.b16 %v3783
        %v4314 = vunpack.c.h.b16 %v3783
        %v4315 = vunpack.c.l.b16 %v3784
        %v4316 = vunpack.c.h.b16 %v3784
        %v4317 = vunpack.c.l.b16 %v3785
        %v4318 = vunpack.c.h.b16 %v3785
        %v4319 = vunpack.c.l.b16 %v3786
        %v4320 = vunpack.c.h.b16 %v3786
        %v4321 = vunpack.c.l.b16 %v3787
        %v4322 = vunpack.c.h.b16 %v3787
        %v4323 = vunpack.c.l.b16 %v3788
        %v4324 = vunpack.c.h.b16 %v3788
        %v4325 = vunpack.c.l.b16 %v3789
        %v4326 = vunpack.c.h.b16 %v3789
        %v4327 = vunpack.c.l.b16 %v3790
        %v4328 = vunpack.c.h.b16 %v3790
        %v4329 = vunpack.c.l.b16 %v3791
        %v4330 = vunpack.c.h.b16 %v3791
        %v4331 = vunpack.c.l.b16 %v3792
        %v4332 = vunpack.c.h.b16 %v3792
        %v4333 = vunpack.c.l.b16 %v3793
        %v4334 = vunpack.c.h.b16 %v3793
        %v4335 = vunpack.c.l.b16 %v3794
        %v4336 = vunpack.c.h.b16 %v3794
        %v4337 = vunpack.c.l.b16 %v3795
        %v4338 = vunpack.c.h.b16 %v3795
        %v4339 = vunpack.c.l.b16 %v3796
        %v4340 = vunpack.c.h.b16 %v3796
        %v4341 = vunpack.c.l.b16 %v3797
        %v4342 = vunpack.c.h.b16 %v3797
        %v4343 = vunpack.c.l.b16 %v3798
        %v4344 = vunpack.c.h.b16 %v3798
        %v4345 = vunpack.c.l.b16 %v3799
        %v4346 = vunpack.c.h.b16 %v3799
        %v4347 = vunpack.c.l.b16 %v3800
        %v4348 = vunpack.c.h.b16 %v3800
        %v4349 = vunpack.c.l.b16 %v3801
        %v4350 = vunpack.c.h.b16 %v3801
        %v4351 = vunpack.c.l.b16 %v3802
        %v4352 = vunpack.c.h.b16 %v3802
        %v4353 = vunpack.c.l.b16 %v3803
        %v4354 = vunpack.c.h.b16 %v3803
        %v4355 = vunpack.c.l.b16 %v3804
        %v4356 = vunpack.c.h.b16 %v3804
        %v4357 = vunpack.c.l.b16 %v3805
        %v4358 = vunpack.c.h.b16 %v3805
        %v4359 = vunpack.c.l.b16 %v3806
        %v4360 = vunpack.c.h.b16 %v3806
        %v4361 = vunpack.c.l.b16 %v3807
        %v4362 = vunpack.c.h.b16 %v3807
        %v4363 = vunpack.c.l.b16 %v3808
        %v4364 = vunpack.c.h.b16 %v3808
        %v4365 = vunpack.c.l.b16 %v3809
        %v4366 = vunpack.c.h.b16 %v3809
        %v4367 = vunpack.c.l.b16 %v3810
        %v4368 = vunpack.c.h.b16 %v3810
        %v4369 = vunpack.c.l.b16 %v3811
        %v4370 = vunpack.c.h.b16 %v3811
        %v4371 = vunpack.c.l.b16 %v3812
        %v4372 = vunpack.c.h.b16 %v3812
        %v4373 = vunpack.c.l.b16 %v3813
        %v4374 = vunpack.c.h.b16 %v3813
        %v4375 = vunpack.c.l.b16 %v3814
        %v4376 = vunpack.c.h.b16 %v3814
        %v4377 = vunpack.c.l.b16 %v3815
        %v4378 = vunpack.c.h.b16 %v3815
        %v4379 = vunpack.c.l.b16 %v3816
        %v4380 = vunpack.c.h.b16 %v3816
        %v4381 = vunpack.c.l.b16 %v3817
        %v4382 = vunpack.c.h.b16 %v3817
        %v4383 = vunpack.c.l.b16 %v3818
        %v4384 = vunpack.c.h.b16 %v3818
        %v4385 = vunpack.c.l.b16 %v3819
        %v4386 = vunpack.c.h.b16 %v3819
        %v4387 = vunpack.c.l.b16 %v3820
        %v4388 = vunpack.c.h.b16 %v3820
        %v4389 = vunpack.c.l.b16 %v3821
        %v4390 = vunpack.c.h.b16 %v3821
        %v4391 = vunpack.c.l.b16 %v3822
        %v4392 = vunpack.c.h.b16 %v3822
        %v4393 = vunpack.c.l.b16 %v3823
        %v4394 = vunpack.c.h.b16 %v3823
        %v4395 = vunpack.c.l.b16 %v3824
        %v4396 = vunpack.c.h.b16 %v3824
        %v4397 = vunpack.c.l.b16 %v3825
        %v4398 = vunpack.c.h.b16 %v3825
        %v4399 = vunpack.c.l.b16 %v3826
        %v4400 = vunpack.c.h.b16 %v3826
        %v4401 = vunpack.c.l.b16 %v3827
        %v4402 = vunpack.c.h.b16 %v3827
        %v4403 = vunpack.c.l.b16 %v3828
        %v4404 = vunpack.c.h.b16 %v3828
        %v4405 = vunpack.c.l.b16 %v3829
        %v4406 = vunpack.c.h.b16 %v3829
        %v4407 = vunpack.c.l.b16 %v3830
        %v4408 = vunpack.c.h.b16 %v3830
        %v4409 = vunpack.c.l.b16 %v3831
        %v4410 = vunpack.c.h.b16 %v3831
        %v4411 = vunpack.c.l.b16 %v3832
        %v4412 = vunpack.c.h.b16 %v3832
        %v4413 = vunpack.c.l.b16 %v3833
        %v4414 = vunpack.c.h.b16 %v3833
        %v4415 = vunpack.c.l.b16 %v3834
        %v4416 = vunpack.c.h.b16 %v3834
        %v4417 = vunpack.c.l.b16 %v3835
        %v4418 = vunpack.c.h.b16 %v3835
        %v4419 = vunpack.c.l.b16 %v3836
        %v4420 = vunpack.c.h.b16 %v3836
        %v4421 = vunpack.c.l.b16 %v3837
        %v4422 = vunpack.c.h.b16 %v3837
        %v4423 = vunpack.c.l.b16 %v3838
        %v4424 = vunpack.c.h.b16 %v3838
        %v4425 = vunpack.c.l.b16 %v3839
        %v4426 = vunpack.c.h.b16 %v3839
        %v4427 = vunpack.c.l.b16 %v3840
        %v4428 = vunpack.c.h.b16 %v3840
        %v4429 = vunpack.c.l.b16 %v3841
        %v4430 = vunpack.c.h.b16 %v3841
        %v4431 = vunpack.c.l.b16 %v3842
        %v4432 = vunpack.c.h.b16 %v3842
        %v4433 = vunpack.c.l.b16 %v3843
        %v4434 = vunpack.c.h.b16 %v3843
        %v4435 = vunpack.c.l.b16 %v3844
        %v4436 = vunpack.c.h.b16 %v3844
        %v4437 = vunpack.c.l.b16 %v3845
        %v4438 = vunpack.c.h.b16 %v3845
        %v4439 = vunpack.c.l.b16 %v3846
        %v4440 = vunpack.c.h.b16 %v3846
        %v4441 = vunpack.c.l.b16 %v3847
        %v4442 = vunpack.c.h.b16 %v3847
        %v4443 = vunpack.c.l.b16 %v3848
        %v4444 = vunpack.c.h.b16 %v3848
        %v4445 = vunpack.c.l.b16 %v3849
        %v4446 = vunpack.c.h.b16 %v3849
        %v4447 = vunpack.c.l.b16 %v3850
        %v4448 = vunpack.c.h.b16 %v3850
        %v4449 = vunpack.c.l.b16 %v3851
        %v4450 = vunpack.c.h.b16 %v3851
        %v4451 = vunpack.c.l.b16 %v3852
        %v4452 = vunpack.c.h.b16 %v3852
        %v4453 = vunpack.c.l.b16 %v3853
        %v4454 = vunpack.c.h.b16 %v3853
        %v4455 = vunpack.c.l.b16 %v3854
        %v4456 = vunpack.c.h.b16 %v3854
        %v4457 = vunpack.c.l.b16 %v3855
        %v4458 = vunpack.c.h.b16 %v3855
        %v4459 = vunpack.c.l.b16 %v3856
        %v4460 = vunpack.c.h.b16 %v3856
        %v4461 = vunpack.c.l.b16 %v3857
        %v4462 = vunpack.c.h.b16 %v3857
        %v4463 = vunpack.c.l.b16 %v3858
        %v4464 = vunpack.c.h.b16 %v3858
        %v4465 = vunpack.c.l.b16 %v3859
        %v4466 = vunpack.c.h.b16 %v3859
        %v4467 = vunpack.c.l.b16 %v3860
        %v4468 = vunpack.c.h.b16 %v3860
        %v4469 = vunpack.c.l.b16 %v3861
        %v4470 = vunpack.c.h.b16 %v3861
        %v4471 = vunpack.c.l.b16 %v3862
        %v4472 = vunpack.c.h.b16 %v3862
        %v4473 = vunpack.c.l.b16 %v3863
        %v4474 = vunpack.c.h.b16 %v3863
        %v4475 = vunpack.c.l.b16 %v3864
        %v4476 = vunpack.c.h.b16 %v3864
        %v4477 = vunpack.c.l.b16 %v3865
        %v4478 = vunpack.c.h.b16 %v3865
        %v4479 = vunpack.c.l.b16 %v3866
        %v4480 = vunpack.c.h.b16 %v3866
        %v4481 = vunpack.c.l.b16 %v3867
        %v4482 = vunpack.c.h.b16 %v3867
        %v4483 = vunpack.c.l.b16 %v3868
        %v4484 = vunpack.c.h.b16 %v3868
        %v4485 = vunpack.c.l.b16 %v3869
        %v4486 = vunpack.c.h.b16 %v3869
        %v4487 = vunpack.c.l.b16 %v3870
        %v4488 = vunpack.c.h.b16 %v3870
        %v4489 = vpack.c.b16 %v4113, %v4105
        %v4490 = vpack.c.b16 %v4114, %v4106
        %v4491 = vpack.c.b16 %v4115, %v4107
        %v4492 = vpack.c.b16 %v4116, %v4108
        %v4493 = vpack.c.b16 %v4117, %v4109
        %v4494 = vpack.c.b16 %v4118, %v4110
        %v4495 = vpack.c.b16 %v4119, %v4111
        %v4496 = vpack.c.b16 %v4120, %v4112
        %v4497 = vpack.c.b16 %v4129, %v4121
        %v4498 = vpack.c.b16 %v4130, %v4122
        %v4499 = vpack.c.b16 %v4131, %v4123
        %v4500 = vpack.c.b16 %v4132, %v4124
        %v4501 = vpack.c.b16 %v4133, %v4125
        %v4502 = vpack.c.b16 %v4134, %v4126
        %v4503 = vpack.c.b16 %v4135, %v4127
        %v4504 = vpack.c.b16 %v4136, %v4128
        %v4505 = vpack.c.b16 %v4145, %v4137
        %v4506 = vpack.c.b16 %v4146, %v4138
        %v4507 = vpack.c.b16 %v4147, %v4139
        %v4508 = vpack.c.b16 %v4148, %v4140
        %v4509 = vpack.c.b16 %v4149, %v4141
        %v4510 = vpack.c.b16 %v4150, %v4142
        %v4511 = vpack.c.b16 %v4151, %v4143
        %v4512 = vpack.c.b16 %v4152, %v4144
        %v4513 = vpack.c.b16 %v4161, %v4153
        %v4514 = vpack.c.b16 %v4162, %v4154
        %v4515 = vpack.c.b16 %v4163, %v4155
        %v4516 = vpack.c.b16 %v4164, %v4156
        %v4517 = vpack.c.b16 %v4165, %v4157
        %v4518 = vpack.c.b16 %v4166, %v4158
        %v4519 = vpack.c.b16 %v4167, %v4159
        %v4520 = vpack.c.b16 %v4168, %v4160
        %v4521 = vpack.c.b16 %v4177, %v4169
        %v4522 = vpack.c.b16 %v4178, %v4170
        %v4523 = vpack.c.b16 %v4179, %v4171
        %v4524 = vpack.c.b16 %v4180, %v4172
        %v4525 = vpack.c.b16 %v4181, %v4173
        %v4526 = vpack.c.b16 %v4182, %v4174
        %v4527 = vpack.c.b16 %v4183, %v4175
        %v4528 = vpack.c.b16 %v4184, %v4176
        %v4529 = vpack.c.b16 %v4193, %v4185
        %v4530 = vpack.c.b16 %v4194, %v4186
        %v4531 = vpack.c.b16 %v4195, %v4187
        %v4532 = vpack.c.b16 %v4196, %v4188
        %v4533 = vpack.c.b16 %v4197, %v4189
        %v4534 = vpack.c.b16 %v4198, %v4190
        %v4535 = vpack.c.b16 %v4199, %v4191
        %v4536 = vpack.c.b16 %v4200, %v4192
        %v4537 = vpack.c.b16 %v4209, %v4201
        %v4538 = vpack.c.b16 %v4210, %v4202
        %v4539 = vpack.c.b16 %v4211, %v4203
        %v4540 = vpack.c.b16 %v4212, %v4204
        %v4541 = vpack.c.b16 %v4213, %v4205
        %v4542 = vpack.c.b16 %v4214, %v4206
        %v4543 = vpack.c.b16 %v4215, %v4207
        %v4544 = vpack.c.b16 %v4216, %v4208
        %v4545 = vpack.c.b16 %v4225, %v4217
        %v4546 = vpack.c.b16 %v4226, %v4218
        %v4547 = vpack.c.b16 %v4227, %v4219
        %v4548 = vpack.c.b16 %v4228, %v4220
        %v4549 = vpack.c.b16 %v4229, %v4221
        %v4550 = vpack.c.b16 %v4230, %v4222
        %v4551 = vpack.c.b16 %v4231, %v4223
        %v4552 = vpack.c.b16 %v4232, %v4224
        %v4553 = vpack.c.b16 %v4241, %v4233
        %v4554 = vpack.c.b16 %v4242, %v4234
        %v4555 = vpack.c.b16 %v4243, %v4235
        %v4556 = vpack.c.b16 %v4244, %v4236
        %v4557 = vpack.c.b16 %v4245, %v4237
        %v4558 = vpack.c.b16 %v4246, %v4238
        %v4559 = vpack.c.b16 %v4247, %v4239
        %v4560 = vpack.c.b16 %v4248, %v4240
        %v4561 = vpack.c.b16 %v4257, %v4249
        %v4562 = vpack.c.b16 %v4258, %v4250
        %v4563 = vpack.c.b16 %v4259, %v4251
        %v4564 = vpack.c.b16 %v4260, %v4252
        %v4565 = vpack.c.b16 %v4261, %v4253
        %v4566 = vpack.c.b16 %v4262, %v4254
        %v4567 = vpack.c.b16 %v4263, %v4255
        %v4568 = vpack.c.b16 %v4264, %v4256
        %v4569 = vpack.c.b16 %v4273, %v4265
        %v4570 = vpack.c.b16 %v4274, %v4266
        %v4571 = vpack.c.b16 %v4275, %v4267
        %v4572 = vpack.c.b16 %v4276, %v4268
        %v4573 = vpack.c.b16 %v4277, %v4269
        %v4574 = vpack.c.b16 %v4278, %v4270
        %v4575 = vpack.c.b16 %v4279, %v4271
        %v4576 = vpack.c.b16 %v4280, %v4272
        %v4577 = vpack.c.b16 %v4289, %v4281
        %v4578 = vpack.c.b16 %v4290, %v4282
        %v4579 = vpack.c.b16 %v4291, %v4283
        %v4580 = vpack.c.b16 %v4292, %v4284
        %v4581 = vpack.c.b16 %v4293, %v4285
        %v4582 = vpack.c.b16 %v4294, %v4286
        %v4583 = vpack.c.b16 %v4295, %v4287
        %v4584 = vpack.c.b16 %v4296, %v4288
        %v4585 = vpack.c.b16 %v4305, %v4297
        %v4586 = vpack.c.b16 %v4306, %v4298
        %v4587 = vpack.c.b16 %v4307, %v4299
        %v4588 = vpack.c.b16 %v4308, %v4300
        %v4589 = vpack.c.b16 %v4309, %v4301
        %v4590 = vpack.c.b16 %v4310, %v4302
        %v4591 = vpack.c.b16 %v4311, %v4303
        %v4592 = vpack.c.b16 %v4312, %v4304
        %v4593 = vpack.c.b16 %v4321, %v4313
        %v4594 = vpack.c.b16 %v4322, %v4314
        %v4595 = vpack.c.b16 %v4323, %v4315
        %v4596 = vpack.c.b16 %v4324, %v4316
        %v4597 = vpack.c.b16 %v4325, %v4317
        %v4598 = vpack.c.b16 %v4326, %v4318
        %v4599 = vpack.c.b16 %v4327, %v4319
        %v4600 = vpack.c.b16 %v4328, %v4320
        %v4601 = vpack.c.b16 %v4337, %v4329
        %v4602 = vpack.c.b16 %v4338, %v4330
        %v4603 = vpack.c.b16 %v4339, %v4331
        %v4604 = vpack.c.b16 %v4340, %v4332
        %v4605 = vpack.c.b16 %v4341, %v4333
        %v4606 = vpack.c.b16 %v4342, %v4334
        %v4607 = vpack.c.b16 %v4343, %v4335
        %v4608 = vpack.c.b16 %v4344, %v4336
        %v4609 = vpack.c.b16 %v4353, %v4345
        %v4610 = vpack.c.b16 %v4354, %v4346
        %v4611 = vpack.c.b16 %v4355, %v4347
        %v4612 = vpack.c.b16 %v4356, %v4348
        %v4613 = vpack.c.b16 %v4357, %v4349
        %v4614 = vpack.c.b16 %v4358, %v4350
        %v4615 = vpack.c.b16 %v4359, %v4351
        %v4616 = vpack.c.b16 %v4360, %v4352
        %v4617 = vpack.c.b16 %v4369, %v4361
        %v4618 = vpack.c.b16 %v4370, %v4362
        %v4619 = vpack.c.b16 %v4371, %v4363
        %v4620 = vpack.c.b16 %v4372, %v4364
        %v4621 = vpack.c.b16 %v4373, %v4365
        %v4622 = vpack.c.b16 %v4374, %v4366
        %v4623 = vpack.c.b16 %v4375, %v4367
        %v4624 = vpack.c.b16 %v4376, %v4368
        %v4625 = vpack.c.b16 %v4385, %v4377
        %v4626 = vpack.c.b16 %v4386, %v4378
        %v4627 = vpack.c.b16 %v4387, %v4379
        %v4628 = vpack.c.b16 %v4388, %v4380
        %v4629 = vpack.c.b16 %v4389, %v4381
        %v4630 = vpack.c.b16 %v4390, %v4382
        %v4631 = vpack.c.b16 %v4391, %v4383
        %v4632 = vpack.c.b16 %v4392, %v4384
        %v4633 = vpack.c.b16 %v4401, %v4393
        %v4634 = vpack.c.b16 %v4402, %v4394
        %v4635 = vpack.c.b16 %v4403, %v4395
        %v4636 = vpack.c.b16 %v4404, %v4396
        %v4637 = vpack.c.b16 %v4405, %v4397
        %v4638 = vpack.c.b16 %v4406, %v4398
        %v4639 = vpack.c.b16 %v4407, %v4399
        %v4640 = vpack.c.b16 %v4408, %v4400
        %v4641 = vpack.c.b16 %v4417, %v4409
        %v4642 = vpack.c.b16 %v4418, %v4410
        %v4643 = vpack.c.b16 %v4419, %v4411
        %v4644 = vpack.c.b16 %v4420, %v4412
        %v4645 = vpack.c.b16 %v4421, %v4413
        %v4646 = vpack.c.b16 %v4422, %v4414
        %v4647 = vpack.c.b16 %v4423, %v4415
        %v4648 = vpack.c.b16 %v4424, %v4416
        %v4649 = vpack.c.b16 %v4433, %v4425
        %v4650 = vpack.c.b16 %v4434, %v4426
        %v4651 = vpack.c.b16 %v4435, %v4427
        %v4652 = vpack.c.b16 %v4436, %v4428
        %v4653 = vpack.c.b16 %v4437, %v4429
        %v4654 = vpack.c.b16 %v4438, %v4430
        %v4655 = vpack.c.b16 %v4439, %v4431
        %v4656 = vpack.c.b16 %v4440, %v4432
        %v4657 = vpack.c.b16 %v4449, %v4441
        %v4658 = vpack.c.b16 %v4450, %v4442
        %v4659 = vpack.c.b16 %v4451, %v4443
        %v4660 = vpack.c.b16 %v4452, %v4444
        %v4661 = vpack.c.b16 %v4453, %v4445
        %v4662 = vpack.c.b16 %v4454, %v4446
        %v4663 = vpack.c.b16 %v4455, %v4447
        %v4664 = vpack.c.b16 %v4456, %v4448
        %v4665 = vpack.c.b16 %v4465, %v4457
        %v4666 = vpack.c.b16 %v4466, %v4458
        %v4667 = vpack.c.b16 %v4467, %v4459
        %v4668 = vpack.c.b16 %v4468, %v4460
        %v4669 = vpack.c.b16 %v4469, %v4461
        %v4670 = vpack.c.b16 %v4470, %v4462
        %v4671 = vpack.c.b16 %v4471, %v4463
        %v4672 = vpack.c.b16 %v4472, %v4464
        %v4673 = vpack.c.b16 %v4481, %v4473
        %v4674 = vpack.c.b16 %v4482, %v4474
        %v4675 = vpack.c.b16 %v4483, %v4475
        %v4676 = vpack.c.b16 %v4484, %v4476
        %v4677 = vpack.c.b16 %v4485, %v4477
        %v4678 = vpack.c.b16 %v4486, %v4478
        %v4679 = vpack.c.b16 %v4487, %v4479
        %v4680 = vpack.c.b16 %v4488, %v4480
        %4873 = vmatprep.subr.bf16.mxu0 %v4490
        %4874 = vmatpush1.bf16.msra.mxu0 %v4489
        %4875 = vmatprep.subr.bf16.mxu0 %v4498
        %4876 = vmatpush1.bf16.msra.mxu0 %v4497
        %4877 = vmatprep.subr.bf16.mxu0 %v4506
        %4878 = vmatpush1.bf16.msra.mxu0 %v4505
        %4879 = vmatprep.subr.bf16.mxu0 %v4514
        %4880 = vmatpush1.bf16.msra.mxu0 %v4513
        %4881 = vmatprep.subr.bf16.mxu0 %v4522
        %4882 = vmatpush1.bf16.msra.mxu0 %v4521
        %4883 = vmatprep.subr.bf16.mxu0 %v4530
        %4884 = vmatpush1.bf16.msra.mxu0 %v4529
        %4885 = vmatprep.subr.bf16.mxu0 %v4538
        %4886 = vmatpush1.bf16.msra.mxu0 %v4537
        %4887 = vmatprep.subr.bf16.mxu0 %v4546
        %4888 = vmatpush1.bf16.msra.mxu0 %v4545
        %4889 = vmatprep.subr.bf16.mxu0 %v4554
        %4890 = vmatpush1.bf16.msra.mxu0 %v4553
        %4891 = vmatprep.subr.bf16.mxu0 %v4562
        %4892 = vmatpush1.bf16.msra.mxu0 %v4561
        %4893 = vmatprep.subr.bf16.mxu0 %v4570
        %4894 = vmatpush1.bf16.msra.mxu0 %v4569
        %4895 = vmatprep.subr.bf16.mxu0 %v4578
        %4896 = vmatpush1.bf16.msra.mxu0 %v4577
        %4897 = vmatprep.subr.bf16.mxu0 %v4586
        %4898 = vmatpush1.bf16.msra.mxu0 %v4585
        %4899 = vmatprep.subr.bf16.mxu0 %v4594
        %4900 = vmatpush1.bf16.msra.mxu0 %v4593
        %4901 = vmatprep.subr.bf16.mxu0 %v4602
        %4902 = vmatpush1.bf16.msra.mxu0 %v4601
        %4903 = vmatprep.subr.bf16.mxu0 %v4610
        %4904 = vmatpush1.bf16.msra.mxu0 %v4609
        %4905 = vmatprep.mubr.bf16.mxu0 %v3668
        %4906 = vmatmul.mubr.bf16.gmra.mrb[0].mxu0 %v3667
        %v4907 = vpop.f32.mrb[0].mxu0
        %v4908 = vadd.f32 %v3876, %v4907
        %v4909 = vpop.f32.mrb[0].mxu0
        %v4910 = vadd.f32 %v3880, %v4909
        %v4911 = vpop.f32.mrb[0].mxu0
        %v4912 = vadd.f32 %v3876, %v4911
        %v4913 = vpop.f32.mrb[0].mxu0
        %v4914 = vadd.f32 %v3880, %v4913
        %4915 = vmatprep.mubr.bf16.mxu0 %v3671
        %4916 = vmatmul.mubr.bf16.gmra.mrb[0].mxu0 %v3670
        %v4917 = vpop.f32.mrb[0].mxu0
        %v4918 = vadd.f32 %v3876, %v4917
        %v4919 = vpop.f32.mrb[0].mxu0
        %v4920 = vadd.f32 %v3880, %v4919
        %v4921 = vpop.f32.mrb[0].mxu0
        %v4922 = vadd.f32 %v3876, %v4921
        %v4923 = vpop.f32.mrb[0].mxu0
        %v4924 = vadd.f32 %v3880, %v4923
        %4925 = vmatprep.mubr.bf16.mxu0 %v3674
        %4926 = vmatmul.mubr.bf16.gmra.mrb[0].mxu0 %v3673
        %v4927 = vpop.f32.mrb[0].mxu0
        %v4928 = vadd.f32 %v3876, %v4927
        %v4929 = vpop.f32.mrb[0].mxu0
        %v4930 = vadd.f32 %v3880, %v4929
        %v4931 = vpop.f32.mrb[0].mxu0
        %v4932 = vadd.f32 %v3876, %v4931
        %v4933 = vpop.f32.mrb[0].mxu0
        %v4934 = vadd.f32 %v3880, %v4933
        %4935 = vmatprep.mubr.bf16.mxu0 %v3677
        %4936 = vmatmul.mubr.bf16.gmra.mrb[0].mxu0 %v3676
        %v4937 = vpop.f32.mrb[0].mxu0
        %v4938 = vadd.f32 %v3876, %v4937
        %v4939 = vpop.f32.mrb[0].mxu0
        %v4940 = vadd.f32 %v3880, %v4939
        %v4941 = vpop.f32.mrb[0].mxu0
        %v4942 = vadd.f32 %v3876, %v4941
        %v4943 = vpop.f32.mrb[0].mxu0
        %v4944 = vadd.f32 %v3880, %v4943
        %4945 = vdwg.mxu0
        %4946 = vmatprep.subr.bf16.mxu0 %v4618
        %4947 = vmatpush1.bf16.msra.mxu0 %v4617
        %4948 = vmatprep.subr.bf16.mxu0 %v4626
        %4949 = vmatpush1.bf16.msra.mxu0 %v4625
        %4950 = vmatprep.subr.bf16.mxu0 %v4634
        %4951 = vmatpush1.bf16.msra.mxu0 %v4633
        %4952 = vmatprep.subr.bf16.mxu0 %v4642
        %4953 = vmatpush1.bf16.msra.mxu0 %v4641
        %4954 = vmatprep.subr.bf16.mxu0 %v4650
        %4955 = vmatpush1.bf16.msra.mxu0 %v4649
        %4956 = vmatprep.subr.bf16.mxu0 %v4658
        %4957 = vmatpush1.bf16.msra.mxu0 %v4657
        %4958 = vmatprep.subr.bf16.mxu0 %v4666
        %4959 = vmatpush1.bf16.msra.mxu0 %v4665
        %4960 = vmatprep.subr.bf16.mxu0 %v4674
        %4961 = vmatpush1.bf16.msra.mxu0 %v4673
        %4962 = vmatprep.subr.bf16.mxu0 0
        %4963 = vmatpush1.bf16.msra.mxu0 0
        %4964 = vmatprep.subr.bf16.mxu0 0
        %4965 = vmatpush1.bf16.msra.mxu0 0
        %4966 = vmatprep.subr.bf16.mxu0 0
        %4967 = vmatpush1.bf16.msra.mxu0 0
        %4968 = vmatprep.subr.bf16.mxu0 0
        %4969 = vmatpush1.bf16.msra.mxu0 0
        %4970 = vmatprep.subr.bf16.mxu0 0
        %4971 = vmatpush1.bf16.msra.mxu0 0
        %4972 = vmatprep.subr.bf16.mxu0 0
        %4973 = vmatpush1.bf16.msra.mxu0 0
        %4974 = vmatprep.subr.bf16.mxu0 0
        %4975 = vmatpush1.bf16.msra.mxu0 0
        %4976 = vmatprep.subr.bf16.mxu0 0
        %4977 = vmatpush1.bf16.msra.mxu0 0
        %4978 = vmatprep.mubr.bf16.mxu0 0
        %4979 = vmatmul.mubr.bf16.gmra.mrb[0].mxu0 %v3669
        %v4980 = vpop.f32.mrb[0].mxu0
        %v4981 = vadd.f32 %v4908, %v4980
        %v4982 = vpop.f32.mrb[0].mxu0
        %v4983 = vadd.f32 %v4910, %v4982
        %v4984 = vpop.f32.mrb[0].mxu0
        %v4985 = vadd.f32 %v4912, %v4984
        %v4986 = vpop.f32.mrb[0].mxu0
        %v4987 = vadd.f32 %v4914, %v4986
        %4988 = vmatprep.mubr.bf16.mxu0 0
        %4989 = vmatmul.mubr.bf16.gmra.mrb[0].mxu0 %v3672
        %v4990 = vpop.f32.mrb[0].mxu0
        %v4991 = vadd.f32 %v4918, %v4990
        %v4992 = vpop.f32.mrb[0].mxu0
        %v4993 = vadd.f32 %v4920, %v4992
        %v4994 = vpop.f32.mrb[0].mxu0
        %v4995 = vadd.f32 %v4922, %v4994
        %v4996 = vpop.f32.mrb[0].mxu0
        %v4997 = vadd.f32 %v4924, %v4996
        %4998 = vmatprep.mubr.bf16.mxu0 0
        %4999 = vmatmul.mubr.bf16.gmra.mrb[0].mxu0 %v3675
        %v5000 = vpop.f32.mrb[0].mxu0
        %v5001 = vadd.f32 %v4928, %v5000
        %v5002 = vpop.f32.mrb[0].mxu0
        %v5003 = vadd.f32 %v4930, %v5002
        %v5004 = vpop.f32.mrb[0].mxu0
        %v5005 = vadd.f32 %v4932, %v5004
        %v5006 = vpop.f32.mrb[0].mxu0
        %v5007 = vadd.f32 %v4934, %v5006
        %5008 = vmatprep.mubr.bf16.mxu0 0
        %5009 = vmatmul.mubr.bf16.gmra.mrb[0].mxu0 %v3678
        %v5010 = vpop.f32.mrb[0].mxu0
        %v5011 = vadd.f32 %v4938, %v5010
        %v5012 = vpop.f32.mrb[0].mxu0
        %v5013 = vadd.f32 %v4940, %v5012
        %v5014 = vpop.f32.mrb[0].mxu0
        %v5015 = vadd.f32 %v4942, %v5014
        %v5016 = vpop.f32.mrb[0].mxu0
        %v5017 = vadd.f32 %v4944, %v5016
        %5018 = vdwg.mxu0
        %5019 = vmatprep.subr.bf16.mxu0 %v4492
        %5020 = vmatpush1.bf16.msra.mxu0 %v4491
        %5021 = vmatprep.subr.bf16.mxu0 %v4500
        %5022 = vmatpush1.bf16.msra.mxu0 %v4499
        %5023 = vmatprep.subr.bf16.mxu0 %v4508
        %5024 = vmatpush1.bf16.msra.mxu0 %v4507
        %5025 = vmatprep.subr.bf16.mxu0 %v4516
        %5026 = vmatpush1.bf16.msra.mxu0 %v4515
        %5027 = vmatprep.subr.bf16.mxu0 %v4524
        %5028 = vmatpush1.bf16.msra.mxu0 %v4523
        %5029 = vmatprep.subr.bf16.mxu0 %v4532
        %5030 = vmatpush1.bf16.msra.mxu0 %v4531
        %5031 = vmatprep.subr.bf16.mxu0 %v4540
        %5032 = vmatpush1.bf16.msra.mxu0 %v4539
        %5033 = vmatprep.subr.bf16.mxu0 %v4548
        %5034 = vmatpush1.bf16.msra.mxu0 %v4547
        %5035 = vmatprep.subr.bf16.mxu0 %v4556
        %5036 = vmatpush1.bf16.msra.mxu0 %v4555
        %5037 = vmatprep.subr.bf16.mxu0 %v4564
        %5038 = vmatpush1.bf16.msra.mxu0 %v4563
        %5039 = vmatprep.subr.bf16.mxu0 %v4572
        %5040 = vmatpush1.bf16.msra.mxu0 %v4571
        %5041 = vmatprep.subr.bf16.mxu0 %v4580
        %5042 = vmatpush1.bf16.msra.mxu0 %v4579
        %5043 = vmatprep.subr.bf16.mxu0 %v4588
        %5044 = vmatpush1.bf16.msra.mxu0 %v4587
        %5045 = vmatprep.subr.bf16.mxu0 %v4596
        %5046 = vmatpush1.bf16.msra.mxu0 %v4595
        %5047 = vmatprep.subr.bf16.mxu0 %v4604
        %5048 = vmatpush1.bf16.msra.mxu0 %v4603
        %5049 = vmatprep.subr.bf16.mxu0 %v4612
        %5050 = vmatpush1.bf16.msra.mxu0 %v4611
        %5051 = vmatprep.mubr.bf16.mxu0 %v3668
        %5052 = vmatmul.mubr.bf16.gmra.mrb[0].mxu0 %v3667
        %v5053 = vpop.f32.mrb[0].mxu0
        %v5054 = vadd.f32 %v3884, %v5053
        %v5055 = vpop.f32.mrb[0].mxu0
        %v5056 = vadd.f32 %v3888, %v5055
        %v5057 = vpop.f32.mrb[0].mxu0
        %v5058 = vadd.f32 %v3884, %v5057
        %v5059 = vpop.f32.mrb[0].mxu0
        %v5060 = vadd.f32 %v3888, %v5059
        %5061 = vmatprep.mubr.bf16.mxu0 %v3671
        %5062 = vmatmul.mubr.bf16.gmra.mrb[0].mxu0 %v3670
        %v5063 = vpop.f32.mrb[0].mxu0
        %v5064 = vadd.f32 %v3884, %v5063
        %v5065 = vpop.f32.mrb[0].mxu0
        %v5066 = vadd.f32 %v3888, %v5065
        %v5067 = vpop.f32.mrb[0].mxu0
        %v5068 = vadd.f32 %v3884, %v5067
        %v5069 = vpop.f32.mrb[0].mxu0
        %v5070 = vadd.f32 %v3888, %v5069
        %5071 = vmatprep.mubr.bf16.mxu0 %v3674
        %5072 = vmatmul.mubr.bf16.gmra.mrb[0].mxu0 %v3673
        %v5073 = vpop.f32.mrb[0].mxu0
        %v5074 = vadd.f32 %v3884, %v5073
        %v5075 = vpop.f32.mrb[0].mxu0
        %v5076 = vadd.f32 %v3888, %v5075
        %v5077 = vpop.f32.mrb[0].mxu0
        %v5078 = vadd.f32 %v3884, %v5077
        %v5079 = vpop.f32.mrb[0].mxu0
        %v5080 = vadd.f32 %v3888, %v5079
        %5081 = vmatprep.mubr.bf16.mxu0 %v3677
        %5082 = vmatmul.mubr.bf16.gmra.mrb[0].mxu0 %v3676
        %v5083 = vpop.f32.mrb[0].mxu0
        %v5084 = vadd.f32 %v3884, %v5083
        %v5085 = vpop.f32.mrb[0].mxu0
        %v5086 = vadd.f32 %v3888, %v5085
        %v5087 = vpop.f32.mrb[0].mxu0
        %v5088 = vadd.f32 %v3884, %v5087
        %v5089 = vpop.f32.mrb[0].mxu0
        %v5090 = vadd.f32 %v3888, %v5089
        %5091 = vdwg.mxu0
        %5092 = vmatprep.subr.bf16.mxu0 %v4620
        %5093 = vmatpush1.bf16.msra.mxu0 %v4619
        %5094 = vmatprep.subr.bf16.mxu0 %v4628
        %5095 = vmatpush1.bf16.msra.mxu0 %v4627
        %5096 = vmatprep.subr.bf16.mxu0 %v4636
        %5097 = vmatpush1.bf16.msra.mxu0 %v4635
        %5098 = vmatprep.subr.bf16.mxu0 %v4644
        %5099 = vmatpush1.bf16.msra.mxu0 %v4643
        %5100 = vmatprep.subr.bf16.mxu0 %v4652
        %5101 = vmatpush1.bf16.msra.mxu0 %v4651
        %5102 = vmatprep.subr.bf16.mxu0 %v4660
        %5103 = vmatpush1.bf16.msra.mxu0 %v4659
        %5104 = vmatprep.subr.bf16.mxu0 %v4668
        %5105 = vmatpush1.bf16.msra.mxu0 %v4667
        %5106 = vmatprep.subr.bf16.mxu0 %v4676
        %5107 = vmatpush1.bf16.msra.mxu0 %v4675
        %5108 = vmatprep.subr.bf16.mxu0 0
        %5109 = vmatpush1.bf16.msra.mxu0 0
        %5110 = vmatprep.subr.bf16.mxu0 0
        %5111 = vmatpush1.bf16.msra.mxu0 0
        %5112 = vmatprep.subr.bf16.mxu0 0
        %5113 = vmatpush1.bf16.msra.mxu0 0
        %5114 = vmatprep.subr.bf16.mxu0 0
        %5115 = vmatpush1.bf16.msra.mxu0 0
        %5116 = vmatprep.subr.bf16.mxu0 0
        %5117 = vmatpush1.bf16.msra.mxu0 0
        %5118 = vmatprep.subr.bf16.mxu0 0
        %5119 = vmatpush1.bf16.msra.mxu0 0
        %5120 = vmatprep.subr.bf16.mxu0 0
        %5121 = vmatpush1.bf16.msra.mxu0 0
        %5122 = vmatprep.subr.bf16.mxu0 0
        %5123 = vmatpush1.bf16.msra.mxu0 0
        %5124 = vmatprep.mubr.bf16.mxu0 0
        %5125 = vmatmul.mubr.bf16.gmra.mrb[0].mxu0 %v3669
        %v5126 = vpop.f32.mrb[0].mxu0
        %v5127 = vadd.f32 %v5054, %v5126
        %v5128 = vpop.f32.mrb[0].mxu0
        %v5129 = vadd.f32 %v5056, %v5128
        %v5130 = vpop.f32.mrb[0].mxu0
        %v5131 = vadd.f32 %v5058, %v5130
        %v5132 = vpop.f32.mrb[0].mxu0
        %v5133 = vadd.f32 %v5060, %v5132
        %5134 = vmatprep.mubr.bf16.mxu0 0
        %5135 = vmatmul.mubr.bf16.gmra.mrb[0].mxu0 %v3672
        %v5136 = vpop.f32.mrb[0].mxu0
        %v5137 = vadd.f32 %v5064, %v5136
        %v5138 = vpop.f32.mrb[0].mxu0
        %v5139 = vadd.f32 %v5066, %v5138
        %v5140 = vpop.f32.mrb[0].mxu0
        %v5141 = vadd.f32 %v5068, %v5140
        %v5142 = vpop.f32.mrb[0].mxu0
        %v5143 = vadd.f32 %v5070, %v5142
        %5144 = vmatprep.mubr.bf16.mxu0 0
        %5145 = vmatmul.mubr.bf16.gmra.mrb[0].mxu0 %v3675
        %v5146 = vpop.f32.mrb[0].mxu0
        %v5147 = vadd.f32 %v5074, %v5146
        %v5148 = vpop.f32.mrb[0].mxu0
        %v5149 = vadd.f32 %v5076, %v5148
        %v5150 = vpop.f32.mrb[0].mxu0
        %v5151 = vadd.f32 %v5078, %v5150
        %v5152 = vpop.f32.mrb[0].mxu0
        %v5153 = vadd.f32 %v5080, %v5152
        %5154 = vmatprep.mubr.bf16.mxu0 0
        %5155 = vmatmul.mubr.bf16.gmra.mrb[0].mxu0 %v3678
        %v5156 = vpop.f32.mrb[0].mxu0
        %v5157 = vadd.f32 %v5084, %v5156
        %v5158 = vpop.f32.mrb[0].mxu0
        %v5159 = vadd.f32 %v5086, %v5158
        %v5160 = vpop.f32.mrb[0].mxu0
        %v5161 = vadd.f32 %v5088, %v5160
        %v5162 = vpop.f32.mrb[0].mxu0
        %v5163 = vadd.f32 %v5090, %v5162
        %5164 = vdwg.mxu0
        %5165 = vmatprep.subr.bf16.mxu0 %v4494
        %5166 = vmatpush1.bf16.msra.mxu0 %v4493
        %5167 = vmatprep.subr.bf16.mxu0 %v4502
        %5168 = vmatpush1.bf16.msra.mxu0 %v4501
        %5169 = vmatprep.subr.bf16.mxu0 %v4510
        %5170 = vmatpush1.bf16.msra.mxu0 %v4509
        %5171 = vmatprep.subr.bf16.mxu0 %v4518
        %5172 = vmatpush1.bf16.msra.mxu0 %v4517
        %5173 = vmatprep.subr.bf16.mxu0 %v4526
        %5174 = vmatpush1.bf16.msra.mxu0 %v4525
        %5175 = vmatprep.subr.bf16.mxu0 %v4534
        %5176 = vmatpush1.bf16.msra.mxu0 %v4533
        %5177 = vmatprep.subr.bf16.mxu0 %v4542
        %5178 = vmatpush1.bf16.msra.mxu0 %v4541
        %5179 = vmatprep.subr.bf16.mxu0 %v4550
        %5180 = vmatpush1.bf16.msra.mxu0 %v4549
        %5181 = vmatprep.subr.bf16.mxu0 %v4558
        %5182 = vmatpush1.bf16.msra.mxu0 %v4557
        %5183 = vmatprep.subr.bf16.mxu0 %v4566
        %5184 = vmatpush1.bf16.msra.mxu0 %v4565
        %5185 = vmatprep.subr.bf16.mxu0 %v4574
        %5186 = vmatpush1.bf16.msra.mxu0 %v4573
        %5187 = vmatprep.subr.bf16.mxu0 %v4582
        %5188 = vmatpush1.bf16.msra.mxu0 %v4581
        %5189 = vmatprep.subr.bf16.mxu0 %v4590
        %5190 = vmatpush1.bf16.msra.mxu0 %v4589
        %5191 = vmatprep.subr.bf16.mxu0 %v4598
        %5192 = vmatpush1.bf16.msra.mxu0 %v4597
        %5193 = vmatprep.subr.bf16.mxu0 %v4606
        %5194 = vmatpush1.bf16.msra.mxu0 %v4605
        %5195 = vmatprep.subr.bf16.mxu0 %v4614
        %5196 = vmatpush1.bf16.msra.mxu0 %v4613
        %5197 = vmatprep.mubr.bf16.mxu0 %v3668
        %5198 = vmatmul.mubr.bf16.gmra.mrb[0].mxu0 %v3667
        %v5199 = vpop.f32.mrb[0].mxu0
        %v5200 = vadd.f32 %v3892, %v5199
        %v5201 = vpop.f32.mrb[0].mxu0
        %v5202 = vadd.f32 %v3896, %v5201
        %v5203 = vpop.f32.mrb[0].mxu0
        %v5204 = vadd.f32 %v3892, %v5203
        %v5205 = vpop.f32.mrb[0].mxu0
        %v5206 = vadd.f32 %v3896, %v5205
        %5207 = vmatprep.mubr.bf16.mxu0 %v3671
        %5208 = vmatmul.mubr.bf16.gmra.mrb[0].mxu0 %v3670
        %v5209 = vpop.f32.mrb[0].mxu0
        %v5210 = vadd.f32 %v3892, %v5209
        %v5211 = vpop.f32.mrb[0].mxu0
        %v5212 = vadd.f32 %v3896, %v5211
        %v5213 = vpop.f32.mrb[0].mxu0
        %v5214 = vadd.f32 %v3892, %v5213
        %v5215 = vpop.f32.mrb[0].mxu0
        %v5216 = vadd.f32 %v3896, %v5215
        %5217 = vmatprep.mubr.bf16.mxu0 %v3674
        %5218 = vmatmul.mubr.bf16.gmra.mrb[0].mxu0 %v3673
        %v5219 = vpop.f32.mrb[0].mxu0
        %v5220 = vadd.f32 %v3892, %v5219
        %v5221 = vpop.f32.mrb[0].mxu0
        %v5222 = vadd.f32 %v3896, %v5221
        %v5223 = vpop.f32.mrb[0].mxu0
        %v5224 = vadd.f32 %v3892, %v5223
        %v5225 = vpop.f32.mrb[0].mxu0
        %v5226 = vadd.f32 %v3896, %v5225
        %5227 = vmatprep.mubr.bf16.mxu0 %v3677
        %5228 = vmatmul.mubr.bf16.gmra.mrb[0].mxu0 %v3676
        %v5229 = vpop.f32.mrb[0].mxu0
        %v5230 = vadd.f32 %v3892, %v5229
        %v5231 = vpop.f32.mrb[0].mxu0
        %v5232 = vadd.f32 %v3896, %v5231
        %v5233 = vpop.f32.mrb[0].mxu0
        %v5234 = vadd.f32 %v3892, %v5233
        %v5235 = vpop.f32.mrb[0].mxu0
        %v5236 = vadd.f32 %v3896, %v5235
        %5237 = vdwg.mxu0
        %5238 = vmatprep.subr.bf16.mxu0 %v4622
        %5239 = vmatpush1.bf16.msra.mxu0 %v4621
        %5240 = vmatprep.subr.bf16.mxu0 %v4630
        %5241 = vmatpush1.bf16.msra.mxu0 %v4629
        %5242 = vmatprep.subr.bf16.mxu0 %v4638
        %5243 = vmatpush1.bf16.msra.mxu0 %v4637
        %5244 = vmatprep.subr.bf16.mxu0 %v4646
        %5245 = vmatpush1.bf16.msra.mxu0 %v4645
        %5246 = vmatprep.subr.bf16.mxu0 %v4654
        %5247 = vmatpush1.bf16.msra.mxu0 %v4653
        %5248 = vmatprep.subr.bf16.mxu0 %v4662
        %5249 = vmatpush1.bf16.msra.mxu0 %v4661
        %5250 = vmatprep.subr.bf16.mxu0 %v4670
        %5251 = vmatpush1.bf16.msra.mxu0 %v4669
        %5252 = vmatprep.subr.bf16.mxu0 %v4678
        %5253 = vmatpush1.bf16.msra.mxu0 %v4677
        %5254 = vmatprep.subr.bf16.mxu0 0
        %5255 = vmatpush1.bf16.msra.mxu0 0
        %5256 = vmatprep.subr.bf16.mxu0 0
        %5257 = vmatpush1.bf16.msra.mxu0 0
        %5258 = vmatprep.subr.bf16.mxu0 0
        %5259 = vmatpush1.bf16.msra.mxu0 0
        %5260 = vmatprep.subr.bf16.mxu0 0
        %5261 = vmatpush1.bf16.msra.mxu0 0
        %5262 = vmatprep.subr.bf16.mxu0 0
        %5263 = vmatpush1.bf16.msra.mxu0 0
        %5264 = vmatprep.subr.bf16.mxu0 0
        %5265 = vmatpush1.bf16.msra.mxu0 0
        %5266 = vmatprep.subr.bf16.mxu0 0
        %5267 = vmatpush1.bf16.msra.mxu0 0
        %5268 = vmatprep.subr.bf16.mxu0 0
        %5269 = vmatpush1.bf16.msra.mxu0 0
        %5270 = vmatprep.mubr.bf16.mxu0 0
        %5271 = vmatmul.mubr.bf16.gmra.mrb[0].mxu0 %v3669
        %v5272 = vpop.f32.mrb[0].mxu0
        %v5273 = vadd.f32 %v5200, %v5272
        %v5274 = vpop.f32.mrb[0].mxu0
        %v5275 = vadd.f32 %v5202, %v5274
        %v5276 = vpop.f32.mrb[0].mxu0
        %v5277 = vadd.f32 %v5204, %v5276
        %v5278 = vpop.f32.mrb[0].mxu0
        %v5279 = vadd.f32 %v5206, %v5278
        %5280 = vmatprep.mubr.bf16.mxu0 0
        %5281 = vmatmul.mubr.bf16.gmra.mrb[0].mxu0 %v3672
        %v5282 = vpop.f32.mrb[0].mxu0
        %v5283 = vadd.f32 %v5210, %v5282
        %v5284 = vpop.f32.mrb[0].mxu0
        %v5285 = vadd.f32 %v5212, %v5284
        %v5286 = vpop.f32.mrb[0].mxu0
        %v5287 = vadd.f32 %v5214, %v5286
        %v5288 = vpop.f32.mrb[0].mxu0
        %v5289 = vadd.f32 %v5216, %v5288
        %5290 = vmatprep.mubr.bf16.mxu0 0
        %5291 = vmatmul.mubr.bf16.gmra.mrb[0].mxu0 %v3675
        %v5292 = vpop.f32.mrb[0].mxu0
        %v5293 = vadd.f32 %v5220, %v5292
        %v5294 = vpop.f32.mrb[0].mxu0
        %v5295 = vadd.f32 %v5222, %v5294
        %v5296 = vpop.f32.mrb[0].mxu0
        %v5297 = vadd.f32 %v5224, %v5296
        %v5298 = vpop.f32.mrb[0].mxu0
        %v5299 = vadd.f32 %v5226, %v5298
        %5300 = vmatprep.mubr.bf16.mxu0 0
        %5301 = vmatmul.mubr.bf16.gmra.mrb[0].mxu0 %v3678
        %v5302 = vpop.f32.mrb[0].mxu0
        %v5303 = vadd.f32 %v5230, %v5302
        %v5304 = vpop.f32.mrb[0].mxu0
        %v5305 = vadd.f32 %v5232, %v5304
        %v5306 = vpop.f32.mrb[0].mxu0
        %v5307 = vadd.f32 %v5234, %v5306
        %v5308 = vpop.f32.mrb[0].mxu0
        %v5309 = vadd.f32 %v5236, %v5308
        %5310 = vdwg.mxu0
        %5311 = vmatprep.subr.bf16.mxu0 %v4496
        %5312 = vmatpush1.bf16.msra.mxu0 %v4495
        %5313 = vmatprep.subr.bf16.mxu0 %v4504
        %5314 = vmatpush1.bf16.msra.mxu0 %v4503
        %5315 = vmatprep.subr.bf16.mxu0 %v4512
        %5316 = vmatpush1.bf16.msra.mxu0 %v4511
        %5317 = vmatprep.subr.bf16.mxu0 %v4520
        %5318 = vmatpush1.bf16.msra.mxu0 %v4519
        %5319 = vmatprep.subr.bf16.mxu0 %v4528
        %5320 = vmatpush1.bf16.msra.mxu0 %v4527
        %5321 = vmatprep.subr.bf16.mxu0 %v4536
        %5322 = vmatpush1.bf16.msra.mxu0 %v4535
        %5323 = vmatprep.subr.bf16.mxu0 %v4544
        %5324 = vmatpush1.bf16.msra.mxu0 %v4543
        %5325 = vmatprep.subr.bf16.mxu0 %v4552
        %5326 = vmatpush1.bf16.msra.mxu0 %v4551
        %5327 = vmatprep.subr.bf16.mxu0 %v4560
        %5328 = vmatpush1.bf16.msra.mxu0 %v4559
        %5329 = vmatprep.subr.bf16.mxu0 %v4568
        %5330 = vmatpush1.bf16.msra.mxu0 %v4567
        %5331 = vmatprep.subr.bf16.mxu0 %v4576
        %5332 = vmatpush1.bf16.msra.mxu0 %v4575
        %5333 = vmatprep.subr.bf16.mxu0 %v4584
        %5334 = vmatpush1.bf16.msra.mxu0 %v4583
        %5335 = vmatprep.subr.bf16.mxu0 %v4592
        %5336 = vmatpush1.bf16.msra.mxu0 %v4591
        %5337 = vmatprep.subr.bf16.mxu0 %v4600
        %5338 = vmatpush1.bf16.msra.mxu0 %v4599
        %5339 = vmatprep.subr.bf16.mxu0 %v4608
        %5340 = vmatpush1.bf16.msra.mxu0 %v4607
        %5341 = vmatprep.subr.bf16.mxu0 %v4616
        %5342 = vmatpush1.bf16.msra.mxu0 %v4615
        %5343 = vmatprep.mubr.bf16.mxu0 %v3668
        %5344 = vmatmul.mubr.bf16.gmra.mrb[0].mxu0 %v3667
        %v5345 = vpop.f32.mrb[0].mxu0
        %v5346 = vadd.f32 %v3900, %v5345
        %v5347 = vpop.f32.mrb[0].mxu0
        %v5348 = vadd.f32 %v3904, %v5347
        %v5349 = vpop.f32.mrb[0].mxu0
        %v5350 = vadd.f32 %v3900, %v5349
        %v5351 = vpop.f32.mrb[0].mxu0
        %v5352 = vadd.f32 %v3904, %v5351
        %5353 = vmatprep.mubr.bf16.mxu0 %v3671
        %5354 = vmatmul.mubr.bf16.gmra.mrb[0].mxu0 %v3670
        %v5355 = vpop.f32.mrb[0].mxu0
        %v5356 = vadd.f32 %v3900, %v5355
        %v5357 = vpop.f32.mrb[0].mxu0
        %v5358 = vadd.f32 %v3904, %v5357
        %v5359 = vpop.f32.mrb[0].mxu0
        %v5360 = vadd.f32 %v3900, %v5359
        %v5361 = vpop.f32.mrb[0].mxu0
        %v5362 = vadd.f32 %v3904, %v5361
        %5363 = vmatprep.mubr.bf16.mxu0 %v3674
        %5364 = vmatmul.mubr.bf16.gmra.mrb[0].mxu0 %v3673
        %v5365 = vpop.f32.mrb[0].mxu0
        %v5366 = vadd.f32 %v3900, %v5365
        %v5367 = vpop.f32.mrb[0].mxu0
        %v5368 = vadd.f32 %v3904, %v5367
        %v5369 = vpop.f32.mrb[0].mxu0
        %v5370 = vadd.f32 %v3900, %v5369
        %v5371 = vpop.f32.mrb[0].mxu0
        %v5372 = vadd.f32 %v3904, %v5371
        %5373 = vmatprep.mubr.bf16.mxu0 %v3677
        %5374 = vmatmul.mubr.bf16.gmra.mrb[0].mxu0 %v3676
        %v5375 = vpop.f32.mrb[0].mxu0
        %v5376 = vadd.f32 %v3900, %v5375
        %v5377 = vpop.f32.mrb[0].mxu0
        %v5378 = vadd.f32 %v3904, %v5377
        %v5379 = vpop.f32.mrb[0].mxu0
        %v5380 = vadd.f32 %v3900, %v5379
        %v5381 = vpop.f32.mrb[0].mxu0
        %v5382 = vadd.f32 %v3904, %v5381
        %5383 = vdwg.mxu0
        %5384 = vmatprep.subr.bf16.mxu0 %v4624
        %5385 = vmatpush1.bf16.msra.mxu0 %v4623
        %5386 = vmatprep.subr.bf16.mxu0 %v4632
        %5387 = vmatpush1.bf16.msra.mxu0 %v4631
        %5388 = vmatprep.subr.bf16.mxu0 %v4640
        %5389 = vmatpush1.bf16.msra.mxu0 %v4639
        %5390 = vmatprep.subr.bf16.mxu0 %v4648
        %5391 = vmatpush1.bf16.msra.mxu0 %v4647
        %5392 = vmatprep.subr.bf16.mxu0 %v4656
        %5393 = vmatpush1.bf16.msra.mxu0 %v4655
        %5394 = vmatprep.subr.bf16.mxu0 %v4664
        %5395 = vmatpush1.bf16.msra.mxu0 %v4663
        %5396 = vmatprep.subr.bf16.mxu0 %v4672
        %5397 = vmatpush1.bf16.msra.mxu0 %v4671
        %5398 = vmatprep.subr.bf16.mxu0 %v4680
        %5399 = vmatpush1.bf16.msra.mxu0 %v4679
        %5400 = vmatprep.subr.bf16.mxu0 0
        %5401 = vmatpush1.bf16.msra.mxu0 0
        %5402 = vmatprep.subr.bf16.mxu0 0
        %5403 = vmatpush1.bf16.msra.mxu0 0
        %5404 = vmatprep.subr.bf16.mxu0 0
        %5405 = vmatpush1.bf16.msra.mxu0 0
        %5406 = vmatprep.subr.bf16.mxu0 0
        %5407 = vmatpush1.bf16.msra.mxu0 0
        %5408 = vmatprep.subr.bf16.mxu0 0
        %5409 = vmatpush1.bf16.msra.mxu0 0
        %5410 = vmatprep.subr.bf16.mxu0 0
        %5411 = vmatpush1.bf16.msra.mxu0 0
        %5412 = vmatprep.subr.bf16.mxu0 0
        %5413 = vmatpush1.bf16.msra.mxu0 0
        %5414 = vmatprep.subr.bf16.mxu0 0
        %5415 = vmatpush1.bf16.msra.mxu0 0
        %5416 = vmatprep.mubr.bf16.mxu0 0
        %5417 = vmatmul.mubr.bf16.gmra.mrb[0].mxu0 %v3669
        %v5418 = vpop.f32.mrb[0].mxu0
        %v5419 = vadd.f32 %v5346, %v5418
        %v5420 = vpop.f32.mrb[0].mxu0
        %v5421 = vadd.f32 %v5348, %v5420
        %v5422 = vpop.f32.mrb[0].mxu0
        %v5423 = vadd.f32 %v5350, %v5422
        %v5424 = vpop.f32.mrb[0].mxu0
        %v5425 = vadd.f32 %v5352, %v5424
        %5426 = vmatprep.mubr.bf16.mxu0 0
        %5427 = vmatmul.mubr.bf16.gmra.mrb[0].mxu0 %v3672
        %v5428 = vpop.f32.mrb[0].mxu0
        %v5429 = vadd.f32 %v5356, %v5428
        %v5430 = vpop.f32.mrb[0].mxu0
        %v5431 = vadd.f32 %v5358, %v5430
        %v5432 = vpop.f32.mrb[0].mxu0
        %v5433 = vadd.f32 %v5360, %v5432
        %v5434 = vpop.f32.mrb[0].mxu0
        %v5435 = vadd.f32 %v5362, %v5434
        %5436 = vmatprep.mubr.bf16.mxu0 0
        %5437 = vmatmul.mubr.bf16.gmra.mrb[0].mxu0 %v3675
        %v5438 = vpop.f32.mrb[0].mxu0
        %v5439 = vadd.f32 %v5366, %v5438
        %v5440 = vpop.f32.mrb[0].mxu0
        %v5441 = vadd.f32 %v5368, %v5440
        %v5442 = vpop.f32.mrb[0].mxu0
        %v5443 = vadd.f32 %v5370, %v5442
        %v5444 = vpop.f32.mrb[0].mxu0
        %v5445 = vadd.f32 %v5372, %v5444
        %5446 = vmatprep.mubr.bf16.mxu0 0
        %5447 = vmatmul.mubr.bf16.gmra.mrb[0].mxu0 %v3678
        %v5448 = vpop.f32.mrb[0].mxu0
        %v5449 = vadd.f32 %v5376, %v5448
        %v5450 = vpop.f32.mrb[0].mxu0
        %v5451 = vadd.f32 %v5378, %v5450
        %v5452 = vpop.f32.mrb[0].mxu0
        %v5453 = vadd.f32 %v5380, %v5452
        %v5454 = vpop.f32.mrb[0].mxu0
        %v5455 = vadd.f32 %v5382, %v5454
        %5456 = vdwg.mxu0
        %v5457 = vpack.c.bf16 %v4985, %v4981
        %v5458 = vpack.c.bf16 %v4987, %v4983
        %v5459 = vpack.c.bf16 %v5131, %v5127
        %v5460 = vpack.c.bf16 %v5133, %v5129
        %v5461 = vpack.c.bf16 %v5277, %v5273
        %v5462 = vpack.c.bf16 %v5279, %v5275
        %v5463 = vpack.c.bf16 %v5423, %v5419
        %v5464 = vpack.c.bf16 %v5425, %v5421
        %v5465 = vpack.c.bf16 %v4995, %v4991
        %v5466 = vpack.c.bf16 %v4997, %v4993
        %v5467 = vpack.c.bf16 %v5141, %v5137
        %v5468 = vpack.c.bf16 %v5143, %v5139
        %v5469 = vpack.c.bf16 %v5287, %v5283
        %v5470 = vpack.c.bf16 %v5289, %v5285
        %v5471 = vpack.c.bf16 %v5433, %v5429
        %v5472 = vpack.c.bf16 %v5435, %v5431
        %v5473 = vpack.c.bf16 %v5005, %v5001
        %v5474 = vpack.c.bf16 %v5007, %v5003
        %v5475 = vpack.c.bf16 %v5151, %v5147
        %v5476 = vpack.c.bf16 %v5153, %v5149
        %v5477 = vpack.c.bf16 %v5297, %v5293
        %v5478 = vpack.c.bf16 %v5299, %v5295
        %v5479 = vpack.c.bf16 %v5443, %v5439
        %v5480 = vpack.c.bf16 %v5445, %v5441
        %v5481 = vpack.c.bf16 %v5015, %v5011
        %v5482 = vpack.c.bf16 %v5017, %v5013
        %v5483 = vpack.c.bf16 %v5161, %v5157
        %v5484 = vpack.c.bf16 %v5163, %v5159
        %v5485 = vpack.c.bf16 %v5307, %v5303
        %v5486 = vpack.c.bf16 %v5309, %v5305
        %v5487 = vpack.c.bf16 %v5453, %v5449
        %v5488 = vpack.c.bf16 %v5455, %v5451
        %v5521 = vunpack.c.l.b16 %v5457
        %v5522 = vunpack.c.l.b16 %v5458
        %v5523 = vunpack.c.l.b16 %v5459
        %v5524 = vunpack.c.l.b16 %v5460
        %v5525 = vunpack.c.l.b16 %v5461
        %v5526 = vunpack.c.l.b16 %v5462
        %v5527 = vunpack.c.l.b16 %v5463
        %v5528 = vunpack.c.l.b16 %v5464
        %v5529 = vunpack.c.h.b16 %v5457
        %v5530 = vunpack.c.h.b16 %v5458
        %v5531 = vunpack.c.h.b16 %v5459
        %v5532 = vunpack.c.h.b16 %v5460
        %v5533 = vunpack.c.h.b16 %v5461
        %v5534 = vunpack.c.h.b16 %v5462
        %v5535 = vunpack.c.h.b16 %v5463
        %v5536 = vunpack.c.h.b16 %v5464
        %v5537 = vunpack.c.l.b16 %v5465
        %v5538 = vunpack.c.l.b16 %v5466
        %v5539 = vunpack.c.l.b16 %v5467
        %v5540 = vunpack.c.l.b16 %v5468
        %v5541 = vunpack.c.l.b16 %v5469
        %v5542 = vunpack.c.l.b16 %v5470
        %v5543 = vunpack.c.l.b16 %v5471
        %v5544 = vunpack.c.l.b16 %v5472
        %v5545 = vunpack.c.h.b16 %v5465
        %v5546 = vunpack.c.h.b16 %v5466
        %v5547 = vunpack.c.h.b16 %v5467
        %v5548 = vunpack.c.h.b16 %v5468
        %v5549 = vunpack.c.h.b16 %v5469
        %v5550 = vunpack.c.h.b16 %v5470
        %v5551 = vunpack.c.h.b16 %v5471
        %v5552 = vunpack.c.h.b16 %v5472
        %v5553 = vunpack.c.l.b16 %v5473
        %v5554 = vunpack.c.l.b16 %v5474
        %v5555 = vunpack.c.l.b16 %v5475
        %v5556 = vunpack.c.l.b16 %v5476
        %v5557 = vunpack.c.l.b16 %v5477
        %v5558 = vunpack.c.l.b16 %v5478
        %v5559 = vunpack.c.l.b16 %v5479
        %v5560 = vunpack.c.l.b16 %v5480
        %v5561 = vunpack.c.h.b16 %v5473
        %v5562 = vunpack.c.h.b16 %v5474
        %v5563 = vunpack.c.h.b16 %v5475
        %v5564 = vunpack.c.h.b16 %v5476
        %v5565 = vunpack.c.h.b16 %v5477
        %v5566 = vunpack.c.h.b16 %v5478
        %v5567 = vunpack.c.h.b16 %v5479
        %v5568 = vunpack.c.h.b16 %v5480
        %v5569 = vunpack.c.l.b16 %v5481
        %v5570 = vunpack.c.l.b16 %v5482
        %v5571 = vunpack.c.l.b16 %v5483
        %v5572 = vunpack.c.l.b16 %v5484
        %v5573 = vunpack.c.l.b16 %v5485
        %v5574 = vunpack.c.l.b16 %v5486
        %v5575 = vunpack.c.l.b16 %v5487
        %v5576 = vunpack.c.l.b16 %v5488
        %v5577 = vunpack.c.h.b16 %v5481
        %v5578 = vunpack.c.h.b16 %v5482
        %v5579 = vunpack.c.h.b16 %v5483
        %v5580 = vunpack.c.h.b16 %v5484
        %v5581 = vunpack.c.h.b16 %v5485
        %v5582 = vunpack.c.h.b16 %v5486
        %v5583 = vunpack.c.h.b16 %v5487
        %v5584 = vunpack.c.h.b16 %v5488
        %v5585 = vpack.c.b16 %v5522, %v5521
        %v5586 = vpack.c.b16 %v5524, %v5523
        %v5587 = vpack.c.b16 %v5526, %v5525
        %v5588 = vpack.c.b16 %v5528, %v5527
        %v5589 = vpack.c.b16 %v5530, %v5529
        %v5590 = vpack.c.b16 %v5532, %v5531
        %v5591 = vpack.c.b16 %v5534, %v5533
        %v5592 = vpack.c.b16 %v5536, %v5535
        %v5593 = vpack.c.b16 %v5538, %v5537
        %v5594 = vpack.c.b16 %v5540, %v5539
        %v5595 = vpack.c.b16 %v5542, %v5541
        %v5596 = vpack.c.b16 %v5544, %v5543
        %v5597 = vpack.c.b16 %v5546, %v5545
        %v5598 = vpack.c.b16 %v5548, %v5547
        %v5599 = vpack.c.b16 %v5550, %v5549
        %v5600 = vpack.c.b16 %v5552, %v5551
        %v5601 = vpack.c.b16 %v5554, %v5553
        %v5602 = vpack.c.b16 %v5556, %v5555
        %v5603 = vpack.c.b16 %v5558, %v5557
        %v5604 = vpack.c.b16 %v5560, %v5559
        %v5605 = vpack.c.b16 %v5562, %v5561
        %v5606 = vpack.c.b16 %v5564, %v5563
        %v5607 = vpack.c.b16 %v5566, %v5565
        %v5608 = vpack.c.b16 %v5568, %v5567
        %v5609 = vpack.c.b16 %v5570, %v5569
        %v5610 = vpack.c.b16 %v5572, %v5571
        %v5611 = vpack.c.b16 %v5574, %v5573
        %v5612 = vpack.c.b16 %v5576, %v5575
        %v5613 = vpack.c.b16 %v5578, %v5577
        %v5614 = vpack.c.b16 %v5580, %v5579
        %v5615 = vpack.c.b16 %v5582, %v5581
        %v5616 = vpack.c.b16 %v5584, %v5583
        %5649 = vst [vmem:[%s773] sm:$0xff] %v5585
        %5650 = vst [vmem:[%s773 + $0x8] sm:$0xff] %v5586
        %5651 = vst [vmem:[%s773 + $0x10] sm:$0xff] %v5587
        %5652 = vst [vmem:[%s773 + $0x18] sm:$0xff] %v5588
        %5653 = vst [vmem:[%s773 + $0x20] sm:$0xff] %v5589
        %5654 = vst [vmem:[%s773 + $0x28] sm:$0xff] %v5590
        %5655 = vst [vmem:[%s773 + $0x30] sm:$0xff] %v5591
        %5656 = vst [vmem:[%s773 + $0x38] sm:$0xff] %v5592
        %5657 = vst [vmem:[%s773 + $0x40] sm:$0xff] %v5593
        %5658 = vst [vmem:[%s773 + $0x48] sm:$0xff] %v5594
        %5659 = vst [vmem:[%s773 + $0x50] sm:$0xff] %v5595
        %5660 = vst [vmem:[%s773 + $0x58] sm:$0xff] %v5596
        %5661 = vst [vmem:[%s773 + $0x60] sm:$0xff] %v5597
        %5662 = vst [vmem:[%s773 + $0x68] sm:$0xff] %v5598
        %5663 = vst [vmem:[%s773 + $0x70] sm:$0xff] %v5599
        %5664 = vst [vmem:[%s773 + $0x78] sm:$0xff] %v5600
        %5665 = vst [vmem:[%s773 + $0x80] sm:$0xff] %v5601
        %5666 = vst [vmem:[%s773 + $0x88] sm:$0xff] %v5602
        %5667 = vst [vmem:[%s773 + $0x90] sm:$0xff] %v5603
        %5668 = vst [vmem:[%s773 + $0x98] sm:$0xff] %v5604
        %5669 = vst [vmem:[%s773 + $0xa0] sm:$0xff] %v5605
        %5670 = vst [vmem:[%s773 + $0xa8] sm:$0xff] %v5606
        %5671 = vst [vmem:[%s773 + $0xb0] sm:$0xff] %v5607
        %5672 = vst [vmem:[%s773 + $0xb8] sm:$0xff] %v5608
        %5673 = vst [vmem:[%s773 + $0xc0] sm:$0xff] %v5609
        %5674 = vst [vmem:[%s773 + $0xc8] sm:$0xff] %v5610
        %5675 = vst [vmem:[%s773 + $0xd0] sm:$0xff] %v5611
        %5676 = vst [vmem:[%s773 + $0xd8] sm:$0xff] %v5612
        %5677 = vst [vmem:[%s773 + $0xe0] sm:$0xff] %v5613
        %5678 = vst [vmem:[%s773 + $0xe8] sm:$0xff] %v5614
        %5679 = vst [vmem:[%s773 + $0xf0] sm:$0xff] %v5615
        %5680 = vst [vmem:[%s773 + $0xf8] sm:$0xff] %v5616
        %s5681 = smul.u32 8, %s37
        %p5682 = scmp.lt.s32.totalorder %s5681, 15
        %s5683 = scalar_select %p5682, %s5681, 15
        %s5684 = smul.addr %s5683, 8
        %s5685 = smul.addr %s5684, 4
        %s5686 = scalar_lea.vmem %s23, %s5685
        // Predicated region
        $region129: #{straightnet_back_lc_forward.2} parent=111 // pred_check
          %p5687 = pneg %p543
        $region130: #{straightnet_back_lc_forward.2} parent=111 // pred_check_branch
          %5689 = sbr.rel (%p5687) target = $region132
        $region131: #{straightnet_back_lc_forward.2} parent=111 // pred_region
          %s5690 = smul.u32 8, %s37
        $region132: #{straightnet_back_lc_forward.2} parent=111 // pred_fallthru
          _
      $region112: #{straightnet_back_lc_forward.2} parent=5 // pred_fallthru
        _
      %p5691 = scmp.le.s32.totalorder 2, %s32
      // Predicated region
      $region133: #{straightnet_back_lc_forward.2} parent=5 // pred_check
        %p5692 = pneg %p5691
      $region134: #{straightnet_back_lc_forward.2} parent=5 // pred_check_branch
        %5694 = sbr.rel (%p5692) target = $region136
      $region135: #{straightnet_back_lc_forward.2} parent=5 // pred_region
        %s5695 = ssub.s32 %s32, 2
        // Predicated region
        $region137: #{straightnet_back_lc_forward.2} parent=135 // pred_check
          %p5696 = pneg %p549
        $region138: #{straightnet_back_lc_forward.2} parent=135 // pred_check_branch
          %5698 = sbr.rel (%p5696) target = $region140
        $region139: #{straightnet_back_lc_forward.2} parent=135 // pred_region
          %s5699 = smul.u32 8, %s38
          %p5700 = scmp.lt.s32.totalorder %s5699, 15
          %s5701 = scalar_select %p5700, %s5699, 15
          %s5702 = smul.addr %s5701, 8
          %s5703 = smul.addr %s5702, 4
          %s5704 = scalar_lea.vmem %s23, %s5703
        $region140: #{straightnet_back_lc_forward.2} parent=135 // pred_fallthru
          _
      $region136: #{straightnet_back_lc_forward.2} parent=5 // pred_fallthru
        _
    $region6: #{straightnet_back_lc_forward.2} parent=1 // loop_footer
      %s36 = sadd.s32 1, %s32
    $region7: #{straightnet_back_lc_forward.2} parent=1 // loop_footer_branch
      %31 = sbr.rel target = $region3
    $region8: #{straightnet_back_lc_forward.2} parent=1 // loop_exit
      _
    %5705 = vsyncpa [#allocation3], 1
    %s5706 = scalar_lea.sflag [#allocation3], 1
    %5707 = vsyncpa %s5706, 1
    %5708 = vsyncpa [#allocation5], 1
    %5709 = vsyncpa [#allocation8], 1

</llo_original>
